<compile_context>
chip_gen: v5e
topology: v5e:2x2
jax: 0.10.0
libtpu: 0.0.40
codegen_flags: <defaults>
</compile_context>

<pallas_src>
import jax
import jax.numpy as jnp
from jax import lax
from jax.experimental import pallas as pl
from jax.experimental.pallas import tpu as pltpu

B = 2
H = W = 28
KSZ = 3
TAPS = KSZ * KSZ           # 9
OH = OW = 26
P = OH * OW                # 676 spatial positions
C_OUT = 32
K_FC = C_OUT * P           # 21632
HID = 128
N_CLS = 10
CG = 16                    # conv channels (fc1 K-chunks of width P) per grid step
N_STEPS = C_OUT // CG      # 2 grid steps


# ----------------------------- Pallas kernel -------------------------------

def fused_cnn_kernel(patches_ref, wc_ref, bc_ref, w1_ref, b1_ref, w2_ref,
                     b2_ref, o_ref, acc_ref, conv_ref):
    """conv(3x3)+ReLU (VPU) -> batched fc1 accumulate (MXU, bf16) -> ReLU -> fc2."""
    k = pl.program_id(0)

    @pl.when(k == 0)
    def _():
        acc_ref[...] = jnp.zeros_like(acc_ref)

    # ---- conv + bias + ReLU for this step's CG output channels (VPU) ----
    pp = patches_ref[...]                          # (9, B, P) f32, VMEM-resident
    for cl in range(CG):                           # unrolled over channels
        c = k * CG + cl                            # global conv output channel
        w_taps = [wc_ref[c, t] for t in range(TAPS)]   # hoisted scalar reads
        bias_c = bc_ref[c]
        z = w_taps[0] * pp[0]
        for t in range(1, TAPS):
            z = z + w_taps[t] * pp[t]
        conv_ref[cl] = jnp.maximum(z + bias_c, 0.0).astype(jnp.bfloat16)

    # ---- fc1 partial: single batched MXU contraction over all CG channels ----
    # (CG, B, P) x (CG, P, HID) -> (CG, B, HID), f32 accumulation
    part = jnp.einsum("cbp,cph->cbh", conv_ref[...], w1_ref[...],
                      preferred_element_type=jnp.float32)
    acc_ref[...] += jnp.sum(part, axis=0)

    @pl.when(k == pl.num_programs(0) - 1)
    def _():
        h = jnp.maximum(acc_ref[...] + b1_ref[...], 0.0)
        o_ref[...] = (jnp.dot(h, w2_ref[...], preferred_element_type=jnp.float32)
                      + b2_ref[...]).astype(o_ref.dtype)


# ------------------------------ JAX glue ------------------------------------

def prepare_params(params):
    """One-time weight re-layout: fold the NCHW flatten into w1, cast to bf16."""
    wc, bc, w1, b1, w2, b2 = params
    wc_r = wc.reshape(C_OUT, TAPS)                          # (32, 9)   -> SMEM
    w1_r = (w1.reshape(HID, C_OUT, P)                       # (128, 32, 676)
              .transpose(1, 2, 0)                           # (32, 676, 128)
              .astype(jnp.bfloat16))
    return (wc_r, bc, w1_r, b1.reshape(1, HID), w2.T, b2.reshape(1, N_CLS))


def im2col_planes(x):
    """x: (B, 1, 28, 28) NCHW -> tap-major patch planes (9, B, 676)."""
    cols = [x[:, 0, kh:kh + OH, kw:kw + OW].reshape(B, P)
            for kh in range(KSZ) for kw in range(KSZ)]
    return jnp.stack(cols, axis=0)


@jax.jit
def cnn_forward(x, prepped):
    wc_r, bc, w1_r, b1_r, w2_t, b2_r = prepped
    patches = im2col_planes(x)                              # (9, B, 676) f32

    return pl.pallas_call(
        fused_cnn_kernel,
        out_shape=jax.ShapeDtypeStruct((B, N_CLS), jnp.float32),
        grid_spec=pltpu.PrefetchScalarGridSpec(
            num_scalar_prefetch=0,
            grid=(N_STEPS,),
            in_specs=[
                # patch planes: resident in VMEM across all steps
                pl.BlockSpec((TAPS, B, P), lambda k: (0, 0, 0)),
                # conv weights / bias: whole arrays in SMEM (scalar reads)
                pl.BlockSpec(memory_space=pltpu.MemorySpace.SMEM),
                pl.BlockSpec(memory_space=pltpu.MemorySpace.SMEM),
                # fc1 weight: the only large stream, K-tiled by channel group
                pl.BlockSpec((CG, P, HID), lambda k: (k, 0, 0)),
                # small fc params: resident
                pl.BlockSpec((1, HID), lambda k: (0, 0)),
                pl.BlockSpec((HID, N_CLS), lambda k: (0, 0)),
                pl.BlockSpec((1, N_CLS), lambda k: (0, 0)),
            ],
            out_specs=pl.BlockSpec((B, N_CLS), lambda k: (0, 0)),
            scratch_shapes=[
                pltpu.VMEM((B, HID), jnp.float32),            # fc1 accumulator
                pltpu.VMEM((CG, B, P), jnp.bfloat16),         # staged conv acts
            ],
        ),
        compiler_params=pltpu.CompilerParams(
            dimension_semantics=("arbitrary",),
            vmem_limit_bytes=32 * 1024 * 1024),
    )(patches, wc_r, bc, w1_r, b1_r, w2_t, b2_r)


# ------------------------- pure-JAX reference --------------------------------

def cnn_reference(x, params):
    wc, bc, w1, b1, w2, b2 = params
    y = lax.conv_general_dilated(
        x, wc, window_strides=(1, 1), padding="VALID",
        dimension_numbers=("NCHW", "OIHW", "NCHW"))
    y = jnp.maximum(y + bc.reshape(1, C_OUT, 1, 1), 0.0)
    y = y.reshape(B, K_FC)
    y = jnp.maximum(y @ w1.T + b1, 0.0)
    return y @ w2.T + b2


# ------------------------------- main ----------------------------------------

if __name__ == "__main__":
    key = jax.random.PRNGKey(0)
    keys = jax.random.split(key, 7)

    def uinit(k, shape, fan_in):
        bound = fan_in ** -0.5
        return jax.random.uniform(k, shape, jnp.float32, -bound, bound)

    wc = uinit(keys[0], (C_OUT, 1, KSZ, KSZ), 9)
    bc = uinit(keys[1], (C_OUT,), 9)
    w1 = uinit(keys[2], (HID, K_FC), K_FC)
    b1 = uinit(keys[3], (HID,), K_FC)
    w2 = uinit(keys[4], (N_CLS, HID), HID)
    b2 = uinit(keys[5], (N_CLS,), HID)
    params = (wc, bc, w1, b1, w2, b2)
    prepped = prepare_params(params)            # one-time weight prep

    x = jax.random.normal(keys[6], (B, 1, H, W), jnp.float32)

    out = jax.block_until_ready(cnn_forward(x, prepped))
    ref = jax.block_until_ready(cnn_reference(x, params))

    assert out.shape == (B, N_CLS)
    # fc1 weights/activations run in bf16 -> loosened tolerance vs f32 reference
    assert jnp.allclose(out, ref, rtol=1e-2, atol=1e-2), "mismatch vs reference"
    print("KERNEL_OK")
</pallas_src>

<mosaic_0001>
module attributes {stable_mosaic.version = 11 : i64} {
  func.func @fused_cnn_kernel(%arg0: i32, %arg1: memref<9x2x676xf32, #tpu.memory_space<vmem>>, %arg2: memref<32x9xf32, #tpu.memory_space<smem>>, %arg3: memref<32xf32, #tpu.memory_space<smem>>, %arg4: memref<16x676x128xbf16, #tpu.memory_space<vmem>>, %arg5: memref<1x128xf32, #tpu.memory_space<vmem>>, %arg6: memref<128x10xf32, #tpu.memory_space<vmem>>, %arg7: memref<1x10xf32, #tpu.memory_space<vmem>>, %arg8: memref<2x10xf32, #tpu.memory_space<vmem>>, %arg9: memref<2x128xf32, #tpu.memory_space<vmem>>, %arg10: memref<16x2x676xbf16, #tpu.memory_space<vmem>>) attributes {dimension_semantics = [#tpu.dimension_semantics<arbitrary>], iteration_bounds = array<i64: 2>, scalar_prefetch = 0 : i64, scratch_operands = 2 : i64, tpu.core_type = #tpu.core_type<tc>, window_params = [{pipeline_mode = #tpu.pipeline_mode<synchronous>, transform_indices = @transform_0, window_bounds = array<i64: 9, 2, 676>}, {transform_indices = @transform_1, window_bounds = array<i64: 32, 9>}, {transform_indices = @transform_2, window_bounds = array<i64: 32>}, {transform_indices = @transform_3, window_bounds = array<i64: 16, 676, 128>}, {pipeline_mode = #tpu.pipeline_mode<synchronous>, transform_indices = @transform_4, window_bounds = array<i64: 1, 128>}, {pipeline_mode = #tpu.pipeline_mode<synchronous>, transform_indices = @transform_5, window_bounds = array<i64: 128, 10>}, {pipeline_mode = #tpu.pipeline_mode<synchronous>, transform_indices = @transform_6, window_bounds = array<i64: 1, 10>}, {pipeline_mode = #tpu.pipeline_mode<synchronous>, transform_indices = @transform_7, window_bounds = array<i64: 2, 10>}]} {
    %c0_i32 = arith.constant 0 : i32
    %0 = arith.cmpi eq, %arg0, %c0_i32 : i32
    %1 = arith.extui %0 : i1 to i32
    %c0_i32_0 = arith.constant 0 : i32
    %2 = arith.cmpi ne, %1, %c0_i32_0 : i32
    scf.if %2 {
      %cst_225 = arith.constant 0.000000e+00 : f32
      %1198 = vector.broadcast %cst_225 : f32 to vector<2x128xf32>
      %c0_226 = arith.constant 0 : index
      %c0_227 = arith.constant 0 : index
      %1199 = vector.load %arg9[%c0_226, %c0_227] : memref<2x128xf32, #tpu.memory_space<vmem>>, vector<2x128xf32>
      tpu.vector_store %arg9[%c0_226, %c0_227], %1198 {strides = array<i32>} : memref<2x128xf32, #tpu.memory_space<vmem>>, vector<2x128xf32>,
    } else {
    }
    %c0 = arith.constant 0 : index
    %c0_1 = arith.constant 0 : index
    %c0_2 = arith.constant 0 : index
    %3 = vector.load %arg1[%c0, %c0_1, %c0_2] : memref<9x2x676xf32, #tpu.memory_space<vmem>>, vector<9x2x676xf32>
    %c16_i32 = arith.constant 16 : i32
    %4 = arith.muli %arg0, %c16_i32 : i32
    %c0_i32_3 = arith.constant 0 : i32
    %5 = arith.addi %4, %c0_i32_3 : i32
    %6 = arith.index_cast %5 : i32 to index
    %c0_4 = arith.constant 0 : index
    %7 = memref.load %arg2[%6, %c0_4] : memref<32x9xf32, #tpu.memory_space<smem>>
    %8 = arith.index_cast %5 : i32 to index
    %c1 = arith.constant 1 : index
    %9 = memref.load %arg2[%8, %c1] : memref<32x9xf32, #tpu.memory_space<smem>>
    %10 = arith.index_cast %5 : i32 to index
    %c2 = arith.constant 2 : index
    %11 = memref.load %arg2[%10, %c2] : memref<32x9xf32, #tpu.memory_space<smem>>
    %12 = arith.index_cast %5 : i32 to index
    %c3 = arith.constant 3 : index
    %13 = memref.load %arg2[%12, %c3] : memref<32x9xf32, #tpu.memory_space<smem>>
    %14 = arith.index_cast %5 : i32 to index
    %c4 = arith.constant 4 : index
    %15 = memref.load %arg2[%14, %c4] : memref<32x9xf32, #tpu.memory_space<smem>>
    %16 = arith.index_cast %5 : i32 to index
    %c5 = arith.constant 5 : index
    %17 = memref.load %arg2[%16, %c5] : memref<32x9xf32, #tpu.memory_space<smem>>
    %18 = arith.index_cast %5 : i32 to index
    %c6 = arith.constant 6 : index
    %19 = memref.load %arg2[%18, %c6] : memref<32x9xf32, #tpu.memory_space<smem>>
    %20 = arith.index_cast %5 : i32 to index
    %c7 = arith.constant 7 : index
    %21 = memref.load %arg2[%20, %c7] : memref<32x9xf32, #tpu.memory_space<smem>>
    %22 = arith.index_cast %5 : i32 to index
    %c8 = arith.constant 8 : index
    %23 = memref.load %arg2[%22, %c8] : memref<32x9xf32, #tpu.memory_space<smem>>
    %24 = arith.index_cast %5 : i32 to index
    %25 = memref.load %arg3[%24] : memref<32xf32, #tpu.memory_space<smem>>
    %26 = vector.extract_strided_slice %3 {offsets = [0, 0, 0], sizes = [1, 2, 676], strides = [1, 1, 1]} : vector<9x2x676xf32> to vector<1x2x676xf32>
    %27 = vector.shape_cast %26 : vector<1x2x676xf32> to vector<2x676xf32>
    %28 = vector.broadcast %7 : f32 to vector<2x676xf32>
    %29 = arith.mulf %28, %27 : vector<2x676xf32>
    %30 = vector.extract_strided_slice %3 {offsets = [1, 0, 0], sizes = [1, 2, 676], strides = [1, 1, 1]} : vector<9x2x676xf32> to vector<1x2x676xf32>
    %31 = vector.shape_cast %30 : vector<1x2x676xf32> to vector<2x676xf32>
    %32 = vector.broadcast %9 : f32 to vector<2x676xf32>
    %33 = arith.mulf %32, %31 : vector<2x676xf32>
    %34 = arith.addf %29, %33 : vector<2x676xf32>
    %35 = vector.extract_strided_slice %3 {offsets = [2, 0, 0], sizes = [1, 2, 676], strides = [1, 1, 1]} : vector<9x2x676xf32> to vector<1x2x676xf32>
    %36 = vector.shape_cast %35 : vector<1x2x676xf32> to vector<2x676xf32>
    %37 = vector.broadcast %11 : f32 to vector<2x676xf32>
    %38 = arith.mulf %37, %36 : vector<2x676xf32>
    %39 = arith.addf %34, %38 : vector<2x676xf32>
    %40 = vector.extract_strided_slice %3 {offsets = [3, 0, 0], sizes = [1, 2, 676], strides = [1, 1, 1]} : vector<9x2x676xf32> to vector<1x2x676xf32>
    %41 = vector.shape_cast %40 : vector<1x2x676xf32> to vector<2x676xf32>
    %42 = vector.broadcast %13 : f32 to vector<2x676xf32>
    %43 = arith.mulf %42, %41 : vector<2x676xf32>
    %44 = arith.addf %39, %43 : vector<2x676xf32>
    %45 = vector.extract_strided_slice %3 {offsets = [4, 0, 0], sizes = [1, 2, 676], strides = [1, 1, 1]} : vector<9x2x676xf32> to vector<1x2x676xf32>
    %46 = vector.shape_cast %45 : vector<1x2x676xf32> to vector<2x676xf32>
    %47 = vector.broadcast %15 : f32 to vector<2x676xf32>
    %48 = arith.mulf %47, %46 : vector<2x676xf32>
    %49 = arith.addf %44, %48 : vector<2x676xf32>
    %50 = vector.extract_strided_slice %3 {offsets = [5, 0, 0], sizes = [1, 2, 676], strides = [1, 1, 1]} : vector<9x2x676xf32> to vector<1x2x676xf32>
    %51 = vector.shape_cast %50 : vector<1x2x676xf32> to vector<2x676xf32>
    %52 = vector.broadcast %17 : f32 to vector<2x676xf32>
    %53 = arith.mulf %52, %51 : vector<2x676xf32>
    %54 = arith.addf %49, %53 : vector<2x676xf32>
    %55 = vector.extract_strided_slice %3 {offsets = [6, 0, 0], sizes = [1, 2, 676], strides = [1, 1, 1]} : vector<9x2x676xf32> to vector<1x2x676xf32>
    %56 = vector.shape_cast %55 : vector<1x2x676xf32> to vector<2x676xf32>
    %57 = vector.broadcast %19 : f32 to vector<2x676xf32>
    %58 = arith.mulf %57, %56 : vector<2x676xf32>
    %59 = arith.addf %54, %58 : vector<2x676xf32>
    %60 = vector.extract_strided_slice %3 {offsets = [7, 0, 0], sizes = [1, 2, 676], strides = [1, 1, 1]} : vector<9x2x676xf32> to vector<1x2x676xf32>
    %61 = vector.shape_cast %60 : vector<1x2x676xf32> to vector<2x676xf32>
    %62 = vector.broadcast %21 : f32 to vector<2x676xf32>
    %63 = arith.mulf %62, %61 : vector<2x676xf32>
    %64 = arith.addf %59, %63 : vector<2x676xf32>
    %65 = vector.extract_strided_slice %3 {offsets = [8, 0, 0], sizes = [1, 2, 676], strides = [1, 1, 1]} : vector<9x2x676xf32> to vector<1x2x676xf32>
    %66 = vector.shape_cast %65 : vector<1x2x676xf32> to vector<2x676xf32>
    %67 = vector.broadcast %23 : f32 to vector<2x676xf32>
    %68 = arith.mulf %67, %66 : vector<2x676xf32>
    %69 = arith.addf %64, %68 : vector<2x676xf32>
    %70 = vector.broadcast %25 : f32 to vector<2x676xf32>
    %71 = arith.addf %69, %70 : vector<2x676xf32>
    %cst = arith.constant 0.000000e+00 : f32
    %72 = vector.broadcast %cst : f32 to vector<2x676xf32>
    %73 = arith.maximumf %71, %72 : vector<2x676xf32>
    %74 = arith.truncf %73 : vector<2x676xf32> to vector<2x676xbf16>
    %c0_5 = arith.constant 0 : index
    %c0_6 = arith.constant 0 : index
    %c0_7 = arith.constant 0 : index
    %75 = vector.load %arg10[%c0_5, %c0_6, %c0_7] : memref<16x2x676xbf16, #tpu.memory_space<vmem>>, vector<1x2x676xbf16>
    %76 = vector.shape_cast %75 : vector<1x2x676xbf16> to vector<2x676xbf16>
    %77 = vector.shape_cast %74 : vector<2x676xbf16> to vector<1x2x676xbf16>
    tpu.vector_store %arg10[%c0_5, %c0_6, %c0_7], %77 {strides = array<i32>} : memref<16x2x676xbf16, #tpu.memory_space<vmem>>, vector<1x2x676xbf16>,
    %c16_i32_8 = arith.constant 16 : i32
    %78 = arith.muli %arg0, %c16_i32_8 : i32
    %c1_i32 = arith.constant 1 : i32
    %79 = arith.addi %78, %c1_i32 : i32
    %80 = arith.index_cast %79 : i32 to index
    %c0_9 = arith.constant 0 : index
    %81 = memref.load %arg2[%80, %c0_9] : memref<32x9xf32, #tpu.memory_space<smem>>
    %82 = arith.index_cast %79 : i32 to index
    %c1_10 = arith.constant 1 : index
    %83 = memref.load %arg2[%82, %c1_10] : memref<32x9xf32, #tpu.memory_space<smem>>
    %84 = arith.index_cast %79 : i32 to index
    %c2_11 = arith.constant 2 : index
    %85 = memref.load %arg2[%84, %c2_11] : memref<32x9xf32, #tpu.memory_space<smem>>
    %86 = arith.index_cast %79 : i32 to index
    %c3_12 = arith.constant 3 : index
    %87 = memref.load %arg2[%86, %c3_12] : memref<32x9xf32, #tpu.memory_space<smem>>
    %88 = arith.index_cast %79 : i32 to index
    %c4_13 = arith.constant 4 : index
    %89 = memref.load %arg2[%88, %c4_13] : memref<32x9xf32, #tpu.memory_space<smem>>
    %90 = arith.index_cast %79 : i32 to index
    %c5_14 = arith.constant 5 : index
    %91 = memref.load %arg2[%90, %c5_14] : memref<32x9xf32, #tpu.memory_space<smem>>
    %92 = arith.index_cast %79 : i32 to index
    %c6_15 = arith.constant 6 : index
    %93 = memref.load %arg2[%92, %c6_15] : memref<32x9xf32, #tpu.memory_space<smem>>
    %94 = arith.index_cast %79 : i32 to index
    %c7_16 = arith.constant 7 : index
    %95 = memref.load %arg2[%94, %c7_16] : memref<32x9xf32, #tpu.memory_space<smem>>
    %96 = arith.index_cast %79 : i32 to index
    %c8_17 = arith.constant 8 : index
    %97 = memref.load %arg2[%96, %c8_17] : memref<32x9xf32, #tpu.memory_space<smem>>
    %98 = arith.index_cast %79 : i32 to index
    %99 = memref.load %arg3[%98] : memref<32xf32, #tpu.memory_space<smem>>
    %100 = vector.extract_strided_slice %3 {offsets = [0, 0, 0], sizes = [1, 2, 676], strides = [1, 1, 1]} : vector<9x2x676xf32> to vector<1x2x676xf32>
    %101 = vector.shape_cast %100 : vector<1x2x676xf32> to vector<2x676xf32>
    %102 = vector.broadcast %81 : f32 to vector<2x676xf32>
    %103 = arith.mulf %102, %101 : vector<2x676xf32>
    %104 = vector.extract_strided_slice %3 {offsets = [1, 0, 0], sizes = [1, 2, 676], strides = [1, 1, 1]} : vector<9x2x676xf32> to vector<1x2x676xf32>
    %105 = vector.shape_cast %104 : vector<1x2x676xf32> to vector<2x676xf32>
    %106 = vector.broadcast %83 : f32 to vector<2x676xf32>
    %107 = arith.mulf %106, %105 : vector<2x676xf32>
    %108 = arith.addf %103, %107 : vector<2x676xf32>
    %109 = vector.extract_strided_slice %3 {offsets = [2, 0, 0], sizes = [1, 2, 676], strides = [1, 1, 1]} : vector<9x2x676xf32> to vector<1x2x676xf32>
    %110 = vector.shape_cast %109 : vector<1x2x676xf32> to vector<2x676xf32>
    %111 = vector.broadcast %85 : f32 to vector<2x676xf32>
    %112 = arith.mulf %111, %110 : vector<2x676xf32>
    %113 = arith.addf %108, %112 : vector<2x676xf32>
    %114 = vector.extract_strided_slice %3 {offsets = [3, 0, 0], sizes = [1, 2, 676], strides = [1, 1, 1]} : vector<9x2x676xf32> to vector<1x2x676xf32>
    %115 = vector.shape_cast %114 : vector<1x2x676xf32> to vector<2x676xf32>
    %116 = vector.broadcast %87 : f32 to vector<2x676xf32>
    %117 = arith.mulf %116, %115 : vector<2x676xf32>
    %118 = arith.addf %113, %117 : vector<2x676xf32>
    %119 = vector.extract_strided_slice %3 {offsets = [4, 0, 0], sizes = [1, 2, 676], strides = [1, 1, 1]} : vector<9x2x676xf32> to vector<1x2x676xf32>
    %120 = vector.shape_cast %119 : vector<1x2x676xf32> to vector<2x676xf32>
    %121 = vector.broadcast %89 : f32 to vector<2x676xf32>
    %122 = arith.mulf %121, %120 : vector<2x676xf32>
    %123 = arith.addf %118, %122 : vector<2x676xf32>
    %124 = vector.extract_strided_slice %3 {offsets = [5, 0, 0], sizes = [1, 2, 676], strides = [1, 1, 1]} : vector<9x2x676xf32> to vector<1x2x676xf32>
    %125 = vector.shape_cast %124 : vector<1x2x676xf32> to vector<2x676xf32>
    %126 = vector.broadcast %91 : f32 to vector<2x676xf32>
    %127 = arith.mulf %126, %125 : vector<2x676xf32>
    %128 = arith.addf %123, %127 : vector<2x676xf32>
    %129 = vector.extract_strided_slice %3 {offsets = [6, 0, 0], sizes = [1, 2, 676], strides = [1, 1, 1]} : vector<9x2x676xf32> to vector<1x2x676xf32>
    %130 = vector.shape_cast %129 : vector<1x2x676xf32> to vector<2x676xf32>
    %131 = vector.broadcast %93 : f32 to vector<2x676xf32>
    %132 = arith.mulf %131, %130 : vector<2x676xf32>
    %133 = arith.addf %128, %132 : vector<2x676xf32>
    %134 = vector.extract_strided_slice %3 {offsets = [7, 0, 0], sizes = [1, 2, 676], strides = [1, 1, 1]} : vector<9x2x676xf32> to vector<1x2x676xf32>
    %135 = vector.shape_cast %134 : vector<1x2x676xf32> to vector<2x676xf32>
    %136 = vector.broadcast %95 : f32 to vector<2x676xf32>
    %137 = arith.mulf %136, %135 : vector<2x676xf32>
    %138 = arith.addf %133, %137 : vector<2x676xf32>
    %139 = vector.extract_strided_slice %3 {offsets = [8, 0, 0], sizes = [1, 2, 676], strides = [1, 1, 1]} : vector<9x2x676xf32> to vector<1x2x676xf32>
    %140 = vector.shape_cast %139 : vector<1x2x676xf32> to vector<2x676xf32>
    %141 = vector.broadcast %97 : f32 to vector<2x676xf32>
    %142 = arith.mulf %141, %140 : vector<2x676xf32>
    %143 = arith.addf %138, %142 : vector<2x676xf32>
    %144 = vector.broadcast %99 : f32 to vector<2x676xf32>
    %145 = arith.addf %143, %144 : vector<2x676xf32>
    %cst_18 = arith.constant 0.000000e+00 : f32
    %146 = vector.broadcast %cst_18 : f32 to vector<2x676xf32>
    %147 = arith.maximumf %145, %146 : vector<2x676xf32>
    %148 = arith.truncf %147 : vector<2x676xf32> to vector<2x676xbf16>
    %c1_19 = arith.constant 1 : index
    %c0_20 = arith.constant 0 : index
    %c0_21 = arith.constant 0 : index
    %149 = vector.load %arg10[%c1_19, %c0_20, %c0_21] : memref<16x2x676xbf16, #tpu.memory_space<vmem>>, vector<1x2x676xbf16>
    %150 = vector.shape_cast %149 : vector<1x2x676xbf16> to vector<2x676xbf16>
    %151 = vector.shape_cast %148 : vector<2x676xbf16> to vector<1x2x676xbf16>
    tpu.vector_store %arg10[%c1_19, %c0_20, %c0_21], %151 {strides = array<i32>} : memref<16x2x676xbf16, #tpu.memory_space<vmem>>, vector<1x2x676xbf16>,
    %c16_i32_22 = arith.constant 16 : i32
    %152 = arith.muli %arg0, %c16_i32_22 : i32
    %c2_i32 = arith.constant 2 : i32
    %153 = arith.addi %152, %c2_i32 : i32
    %154 = arith.index_cast %153 : i32 to index
    %c0_23 = arith.constant 0 : index
    %155 = memref.load %arg2[%154, %c0_23] : memref<32x9xf32, #tpu.memory_space<smem>>
    %156 = arith.index_cast %153 : i32 to index
    %c1_24 = arith.constant 1 : index
    %157 = memref.load %arg2[%156, %c1_24] : memref<32x9xf32, #tpu.memory_space<smem>>
    %158 = arith.index_cast %153 : i32 to index
    %c2_25 = arith.constant 2 : index
    %159 = memref.load %arg2[%158, %c2_25] : memref<32x9xf32, #tpu.memory_space<smem>>
    %160 = arith.index_cast %153 : i32 to index
    %c3_26 = arith.constant 3 : index
    %161 = memref.load %arg2[%160, %c3_26] : memref<32x9xf32, #tpu.memory_space<smem>>
    %162 = arith.index_cast %153 : i32 to index
    %c4_27 = arith.constant 4 : index
    %163 = memref.load %arg2[%162, %c4_27] : memref<32x9xf32, #tpu.memory_space<smem>>
    %164 = arith.index_cast %153 : i32 to index
    %c5_28 = arith.constant 5 : index
    %165 = memref.load %arg2[%164, %c5_28] : memref<32x9xf32, #tpu.memory_space<smem>>
    %166 = arith.index_cast %153 : i32 to index
    %c6_29 = arith.constant 6 : index
    %167 = memref.load %arg2[%166, %c6_29] : memref<32x9xf32, #tpu.memory_space<smem>>
    %168 = arith.index_cast %153 : i32 to index
    %c7_30 = arith.constant 7 : index
    %169 = memref.load %arg2[%168, %c7_30] : memref<32x9xf32, #tpu.memory_space<smem>>
    %170 = arith.index_cast %153 : i32 to index
    %c8_31 = arith.constant 8 : index
    %171 = memref.load %arg2[%170, %c8_31] : memref<32x9xf32, #tpu.memory_space<smem>>
    %172 = arith.index_cast %153 : i32 to index
    %173 = memref.load %arg3[%172] : memref<32xf32, #tpu.memory_space<smem>>
    %174 = vector.extract_strided_slice %3 {offsets = [0, 0, 0], sizes = [1, 2, 676], strides = [1, 1, 1]} : vector<9x2x676xf32> to vector<1x2x676xf32>
    %175 = vector.shape_cast %174 : vector<1x2x676xf32> to vector<2x676xf32>
    %176 = vector.broadcast %155 : f32 to vector<2x676xf32>
    %177 = arith.mulf %176, %175 : vector<2x676xf32>
    %178 = vector.extract_strided_slice %3 {offsets = [1, 0, 0], sizes = [1, 2, 676], strides = [1, 1, 1]} : vector<9x2x676xf32> to vector<1x2x676xf32>
    %179 = vector.shape_cast %178 : vector<1x2x676xf32> to vector<2x676xf32>
    %180 = vector.broadcast %157 : f32 to vector<2x676xf32>
    %181 = arith.mulf %180, %179 : vector<2x676xf32>
    %182 = arith.addf %177, %181 : vector<2x676xf32>
    %183 = vector.extract_strided_slice %3 {offsets = [2, 0, 0], sizes = [1, 2, 676], strides = [1, 1, 1]} : vector<9x2x676xf32> to vector<1x2x676xf32>
    %184 = vector.shape_cast %183 : vector<1x2x676xf32> to vector<2x676xf32>
    %185 = vector.broadcast %159 : f32 to vector<2x676xf32>
    %186 = arith.mulf %185, %184 : vector<2x676xf32>
    %187 = arith.addf %182, %186 : vector<2x676xf32>
    %188 = vector.extract_strided_slice %3 {offsets = [3, 0, 0], sizes = [1, 2, 676], strides = [1, 1, 1]} : vector<9x2x676xf32> to vector<1x2x676xf32>
    %189 = vector.shape_cast %188 : vector<1x2x676xf32> to vector<2x676xf32>
    %190 = vector.broadcast %161 : f32 to vector<2x676xf32>
    %191 = arith.mulf %190, %189 : vector<2x676xf32>
    %192 = arith.addf %187, %191 : vector<2x676xf32>
    %193 = vector.extract_strided_slice %3 {offsets = [4, 0, 0], sizes = [1, 2, 676], strides = [1, 1, 1]} : vector<9x2x676xf32> to vector<1x2x676xf32>
    %194 = vector.shape_cast %193 : vector<1x2x676xf32> to vector<2x676xf32>
    %195 = vector.broadcast %163 : f32 to vector<2x676xf32>
    %196 = arith.mulf %195, %194 : vector<2x676xf32>
    %197 = arith.addf %192, %196 : vector<2x676xf32>
    %198 = vector.extract_strided_slice %3 {offsets = [5, 0, 0], sizes = [1, 2, 676], strides = [1, 1, 1]} : vector<9x2x676xf32> to vector<1x2x676xf32>
    %199 = vector.shape_cast %198 : vector<1x2x676xf32> to vector<2x676xf32>
    %200 = vector.broadcast %165 : f32 to vector<2x676xf32>
    %201 = arith.mulf %200, %199 : vector<2x676xf32>
    %202 = arith.addf %197, %201 : vector<2x676xf32>
    %203 = vector.extract_strided_slice %3 {offsets = [6, 0, 0], sizes = [1, 2, 676], strides = [1, 1, 1]} : vector<9x2x676xf32> to vector<1x2x676xf32>
    %204 = vector.shape_cast %203 : vector<1x2x676xf32> to vector<2x676xf32>
    %205 = vector.broadcast %167 : f32 to vector<2x676xf32>
    %206 = arith.mulf %205, %204 : vector<2x676xf32>
    %207 = arith.addf %202, %206 : vector<2x676xf32>
    %208 = vector.extract_strided_slice %3 {offsets = [7, 0, 0], sizes = [1, 2, 676], strides = [1, 1, 1]} : vector<9x2x676xf32> to vector<1x2x676xf32>
    %209 = vector.shape_cast %208 : vector<1x2x676xf32> to vector<2x676xf32>
    %210 = vector.broadcast %169 : f32 to vector<2x676xf32>
    %211 = arith.mulf %210, %209 : vector<2x676xf32>
    %212 = arith.addf %207, %211 : vector<2x676xf32>
    %213 = vector.extract_strided_slice %3 {offsets = [8, 0, 0], sizes = [1, 2, 676], strides = [1, 1, 1]} : vector<9x2x676xf32> to vector<1x2x676xf32>
    %214 = vector.shape_cast %213 : vector<1x2x676xf32> to vector<2x676xf32>
    %215 = vector.broadcast %171 : f32 to vector<2x676xf32>
    %216 = arith.mulf %215, %214 : vector<2x676xf32>
    %217 = arith.addf %212, %216 : vector<2x676xf32>
    %218 = vector.broadcast %173 : f32 to vector<2x676xf32>
    %219 = arith.addf %217, %218 : vector<2x676xf32>
    %cst_32 = arith.constant 0.000000e+00 : f32
    %220 = vector.broadcast %cst_32 : f32 to vector<2x676xf32>
    %221 = arith.maximumf %219, %220 : vector<2x676xf32>
    %222 = arith.truncf %221 : vector<2x676xf32> to vector<2x676xbf16>
    %c2_33 = arith.constant 2 : index
    %c0_34 = arith.constant 0 : index
    %c0_35 = arith.constant 0 : index
    %223 = vector.load %arg10[%c2_33, %c0_34, %c0_35] : memref<16x2x676xbf16, #tpu.memory_space<vmem>>, vector<1x2x676xbf16>
    %224 = vector.shape_cast %223 : vector<1x2x676xbf16> to vector<2x676xbf16>
    %225 = vector.shape_cast %222 : vector<2x676xbf16> to vector<1x2x676xbf16>
    tpu.vector_store %arg10[%c2_33, %c0_34, %c0_35], %225 {strides = array<i32>} : memref<16x2x676xbf16, #tpu.memory_space<vmem>>, vector<1x2x676xbf16>,
    %c16_i32_36 = arith.constant 16 : i32
    %226 = arith.muli %arg0, %c16_i32_36 : i32
    %c3_i32 = arith.constant 3 : i32
    %227 = arith.addi %226, %c3_i32 : i32
    %228 = arith.index_cast %227 : i32 to index
    %c0_37 = arith.constant 0 : index
    %229 = memref.load %arg2[%228, %c0_37] : memref<32x9xf32, #tpu.memory_space<smem>>
    %230 = arith.index_cast %227 : i32 to index
    %c1_38 = arith.constant 1 : index
    %231 = memref.load %arg2[%230, %c1_38] : memref<32x9xf32, #tpu.memory_space<smem>>
    %232 = arith.index_cast %227 : i32 to index
    %c2_39 = arith.constant 2 : index
    %233 = memref.load %arg2[%232, %c2_39] : memref<32x9xf32, #tpu.memory_space<smem>>
    %234 = arith.index_cast %227 : i32 to index
    %c3_40 = arith.constant 3 : index
    %235 = memref.load %arg2[%234, %c3_40] : memref<32x9xf32, #tpu.memory_space<smem>>
    %236 = arith.index_cast %227 : i32 to index
    %c4_41 = arith.constant 4 : index
    %237 = memref.load %arg2[%236, %c4_41] : memref<32x9xf32, #tpu.memory_space<smem>>
    %238 = arith.index_cast %227 : i32 to index
    %c5_42 = arith.constant 5 : index
    %239 = memref.load %arg2[%238, %c5_42] : memref<32x9xf32, #tpu.memory_space<smem>>
    %240 = arith.index_cast %227 : i32 to index
    %c6_43 = arith.constant 6 : index
    %241 = memref.load %arg2[%240, %c6_43] : memref<32x9xf32, #tpu.memory_space<smem>>
    %242 = arith.index_cast %227 : i32 to index
    %c7_44 = arith.constant 7 : index
    %243 = memref.load %arg2[%242, %c7_44] : memref<32x9xf32, #tpu.memory_space<smem>>
    %244 = arith.index_cast %227 : i32 to index
    %c8_45 = arith.constant 8 : index
    %245 = memref.load %arg2[%244, %c8_45] : memref<32x9xf32, #tpu.memory_space<smem>>
    %246 = arith.index_cast %227 : i32 to index
    %247 = memref.load %arg3[%246] : memref<32xf32, #tpu.memory_space<smem>>
    %248 = vector.extract_strided_slice %3 {offsets = [0, 0, 0], sizes = [1, 2, 676], strides = [1, 1, 1]} : vector<9x2x676xf32> to vector<1x2x676xf32>
    %249 = vector.shape_cast %248 : vector<1x2x676xf32> to vector<2x676xf32>
    %250 = vector.broadcast %229 : f32 to vector<2x676xf32>
    %251 = arith.mulf %250, %249 : vector<2x676xf32>
    %252 = vector.extract_strided_slice %3 {offsets = [1, 0, 0], sizes = [1, 2, 676], strides = [1, 1, 1]} : vector<9x2x676xf32> to vector<1x2x676xf32>
    %253 = vector.shape_cast %252 : vector<1x2x676xf32> to vector<2x676xf32>
    %254 = vector.broadcast %231 : f32 to vector<2x676xf32>
    %255 = arith.mulf %254, %253 : vector<2x676xf32>
    %256 = arith.addf %251, %255 : vector<2x676xf32>
    %257 = vector.extract_strided_slice %3 {offsets = [2, 0, 0], sizes = [1, 2, 676], strides = [1, 1, 1]} : vector<9x2x676xf32> to vector<1x2x676xf32>
    %258 = vector.shape_cast %257 : vector<1x2x676xf32> to vector<2x676xf32>
    %259 = vector.broadcast %233 : f32 to vector<2x676xf32>
    %260 = arith.mulf %259, %258 : vector<2x676xf32>
    %261 = arith.addf %256, %260 : vector<2x676xf32>
    %262 = vector.extract_strided_slice %3 {offsets = [3, 0, 0], sizes = [1, 2, 676], strides = [1, 1, 1]} : vector<9x2x676xf32> to vector<1x2x676xf32>
    %263 = vector.shape_cast %262 : vector<1x2x676xf32> to vector<2x676xf32>
    %264 = vector.broadcast %235 : f32 to vector<2x676xf32>
    %265 = arith.mulf %264, %263 : vector<2x676xf32>
    %266 = arith.addf %261, %265 : vector<2x676xf32>
    %267 = vector.extract_strided_slice %3 {offsets = [4, 0, 0], sizes = [1, 2, 676], strides = [1, 1, 1]} : vector<9x2x676xf32> to vector<1x2x676xf32>
    %268 = vector.shape_cast %267 : vector<1x2x676xf32> to vector<2x676xf32>
    %269 = vector.broadcast %237 : f32 to vector<2x676xf32>
    %270 = arith.mulf %269, %268 : vector<2x676xf32>
    %271 = arith.addf %266, %270 : vector<2x676xf32>
    %272 = vector.extract_strided_slice %3 {offsets = [5, 0, 0], sizes = [1, 2, 676], strides = [1, 1, 1]} : vector<9x2x676xf32> to vector<1x2x676xf32>
    %273 = vector.shape_cast %272 : vector<1x2x676xf32> to vector<2x676xf32>
    %274 = vector.broadcast %239 : f32 to vector<2x676xf32>
    %275 = arith.mulf %274, %273 : vector<2x676xf32>
    %276 = arith.addf %271, %275 : vector<2x676xf32>
    %277 = vector.extract_strided_slice %3 {offsets = [6, 0, 0], sizes = [1, 2, 676], strides = [1, 1, 1]} : vector<9x2x676xf32> to vector<1x2x676xf32>
    %278 = vector.shape_cast %277 : vector<1x2x676xf32> to vector<2x676xf32>
    %279 = vector.broadcast %241 : f32 to vector<2x676xf32>
    %280 = arith.mulf %279, %278 : vector<2x676xf32>
    %281 = arith.addf %276, %280 : vector<2x676xf32>
    %282 = vector.extract_strided_slice %3 {offsets = [7, 0, 0], sizes = [1, 2, 676], strides = [1, 1, 1]} : vector<9x2x676xf32> to vector<1x2x676xf32>
    %283 = vector.shape_cast %282 : vector<1x2x676xf32> to vector<2x676xf32>
    %284 = vector.broadcast %243 : f32 to vector<2x676xf32>
    %285 = arith.mulf %284, %283 : vector<2x676xf32>
    %286 = arith.addf %281, %285 : vector<2x676xf32>
    %287 = vector.extract_strided_slice %3 {offsets = [8, 0, 0], sizes = [1, 2, 676], strides = [1, 1, 1]} : vector<9x2x676xf32> to vector<1x2x676xf32>
    %288 = vector.shape_cast %287 : vector<1x2x676xf32> to vector<2x676xf32>
    %289 = vector.broadcast %245 : f32 to vector<2x676xf32>
    %290 = arith.mulf %289, %288 : vector<2x676xf32>
    %291 = arith.addf %286, %290 : vector<2x676xf32>
    %292 = vector.broadcast %247 : f32 to vector<2x676xf32>
    %293 = arith.addf %291, %292 : vector<2x676xf32>
    %cst_46 = arith.constant 0.000000e+00 : f32
    %294 = vector.broadcast %cst_46 : f32 to vector<2x676xf32>
    %295 = arith.maximumf %293, %294 : vector<2x676xf32>
    %296 = arith.truncf %295 : vector<2x676xf32> to vector<2x676xbf16>
    %c3_47 = arith.constant 3 : index
    %c0_48 = arith.constant 0 : index
    %c0_49 = arith.constant 0 : index
    %297 = vector.load %arg10[%c3_47, %c0_48, %c0_49] : memref<16x2x676xbf16, #tpu.memory_space<vmem>>, vector<1x2x676xbf16>
    %298 = vector.shape_cast %297 : vector<1x2x676xbf16> to vector<2x676xbf16>
    %299 = vector.shape_cast %296 : vector<2x676xbf16> to vector<1x2x676xbf16>
    tpu.vector_store %arg10[%c3_47, %c0_48, %c0_49], %299 {strides = array<i32>} : memref<16x2x676xbf16, #tpu.memory_space<vmem>>, vector<1x2x676xbf16>,
    %c16_i32_50 = arith.constant 16 : i32
    %300 = arith.muli %arg0, %c16_i32_50 : i32
    %c4_i32 = arith.constant 4 : i32
    %301 = arith.addi %300, %c4_i32 : i32
    %302 = arith.index_cast %301 : i32 to index
    %c0_51 = arith.constant 0 : index
    %303 = memref.load %arg2[%302, %c0_51] : memref<32x9xf32, #tpu.memory_space<smem>>
    %304 = arith.index_cast %301 : i32 to index
    %c1_52 = arith.constant 1 : index
    %305 = memref.load %arg2[%304, %c1_52] : memref<32x9xf32, #tpu.memory_space<smem>>
    %306 = arith.index_cast %301 : i32 to index
    %c2_53 = arith.constant 2 : index
    %307 = memref.load %arg2[%306, %c2_53] : memref<32x9xf32, #tpu.memory_space<smem>>
    %308 = arith.index_cast %301 : i32 to index
    %c3_54 = arith.constant 3 : index
    %309 = memref.load %arg2[%308, %c3_54] : memref<32x9xf32, #tpu.memory_space<smem>>
    %310 = arith.index_cast %301 : i32 to index
    %c4_55 = arith.constant 4 : index
    %311 = memref.load %arg2[%310, %c4_55] : memref<32x9xf32, #tpu.memory_space<smem>>
    %312 = arith.index_cast %301 : i32 to index
    %c5_56 = arith.constant 5 : index
    %313 = memref.load %arg2[%312, %c5_56] : memref<32x9xf32, #tpu.memory_space<smem>>
    %314 = arith.index_cast %301 : i32 to index
    %c6_57 = arith.constant 6 : index
    %315 = memref.load %arg2[%314, %c6_57] : memref<32x9xf32, #tpu.memory_space<smem>>
    %316 = arith.index_cast %301 : i32 to index
    %c7_58 = arith.constant 7 : index
    %317 = memref.load %arg2[%316, %c7_58] : memref<32x9xf32, #tpu.memory_space<smem>>
    %318 = arith.index_cast %301 : i32 to index
    %c8_59 = arith.constant 8 : index
    %319 = memref.load %arg2[%318, %c8_59] : memref<32x9xf32, #tpu.memory_space<smem>>
    %320 = arith.index_cast %301 : i32 to index
    %321 = memref.load %arg3[%320] : memref<32xf32, #tpu.memory_space<smem>>
    %322 = vector.extract_strided_slice %3 {offsets = [0, 0, 0], sizes = [1, 2, 676], strides = [1, 1, 1]} : vector<9x2x676xf32> to vector<1x2x676xf32>
    %323 = vector.shape_cast %322 : vector<1x2x676xf32> to vector<2x676xf32>
    %324 = vector.broadcast %303 : f32 to vector<2x676xf32>
    %325 = arith.mulf %324, %323 : vector<2x676xf32>
    %326 = vector.extract_strided_slice %3 {offsets = [1, 0, 0], sizes = [1, 2, 676], strides = [1, 1, 1]} : vector<9x2x676xf32> to vector<1x2x676xf32>
    %327 = vector.shape_cast %326 : vector<1x2x676xf32> to vector<2x676xf32>
    %328 = vector.broadcast %305 : f32 to vector<2x676xf32>
    %329 = arith.mulf %328, %327 : vector<2x676xf32>
    %330 = arith.addf %325, %329 : vector<2x676xf32>
    %331 = vector.extract_strided_slice %3 {offsets = [2, 0, 0], sizes = [1, 2, 676], strides = [1, 1, 1]} : vector<9x2x676xf32> to vector<1x2x676xf32>
    %332 = vector.shape_cast %331 : vector<1x2x676xf32> to vector<2x676xf32>
    %333 = vector.broadcast %307 : f32 to vector<2x676xf32>
    %334 = arith.mulf %333, %332 : vector<2x676xf32>
    %335 = arith.addf %330, %334 : vector<2x676xf32>
    %336 = vector.extract_strided_slice %3 {offsets = [3, 0, 0], sizes = [1, 2, 676], strides = [1, 1, 1]} : vector<9x2x676xf32> to vector<1x2x676xf32>
    %337 = vector.shape_cast %336 : vector<1x2x676xf32> to vector<2x676xf32>
    %338 = vector.broadcast %309 : f32 to vector<2x676xf32>
    %339 = arith.mulf %338, %337 : vector<2x676xf32>
    %340 = arith.addf %335, %339 : vector<2x676xf32>
    %341 = vector.extract_strided_slice %3 {offsets = [4, 0, 0], sizes = [1, 2, 676], strides = [1, 1, 1]} : vector<9x2x676xf32> to vector<1x2x676xf32>
    %342 = vector.shape_cast %341 : vector<1x2x676xf32> to vector<2x676xf32>
    %343 = vector.broadcast %311 : f32 to vector<2x676xf32>
    %344 = arith.mulf %343, %342 : vector<2x676xf32>
    %345 = arith.addf %340, %344 : vector<2x676xf32>
    %346 = vector.extract_strided_slice %3 {offsets = [5, 0, 0], sizes = [1, 2, 676], strides = [1, 1, 1]} : vector<9x2x676xf32> to vector<1x2x676xf32>
    %347 = vector.shape_cast %346 : vector<1x2x676xf32> to vector<2x676xf32>
    %348 = vector.broadcast %313 : f32 to vector<2x676xf32>
    %349 = arith.mulf %348, %347 : vector<2x676xf32>
    %350 = arith.addf %345, %349 : vector<2x676xf32>
    %351 = vector.extract_strided_slice %3 {offsets = [6, 0, 0], sizes = [1, 2, 676], strides = [1, 1, 1]} : vector<9x2x676xf32> to vector<1x2x676xf32>
    %352 = vector.shape_cast %351 : vector<1x2x676xf32> to vector<2x676xf32>
    %353 = vector.broadcast %315 : f32 to vector<2x676xf32>
    %354 = arith.mulf %353, %352 : vector<2x676xf32>
    %355 = arith.addf %350, %354 : vector<2x676xf32>
    %356 = vector.extract_strided_slice %3 {offsets = [7, 0, 0], sizes = [1, 2, 676], strides = [1, 1, 1]} : vector<9x2x676xf32> to vector<1x2x676xf32>
    %357 = vector.shape_cast %356 : vector<1x2x676xf32> to vector<2x676xf32>
    %358 = vector.broadcast %317 : f32 to vector<2x676xf32>
    %359 = arith.mulf %358, %357 : vector<2x676xf32>
    %360 = arith.addf %355, %359 : vector<2x676xf32>
    %361 = vector.extract_strided_slice %3 {offsets = [8, 0, 0], sizes = [1, 2, 676], strides = [1, 1, 1]} : vector<9x2x676xf32> to vector<1x2x676xf32>
    %362 = vector.shape_cast %361 : vector<1x2x676xf32> to vector<2x676xf32>
    %363 = vector.broadcast %319 : f32 to vector<2x676xf32>
    %364 = arith.mulf %363, %362 : vector<2x676xf32>
    %365 = arith.addf %360, %364 : vector<2x676xf32>
    %366 = vector.broadcast %321 : f32 to vector<2x676xf32>
    %367 = arith.addf %365, %366 : vector<2x676xf32>
    %cst_60 = arith.constant 0.000000e+00 : f32
    %368 = vector.broadcast %cst_60 : f32 to vector<2x676xf32>
    %369 = arith.maximumf %367, %368 : vector<2x676xf32>
    %370 = arith.truncf %369 : vector<2x676xf32> to vector<2x676xbf16>
    %c4_61 = arith.constant 4 : index
    %c0_62 = arith.constant 0 : index
    %c0_63 = arith.constant 0 : index
    %371 = vector.load %arg10[%c4_61, %c0_62, %c0_63] : memref<16x2x676xbf16, #tpu.memory_space<vmem>>, vector<1x2x676xbf16>
    %372 = vector.shape_cast %371 : vector<1x2x676xbf16> to vector<2x676xbf16>
    %373 = vector.shape_cast %370 : vector<2x676xbf16> to vector<1x2x676xbf16>
    tpu.vector_store %arg10[%c4_61, %c0_62, %c0_63], %373 {strides = array<i32>} : memref<16x2x676xbf16, #tpu.memory_space<vmem>>, vector<1x2x676xbf16>,
    %c16_i32_64 = arith.constant 16 : i32
    %374 = arith.muli %arg0, %c16_i32_64 : i32
    %c5_i32 = arith.constant 5 : i32
    %375 = arith.addi %374, %c5_i32 : i32
    %376 = arith.index_cast %375 : i32 to index
    %c0_65 = arith.constant 0 : index
    %377 = memref.load %arg2[%376, %c0_65] : memref<32x9xf32, #tpu.memory_space<smem>>
    %378 = arith.index_cast %375 : i32 to index
    %c1_66 = arith.constant 1 : index
    %379 = memref.load %arg2[%378, %c1_66] : memref<32x9xf32, #tpu.memory_space<smem>>
    %380 = arith.index_cast %375 : i32 to index
    %c2_67 = arith.constant 2 : index
    %381 = memref.load %arg2[%380, %c2_67] : memref<32x9xf32, #tpu.memory_space<smem>>
    %382 = arith.index_cast %375 : i32 to index
    %c3_68 = arith.constant 3 : index
    %383 = memref.load %arg2[%382, %c3_68] : memref<32x9xf32, #tpu.memory_space<smem>>
    %384 = arith.index_cast %375 : i32 to index
    %c4_69 = arith.constant 4 : index
    %385 = memref.load %arg2[%384, %c4_69] : memref<32x9xf32, #tpu.memory_space<smem>>
    %386 = arith.index_cast %375 : i32 to index
    %c5_70 = arith.constant 5 : index
    %387 = memref.load %arg2[%386, %c5_70] : memref<32x9xf32, #tpu.memory_space<smem>>
    %388 = arith.index_cast %375 : i32 to index
    %c6_71 = arith.constant 6 : index
    %389 = memref.load %arg2[%388, %c6_71] : memref<32x9xf32, #tpu.memory_space<smem>>
    %390 = arith.index_cast %375 : i32 to index
    %c7_72 = arith.constant 7 : index
    %391 = memref.load %arg2[%390, %c7_72] : memref<32x9xf32, #tpu.memory_space<smem>>
    %392 = arith.index_cast %375 : i32 to index
    %c8_73 = arith.constant 8 : index
    %393 = memref.load %arg2[%392, %c8_73] : memref<32x9xf32, #tpu.memory_space<smem>>
    %394 = arith.index_cast %375 : i32 to index
    %395 = memref.load %arg3[%394] : memref<32xf32, #tpu.memory_space<smem>>
    %396 = vector.extract_strided_slice %3 {offsets = [0, 0, 0], sizes = [1, 2, 676], strides = [1, 1, 1]} : vector<9x2x676xf32> to vector<1x2x676xf32>
    %397 = vector.shape_cast %396 : vector<1x2x676xf32> to vector<2x676xf32>
    %398 = vector.broadcast %377 : f32 to vector<2x676xf32>
    %399 = arith.mulf %398, %397 : vector<2x676xf32>
    %400 = vector.extract_strided_slice %3 {offsets = [1, 0, 0], sizes = [1, 2, 676], strides = [1, 1, 1]} : vector<9x2x676xf32> to vector<1x2x676xf32>
    %401 = vector.shape_cast %400 : vector<1x2x676xf32> to vector<2x676xf32>
    %402 = vector.broadcast %379 : f32 to vector<2x676xf32>
    %403 = arith.mulf %402, %401 : vector<2x676xf32>
    %404 = arith.addf %399, %403 : vector<2x676xf32>
    %405 = vector.extract_strided_slice %3 {offsets = [2, 0, 0], sizes = [1, 2, 676], strides = [1, 1, 1]} : vector<9x2x676xf32> to vector<1x2x676xf32>
    %406 = vector.shape_cast %405 : vector<1x2x676xf32> to vector<2x676xf32>
    %407 = vector.broadcast %381 : f32 to vector<2x676xf32>
    %408 = arith.mulf %407, %406 : vector<2x676xf32>
    %409 = arith.addf %404, %408 : vector<2x676xf32>
    %410 = vector.extract_strided_slice %3 {offsets = [3, 0, 0], sizes = [1, 2, 676], strides = [1, 1, 1]} : vector<9x2x676xf32> to vector<1x2x676xf32>
    %411 = vector.shape_cast %410 : vector<1x2x676xf32> to vector<2x676xf32>
    %412 = vector.broadcast %383 : f32 to vector<2x676xf32>
    %413 = arith.mulf %412, %411 : vector<2x676xf32>
    %414 = arith.addf %409, %413 : vector<2x676xf32>
    %415 = vector.extract_strided_slice %3 {offsets = [4, 0, 0], sizes = [1, 2, 676], strides = [1, 1, 1]} : vector<9x2x676xf32> to vector<1x2x676xf32>
    %416 = vector.shape_cast %415 : vector<1x2x676xf32> to vector<2x676xf32>
    %417 = vector.broadcast %385 : f32 to vector<2x676xf32>
    %418 = arith.mulf %417, %416 : vector<2x676xf32>
    %419 = arith.addf %414, %418 : vector<2x676xf32>
    %420 = vector.extract_strided_slice %3 {offsets = [5, 0, 0], sizes = [1, 2, 676], strides = [1, 1, 1]} : vector<9x2x676xf32> to vector<1x2x676xf32>
    %421 = vector.shape_cast %420 : vector<1x2x676xf32> to vector<2x676xf32>
    %422 = vector.broadcast %387 : f32 to vector<2x676xf32>
    %423 = arith.mulf %422, %421 : vector<2x676xf32>
    %424 = arith.addf %419, %423 : vector<2x676xf32>
    %425 = vector.extract_strided_slice %3 {offsets = [6, 0, 0], sizes = [1, 2, 676], strides = [1, 1, 1]} : vector<9x2x676xf32> to vector<1x2x676xf32>
    %426 = vector.shape_cast %425 : vector<1x2x676xf32> to vector<2x676xf32>
    %427 = vector.broadcast %389 : f32 to vector<2x676xf32>
    %428 = arith.mulf %427, %426 : vector<2x676xf32>
    %429 = arith.addf %424, %428 : vector<2x676xf32>
    %430 = vector.extract_strided_slice %3 {offsets = [7, 0, 0], sizes = [1, 2, 676], strides = [1, 1, 1]} : vector<9x2x676xf32> to vector<1x2x676xf32>
    %431 = vector.shape_cast %430 : vector<1x2x676xf32> to vector<2x676xf32>
    %432 = vector.broadcast %391 : f32 to vector<2x676xf32>
    %433 = arith.mulf %432, %431 : vector<2x676xf32>
    %434 = arith.addf %429, %433 : vector<2x676xf32>
    %435 = vector.extract_strided_slice %3 {offsets = [8, 0, 0], sizes = [1, 2, 676], strides = [1, 1, 1]} : vector<9x2x676xf32> to vector<1x2x676xf32>
    %436 = vector.shape_cast %435 : vector<1x2x676xf32> to vector<2x676xf32>
    %437 = vector.broadcast %393 : f32 to vector<2x676xf32>
    %438 = arith.mulf %437, %436 : vector<2x676xf32>
    %439 = arith.addf %434, %438 : vector<2x676xf32>
    %440 = vector.broadcast %395 : f32 to vector<2x676xf32>
    %441 = arith.addf %439, %440 : vector<2x676xf32>
    %cst_74 = arith.constant 0.000000e+00 : f32
    %442 = vector.broadcast %cst_74 : f32 to vector<2x676xf32>
    %443 = arith.maximumf %441, %442 : vector<2x676xf32>
    %444 = arith.truncf %443 : vector<2x676xf32> to vector<2x676xbf16>
    %c5_75 = arith.constant 5 : index
    %c0_76 = arith.constant 0 : index
    %c0_77 = arith.constant 0 : index
    %445 = vector.load %arg10[%c5_75, %c0_76, %c0_77] : memref<16x2x676xbf16, #tpu.memory_space<vmem>>, vector<1x2x676xbf16>
    %446 = vector.shape_cast %445 : vector<1x2x676xbf16> to vector<2x676xbf16>
    %447 = vector.shape_cast %444 : vector<2x676xbf16> to vector<1x2x676xbf16>
    tpu.vector_store %arg10[%c5_75, %c0_76, %c0_77], %447 {strides = array<i32>} : memref<16x2x676xbf16, #tpu.memory_space<vmem>>, vector<1x2x676xbf16>,
    %c16_i32_78 = arith.constant 16 : i32
    %448 = arith.muli %arg0, %c16_i32_78 : i32
    %c6_i32 = arith.constant 6 : i32
    %449 = arith.addi %448, %c6_i32 : i32
    %450 = arith.index_cast %449 : i32 to index
    %c0_79 = arith.constant 0 : index
    %451 = memref.load %arg2[%450, %c0_79] : memref<32x9xf32, #tpu.memory_space<smem>>
    %452 = arith.index_cast %449 : i32 to index
    %c1_80 = arith.constant 1 : index
    %453 = memref.load %arg2[%452, %c1_80] : memref<32x9xf32, #tpu.memory_space<smem>>
    %454 = arith.index_cast %449 : i32 to index
    %c2_81 = arith.constant 2 : index
    %455 = memref.load %arg2[%454, %c2_81] : memref<32x9xf32, #tpu.memory_space<smem>>
    %456 = arith.index_cast %449 : i32 to index
    %c3_82 = arith.constant 3 : index
    %457 = memref.load %arg2[%456, %c3_82] : memref<32x9xf32, #tpu.memory_space<smem>>
    %458 = arith.index_cast %449 : i32 to index
    %c4_83 = arith.constant 4 : index
    %459 = memref.load %arg2[%458, %c4_83] : memref<32x9xf32, #tpu.memory_space<smem>>
    %460 = arith.index_cast %449 : i32 to index
    %c5_84 = arith.constant 5 : index
    %461 = memref.load %arg2[%460, %c5_84] : memref<32x9xf32, #tpu.memory_space<smem>>
    %462 = arith.index_cast %449 : i32 to index
    %c6_85 = arith.constant 6 : index
    %463 = memref.load %arg2[%462, %c6_85] : memref<32x9xf32, #tpu.memory_space<smem>>
    %464 = arith.index_cast %449 : i32 to index
    %c7_86 = arith.constant 7 : index
    %465 = memref.load %arg2[%464, %c7_86] : memref<32x9xf32, #tpu.memory_space<smem>>
    %466 = arith.index_cast %449 : i32 to index
    %c8_87 = arith.constant 8 : index
    %467 = memref.load %arg2[%466, %c8_87] : memref<32x9xf32, #tpu.memory_space<smem>>
    %468 = arith.index_cast %449 : i32 to index
    %469 = memref.load %arg3[%468] : memref<32xf32, #tpu.memory_space<smem>>
    %470 = vector.extract_strided_slice %3 {offsets = [0, 0, 0], sizes = [1, 2, 676], strides = [1, 1, 1]} : vector<9x2x676xf32> to vector<1x2x676xf32>
    %471 = vector.shape_cast %470 : vector<1x2x676xf32> to vector<2x676xf32>
    %472 = vector.broadcast %451 : f32 to vector<2x676xf32>
    %473 = arith.mulf %472, %471 : vector<2x676xf32>
    %474 = vector.extract_strided_slice %3 {offsets = [1, 0, 0], sizes = [1, 2, 676], strides = [1, 1, 1]} : vector<9x2x676xf32> to vector<1x2x676xf32>
    %475 = vector.shape_cast %474 : vector<1x2x676xf32> to vector<2x676xf32>
    %476 = vector.broadcast %453 : f32 to vector<2x676xf32>
    %477 = arith.mulf %476, %475 : vector<2x676xf32>
    %478 = arith.addf %473, %477 : vector<2x676xf32>
    %479 = vector.extract_strided_slice %3 {offsets = [2, 0, 0], sizes = [1, 2, 676], strides = [1, 1, 1]} : vector<9x2x676xf32> to vector<1x2x676xf32>
    %480 = vector.shape_cast %479 : vector<1x2x676xf32> to vector<2x676xf32>
    %481 = vector.broadcast %455 : f32 to vector<2x676xf32>
    %482 = arith.mulf %481, %480 : vector<2x676xf32>
    %483 = arith.addf %478, %482 : vector<2x676xf32>
    %484 = vector.extract_strided_slice %3 {offsets = [3, 0, 0], sizes = [1, 2, 676], strides = [1, 1, 1]} : vector<9x2x676xf32> to vector<1x2x676xf32>
    %485 = vector.shape_cast %484 : vector<1x2x676xf32> to vector<2x676xf32>
    %486 = vector.broadcast %457 : f32 to vector<2x676xf32>
    %487 = arith.mulf %486, %485 : vector<2x676xf32>
    %488 = arith.addf %483, %487 : vector<2x676xf32>
    %489 = vector.extract_strided_slice %3 {offsets = [4, 0, 0], sizes = [1, 2, 676], strides = [1, 1, 1]} : vector<9x2x676xf32> to vector<1x2x676xf32>
    %490 = vector.shape_cast %489 : vector<1x2x676xf32> to vector<2x676xf32>
    %491 = vector.broadcast %459 : f32 to vector<2x676xf32>
    %492 = arith.mulf %491, %490 : vector<2x676xf32>
    %493 = arith.addf %488, %492 : vector<2x676xf32>
    %494 = vector.extract_strided_slice %3 {offsets = [5, 0, 0], sizes = [1, 2, 676], strides = [1, 1, 1]} : vector<9x2x676xf32> to vector<1x2x676xf32>
    %495 = vector.shape_cast %494 : vector<1x2x676xf32> to vector<2x676xf32>
    %496 = vector.broadcast %461 : f32 to vector<2x676xf32>
    %497 = arith.mulf %496, %495 : vector<2x676xf32>
    %498 = arith.addf %493, %497 : vector<2x676xf32>
    %499 = vector.extract_strided_slice %3 {offsets = [6, 0, 0], sizes = [1, 2, 676], strides = [1, 1, 1]} : vector<9x2x676xf32> to vector<1x2x676xf32>
    %500 = vector.shape_cast %499 : vector<1x2x676xf32> to vector<2x676xf32>
    %501 = vector.broadcast %463 : f32 to vector<2x676xf32>
    %502 = arith.mulf %501, %500 : vector<2x676xf32>
    %503 = arith.addf %498, %502 : vector<2x676xf32>
    %504 = vector.extract_strided_slice %3 {offsets = [7, 0, 0], sizes = [1, 2, 676], strides = [1, 1, 1]} : vector<9x2x676xf32> to vector<1x2x676xf32>
    %505 = vector.shape_cast %504 : vector<1x2x676xf32> to vector<2x676xf32>
    %506 = vector.broadcast %465 : f32 to vector<2x676xf32>
    %507 = arith.mulf %506, %505 : vector<2x676xf32>
    %508 = arith.addf %503, %507 : vector<2x676xf32>
    %509 = vector.extract_strided_slice %3 {offsets = [8, 0, 0], sizes = [1, 2, 676], strides = [1, 1, 1]} : vector<9x2x676xf32> to vector<1x2x676xf32>
    %510 = vector.shape_cast %509 : vector<1x2x676xf32> to vector<2x676xf32>
    %511 = vector.broadcast %467 : f32 to vector<2x676xf32>
    %512 = arith.mulf %511, %510 : vector<2x676xf32>
    %513 = arith.addf %508, %512 : vector<2x676xf32>
    %514 = vector.broadcast %469 : f32 to vector<2x676xf32>
    %515 = arith.addf %513, %514 : vector<2x676xf32>
    %cst_88 = arith.constant 0.000000e+00 : f32
    %516 = vector.broadcast %cst_88 : f32 to vector<2x676xf32>
    %517 = arith.maximumf %515, %516 : vector<2x676xf32>
    %518 = arith.truncf %517 : vector<2x676xf32> to vector<2x676xbf16>
    %c6_89 = arith.constant 6 : index
    %c0_90 = arith.constant 0 : index
    %c0_91 = arith.constant 0 : index
    %519 = vector.load %arg10[%c6_89, %c0_90, %c0_91] : memref<16x2x676xbf16, #tpu.memory_space<vmem>>, vector<1x2x676xbf16>
    %520 = vector.shape_cast %519 : vector<1x2x676xbf16> to vector<2x676xbf16>
    %521 = vector.shape_cast %518 : vector<2x676xbf16> to vector<1x2x676xbf16>
    tpu.vector_store %arg10[%c6_89, %c0_90, %c0_91], %521 {strides = array<i32>} : memref<16x2x676xbf16, #tpu.memory_space<vmem>>, vector<1x2x676xbf16>,
    %c16_i32_92 = arith.constant 16 : i32
    %522 = arith.muli %arg0, %c16_i32_92 : i32
    %c7_i32 = arith.constant 7 : i32
    %523 = arith.addi %522, %c7_i32 : i32
    %524 = arith.index_cast %523 : i32 to index
    %c0_93 = arith.constant 0 : index
    %525 = memref.load %arg2[%524, %c0_93] : memref<32x9xf32, #tpu.memory_space<smem>>
    %526 = arith.index_cast %523 : i32 to index
    %c1_94 = arith.constant 1 : index
    %527 = memref.load %arg2[%526, %c1_94] : memref<32x9xf32, #tpu.memory_space<smem>>
    %528 = arith.index_cast %523 : i32 to index
    %c2_95 = arith.constant 2 : index
    %529 = memref.load %arg2[%528, %c2_95] : memref<32x9xf32, #tpu.memory_space<smem>>
    %530 = arith.index_cast %523 : i32 to index
    %c3_96 = arith.constant 3 : index
    %531 = memref.load %arg2[%530, %c3_96] : memref<32x9xf32, #tpu.memory_space<smem>>
    %532 = arith.index_cast %523 : i32 to index
    %c4_97 = arith.constant 4 : index
    %533 = memref.load %arg2[%532, %c4_97] : memref<32x9xf32, #tpu.memory_space<smem>>
    %534 = arith.index_cast %523 : i32 to index
    %c5_98 = arith.constant 5 : index
    %535 = memref.load %arg2[%534, %c5_98] : memref<32x9xf32, #tpu.memory_space<smem>>
    %536 = arith.index_cast %523 : i32 to index
    %c6_99 = arith.constant 6 : index
    %537 = memref.load %arg2[%536, %c6_99] : memref<32x9xf32, #tpu.memory_space<smem>>
    %538 = arith.index_cast %523 : i32 to index
    %c7_100 = arith.constant 7 : index
    %539 = memref.load %arg2[%538, %c7_100] : memref<32x9xf32, #tpu.memory_space<smem>>
    %540 = arith.index_cast %523 : i32 to index
    %c8_101 = arith.constant 8 : index
    %541 = memref.load %arg2[%540, %c8_101] : memref<32x9xf32, #tpu.memory_space<smem>>
    %542 = arith.index_cast %523 : i32 to index
    %543 = memref.load %arg3[%542] : memref<32xf32, #tpu.memory_space<smem>>
    %544 = vector.extract_strided_slice %3 {offsets = [0, 0, 0], sizes = [1, 2, 676], strides = [1, 1, 1]} : vector<9x2x676xf32> to vector<1x2x676xf32>
    %545 = vector.shape_cast %544 : vector<1x2x676xf32> to vector<2x676xf32>
    %546 = vector.broadcast %525 : f32 to vector<2x676xf32>
    %547 = arith.mulf %546, %545 : vector<2x676xf32>
    %548 = vector.extract_strided_slice %3 {offsets = [1, 0, 0], sizes = [1, 2, 676], strides = [1, 1, 1]} : vector<9x2x676xf32> to vector<1x2x676xf32>
    %549 = vector.shape_cast %548 : vector<1x2x676xf32> to vector<2x676xf32>
    %550 = vector.broadcast %527 : f32 to vector<2x676xf32>
    %551 = arith.mulf %550, %549 : vector<2x676xf32>
    %552 = arith.addf %547, %551 : vector<2x676xf32>
    %553 = vector.extract_strided_slice %3 {offsets = [2, 0, 0], sizes = [1, 2, 676], strides = [1, 1, 1]} : vector<9x2x676xf32> to vector<1x2x676xf32>
    %554 = vector.shape_cast %553 : vector<1x2x676xf32> to vector<2x676xf32>
    %555 = vector.broadcast %529 : f32 to vector<2x676xf32>
    %556 = arith.mulf %555, %554 : vector<2x676xf32>
    %557 = arith.addf %552, %556 : vector<2x676xf32>
    %558 = vector.extract_strided_slice %3 {offsets = [3, 0, 0], sizes = [1, 2, 676], strides = [1, 1, 1]} : vector<9x2x676xf32> to vector<1x2x676xf32>
    %559 = vector.shape_cast %558 : vector<1x2x676xf32> to vector<2x676xf32>
    %560 = vector.broadcast %531 : f32 to vector<2x676xf32>
    %561 = arith.mulf %560, %559 : vector<2x676xf32>
    %562 = arith.addf %557, %561 : vector<2x676xf32>
    %563 = vector.extract_strided_slice %3 {offsets = [4, 0, 0], sizes = [1, 2, 676], strides = [1, 1, 1]} : vector<9x2x676xf32> to vector<1x2x676xf32>
    %564 = vector.shape_cast %563 : vector<1x2x676xf32> to vector<2x676xf32>
    %565 = vector.broadcast %533 : f32 to vector<2x676xf32>
    %566 = arith.mulf %565, %564 : vector<2x676xf32>
    %567 = arith.addf %562, %566 : vector<2x676xf32>
    %568 = vector.extract_strided_slice %3 {offsets = [5, 0, 0], sizes = [1, 2, 676], strides = [1, 1, 1]} : vector<9x2x676xf32> to vector<1x2x676xf32>
    %569 = vector.shape_cast %568 : vector<1x2x676xf32> to vector<2x676xf32>
    %570 = vector.broadcast %535 : f32 to vector<2x676xf32>
    %571 = arith.mulf %570, %569 : vector<2x676xf32>
    %572 = arith.addf %567, %571 : vector<2x676xf32>
    %573 = vector.extract_strided_slice %3 {offsets = [6, 0, 0], sizes = [1, 2, 676], strides = [1, 1, 1]} : vector<9x2x676xf32> to vector<1x2x676xf32>
    %574 = vector.shape_cast %573 : vector<1x2x676xf32> to vector<2x676xf32>
    %575 = vector.broadcast %537 : f32 to vector<2x676xf32>
    %576 = arith.mulf %575, %574 : vector<2x676xf32>
    %577 = arith.addf %572, %576 : vector<2x676xf32>
    %578 = vector.extract_strided_slice %3 {offsets = [7, 0, 0], sizes = [1, 2, 676], strides = [1, 1, 1]} : vector<9x2x676xf32> to vector<1x2x676xf32>
    %579 = vector.shape_cast %578 : vector<1x2x676xf32> to vector<2x676xf32>
    %580 = vector.broadcast %539 : f32 to vector<2x676xf32>
    %581 = arith.mulf %580, %579 : vector<2x676xf32>
    %582 = arith.addf %577, %581 : vector<2x676xf32>
    %583 = vector.extract_strided_slice %3 {offsets = [8, 0, 0], sizes = [1, 2, 676], strides = [1, 1, 1]} : vector<9x2x676xf32> to vector<1x2x676xf32>
    %584 = vector.shape_cast %583 : vector<1x2x676xf32> to vector<2x676xf32>
    %585 = vector.broadcast %541 : f32 to vector<2x676xf32>
    %586 = arith.mulf %585, %584 : vector<2x676xf32>
    %587 = arith.addf %582, %586 : vector<2x676xf32>
    %588 = vector.broadcast %543 : f32 to vector<2x676xf32>
    %589 = arith.addf %587, %588 : vector<2x676xf32>
    %cst_102 = arith.constant 0.000000e+00 : f32
    %590 = vector.broadcast %cst_102 : f32 to vector<2x676xf32>
    %591 = arith.maximumf %589, %590 : vector<2x676xf32>
    %592 = arith.truncf %591 : vector<2x676xf32> to vector<2x676xbf16>
    %c7_103 = arith.constant 7 : index
    %c0_104 = arith.constant 0 : index
    %c0_105 = arith.constant 0 : index
    %593 = vector.load %arg10[%c7_103, %c0_104, %c0_105] : memref<16x2x676xbf16, #tpu.memory_space<vmem>>, vector<1x2x676xbf16>
    %594 = vector.shape_cast %593 : vector<1x2x676xbf16> to vector<2x676xbf16>
    %595 = vector.shape_cast %592 : vector<2x676xbf16> to vector<1x2x676xbf16>
    tpu.vector_store %arg10[%c7_103, %c0_104, %c0_105], %595 {strides = array<i32>} : memref<16x2x676xbf16, #tpu.memory_space<vmem>>, vector<1x2x676xbf16>,
    %c16_i32_106 = arith.constant 16 : i32
    %596 = arith.muli %arg0, %c16_i32_106 : i32
    %c8_i32 = arith.constant 8 : i32
    %597 = arith.addi %596, %c8_i32 : i32
    %598 = arith.index_cast %597 : i32 to index
    %c0_107 = arith.constant 0 : index
    %599 = memref.load %arg2[%598, %c0_107] : memref<32x9xf32, #tpu.memory_space<smem>>
    %600 = arith.index_cast %597 : i32 to index
    %c1_108 = arith.constant 1 : index
    %601 = memref.load %arg2[%600, %c1_108] : memref<32x9xf32, #tpu.memory_space<smem>>
    %602 = arith.index_cast %597 : i32 to index
    %c2_109 = arith.constant 2 : index
    %603 = memref.load %arg2[%602, %c2_109] : memref<32x9xf32, #tpu.memory_space<smem>>
    %604 = arith.index_cast %597 : i32 to index
    %c3_110 = arith.constant 3 : index
    %605 = memref.load %arg2[%604, %c3_110] : memref<32x9xf32, #tpu.memory_space<smem>>
    %606 = arith.index_cast %597 : i32 to index
    %c4_111 = arith.constant 4 : index
    %607 = memref.load %arg2[%606, %c4_111] : memref<32x9xf32, #tpu.memory_space<smem>>
    %608 = arith.index_cast %597 : i32 to index
    %c5_112 = arith.constant 5 : index
    %609 = memref.load %arg2[%608, %c5_112] : memref<32x9xf32, #tpu.memory_space<smem>>
    %610 = arith.index_cast %597 : i32 to index
    %c6_113 = arith.constant 6 : index
    %611 = memref.load %arg2[%610, %c6_113] : memref<32x9xf32, #tpu.memory_space<smem>>
    %612 = arith.index_cast %597 : i32 to index
    %c7_114 = arith.constant 7 : index
    %613 = memref.load %arg2[%612, %c7_114] : memref<32x9xf32, #tpu.memory_space<smem>>
    %614 = arith.index_cast %597 : i32 to index
    %c8_115 = arith.constant 8 : index
    %615 = memref.load %arg2[%614, %c8_115] : memref<32x9xf32, #tpu.memory_space<smem>>
    %616 = arith.index_cast %597 : i32 to index
    %617 = memref.load %arg3[%616] : memref<32xf32, #tpu.memory_space<smem>>
    %618 = vector.extract_strided_slice %3 {offsets = [0, 0, 0], sizes = [1, 2, 676], strides = [1, 1, 1]} : vector<9x2x676xf32> to vector<1x2x676xf32>
    %619 = vector.shape_cast %618 : vector<1x2x676xf32> to vector<2x676xf32>
    %620 = vector.broadcast %599 : f32 to vector<2x676xf32>
    %621 = arith.mulf %620, %619 : vector<2x676xf32>
    %622 = vector.extract_strided_slice %3 {offsets = [1, 0, 0], sizes = [1, 2, 676], strides = [1, 1, 1]} : vector<9x2x676xf32> to vector<1x2x676xf32>
    %623 = vector.shape_cast %622 : vector<1x2x676xf32> to vector<2x676xf32>
    %624 = vector.broadcast %601 : f32 to vector<2x676xf32>
    %625 = arith.mulf %624, %623 : vector<2x676xf32>
    %626 = arith.addf %621, %625 : vector<2x676xf32>
    %627 = vector.extract_strided_slice %3 {offsets = [2, 0, 0], sizes = [1, 2, 676], strides = [1, 1, 1]} : vector<9x2x676xf32> to vector<1x2x676xf32>
    %628 = vector.shape_cast %627 : vector<1x2x676xf32> to vector<2x676xf32>
    %629 = vector.broadcast %603 : f32 to vector<2x676xf32>
    %630 = arith.mulf %629, %628 : vector<2x676xf32>
    %631 = arith.addf %626, %630 : vector<2x676xf32>
    %632 = vector.extract_strided_slice %3 {offsets = [3, 0, 0], sizes = [1, 2, 676], strides = [1, 1, 1]} : vector<9x2x676xf32> to vector<1x2x676xf32>
    %633 = vector.shape_cast %632 : vector<1x2x676xf32> to vector<2x676xf32>
    %634 = vector.broadcast %605 : f32 to vector<2x676xf32>
    %635 = arith.mulf %634, %633 : vector<2x676xf32>
    %636 = arith.addf %631, %635 : vector<2x676xf32>
    %637 = vector.extract_strided_slice %3 {offsets = [4, 0, 0], sizes = [1, 2, 676], strides = [1, 1, 1]} : vector<9x2x676xf32> to vector<1x2x676xf32>
    %638 = vector.shape_cast %637 : vector<1x2x676xf32> to vector<2x676xf32>
    %639 = vector.broadcast %607 : f32 to vector<2x676xf32>
    %640 = arith.mulf %639, %638 : vector<2x676xf32>
    %641 = arith.addf %636, %640 : vector<2x676xf32>
    %642 = vector.extract_strided_slice %3 {offsets = [5, 0, 0], sizes = [1, 2, 676], strides = [1, 1, 1]} : vector<9x2x676xf32> to vector<1x2x676xf32>
    %643 = vector.shape_cast %642 : vector<1x2x676xf32> to vector<2x676xf32>
    %644 = vector.broadcast %609 : f32 to vector<2x676xf32>
    %645 = arith.mulf %644, %643 : vector<2x676xf32>
    %646 = arith.addf %641, %645 : vector<2x676xf32>
    %647 = vector.extract_strided_slice %3 {offsets = [6, 0, 0], sizes = [1, 2, 676], strides = [1, 1, 1]} : vector<9x2x676xf32> to vector<1x2x676xf32>
    %648 = vector.shape_cast %647 : vector<1x2x676xf32> to vector<2x676xf32>
    %649 = vector.broadcast %611 : f32 to vector<2x676xf32>
    %650 = arith.mulf %649, %648 : vector<2x676xf32>
    %651 = arith.addf %646, %650 : vector<2x676xf32>
    %652 = vector.extract_strided_slice %3 {offsets = [7, 0, 0], sizes = [1, 2, 676], strides = [1, 1, 1]} : vector<9x2x676xf32> to vector<1x2x676xf32>
    %653 = vector.shape_cast %652 : vector<1x2x676xf32> to vector<2x676xf32>
    %654 = vector.broadcast %613 : f32 to vector<2x676xf32>
    %655 = arith.mulf %654, %653 : vector<2x676xf32>
    %656 = arith.addf %651, %655 : vector<2x676xf32>
    %657 = vector.extract_strided_slice %3 {offsets = [8, 0, 0], sizes = [1, 2, 676], strides = [1, 1, 1]} : vector<9x2x676xf32> to vector<1x2x676xf32>
    %658 = vector.shape_cast %657 : vector<1x2x676xf32> to vector<2x676xf32>
    %659 = vector.broadcast %615 : f32 to vector<2x676xf32>
    %660 = arith.mulf %659, %658 : vector<2x676xf32>
    %661 = arith.addf %656, %660 : vector<2x676xf32>
    %662 = vector.broadcast %617 : f32 to vector<2x676xf32>
    %663 = arith.addf %661, %662 : vector<2x676xf32>
    %cst_116 = arith.constant 0.000000e+00 : f32
    %664 = vector.broadcast %cst_116 : f32 to vector<2x676xf32>
    %665 = arith.maximumf %663, %664 : vector<2x676xf32>
    %666 = arith.truncf %665 : vector<2x676xf32> to vector<2x676xbf16>
    %c8_117 = arith.constant 8 : index
    %c0_118 = arith.constant 0 : index
    %c0_119 = arith.constant 0 : index
    %667 = vector.load %arg10[%c8_117, %c0_118, %c0_119] : memref<16x2x676xbf16, #tpu.memory_space<vmem>>, vector<1x2x676xbf16>
    %668 = vector.shape_cast %667 : vector<1x2x676xbf16> to vector<2x676xbf16>
    %669 = vector.shape_cast %666 : vector<2x676xbf16> to vector<1x2x676xbf16>
    tpu.vector_store %arg10[%c8_117, %c0_118, %c0_119], %669 {strides = array<i32>} : memref<16x2x676xbf16, #tpu.memory_space<vmem>>, vector<1x2x676xbf16>,
    %c16_i32_120 = arith.constant 16 : i32
    %670 = arith.muli %arg0, %c16_i32_120 : i32
    %c9_i32 = arith.constant 9 : i32
    %671 = arith.addi %670, %c9_i32 : i32
    %672 = arith.index_cast %671 : i32 to index
    %c0_121 = arith.constant 0 : index
    %673 = memref.load %arg2[%672, %c0_121] : memref<32x9xf32, #tpu.memory_space<smem>>
    %674 = arith.index_cast %671 : i32 to index
    %c1_122 = arith.constant 1 : index
    %675 = memref.load %arg2[%674, %c1_122] : memref<32x9xf32, #tpu.memory_space<smem>>
    %676 = arith.index_cast %671 : i32 to index
    %c2_123 = arith.constant 2 : index
    %677 = memref.load %arg2[%676, %c2_123] : memref<32x9xf32, #tpu.memory_space<smem>>
    %678 = arith.index_cast %671 : i32 to index
    %c3_124 = arith.constant 3 : index
    %679 = memref.load %arg2[%678, %c3_124] : memref<32x9xf32, #tpu.memory_space<smem>>
    %680 = arith.index_cast %671 : i32 to index
    %c4_125 = arith.constant 4 : index
    %681 = memref.load %arg2[%680, %c4_125] : memref<32x9xf32, #tpu.memory_space<smem>>
    %682 = arith.index_cast %671 : i32 to index
    %c5_126 = arith.constant 5 : index
    %683 = memref.load %arg2[%682, %c5_126] : memref<32x9xf32, #tpu.memory_space<smem>>
    %684 = arith.index_cast %671 : i32 to index
    %c6_127 = arith.constant 6 : index
    %685 = memref.load %arg2[%684, %c6_127] : memref<32x9xf32, #tpu.memory_space<smem>>
    %686 = arith.index_cast %671 : i32 to index
    %c7_128 = arith.constant 7 : index
    %687 = memref.load %arg2[%686, %c7_128] : memref<32x9xf32, #tpu.memory_space<smem>>
    %688 = arith.index_cast %671 : i32 to index
    %c8_129 = arith.constant 8 : index
    %689 = memref.load %arg2[%688, %c8_129] : memref<32x9xf32, #tpu.memory_space<smem>>
    %690 = arith.index_cast %671 : i32 to index
    %691 = memref.load %arg3[%690] : memref<32xf32, #tpu.memory_space<smem>>
    %692 = vector.extract_strided_slice %3 {offsets = [0, 0, 0], sizes = [1, 2, 676], strides = [1, 1, 1]} : vector<9x2x676xf32> to vector<1x2x676xf32>
    %693 = vector.shape_cast %692 : vector<1x2x676xf32> to vector<2x676xf32>
    %694 = vector.broadcast %673 : f32 to vector<2x676xf32>
    %695 = arith.mulf %694, %693 : vector<2x676xf32>
    %696 = vector.extract_strided_slice %3 {offsets = [1, 0, 0], sizes = [1, 2, 676], strides = [1, 1, 1]} : vector<9x2x676xf32> to vector<1x2x676xf32>
    %697 = vector.shape_cast %696 : vector<1x2x676xf32> to vector<2x676xf32>
    %698 = vector.broadcast %675 : f32 to vector<2x676xf32>
    %699 = arith.mulf %698, %697 : vector<2x676xf32>
    %700 = arith.addf %695, %699 : vector<2x676xf32>
    %701 = vector.extract_strided_slice %3 {offsets = [2, 0, 0], sizes = [1, 2, 676], strides = [1, 1, 1]} : vector<9x2x676xf32> to vector<1x2x676xf32>
    %702 = vector.shape_cast %701 : vector<1x2x676xf32> to vector<2x676xf32>
    %703 = vector.broadcast %677 : f32 to vector<2x676xf32>
    %704 = arith.mulf %703, %702 : vector<2x676xf32>
    %705 = arith.addf %700, %704 : vector<2x676xf32>
    %706 = vector.extract_strided_slice %3 {offsets = [3, 0, 0], sizes = [1, 2, 676], strides = [1, 1, 1]} : vector<9x2x676xf32> to vector<1x2x676xf32>
    %707 = vector.shape_cast %706 : vector<1x2x676xf32> to vector<2x676xf32>
    %708 = vector.broadcast %679 : f32 to vector<2x676xf32>
    %709 = arith.mulf %708, %707 : vector<2x676xf32>
    %710 = arith.addf %705, %709 : vector<2x676xf32>
    %711 = vector.extract_strided_slice %3 {offsets = [4, 0, 0], sizes = [1, 2, 676], strides = [1, 1, 1]} : vector<9x2x676xf32> to vector<1x2x676xf32>
    %712 = vector.shape_cast %711 : vector<1x2x676xf32> to vector<2x676xf32>
    %713 = vector.broadcast %681 : f32 to vector<2x676xf32>
    %714 = arith.mulf %713, %712 : vector<2x676xf32>
    %715 = arith.addf %710, %714 : vector<2x676xf32>
    %716 = vector.extract_strided_slice %3 {offsets = [5, 0, 0], sizes = [1, 2, 676], strides = [1, 1, 1]} : vector<9x2x676xf32> to vector<1x2x676xf32>
    %717 = vector.shape_cast %716 : vector<1x2x676xf32> to vector<2x676xf32>
    %718 = vector.broadcast %683 : f32 to vector<2x676xf32>
    %719 = arith.mulf %718, %717 : vector<2x676xf32>
    %720 = arith.addf %715, %719 : vector<2x676xf32>
    %721 = vector.extract_strided_slice %3 {offsets = [6, 0, 0], sizes = [1, 2, 676], strides = [1, 1, 1]} : vector<9x2x676xf32> to vector<1x2x676xf32>
    %722 = vector.shape_cast %721 : vector<1x2x676xf32> to vector<2x676xf32>
    %723 = vector.broadcast %685 : f32 to vector<2x676xf32>
    %724 = arith.mulf %723, %722 : vector<2x676xf32>
    %725 = arith.addf %720, %724 : vector<2x676xf32>
    %726 = vector.extract_strided_slice %3 {offsets = [7, 0, 0], sizes = [1, 2, 676], strides = [1, 1, 1]} : vector<9x2x676xf32> to vector<1x2x676xf32>
    %727 = vector.shape_cast %726 : vector<1x2x676xf32> to vector<2x676xf32>
    %728 = vector.broadcast %687 : f32 to vector<2x676xf32>
    %729 = arith.mulf %728, %727 : vector<2x676xf32>
    %730 = arith.addf %725, %729 : vector<2x676xf32>
    %731 = vector.extract_strided_slice %3 {offsets = [8, 0, 0], sizes = [1, 2, 676], strides = [1, 1, 1]} : vector<9x2x676xf32> to vector<1x2x676xf32>
    %732 = vector.shape_cast %731 : vector<1x2x676xf32> to vector<2x676xf32>
    %733 = vector.broadcast %689 : f32 to vector<2x676xf32>
    %734 = arith.mulf %733, %732 : vector<2x676xf32>
    %735 = arith.addf %730, %734 : vector<2x676xf32>
    %736 = vector.broadcast %691 : f32 to vector<2x676xf32>
    %737 = arith.addf %735, %736 : vector<2x676xf32>
    %cst_130 = arith.constant 0.000000e+00 : f32
    %738 = vector.broadcast %cst_130 : f32 to vector<2x676xf32>
    %739 = arith.maximumf %737, %738 : vector<2x676xf32>
    %740 = arith.truncf %739 : vector<2x676xf32> to vector<2x676xbf16>
    %c9 = arith.constant 9 : index
    %c0_131 = arith.constant 0 : index
    %c0_132 = arith.constant 0 : index
    %741 = vector.load %arg10[%c9, %c0_131, %c0_132] : memref<16x2x676xbf16, #tpu.memory_space<vmem>>, vector<1x2x676xbf16>
    %742 = vector.shape_cast %741 : vector<1x2x676xbf16> to vector<2x676xbf16>
    %743 = vector.shape_cast %740 : vector<2x676xbf16> to vector<1x2x676xbf16>
    tpu.vector_store %arg10[%c9, %c0_131, %c0_132], %743 {strides = array<i32>} : memref<16x2x676xbf16, #tpu.memory_space<vmem>>, vector<1x2x676xbf16>,
    %c16_i32_133 = arith.constant 16 : i32
    %744 = arith.muli %arg0, %c16_i32_133 : i32
    %c10_i32 = arith.constant 10 : i32
    %745 = arith.addi %744, %c10_i32 : i32
    %746 = arith.index_cast %745 : i32 to index
    %c0_134 = arith.constant 0 : index
    %747 = memref.load %arg2[%746, %c0_134] : memref<32x9xf32, #tpu.memory_space<smem>>
    %748 = arith.index_cast %745 : i32 to index
    %c1_135 = arith.constant 1 : index
    %749 = memref.load %arg2[%748, %c1_135] : memref<32x9xf32, #tpu.memory_space<smem>>
    %750 = arith.index_cast %745 : i32 to index
    %c2_136 = arith.constant 2 : index
    %751 = memref.load %arg2[%750, %c2_136] : memref<32x9xf32, #tpu.memory_space<smem>>
    %752 = arith.index_cast %745 : i32 to index
    %c3_137 = arith.constant 3 : index
    %753 = memref.load %arg2[%752, %c3_137] : memref<32x9xf32, #tpu.memory_space<smem>>
    %754 = arith.index_cast %745 : i32 to index
    %c4_138 = arith.constant 4 : index
    %755 = memref.load %arg2[%754, %c4_138] : memref<32x9xf32, #tpu.memory_space<smem>>
    %756 = arith.index_cast %745 : i32 to index
    %c5_139 = arith.constant 5 : index
    %757 = memref.load %arg2[%756, %c5_139] : memref<32x9xf32, #tpu.memory_space<smem>>
    %758 = arith.index_cast %745 : i32 to index
    %c6_140 = arith.constant 6 : index
    %759 = memref.load %arg2[%758, %c6_140] : memref<32x9xf32, #tpu.memory_space<smem>>
    %760 = arith.index_cast %745 : i32 to index
    %c7_141 = arith.constant 7 : index
    %761 = memref.load %arg2[%760, %c7_141] : memref<32x9xf32, #tpu.memory_space<smem>>
    %762 = arith.index_cast %745 : i32 to index
    %c8_142 = arith.constant 8 : index
    %763 = memref.load %arg2[%762, %c8_142] : memref<32x9xf32, #tpu.memory_space<smem>>
    %764 = arith.index_cast %745 : i32 to index
    %765 = memref.load %arg3[%764] : memref<32xf32, #tpu.memory_space<smem>>
    %766 = vector.extract_strided_slice %3 {offsets = [0, 0, 0], sizes = [1, 2, 676], strides = [1, 1, 1]} : vector<9x2x676xf32> to vector<1x2x676xf32>
    %767 = vector.shape_cast %766 : vector<1x2x676xf32> to vector<2x676xf32>
    %768 = vector.broadcast %747 : f32 to vector<2x676xf32>
    %769 = arith.mulf %768, %767 : vector<2x676xf32>
    %770 = vector.extract_strided_slice %3 {offsets = [1, 0, 0], sizes = [1, 2, 676], strides = [1, 1, 1]} : vector<9x2x676xf32> to vector<1x2x676xf32>
    %771 = vector.shape_cast %770 : vector<1x2x676xf32> to vector<2x676xf32>
    %772 = vector.broadcast %749 : f32 to vector<2x676xf32>
    %773 = arith.mulf %772, %771 : vector<2x676xf32>
    %774 = arith.addf %769, %773 : vector<2x676xf32>
    %775 = vector.extract_strided_slice %3 {offsets = [2, 0, 0], sizes = [1, 2, 676], strides = [1, 1, 1]} : vector<9x2x676xf32> to vector<1x2x676xf32>
    %776 = vector.shape_cast %775 : vector<1x2x676xf32> to vector<2x676xf32>
    %777 = vector.broadcast %751 : f32 to vector<2x676xf32>
    %778 = arith.mulf %777, %776 : vector<2x676xf32>
    %779 = arith.addf %774, %778 : vector<2x676xf32>
    %780 = vector.extract_strided_slice %3 {offsets = [3, 0, 0], sizes = [1, 2, 676], strides = [1, 1, 1]} : vector<9x2x676xf32> to vector<1x2x676xf32>
    %781 = vector.shape_cast %780 : vector<1x2x676xf32> to vector<2x676xf32>
    %782 = vector.broadcast %753 : f32 to vector<2x676xf32>
    %783 = arith.mulf %782, %781 : vector<2x676xf32>
    %784 = arith.addf %779, %783 : vector<2x676xf32>
    %785 = vector.extract_strided_slice %3 {offsets = [4, 0, 0], sizes = [1, 2, 676], strides = [1, 1, 1]} : vector<9x2x676xf32> to vector<1x2x676xf32>
    %786 = vector.shape_cast %785 : vector<1x2x676xf32> to vector<2x676xf32>
    %787 = vector.broadcast %755 : f32 to vector<2x676xf32>
    %788 = arith.mulf %787, %786 : vector<2x676xf32>
    %789 = arith.addf %784, %788 : vector<2x676xf32>
    %790 = vector.extract_strided_slice %3 {offsets = [5, 0, 0], sizes = [1, 2, 676], strides = [1, 1, 1]} : vector<9x2x676xf32> to vector<1x2x676xf32>
    %791 = vector.shape_cast %790 : vector<1x2x676xf32> to vector<2x676xf32>
    %792 = vector.broadcast %757 : f32 to vector<2x676xf32>
    %793 = arith.mulf %792, %791 : vector<2x676xf32>
    %794 = arith.addf %789, %793 : vector<2x676xf32>
    %795 = vector.extract_strided_slice %3 {offsets = [6, 0, 0], sizes = [1, 2, 676], strides = [1, 1, 1]} : vector<9x2x676xf32> to vector<1x2x676xf32>
    %796 = vector.shape_cast %795 : vector<1x2x676xf32> to vector<2x676xf32>
    %797 = vector.broadcast %759 : f32 to vector<2x676xf32>
    %798 = arith.mulf %797, %796 : vector<2x676xf32>
    %799 = arith.addf %794, %798 : vector<2x676xf32>
    %800 = vector.extract_strided_slice %3 {offsets = [7, 0, 0], sizes = [1, 2, 676], strides = [1, 1, 1]} : vector<9x2x676xf32> to vector<1x2x676xf32>
    %801 = vector.shape_cast %800 : vector<1x2x676xf32> to vector<2x676xf32>
    %802 = vector.broadcast %761 : f32 to vector<2x676xf32>
    %803 = arith.mulf %802, %801 : vector<2x676xf32>
    %804 = arith.addf %799, %803 : vector<2x676xf32>
    %805 = vector.extract_strided_slice %3 {offsets = [8, 0, 0], sizes = [1, 2, 676], strides = [1, 1, 1]} : vector<9x2x676xf32> to vector<1x2x676xf32>
    %806 = vector.shape_cast %805 : vector<1x2x676xf32> to vector<2x676xf32>
    %807 = vector.broadcast %763 : f32 to vector<2x676xf32>
    %808 = arith.mulf %807, %806 : vector<2x676xf32>
    %809 = arith.addf %804, %808 : vector<2x676xf32>
    %810 = vector.broadcast %765 : f32 to vector<2x676xf32>
    %811 = arith.addf %809, %810 : vector<2x676xf32>
    %cst_143 = arith.constant 0.000000e+00 : f32
    %812 = vector.broadcast %cst_143 : f32 to vector<2x676xf32>
    %813 = arith.maximumf %811, %812 : vector<2x676xf32>
    %814 = arith.truncf %813 : vector<2x676xf32> to vector<2x676xbf16>
    %c10 = arith.constant 10 : index
    %c0_144 = arith.constant 0 : index
    %c0_145 = arith.constant 0 : index
    %815 = vector.load %arg10[%c10, %c0_144, %c0_145] : memref<16x2x676xbf16, #tpu.memory_space<vmem>>, vector<1x2x676xbf16>
    %816 = vector.shape_cast %815 : vector<1x2x676xbf16> to vector<2x676xbf16>
    %817 = vector.shape_cast %814 : vector<2x676xbf16> to vector<1x2x676xbf16>
    tpu.vector_store %arg10[%c10, %c0_144, %c0_145], %817 {strides = array<i32>} : memref<16x2x676xbf16, #tpu.memory_space<vmem>>, vector<1x2x676xbf16>,
    %c16_i32_146 = arith.constant 16 : i32
    %818 = arith.muli %arg0, %c16_i32_146 : i32
    %c11_i32 = arith.constant 11 : i32
    %819 = arith.addi %818, %c11_i32 : i32
    %820 = arith.index_cast %819 : i32 to index
    %c0_147 = arith.constant 0 : index
    %821 = memref.load %arg2[%820, %c0_147] : memref<32x9xf32, #tpu.memory_space<smem>>
    %822 = arith.index_cast %819 : i32 to index
    %c1_148 = arith.constant 1 : index
    %823 = memref.load %arg2[%822, %c1_148] : memref<32x9xf32, #tpu.memory_space<smem>>
    %824 = arith.index_cast %819 : i32 to index
    %c2_149 = arith.constant 2 : index
    %825 = memref.load %arg2[%824, %c2_149] : memref<32x9xf32, #tpu.memory_space<smem>>
    %826 = arith.index_cast %819 : i32 to index
    %c3_150 = arith.constant 3 : index
    %827 = memref.load %arg2[%826, %c3_150] : memref<32x9xf32, #tpu.memory_space<smem>>
    %828 = arith.index_cast %819 : i32 to index
    %c4_151 = arith.constant 4 : index
    %829 = memref.load %arg2[%828, %c4_151] : memref<32x9xf32, #tpu.memory_space<smem>>
    %830 = arith.index_cast %819 : i32 to index
    %c5_152 = arith.constant 5 : index
    %831 = memref.load %arg2[%830, %c5_152] : memref<32x9xf32, #tpu.memory_space<smem>>
    %832 = arith.index_cast %819 : i32 to index
    %c6_153 = arith.constant 6 : index
    %833 = memref.load %arg2[%832, %c6_153] : memref<32x9xf32, #tpu.memory_space<smem>>
    %834 = arith.index_cast %819 : i32 to index
    %c7_154 = arith.constant 7 : index
    %835 = memref.load %arg2[%834, %c7_154] : memref<32x9xf32, #tpu.memory_space<smem>>
    %836 = arith.index_cast %819 : i32 to index
    %c8_155 = arith.constant 8 : index
    %837 = memref.load %arg2[%836, %c8_155] : memref<32x9xf32, #tpu.memory_space<smem>>
    %838 = arith.index_cast %819 : i32 to index
    %839 = memref.load %arg3[%838] : memref<32xf32, #tpu.memory_space<smem>>
    %840 = vector.extract_strided_slice %3 {offsets = [0, 0, 0], sizes = [1, 2, 676], strides = [1, 1, 1]} : vector<9x2x676xf32> to vector<1x2x676xf32>
    %841 = vector.shape_cast %840 : vector<1x2x676xf32> to vector<2x676xf32>
    %842 = vector.broadcast %821 : f32 to vector<2x676xf32>
    %843 = arith.mulf %842, %841 : vector<2x676xf32>
    %844 = vector.extract_strided_slice %3 {offsets = [1, 0, 0], sizes = [1, 2, 676], strides = [1, 1, 1]} : vector<9x2x676xf32> to vector<1x2x676xf32>
    %845 = vector.shape_cast %844 : vector<1x2x676xf32> to vector<2x676xf32>
    %846 = vector.broadcast %823 : f32 to vector<2x676xf32>
    %847 = arith.mulf %846, %845 : vector<2x676xf32>
    %848 = arith.addf %843, %847 : vector<2x676xf32>
    %849 = vector.extract_strided_slice %3 {offsets = [2, 0, 0], sizes = [1, 2, 676], strides = [1, 1, 1]} : vector<9x2x676xf32> to vector<1x2x676xf32>
    %850 = vector.shape_cast %849 : vector<1x2x676xf32> to vector<2x676xf32>
    %851 = vector.broadcast %825 : f32 to vector<2x676xf32>
    %852 = arith.mulf %851, %850 : vector<2x676xf32>
    %853 = arith.addf %848, %852 : vector<2x676xf32>
    %854 = vector.extract_strided_slice %3 {offsets = [3, 0, 0], sizes = [1, 2, 676], strides = [1, 1, 1]} : vector<9x2x676xf32> to vector<1x2x676xf32>
    %855 = vector.shape_cast %854 : vector<1x2x676xf32> to vector<2x676xf32>
    %856 = vector.broadcast %827 : f32 to vector<2x676xf32>
    %857 = arith.mulf %856, %855 : vector<2x676xf32>
    %858 = arith.addf %853, %857 : vector<2x676xf32>
    %859 = vector.extract_strided_slice %3 {offsets = [4, 0, 0], sizes = [1, 2, 676], strides = [1, 1, 1]} : vector<9x2x676xf32> to vector<1x2x676xf32>
    %860 = vector.shape_cast %859 : vector<1x2x676xf32> to vector<2x676xf32>
    %861 = vector.broadcast %829 : f32 to vector<2x676xf32>
    %862 = arith.mulf %861, %860 : vector<2x676xf32>
    %863 = arith.addf %858, %862 : vector<2x676xf32>
    %864 = vector.extract_strided_slice %3 {offsets = [5, 0, 0], sizes = [1, 2, 676], strides = [1, 1, 1]} : vector<9x2x676xf32> to vector<1x2x676xf32>
    %865 = vector.shape_cast %864 : vector<1x2x676xf32> to vector<2x676xf32>
    %866 = vector.broadcast %831 : f32 to vector<2x676xf32>
    %867 = arith.mulf %866, %865 : vector<2x676xf32>
    %868 = arith.addf %863, %867 : vector<2x676xf32>
    %869 = vector.extract_strided_slice %3 {offsets = [6, 0, 0], sizes = [1, 2, 676], strides = [1, 1, 1]} : vector<9x2x676xf32> to vector<1x2x676xf32>
    %870 = vector.shape_cast %869 : vector<1x2x676xf32> to vector<2x676xf32>
    %871 = vector.broadcast %833 : f32 to vector<2x676xf32>
    %872 = arith.mulf %871, %870 : vector<2x676xf32>
    %873 = arith.addf %868, %872 : vector<2x676xf32>
    %874 = vector.extract_strided_slice %3 {offsets = [7, 0, 0], sizes = [1, 2, 676], strides = [1, 1, 1]} : vector<9x2x676xf32> to vector<1x2x676xf32>
    %875 = vector.shape_cast %874 : vector<1x2x676xf32> to vector<2x676xf32>
    %876 = vector.broadcast %835 : f32 to vector<2x676xf32>
    %877 = arith.mulf %876, %875 : vector<2x676xf32>
    %878 = arith.addf %873, %877 : vector<2x676xf32>
    %879 = vector.extract_strided_slice %3 {offsets = [8, 0, 0], sizes = [1, 2, 676], strides = [1, 1, 1]} : vector<9x2x676xf32> to vector<1x2x676xf32>
    %880 = vector.shape_cast %879 : vector<1x2x676xf32> to vector<2x676xf32>
    %881 = vector.broadcast %837 : f32 to vector<2x676xf32>
    %882 = arith.mulf %881, %880 : vector<2x676xf32>
    %883 = arith.addf %878, %882 : vector<2x676xf32>
    %884 = vector.broadcast %839 : f32 to vector<2x676xf32>
    %885 = arith.addf %883, %884 : vector<2x676xf32>
    %cst_156 = arith.constant 0.000000e+00 : f32
    %886 = vector.broadcast %cst_156 : f32 to vector<2x676xf32>
    %887 = arith.maximumf %885, %886 : vector<2x676xf32>
    %888 = arith.truncf %887 : vector<2x676xf32> to vector<2x676xbf16>
    %c11 = arith.constant 11 : index
    %c0_157 = arith.constant 0 : index
    %c0_158 = arith.constant 0 : index
    %889 = vector.load %arg10[%c11, %c0_157, %c0_158] : memref<16x2x676xbf16, #tpu.memory_space<vmem>>, vector<1x2x676xbf16>
    %890 = vector.shape_cast %889 : vector<1x2x676xbf16> to vector<2x676xbf16>
    %891 = vector.shape_cast %888 : vector<2x676xbf16> to vector<1x2x676xbf16>
    tpu.vector_store %arg10[%c11, %c0_157, %c0_158], %891 {strides = array<i32>} : memref<16x2x676xbf16, #tpu.memory_space<vmem>>, vector<1x2x676xbf16>,
    %c16_i32_159 = arith.constant 16 : i32
    %892 = arith.muli %arg0, %c16_i32_159 : i32
    %c12_i32 = arith.constant 12 : i32
    %893 = arith.addi %892, %c12_i32 : i32
    %894 = arith.index_cast %893 : i32 to index
    %c0_160 = arith.constant 0 : index
    %895 = memref.load %arg2[%894, %c0_160] : memref<32x9xf32, #tpu.memory_space<smem>>
    %896 = arith.index_cast %893 : i32 to index
    %c1_161 = arith.constant 1 : index
    %897 = memref.load %arg2[%896, %c1_161] : memref<32x9xf32, #tpu.memory_space<smem>>
    %898 = arith.index_cast %893 : i32 to index
    %c2_162 = arith.constant 2 : index
    %899 = memref.load %arg2[%898, %c2_162] : memref<32x9xf32, #tpu.memory_space<smem>>
    %900 = arith.index_cast %893 : i32 to index
    %c3_163 = arith.constant 3 : index
    %901 = memref.load %arg2[%900, %c3_163] : memref<32x9xf32, #tpu.memory_space<smem>>
    %902 = arith.index_cast %893 : i32 to index
    %c4_164 = arith.constant 4 : index
    %903 = memref.load %arg2[%902, %c4_164] : memref<32x9xf32, #tpu.memory_space<smem>>
    %904 = arith.index_cast %893 : i32 to index
    %c5_165 = arith.constant 5 : index
    %905 = memref.load %arg2[%904, %c5_165] : memref<32x9xf32, #tpu.memory_space<smem>>
    %906 = arith.index_cast %893 : i32 to index
    %c6_166 = arith.constant 6 : index
    %907 = memref.load %arg2[%906, %c6_166] : memref<32x9xf32, #tpu.memory_space<smem>>
    %908 = arith.index_cast %893 : i32 to index
    %c7_167 = arith.constant 7 : index
    %909 = memref.load %arg2[%908, %c7_167] : memref<32x9xf32, #tpu.memory_space<smem>>
    %910 = arith.index_cast %893 : i32 to index
    %c8_168 = arith.constant 8 : index
    %911 = memref.load %arg2[%910, %c8_168] : memref<32x9xf32, #tpu.memory_space<smem>>
    %912 = arith.index_cast %893 : i32 to index
    %913 = memref.load %arg3[%912] : memref<32xf32, #tpu.memory_space<smem>>
    %914 = vector.extract_strided_slice %3 {offsets = [0, 0, 0], sizes = [1, 2, 676], strides = [1, 1, 1]} : vector<9x2x676xf32> to vector<1x2x676xf32>
    %915 = vector.shape_cast %914 : vector<1x2x676xf32> to vector<2x676xf32>
    %916 = vector.broadcast %895 : f32 to vector<2x676xf32>
    %917 = arith.mulf %916, %915 : vector<2x676xf32>
    %918 = vector.extract_strided_slice %3 {offsets = [1, 0, 0], sizes = [1, 2, 676], strides = [1, 1, 1]} : vector<9x2x676xf32> to vector<1x2x676xf32>
    %919 = vector.shape_cast %918 : vector<1x2x676xf32> to vector<2x676xf32>
    %920 = vector.broadcast %897 : f32 to vector<2x676xf32>
    %921 = arith.mulf %920, %919 : vector<2x676xf32>
    %922 = arith.addf %917, %921 : vector<2x676xf32>
    %923 = vector.extract_strided_slice %3 {offsets = [2, 0, 0], sizes = [1, 2, 676], strides = [1, 1, 1]} : vector<9x2x676xf32> to vector<1x2x676xf32>
    %924 = vector.shape_cast %923 : vector<1x2x676xf32> to vector<2x676xf32>
    %925 = vector.broadcast %899 : f32 to vector<2x676xf32>
    %926 = arith.mulf %925, %924 : vector<2x676xf32>
    %927 = arith.addf %922, %926 : vector<2x676xf32>
    %928 = vector.extract_strided_slice %3 {offsets = [3, 0, 0], sizes = [1, 2, 676], strides = [1, 1, 1]} : vector<9x2x676xf32> to vector<1x2x676xf32>
    %929 = vector.shape_cast %928 : vector<1x2x676xf32> to vector<2x676xf32>
    %930 = vector.broadcast %901 : f32 to vector<2x676xf32>
    %931 = arith.mulf %930, %929 : vector<2x676xf32>
    %932 = arith.addf %927, %931 : vector<2x676xf32>
    %933 = vector.extract_strided_slice %3 {offsets = [4, 0, 0], sizes = [1, 2, 676], strides = [1, 1, 1]} : vector<9x2x676xf32> to vector<1x2x676xf32>
    %934 = vector.shape_cast %933 : vector<1x2x676xf32> to vector<2x676xf32>
    %935 = vector.broadcast %903 : f32 to vector<2x676xf32>
    %936 = arith.mulf %935, %934 : vector<2x676xf32>
    %937 = arith.addf %932, %936 : vector<2x676xf32>
    %938 = vector.extract_strided_slice %3 {offsets = [5, 0, 0], sizes = [1, 2, 676], strides = [1, 1, 1]} : vector<9x2x676xf32> to vector<1x2x676xf32>
    %939 = vector.shape_cast %938 : vector<1x2x676xf32> to vector<2x676xf32>
    %940 = vector.broadcast %905 : f32 to vector<2x676xf32>
    %941 = arith.mulf %940, %939 : vector<2x676xf32>
    %942 = arith.addf %937, %941 : vector<2x676xf32>
    %943 = vector.extract_strided_slice %3 {offsets = [6, 0, 0], sizes = [1, 2, 676], strides = [1, 1, 1]} : vector<9x2x676xf32> to vector<1x2x676xf32>
    %944 = vector.shape_cast %943 : vector<1x2x676xf32> to vector<2x676xf32>
    %945 = vector.broadcast %907 : f32 to vector<2x676xf32>
    %946 = arith.mulf %945, %944 : vector<2x676xf32>
    %947 = arith.addf %942, %946 : vector<2x676xf32>
    %948 = vector.extract_strided_slice %3 {offsets = [7, 0, 0], sizes = [1, 2, 676], strides = [1, 1, 1]} : vector<9x2x676xf32> to vector<1x2x676xf32>
    %949 = vector.shape_cast %948 : vector<1x2x676xf32> to vector<2x676xf32>
    %950 = vector.broadcast %909 : f32 to vector<2x676xf32>
    %951 = arith.mulf %950, %949 : vector<2x676xf32>
    %952 = arith.addf %947, %951 : vector<2x676xf32>
    %953 = vector.extract_strided_slice %3 {offsets = [8, 0, 0], sizes = [1, 2, 676], strides = [1, 1, 1]} : vector<9x2x676xf32> to vector<1x2x676xf32>
    %954 = vector.shape_cast %953 : vector<1x2x676xf32> to vector<2x676xf32>
    %955 = vector.broadcast %911 : f32 to vector<2x676xf32>
    %956 = arith.mulf %955, %954 : vector<2x676xf32>
    %957 = arith.addf %952, %956 : vector<2x676xf32>
    %958 = vector.broadcast %913 : f32 to vector<2x676xf32>
    %959 = arith.addf %957, %958 : vector<2x676xf32>
    %cst_169 = arith.constant 0.000000e+00 : f32
    %960 = vector.broadcast %cst_169 : f32 to vector<2x676xf32>
    %961 = arith.maximumf %959, %960 : vector<2x676xf32>
    %962 = arith.truncf %961 : vector<2x676xf32> to vector<2x676xbf16>
    %c12 = arith.constant 12 : index
    %c0_170 = arith.constant 0 : index
    %c0_171 = arith.constant 0 : index
    %963 = vector.load %arg10[%c12, %c0_170, %c0_171] : memref<16x2x676xbf16, #tpu.memory_space<vmem>>, vector<1x2x676xbf16>
    %964 = vector.shape_cast %963 : vector<1x2x676xbf16> to vector<2x676xbf16>
    %965 = vector.shape_cast %962 : vector<2x676xbf16> to vector<1x2x676xbf16>
    tpu.vector_store %arg10[%c12, %c0_170, %c0_171], %965 {strides = array<i32>} : memref<16x2x676xbf16, #tpu.memory_space<vmem>>, vector<1x2x676xbf16>,
    %c16_i32_172 = arith.constant 16 : i32
    %966 = arith.muli %arg0, %c16_i32_172 : i32
    %c13_i32 = arith.constant 13 : i32
    %967 = arith.addi %966, %c13_i32 : i32
    %968 = arith.index_cast %967 : i32 to index
    %c0_173 = arith.constant 0 : index
    %969 = memref.load %arg2[%968, %c0_173] : memref<32x9xf32, #tpu.memory_space<smem>>
    %970 = arith.index_cast %967 : i32 to index
    %c1_174 = arith.constant 1 : index
    %971 = memref.load %arg2[%970, %c1_174] : memref<32x9xf32, #tpu.memory_space<smem>>
    %972 = arith.index_cast %967 : i32 to index
    %c2_175 = arith.constant 2 : index
    %973 = memref.load %arg2[%972, %c2_175] : memref<32x9xf32, #tpu.memory_space<smem>>
    %974 = arith.index_cast %967 : i32 to index
    %c3_176 = arith.constant 3 : index
    %975 = memref.load %arg2[%974, %c3_176] : memref<32x9xf32, #tpu.memory_space<smem>>
    %976 = arith.index_cast %967 : i32 to index
    %c4_177 = arith.constant 4 : index
    %977 = memref.load %arg2[%976, %c4_177] : memref<32x9xf32, #tpu.memory_space<smem>>
    %978 = arith.index_cast %967 : i32 to index
    %c5_178 = arith.constant 5 : index
    %979 = memref.load %arg2[%978, %c5_178] : memref<32x9xf32, #tpu.memory_space<smem>>
    %980 = arith.index_cast %967 : i32 to index
    %c6_179 = arith.constant 6 : index
    %981 = memref.load %arg2[%980, %c6_179] : memref<32x9xf32, #tpu.memory_space<smem>>
    %982 = arith.index_cast %967 : i32 to index
    %c7_180 = arith.constant 7 : index
    %983 = memref.load %arg2[%982, %c7_180] : memref<32x9xf32, #tpu.memory_space<smem>>
    %984 = arith.index_cast %967 : i32 to index
    %c8_181 = arith.constant 8 : index
    %985 = memref.load %arg2[%984, %c8_181] : memref<32x9xf32, #tpu.memory_space<smem>>
    %986 = arith.index_cast %967 : i32 to index
    %987 = memref.load %arg3[%986] : memref<32xf32, #tpu.memory_space<smem>>
    %988 = vector.extract_strided_slice %3 {offsets = [0, 0, 0], sizes = [1, 2, 676], strides = [1, 1, 1]} : vector<9x2x676xf32> to vector<1x2x676xf32>
    %989 = vector.shape_cast %988 : vector<1x2x676xf32> to vector<2x676xf32>
    %990 = vector.broadcast %969 : f32 to vector<2x676xf32>
    %991 = arith.mulf %990, %989 : vector<2x676xf32>
    %992 = vector.extract_strided_slice %3 {offsets = [1, 0, 0], sizes = [1, 2, 676], strides = [1, 1, 1]} : vector<9x2x676xf32> to vector<1x2x676xf32>
    %993 = vector.shape_cast %992 : vector<1x2x676xf32> to vector<2x676xf32>
    %994 = vector.broadcast %971 : f32 to vector<2x676xf32>
    %995 = arith.mulf %994, %993 : vector<2x676xf32>
    %996 = arith.addf %991, %995 : vector<2x676xf32>
    %997 = vector.extract_strided_slice %3 {offsets = [2, 0, 0], sizes = [1, 2, 676], strides = [1, 1, 1]} : vector<9x2x676xf32> to vector<1x2x676xf32>
    %998 = vector.shape_cast %997 : vector<1x2x676xf32> to vector<2x676xf32>
    %999 = vector.broadcast %973 : f32 to vector<2x676xf32>
    %1000 = arith.mulf %999, %998 : vector<2x676xf32>
    %1001 = arith.addf %996, %1000 : vector<2x676xf32>
    %1002 = vector.extract_strided_slice %3 {offsets = [3, 0, 0], sizes = [1, 2, 676], strides = [1, 1, 1]} : vector<9x2x676xf32> to vector<1x2x676xf32>
    %1003 = vector.shape_cast %1002 : vector<1x2x676xf32> to vector<2x676xf32>
    %1004 = vector.broadcast %975 : f32 to vector<2x676xf32>
    %1005 = arith.mulf %1004, %1003 : vector<2x676xf32>
    %1006 = arith.addf %1001, %1005 : vector<2x676xf32>
    %1007 = vector.extract_strided_slice %3 {offsets = [4, 0, 0], sizes = [1, 2, 676], strides = [1, 1, 1]} : vector<9x2x676xf32> to vector<1x2x676xf32>
    %1008 = vector.shape_cast %1007 : vector<1x2x676xf32> to vector<2x676xf32>
    %1009 = vector.broadcast %977 : f32 to vector<2x676xf32>
    %1010 = arith.mulf %1009, %1008 : vector<2x676xf32>
    %1011 = arith.addf %1006, %1010 : vector<2x676xf32>
    %1012 = vector.extract_strided_slice %3 {offsets = [5, 0, 0], sizes = [1, 2, 676], strides = [1, 1, 1]} : vector<9x2x676xf32> to vector<1x2x676xf32>
    %1013 = vector.shape_cast %1012 : vector<1x2x676xf32> to vector<2x676xf32>
    %1014 = vector.broadcast %979 : f32 to vector<2x676xf32>
    %1015 = arith.mulf %1014, %1013 : vector<2x676xf32>
    %1016 = arith.addf %1011, %1015 : vector<2x676xf32>
    %1017 = vector.extract_strided_slice %3 {offsets = [6, 0, 0], sizes = [1, 2, 676], strides = [1, 1, 1]} : vector<9x2x676xf32> to vector<1x2x676xf32>
    %1018 = vector.shape_cast %1017 : vector<1x2x676xf32> to vector<2x676xf32>
    %1019 = vector.broadcast %981 : f32 to vector<2x676xf32>
    %1020 = arith.mulf %1019, %1018 : vector<2x676xf32>
    %1021 = arith.addf %1016, %1020 : vector<2x676xf32>
    %1022 = vector.extract_strided_slice %3 {offsets = [7, 0, 0], sizes = [1, 2, 676], strides = [1, 1, 1]} : vector<9x2x676xf32> to vector<1x2x676xf32>
    %1023 = vector.shape_cast %1022 : vector<1x2x676xf32> to vector<2x676xf32>
    %1024 = vector.broadcast %983 : f32 to vector<2x676xf32>
    %1025 = arith.mulf %1024, %1023 : vector<2x676xf32>
    %1026 = arith.addf %1021, %1025 : vector<2x676xf32>
    %1027 = vector.extract_strided_slice %3 {offsets = [8, 0, 0], sizes = [1, 2, 676], strides = [1, 1, 1]} : vector<9x2x676xf32> to vector<1x2x676xf32>
    %1028 = vector.shape_cast %1027 : vector<1x2x676xf32> to vector<2x676xf32>
    %1029 = vector.broadcast %985 : f32 to vector<2x676xf32>
    %1030 = arith.mulf %1029, %1028 : vector<2x676xf32>
    %1031 = arith.addf %1026, %1030 : vector<2x676xf32>
    %1032 = vector.broadcast %987 : f32 to vector<2x676xf32>
    %1033 = arith.addf %1031, %1032 : vector<2x676xf32>
    %cst_182 = arith.constant 0.000000e+00 : f32
    %1034 = vector.broadcast %cst_182 : f32 to vector<2x676xf32>
    %1035 = arith.maximumf %1033, %1034 : vector<2x676xf32>
    %1036 = arith.truncf %1035 : vector<2x676xf32> to vector<2x676xbf16>
    %c13 = arith.constant 13 : index
    %c0_183 = arith.constant 0 : index
    %c0_184 = arith.constant 0 : index
    %1037 = vector.load %arg10[%c13, %c0_183, %c0_184] : memref<16x2x676xbf16, #tpu.memory_space<vmem>>, vector<1x2x676xbf16>
    %1038 = vector.shape_cast %1037 : vector<1x2x676xbf16> to vector<2x676xbf16>
    %1039 = vector.shape_cast %1036 : vector<2x676xbf16> to vector<1x2x676xbf16>
    tpu.vector_store %arg10[%c13, %c0_183, %c0_184], %1039 {strides = array<i32>} : memref<16x2x676xbf16, #tpu.memory_space<vmem>>, vector<1x2x676xbf16>,
    %c16_i32_185 = arith.constant 16 : i32
    %1040 = arith.muli %arg0, %c16_i32_185 : i32
    %c14_i32 = arith.constant 14 : i32
    %1041 = arith.addi %1040, %c14_i32 : i32
    %1042 = arith.index_cast %1041 : i32 to index
    %c0_186 = arith.constant 0 : index
    %1043 = memref.load %arg2[%1042, %c0_186] : memref<32x9xf32, #tpu.memory_space<smem>>
    %1044 = arith.index_cast %1041 : i32 to index
    %c1_187 = arith.constant 1 : index
    %1045 = memref.load %arg2[%1044, %c1_187] : memref<32x9xf32, #tpu.memory_space<smem>>
    %1046 = arith.index_cast %1041 : i32 to index
    %c2_188 = arith.constant 2 : index
    %1047 = memref.load %arg2[%1046, %c2_188] : memref<32x9xf32, #tpu.memory_space<smem>>
    %1048 = arith.index_cast %1041 : i32 to index
    %c3_189 = arith.constant 3 : index
    %1049 = memref.load %arg2[%1048, %c3_189] : memref<32x9xf32, #tpu.memory_space<smem>>
    %1050 = arith.index_cast %1041 : i32 to index
    %c4_190 = arith.constant 4 : index
    %1051 = memref.load %arg2[%1050, %c4_190] : memref<32x9xf32, #tpu.memory_space<smem>>
    %1052 = arith.index_cast %1041 : i32 to index
    %c5_191 = arith.constant 5 : index
    %1053 = memref.load %arg2[%1052, %c5_191] : memref<32x9xf32, #tpu.memory_space<smem>>
    %1054 = arith.index_cast %1041 : i32 to index
    %c6_192 = arith.constant 6 : index
    %1055 = memref.load %arg2[%1054, %c6_192] : memref<32x9xf32, #tpu.memory_space<smem>>
    %1056 = arith.index_cast %1041 : i32 to index
    %c7_193 = arith.constant 7 : index
    %1057 = memref.load %arg2[%1056, %c7_193] : memref<32x9xf32, #tpu.memory_space<smem>>
    %1058 = arith.index_cast %1041 : i32 to index
    %c8_194 = arith.constant 8 : index
    %1059 = memref.load %arg2[%1058, %c8_194] : memref<32x9xf32, #tpu.memory_space<smem>>
    %1060 = arith.index_cast %1041 : i32 to index
    %1061 = memref.load %arg3[%1060] : memref<32xf32, #tpu.memory_space<smem>>
    %1062 = vector.extract_strided_slice %3 {offsets = [0, 0, 0], sizes = [1, 2, 676], strides = [1, 1, 1]} : vector<9x2x676xf32> to vector<1x2x676xf32>
    %1063 = vector.shape_cast %1062 : vector<1x2x676xf32> to vector<2x676xf32>
    %1064 = vector.broadcast %1043 : f32 to vector<2x676xf32>
    %1065 = arith.mulf %1064, %1063 : vector<2x676xf32>
    %1066 = vector.extract_strided_slice %3 {offsets = [1, 0, 0], sizes = [1, 2, 676], strides = [1, 1, 1]} : vector<9x2x676xf32> to vector<1x2x676xf32>
    %1067 = vector.shape_cast %1066 : vector<1x2x676xf32> to vector<2x676xf32>
    %1068 = vector.broadcast %1045 : f32 to vector<2x676xf32>
    %1069 = arith.mulf %1068, %1067 : vector<2x676xf32>
    %1070 = arith.addf %1065, %1069 : vector<2x676xf32>
    %1071 = vector.extract_strided_slice %3 {offsets = [2, 0, 0], sizes = [1, 2, 676], strides = [1, 1, 1]} : vector<9x2x676xf32> to vector<1x2x676xf32>
    %1072 = vector.shape_cast %1071 : vector<1x2x676xf32> to vector<2x676xf32>
    %1073 = vector.broadcast %1047 : f32 to vector<2x676xf32>
    %1074 = arith.mulf %1073, %1072 : vector<2x676xf32>
    %1075 = arith.addf %1070, %1074 : vector<2x676xf32>
    %1076 = vector.extract_strided_slice %3 {offsets = [3, 0, 0], sizes = [1, 2, 676], strides = [1, 1, 1]} : vector<9x2x676xf32> to vector<1x2x676xf32>
    %1077 = vector.shape_cast %1076 : vector<1x2x676xf32> to vector<2x676xf32>
    %1078 = vector.broadcast %1049 : f32 to vector<2x676xf32>
    %1079 = arith.mulf %1078, %1077 : vector<2x676xf32>
    %1080 = arith.addf %1075, %1079 : vector<2x676xf32>
    %1081 = vector.extract_strided_slice %3 {offsets = [4, 0, 0], sizes = [1, 2, 676], strides = [1, 1, 1]} : vector<9x2x676xf32> to vector<1x2x676xf32>
    %1082 = vector.shape_cast %1081 : vector<1x2x676xf32> to vector<2x676xf32>
    %1083 = vector.broadcast %1051 : f32 to vector<2x676xf32>
    %1084 = arith.mulf %1083, %1082 : vector<2x676xf32>
    %1085 = arith.addf %1080, %1084 : vector<2x676xf32>
    %1086 = vector.extract_strided_slice %3 {offsets = [5, 0, 0], sizes = [1, 2, 676], strides = [1, 1, 1]} : vector<9x2x676xf32> to vector<1x2x676xf32>
    %1087 = vector.shape_cast %1086 : vector<1x2x676xf32> to vector<2x676xf32>
    %1088 = vector.broadcast %1053 : f32 to vector<2x676xf32>
    %1089 = arith.mulf %1088, %1087 : vector<2x676xf32>
    %1090 = arith.addf %1085, %1089 : vector<2x676xf32>
    %1091 = vector.extract_strided_slice %3 {offsets = [6, 0, 0], sizes = [1, 2, 676], strides = [1, 1, 1]} : vector<9x2x676xf32> to vector<1x2x676xf32>
    %1092 = vector.shape_cast %1091 : vector<1x2x676xf32> to vector<2x676xf32>
    %1093 = vector.broadcast %1055 : f32 to vector<2x676xf32>
    %1094 = arith.mulf %1093, %1092 : vector<2x676xf32>
    %1095 = arith.addf %1090, %1094 : vector<2x676xf32>
    %1096 = vector.extract_strided_slice %3 {offsets = [7, 0, 0], sizes = [1, 2, 676], strides = [1, 1, 1]} : vector<9x2x676xf32> to vector<1x2x676xf32>
    %1097 = vector.shape_cast %1096 : vector<1x2x676xf32> to vector<2x676xf32>
    %1098 = vector.broadcast %1057 : f32 to vector<2x676xf32>
    %1099 = arith.mulf %1098, %1097 : vector<2x676xf32>
    %1100 = arith.addf %1095, %1099 : vector<2x676xf32>
    %1101 = vector.extract_strided_slice %3 {offsets = [8, 0, 0], sizes = [1, 2, 676], strides = [1, 1, 1]} : vector<9x2x676xf32> to vector<1x2x676xf32>
    %1102 = vector.shape_cast %1101 : vector<1x2x676xf32> to vector<2x676xf32>
    %1103 = vector.broadcast %1059 : f32 to vector<2x676xf32>
    %1104 = arith.mulf %1103, %1102 : vector<2x676xf32>
    %1105 = arith.addf %1100, %1104 : vector<2x676xf32>
    %1106 = vector.broadcast %1061 : f32 to vector<2x676xf32>
    %1107 = arith.addf %1105, %1106 : vector<2x676xf32>
    %cst_195 = arith.constant 0.000000e+00 : f32
    %1108 = vector.broadcast %cst_195 : f32 to vector<2x676xf32>
    %1109 = arith.maximumf %1107, %1108 : vector<2x676xf32>
    %1110 = arith.truncf %1109 : vector<2x676xf32> to vector<2x676xbf16>
    %c14 = arith.constant 14 : index
    %c0_196 = arith.constant 0 : index
    %c0_197 = arith.constant 0 : index
    %1111 = vector.load %arg10[%c14, %c0_196, %c0_197] : memref<16x2x676xbf16, #tpu.memory_space<vmem>>, vector<1x2x676xbf16>
    %1112 = vector.shape_cast %1111 : vector<1x2x676xbf16> to vector<2x676xbf16>
    %1113 = vector.shape_cast %1110 : vector<2x676xbf16> to vector<1x2x676xbf16>
    tpu.vector_store %arg10[%c14, %c0_196, %c0_197], %1113 {strides = array<i32>} : memref<16x2x676xbf16, #tpu.memory_space<vmem>>, vector<1x2x676xbf16>,
    %c16_i32_198 = arith.constant 16 : i32
    %1114 = arith.muli %arg0, %c16_i32_198 : i32
    %c15_i32 = arith.constant 15 : i32
    %1115 = arith.addi %1114, %c15_i32 : i32
    %1116 = arith.index_cast %1115 : i32 to index
    %c0_199 = arith.constant 0 : index
    %1117 = memref.load %arg2[%1116, %c0_199] : memref<32x9xf32, #tpu.memory_space<smem>>
    %1118 = arith.index_cast %1115 : i32 to index
    %c1_200 = arith.constant 1 : index
    %1119 = memref.load %arg2[%1118, %c1_200] : memref<32x9xf32, #tpu.memory_space<smem>>
    %1120 = arith.index_cast %1115 : i32 to index
    %c2_201 = arith.constant 2 : index
    %1121 = memref.load %arg2[%1120, %c2_201] : memref<32x9xf32, #tpu.memory_space<smem>>
    %1122 = arith.index_cast %1115 : i32 to index
    %c3_202 = arith.constant 3 : index
    %1123 = memref.load %arg2[%1122, %c3_202] : memref<32x9xf32, #tpu.memory_space<smem>>
    %1124 = arith.index_cast %1115 : i32 to index
    %c4_203 = arith.constant 4 : index
    %1125 = memref.load %arg2[%1124, %c4_203] : memref<32x9xf32, #tpu.memory_space<smem>>
    %1126 = arith.index_cast %1115 : i32 to index
    %c5_204 = arith.constant 5 : index
    %1127 = memref.load %arg2[%1126, %c5_204] : memref<32x9xf32, #tpu.memory_space<smem>>
    %1128 = arith.index_cast %1115 : i32 to index
    %c6_205 = arith.constant 6 : index
    %1129 = memref.load %arg2[%1128, %c6_205] : memref<32x9xf32, #tpu.memory_space<smem>>
    %1130 = arith.index_cast %1115 : i32 to index
    %c7_206 = arith.constant 7 : index
    %1131 = memref.load %arg2[%1130, %c7_206] : memref<32x9xf32, #tpu.memory_space<smem>>
    %1132 = arith.index_cast %1115 : i32 to index
    %c8_207 = arith.constant 8 : index
    %1133 = memref.load %arg2[%1132, %c8_207] : memref<32x9xf32, #tpu.memory_space<smem>>
    %1134 = arith.index_cast %1115 : i32 to index
    %1135 = memref.load %arg3[%1134] : memref<32xf32, #tpu.memory_space<smem>>
    %1136 = vector.extract_strided_slice %3 {offsets = [0, 0, 0], sizes = [1, 2, 676], strides = [1, 1, 1]} : vector<9x2x676xf32> to vector<1x2x676xf32>
    %1137 = vector.shape_cast %1136 : vector<1x2x676xf32> to vector<2x676xf32>
    %1138 = vector.broadcast %1117 : f32 to vector<2x676xf32>
    %1139 = arith.mulf %1138, %1137 : vector<2x676xf32>
    %1140 = vector.extract_strided_slice %3 {offsets = [1, 0, 0], sizes = [1, 2, 676], strides = [1, 1, 1]} : vector<9x2x676xf32> to vector<1x2x676xf32>
    %1141 = vector.shape_cast %1140 : vector<1x2x676xf32> to vector<2x676xf32>
    %1142 = vector.broadcast %1119 : f32 to vector<2x676xf32>
    %1143 = arith.mulf %1142, %1141 : vector<2x676xf32>
    %1144 = arith.addf %1139, %1143 : vector<2x676xf32>
    %1145 = vector.extract_strided_slice %3 {offsets = [2, 0, 0], sizes = [1, 2, 676], strides = [1, 1, 1]} : vector<9x2x676xf32> to vector<1x2x676xf32>
    %1146 = vector.shape_cast %1145 : vector<1x2x676xf32> to vector<2x676xf32>
    %1147 = vector.broadcast %1121 : f32 to vector<2x676xf32>
    %1148 = arith.mulf %1147, %1146 : vector<2x676xf32>
    %1149 = arith.addf %1144, %1148 : vector<2x676xf32>
    %1150 = vector.extract_strided_slice %3 {offsets = [3, 0, 0], sizes = [1, 2, 676], strides = [1, 1, 1]} : vector<9x2x676xf32> to vector<1x2x676xf32>
    %1151 = vector.shape_cast %1150 : vector<1x2x676xf32> to vector<2x676xf32>
    %1152 = vector.broadcast %1123 : f32 to vector<2x676xf32>
    %1153 = arith.mulf %1152, %1151 : vector<2x676xf32>
    %1154 = arith.addf %1149, %1153 : vector<2x676xf32>
    %1155 = vector.extract_strided_slice %3 {offsets = [4, 0, 0], sizes = [1, 2, 676], strides = [1, 1, 1]} : vector<9x2x676xf32> to vector<1x2x676xf32>
    %1156 = vector.shape_cast %1155 : vector<1x2x676xf32> to vector<2x676xf32>
    %1157 = vector.broadcast %1125 : f32 to vector<2x676xf32>
    %1158 = arith.mulf %1157, %1156 : vector<2x676xf32>
    %1159 = arith.addf %1154, %1158 : vector<2x676xf32>
    %1160 = vector.extract_strided_slice %3 {offsets = [5, 0, 0], sizes = [1, 2, 676], strides = [1, 1, 1]} : vector<9x2x676xf32> to vector<1x2x676xf32>
    %1161 = vector.shape_cast %1160 : vector<1x2x676xf32> to vector<2x676xf32>
    %1162 = vector.broadcast %1127 : f32 to vector<2x676xf32>
    %1163 = arith.mulf %1162, %1161 : vector<2x676xf32>
    %1164 = arith.addf %1159, %1163 : vector<2x676xf32>
    %1165 = vector.extract_strided_slice %3 {offsets = [6, 0, 0], sizes = [1, 2, 676], strides = [1, 1, 1]} : vector<9x2x676xf32> to vector<1x2x676xf32>
    %1166 = vector.shape_cast %1165 : vector<1x2x676xf32> to vector<2x676xf32>
    %1167 = vector.broadcast %1129 : f32 to vector<2x676xf32>
    %1168 = arith.mulf %1167, %1166 : vector<2x676xf32>
    %1169 = arith.addf %1164, %1168 : vector<2x676xf32>
    %1170 = vector.extract_strided_slice %3 {offsets = [7, 0, 0], sizes = [1, 2, 676], strides = [1, 1, 1]} : vector<9x2x676xf32> to vector<1x2x676xf32>
    %1171 = vector.shape_cast %1170 : vector<1x2x676xf32> to vector<2x676xf32>
    %1172 = vector.broadcast %1131 : f32 to vector<2x676xf32>
    %1173 = arith.mulf %1172, %1171 : vector<2x676xf32>
    %1174 = arith.addf %1169, %1173 : vector<2x676xf32>
    %1175 = vector.extract_strided_slice %3 {offsets = [8, 0, 0], sizes = [1, 2, 676], strides = [1, 1, 1]} : vector<9x2x676xf32> to vector<1x2x676xf32>
    %1176 = vector.shape_cast %1175 : vector<1x2x676xf32> to vector<2x676xf32>
    %1177 = vector.broadcast %1133 : f32 to vector<2x676xf32>
    %1178 = arith.mulf %1177, %1176 : vector<2x676xf32>
    %1179 = arith.addf %1174, %1178 : vector<2x676xf32>
    %1180 = vector.broadcast %1135 : f32 to vector<2x676xf32>
    %1181 = arith.addf %1179, %1180 : vector<2x676xf32>
    %cst_208 = arith.constant 0.000000e+00 : f32
    %1182 = vector.broadcast %cst_208 : f32 to vector<2x676xf32>
    %1183 = arith.maximumf %1181, %1182 : vector<2x676xf32>
    %1184 = arith.truncf %1183 : vector<2x676xf32> to vector<2x676xbf16>
    %c15 = arith.constant 15 : index
    %c0_209 = arith.constant 0 : index
    %c0_210 = arith.constant 0 : index
    %1185 = vector.load %arg10[%c15, %c0_209, %c0_210] : memref<16x2x676xbf16, #tpu.memory_space<vmem>>, vector<1x2x676xbf16>
    %1186 = vector.shape_cast %1185 : vector<1x2x676xbf16> to vector<2x676xbf16>
    %1187 = vector.shape_cast %1184 : vector<2x676xbf16> to vector<1x2x676xbf16>
    tpu.vector_store %arg10[%c15, %c0_209, %c0_210], %1187 {strides = array<i32>} : memref<16x2x676xbf16, #tpu.memory_space<vmem>>, vector<1x2x676xbf16>,
    %c0_211 = arith.constant 0 : index
    %c0_212 = arith.constant 0 : index
    %c0_213 = arith.constant 0 : index
    %1188 = vector.load %arg10[%c0_211, %c0_212, %c0_213] : memref<16x2x676xbf16, #tpu.memory_space<vmem>>, vector<16x2x676xbf16>
    %c0_214 = arith.constant 0 : index
    %c0_215 = arith.constant 0 : index
    %c0_216 = arith.constant 0 : index
    %1189 = vector.load %arg4[%c0_214, %c0_215, %c0_216] : memref<16x676x128xbf16, #tpu.memory_space<vmem>>, vector<16x676x128xbf16>
    "tpu.trace_start"() <{level = 10 : i32, message = "cbp,cph->cbh"}> : () -> ()
    %cst_217 = arith.constant dense<0.000000e+00> : vector<16x2x128xf32>
    %1190 = tpu.matmul %1188, %1189, %cst_217 {dimension_numbers = #tpu.dot_dimension_numbers<[2], [1], [1], [2], [0, 0, 0, 1, 1, 2], [0], [0]>} : vector<16x2x676xbf16>, vector<16x676x128xbf16>, vector<16x2x128xf32> -> vector<16x2x128xf32>
    "tpu.trace_stop"() : () -> ()
    %c0_218 = arith.constant 0 : index
    %c0_219 = arith.constant 0 : index
    %1191 = vector.load %arg9[%c0_218, %c0_219] : memref<2x128xf32, #tpu.memory_space<vmem>>, vector<2x128xf32>
    %cst_220 = arith.constant dense<0.000000e+00> : vector<2x128xf32>
    %1192 = vector.multi_reduction <add>, %1190, %cst_220 [0] : vector<16x2x128xf32> to vector<2x128xf32>
    %1193 = arith.addf %1191, %1192 : vector<2x128xf32>
    %c0_221 = arith.constant 0 : index
    %c0_222 = arith.constant 0 : index
    %1194 = vector.load %arg9[%c0_221, %c0_222] : memref<2x128xf32, #tpu.memory_space<vmem>>, vector<2x128xf32>
    tpu.vector_store %arg9[%c0_221, %c0_222], %1193 {strides = array<i32>} : memref<2x128xf32, #tpu.memory_space<vmem>>, vector<2x128xf32>,
    %c1_i32_223 = arith.constant 1 : i32
    %1195 = arith.cmpi eq, %arg0, %c1_i32_223 : i32
    %1196 = arith.extui %1195 : i1 to i32
    %c0_i32_224 = arith.constant 0 : i32
    %1197 = arith.cmpi ne, %1196, %c0_i32_224 : i32
    scf.if %1197 {
      %c0_225 = arith.constant 0 : index
      %c0_226 = arith.constant 0 : index
      %1198 = vector.load %arg9[%c0_225, %c0_226] : memref<2x128xf32, #tpu.memory_space<vmem>>, vector<2x128xf32>
      %c0_227 = arith.constant 0 : index
      %c0_228 = arith.constant 0 : index
      %1199 = vector.load %arg5[%c0_227, %c0_228] : memref<1x128xf32, #tpu.memory_space<vmem>>, vector<1x128xf32>
      %1200 = vector.broadcast %1199 : vector<1x128xf32> to vector<2x128xf32>
      %1201 = arith.addf %1198, %1200 : vector<2x128xf32>
      %cst_229 = arith.constant 0.000000e+00 : f32
      %1202 = vector.broadcast %cst_229 : f32 to vector<2x128xf32>
      %1203 = arith.maximumf %1201, %1202 : vector<2x128xf32>
      %c0_230 = arith.constant 0 : index
      %c0_231 = arith.constant 0 : index
      %1204 = vector.load %arg6[%c0_230, %c0_231] : memref<128x10xf32, #tpu.memory_space<vmem>>, vector<128x10xf32>
      %cst_232 = arith.constant dense<0.000000e+00> : vector<2x10xf32>
      %1205 = tpu.matmul %1203, %1204, %cst_232 {dimension_numbers = #tpu.dot_dimension_numbers<[1], [0], [0], [1], [0, 0, 1, 1], [], []>} : vector<2x128xf32>, vector<128x10xf32>, vector<2x10xf32> -> vector<2x10xf32>
      %c0_233 = arith.constant 0 : index
      %c0_234 = arith.constant 0 : index
      %1206 = vector.load %arg7[%c0_233, %c0_234] : memref<1x10xf32, #tpu.memory_space<vmem>>, vector<1x10xf32>
      %1207 = vector.broadcast %1206 : vector<1x10xf32> to vector<2x10xf32>
      %1208 = arith.addf %1205, %1207 : vector<2x10xf32>
      %c0_235 = arith.constant 0 : index
      %c0_236 = arith.constant 0 : index
      %1209 = vector.load %arg8[%c0_235, %c0_236] : memref<2x10xf32, #tpu.memory_space<vmem>>, vector<2x10xf32>
      tpu.vector_store %arg8[%c0_235, %c0_236], %1208 {strides = array<i32>} : memref<2x10xf32, #tpu.memory_space<vmem>>, vector<2x10xf32>,
    } else {
    }
    return
  }
  func.func @transform_0(%arg0: i32) -> (i32, i32, i32) {
    %c0_i32 = arith.constant 0 : i32
    %c0_i32_0 = arith.constant 0 : i32
    %c0_i32_1 = arith.constant 0 : i32
    %c0_i32_2 = arith.constant 0 : i32
    return %c0_i32, %c0_i32_0, %c0_i32_1 : i32, i32, i32
  }
  func.func @transform_1(%arg0: i32) -> (i32, i32) {
    %c0_i32 = arith.constant 0 : i32
    %c0_i32_0 = arith.constant 0 : i32
    %c0_i32_1 = arith.constant 0 : i32
    return %c0_i32, %c0_i32_0 : i32, i32
  }
  func.func @transform_2(%arg0: i32) -> i32 {
    %c0_i32 = arith.constant 0 : i32
    %c0_i32_0 = arith.constant 0 : i32
    return %c0_i32 : i32
  }
  func.func @transform_3(%arg0: i32) -> (i32, i32, i32) {
    %c0_i32 = arith.constant 0 : i32
    %c0_i32_0 = arith.constant 0 : i32
    %c0_i32_1 = arith.constant 0 : i32
    return %arg0, %c0_i32, %c0_i32_0 : i32, i32, i32
  }
  func.func @transform_4(%arg0: i32) -> (i32, i32) {
    %c0_i32 = arith.constant 0 : i32
    %c0_i32_0 = arith.constant 0 : i32
    %c0_i32_1 = arith.constant 0 : i32
    return %c0_i32, %c0_i32_0 : i32, i32
  }
  func.func @transform_5(%arg0: i32) -> (i32, i32) {
    %c0_i32 = arith.constant 0 : i32
    %c0_i32_0 = arith.constant 0 : i32
    %c0_i32_1 = arith.constant 0 : i32
    return %c0_i32, %c0_i32_0 : i32, i32
  }
  func.func @transform_6(%arg0: i32) -> (i32, i32) {
    %c0_i32 = arith.constant 0 : i32
    %c0_i32_0 = arith.constant 0 : i32
    %c0_i32_1 = arith.constant 0 : i32
    return %c0_i32, %c0_i32_0 : i32, i32
  }
  func.func @transform_7(%arg0: i32) -> (i32, i32) {
    %c0_i32 = arith.constant 0 : i32
    %c0_i32_0 = arith.constant 0 : i32
    %c0_i32_1 = arith.constant 0 : i32
    return %c0_i32, %c0_i32_0 : i32, i32
  }
}

</mosaic_0001>

<llo_original>
// kernel: squeeze.17
$region0: #{squeeze.17}
  %s0 = inlined_call_operand.vmem [shape: f32[2,26,26], index: 0, kind: input, shape index: {}]
  %s1 = inlined_call_operand.vmem [shape: f32[1,2,676], index: 1, kind: output, shape index: {}]
  $region1: #{squeeze.17} parent=0
    #allocation0 [shape = 'u8[24576]{0}', space=vmem, size = 0x6000, scoped, tag = 'scoped mem for output reshape']
    %v2 = vld [vmem:[%s0] sm:$0x1]
    %s3 = scalar_lea.vmem %s0, 31
    %v4 = vld [vmem:[%s3] sm:$0x2]
    %vm5 = vcmask 1041409
    %v6 = vsel %vm5, %v4, %v2
    %vm7 = vcmask 211968
    %8 = vst.msk [vmem:[#allocation0] sm:$0x3] %vm7, %v6
    %s9 = scalar_lea.vmem %s0, 24
    %v10 = vld [vmem:[%s9] sm:$0x1]
    %s11 = scalar_lea.vmem %s0, 55
    %v12 = vld [vmem:[%s11] sm:$0x2]
    %vm13 = vcmask 1041409
    %v14 = vsel %vm13, %v12, %v10
    %s15 = scalar_lea.vmem %s0, 24
    %v16 = vld [vmem:[%s15] sm:$0x1]
    %s17 = scalar_lea.vmem %s0, 55
    %v18 = vld [vmem:[%s17] sm:$0x2]
    %vm19 = vcmask 1041409
    %v20 = vsel %vm19, %v18, %v16
    %vm21 = vcmask 130048
    %v22 = vsel %vm21, %v20, %v14
    %23 = vrot.lane.b32.xlu0 %v22, 112
    %v24 = vpop.permute.xlu0 %23
    %vm25 = vcmask 80896
    %s26 = scalar_lea.vmem [#allocation0], 40
    %27 = vst.msk [vmem:[%s26] sm:$0x3] %vm25, %v24
    %vm28 = vcmask 1048448
    %s29 = scalar_lea.vmem [#allocation0], 32
    %30 = vst.msk [vmem:[%s29] sm:$0x3] %vm28, %v24
    %s31 = scalar_lea.vmem %s0, 19
    %v32 = vld [vmem:[%s31] sm:$0x1]
    %s33 = scalar_lea.vmem %s0, 50
    %v34 = vld [vmem:[%s33] sm:$0x2]
    %vm35 = vcmask 1041409
    %v36 = vsel %vm35, %v34, %v32
    %s37 = scalar_lea.vmem %s0, 19
    %v38 = vld [vmem:[%s37] sm:$0x1]
    %s39 = scalar_lea.vmem %s0, 50
    %v40 = vld [vmem:[%s39] sm:$0x2]
    %vm41 = vcmask 1041409
    %v42 = vsel %vm41, %v40, %v38
    %vm43 = vcmask 146432
    %v44 = vsel %vm43, %v42, %v36
    %45 = vrot.lane.b32.xlu0 %v44, 110
    %v46 = vpop.permute.xlu0 %45
    %vm47 = vcmask 64512
    %s48 = scalar_lea.vmem [#allocation0], 32
    %49 = vst.msk [vmem:[%s48] sm:$0x3] %vm47, %v46
    %vm50 = vcmask 1048432
    %s51 = scalar_lea.vmem [#allocation0], 24
    %52 = vst.msk [vmem:[%s51] sm:$0x3] %vm50, %v46
    %s53 = scalar_lea.vmem %s0, 14
    %v54 = vld [vmem:[%s53] sm:$0x1]
    %s55 = scalar_lea.vmem %s0, 45
    %v56 = vld [vmem:[%s55] sm:$0x2]
    %vm57 = vcmask 1041409
    %v58 = vsel %vm57, %v56, %v54
    %s59 = scalar_lea.vmem %s0, 14
    %v60 = vld [vmem:[%s59] sm:$0x1]
    %s61 = scalar_lea.vmem %s0, 45
    %v62 = vld [vmem:[%s61] sm:$0x2]
    %vm63 = vcmask 1041409
    %v64 = vsel %vm63, %v62, %v60
    %vm65 = vcmask 162816
    %v66 = vsel %vm65, %v64, %v58
    %67 = vrot.lane.b32.xlu0 %v66, 108
    %v68 = vpop.permute.xlu0 %67
    %vm69 = vcmask 48128
    %s70 = scalar_lea.vmem [#allocation0], 24
    %71 = vst.msk [vmem:[%s70] sm:$0x3] %vm69, %v68
    %vm72 = vcmask 1048416
    %s73 = scalar_lea.vmem [#allocation0], 16
    %74 = vst.msk [vmem:[%s73] sm:$0x3] %vm72, %v68
    %s75 = scalar_lea.vmem %s0, 9
    %v76 = vld [vmem:[%s75] sm:$0x1]
    %s77 = scalar_lea.vmem %s0, 40
    %v78 = vld [vmem:[%s77] sm:$0x2]
    %vm79 = vcmask 1041409
    %v80 = vsel %vm79, %v78, %v76
    %s81 = scalar_lea.vmem %s0, 9
    %v82 = vld [vmem:[%s81] sm:$0x1]
    %s83 = scalar_lea.vmem %s0, 40
    %v84 = vld [vmem:[%s83] sm:$0x2]
    %vm85 = vcmask 1041409
    %v86 = vsel %vm85, %v84, %v82
    %vm87 = vcmask 179200
    %v88 = vsel %vm87, %v86, %v80
    %89 = vrot.lane.b32.xlu0 %v88, 106
    %v90 = vpop.permute.xlu0 %89
    %vm91 = vcmask 31744
    %s92 = scalar_lea.vmem [#allocation0], 16
    %93 = vst.msk [vmem:[%s92] sm:$0x3] %vm91, %v90
    %vm94 = vcmask 1048400
    %s95 = scalar_lea.vmem [#allocation0], 8
    %96 = vst.msk [vmem:[%s95] sm:$0x3] %vm94, %v90
    %s97 = scalar_lea.vmem %s0, 4
    %v98 = vld [vmem:[%s97] sm:$0x1]
    %s99 = scalar_lea.vmem %s0, 35
    %v100 = vld [vmem:[%s99] sm:$0x2]
    %vm101 = vcmask 1041409
    %v102 = vsel %vm101, %v100, %v98
    %s103 = scalar_lea.vmem %s0, 4
    %v104 = vld [vmem:[%s103] sm:$0x1]
    %s105 = scalar_lea.vmem %s0, 35
    %v106 = vld [vmem:[%s105] sm:$0x2]
    %vm107 = vcmask 1041409
    %v108 = vsel %vm107, %v106, %v104
    %vm109 = vcmask 195584
    %v110 = vsel %vm109, %v108, %v102
    %111 = vrot.lane.b32.xlu0 %v110, 104
    %v112 = vpop.permute.xlu0 %111
    %vm113 = vcmask 15360
    %s114 = scalar_lea.vmem [#allocation0], 8
    %115 = vst.msk [vmem:[%s114] sm:$0x3] %vm113, %v112
    %vm116 = vcmask 1048384
    %117 = vst.msk [vmem:[#allocation0] sm:$0x3] %vm116, %v112
    %s118 = scalar_lea.vmem %s0, 23
    %v119 = vld [vmem:[%s118] sm:$0x1]
    %s120 = scalar_lea.vmem %s0, 54
    %v121 = vld [vmem:[%s120] sm:$0x2]
    %vm122 = vcmask 1041409
    %v123 = vsel %vm122, %v121, %v119
    %124 = vrot.lane.b32.xlu0 %v123, 86
    %v125 = vpop.permute.xlu0 %124
    %vm126 = vcmask 917168
    %s127 = scalar_lea.vmem [#allocation0], 32
    %128 = vst.msk [vmem:[%s127] sm:$0x3] %vm126, %v125
    %s129 = scalar_lea.vmem %s0, 18
    %v130 = vld [vmem:[%s129] sm:$0x1]
    %s131 = scalar_lea.vmem %s0, 49
    %v132 = vld [vmem:[%s131] sm:$0x2]
    %vm133 = vcmask 1041409
    %v134 = vsel %vm133, %v132, %v130
    %135 = vrot.lane.b32.xlu0 %v134, 84
    %v136 = vpop.permute.xlu0 %135
    %vm137 = vcmask 900768
    %s138 = scalar_lea.vmem [#allocation0], 24
    %139 = vst.msk [vmem:[%s138] sm:$0x3] %vm137, %v136
    %s140 = scalar_lea.vmem %s0, 13
    %v141 = vld [vmem:[%s140] sm:$0x1]
    %s142 = scalar_lea.vmem %s0, 44
    %v143 = vld [vmem:[%s142] sm:$0x2]
    %vm144 = vcmask 1041409
    %v145 = vsel %vm144, %v143, %v141
    %146 = vrot.lane.b32.xlu0 %v145, 82
    %v147 = vpop.permute.xlu0 %146
    %vm148 = vcmask 884368
    %s149 = scalar_lea.vmem [#allocation0], 16
    %150 = vst.msk [vmem:[%s149] sm:$0x3] %vm148, %v147
    %s151 = scalar_lea.vmem %s0, 8
    %v152 = vld [vmem:[%s151] sm:$0x1]
    %s153 = scalar_lea.vmem %s0, 39
    %v154 = vld [vmem:[%s153] sm:$0x2]
    %vm155 = vcmask 1041409
    %v156 = vsel %vm155, %v154, %v152
    %157 = vrot.lane.b32.xlu0 %v156, 80
    %v158 = vpop.permute.xlu0 %157
    %vm159 = vcmask 867968
    %s160 = scalar_lea.vmem [#allocation0], 8
    %161 = vst.msk [vmem:[%s160] sm:$0x3] %vm159, %v158
    %s162 = scalar_lea.vmem %s0, 3
    %v163 = vld [vmem:[%s162] sm:$0x1]
    %s164 = scalar_lea.vmem %s0, 34
    %v165 = vld [vmem:[%s164] sm:$0x2]
    %vm166 = vcmask 1041409
    %v167 = vsel %vm166, %v165, %v163
    %168 = vrot.lane.b32.xlu0 %v167, 78
    %v169 = vpop.permute.xlu0 %168
    %vm170 = vcmask 851568
    %171 = vst.msk [vmem:[#allocation0] sm:$0x3] %vm170, %v169
    %s172 = scalar_lea.vmem %s0, 22
    %v173 = vld [vmem:[%s172] sm:$0x1]
    %s174 = scalar_lea.vmem %s0, 53
    %v175 = vld [vmem:[%s174] sm:$0x2]
    %vm176 = vcmask 1041409
    %v177 = vsel %vm176, %v175, %v173
    %178 = vrot.lane.b32.xlu0 %v177, 60
    %v179 = vpop.permute.xlu0 %178
    %vm180 = vcmask 703968
    %s181 = scalar_lea.vmem [#allocation0], 32
    %182 = vst.msk [vmem:[%s181] sm:$0x3] %vm180, %v179
    %s183 = scalar_lea.vmem %s0, 17
    %v184 = vld [vmem:[%s183] sm:$0x1]
    %s185 = scalar_lea.vmem %s0, 48
    %v186 = vld [vmem:[%s185] sm:$0x2]
    %vm187 = vcmask 1041409
    %v188 = vsel %vm187, %v186, %v184
    %189 = vrot.lane.b32.xlu0 %v188, 58
    %v190 = vpop.permute.xlu0 %189
    %vm191 = vcmask 687568
    %s192 = scalar_lea.vmem [#allocation0], 24
    %193 = vst.msk [vmem:[%s192] sm:$0x3] %vm191, %v190
    %s194 = scalar_lea.vmem %s0, 12
    %v195 = vld [vmem:[%s194] sm:$0x1]
    %s196 = scalar_lea.vmem %s0, 43
    %v197 = vld [vmem:[%s196] sm:$0x2]
    %vm198 = vcmask 1041409
    %v199 = vsel %vm198, %v197, %v195
    %200 = vrot.lane.b32.xlu0 %v199, 56
    %v201 = vpop.permute.xlu0 %200
    %vm202 = vcmask 671168
    %s203 = scalar_lea.vmem [#allocation0], 16
    %204 = vst.msk [vmem:[%s203] sm:$0x3] %vm202, %v201
    %s205 = scalar_lea.vmem %s0, 7
    %v206 = vld [vmem:[%s205] sm:$0x1]
    %s207 = scalar_lea.vmem %s0, 38
    %v208 = vld [vmem:[%s207] sm:$0x2]
    %vm209 = vcmask 1041409
    %v210 = vsel %vm209, %v208, %v206
    %211 = vrot.lane.b32.xlu0 %v210, 54
    %v212 = vpop.permute.xlu0 %211
    %vm213 = vcmask 654768
    %s214 = scalar_lea.vmem [#allocation0], 8
    %215 = vst.msk [vmem:[%s214] sm:$0x3] %vm213, %v212
    %s216 = scalar_lea.vmem %s0, 2
    %v217 = vld [vmem:[%s216] sm:$0x1]
    %s218 = scalar_lea.vmem %s0, 33
    %v219 = vld [vmem:[%s218] sm:$0x2]
    %vm220 = vcmask 1041409
    %v221 = vsel %vm220, %v219, %v217
    %222 = vrot.lane.b32.xlu0 %v221, 52
    %v223 = vpop.permute.xlu0 %222
    %vm224 = vcmask 638368
    %225 = vst.msk [vmem:[#allocation0] sm:$0x3] %vm224, %v223
    %s226 = scalar_lea.vmem %s0, 21
    %v227 = vld [vmem:[%s226] sm:$0x1]
    %s228 = scalar_lea.vmem %s0, 52
    %v229 = vld [vmem:[%s228] sm:$0x2]
    %vm230 = vcmask 1041409
    %v231 = vsel %vm230, %v229, %v227
    %232 = vrot.lane.b32.xlu0 %v231, 34
    %v233 = vpop.permute.xlu0 %232
    %vm234 = vcmask 490768
    %s235 = scalar_lea.vmem [#allocation0], 32
    %236 = vst.msk [vmem:[%s235] sm:$0x3] %vm234, %v233
    %s237 = scalar_lea.vmem %s0, 16
    %v238 = vld [vmem:[%s237] sm:$0x1]
    %s239 = scalar_lea.vmem %s0, 47
    %v240 = vld [vmem:[%s239] sm:$0x2]
    %vm241 = vcmask 1041409
    %v242 = vsel %vm241, %v240, %v238
    %243 = vrot.lane.b32.xlu0 %v242, 32
    %v244 = vpop.permute.xlu0 %243
    %vm245 = vcmask 474368
    %s246 = scalar_lea.vmem [#allocation0], 24
    %247 = vst.msk [vmem:[%s246] sm:$0x3] %vm245, %v244
    %s248 = scalar_lea.vmem %s0, 11
    %v249 = vld [vmem:[%s248] sm:$0x1]
    %s250 = scalar_lea.vmem %s0, 42
    %v251 = vld [vmem:[%s250] sm:$0x2]
    %vm252 = vcmask 1041409
    %v253 = vsel %vm252, %v251, %v249
    %254 = vrot.lane.b32.xlu0 %v253, 30
    %v255 = vpop.permute.xlu0 %254
    %vm256 = vcmask 457968
    %s257 = scalar_lea.vmem [#allocation0], 16
    %258 = vst.msk [vmem:[%s257] sm:$0x3] %vm256, %v255
    %s259 = scalar_lea.vmem %s0, 6
    %v260 = vld [vmem:[%s259] sm:$0x1]
    %s261 = scalar_lea.vmem %s0, 37
    %v262 = vld [vmem:[%s261] sm:$0x2]
    %vm263 = vcmask 1041409
    %v264 = vsel %vm263, %v262, %v260
    %265 = vrot.lane.b32.xlu0 %v264, 28
    %v266 = vpop.permute.xlu0 %265
    %vm267 = vcmask 441568
    %s268 = scalar_lea.vmem [#allocation0], 8
    %269 = vst.msk [vmem:[%s268] sm:$0x3] %vm267, %v266
    %s270 = scalar_lea.vmem %s0, 1
    %v271 = vld [vmem:[%s270] sm:$0x1]
    %s272 = scalar_lea.vmem %s0, 32
    %v273 = vld [vmem:[%s272] sm:$0x2]
    %vm274 = vcmask 1041409
    %v275 = vsel %vm274, %v273, %v271
    %276 = vrot.lane.b32.xlu0 %v275, 26
    %v277 = vpop.permute.xlu0 %276
    %vm278 = vcmask 425168
    %279 = vst.msk [vmem:[#allocation0] sm:$0x3] %vm278, %v277
    %s280 = scalar_lea.vmem %s0, 25
    %v281 = vld [vmem:[%s280] sm:$0x1]
    %s282 = scalar_lea.vmem %s0, 56
    %v283 = vld [vmem:[%s282] sm:$0x2]
    %vm284 = vcmask 1041409
    %v285 = vsel %vm284, %v283, %v281
    %286 = vrot.lane.b32.xlu0 %v285, 10
    %v287 = vpop.permute.xlu0 %286
    %vm288 = vcmask 293968
    %s289 = scalar_lea.vmem [#allocation0], 40
    %290 = vst.msk [vmem:[%s289] sm:$0x3] %vm288, %v287
    %s291 = scalar_lea.vmem %s0, 20
    %v292 = vld [vmem:[%s291] sm:$0x1]
    %s293 = scalar_lea.vmem %s0, 51
    %v294 = vld [vmem:[%s293] sm:$0x2]
    %vm295 = vcmask 1041409
    %v296 = vsel %vm295, %v294, %v292
    %297 = vrot.lane.b32.xlu0 %v296, 8
    %v298 = vpop.permute.xlu0 %297
    %vm299 = vcmask 277568
    %s300 = scalar_lea.vmem [#allocation0], 32
    %301 = vst.msk [vmem:[%s300] sm:$0x3] %vm299, %v298
    %s302 = scalar_lea.vmem %s0, 15
    %v303 = vld [vmem:[%s302] sm:$0x1]
    %s304 = scalar_lea.vmem %s0, 46
    %v305 = vld [vmem:[%s304] sm:$0x2]
    %vm306 = vcmask 1041409
    %v307 = vsel %vm306, %v305, %v303
    %308 = vrot.lane.b32.xlu0 %v307, 6
    %v309 = vpop.permute.xlu0 %308
    %vm310 = vcmask 261168
    %s311 = scalar_lea.vmem [#allocation0], 24
    %312 = vst.msk [vmem:[%s311] sm:$0x3] %vm310, %v309
    %s313 = scalar_lea.vmem %s0, 10
    %v314 = vld [vmem:[%s313] sm:$0x1]
    %s315 = scalar_lea.vmem %s0, 41
    %v316 = vld [vmem:[%s315] sm:$0x2]
    %vm317 = vcmask 1041409
    %v318 = vsel %vm317, %v316, %v314
    %319 = vrot.lane.b32.xlu0 %v318, 4
    %v320 = vpop.permute.xlu0 %319
    %vm321 = vcmask 244768
    %s322 = scalar_lea.vmem [#allocation0], 16
    %323 = vst.msk [vmem:[%s322] sm:$0x3] %vm321, %v320
    %s324 = scalar_lea.vmem %s0, 5
    %v325 = vld [vmem:[%s324] sm:$0x1]
    %s326 = scalar_lea.vmem %s0, 36
    %v327 = vld [vmem:[%s326] sm:$0x2]
    %vm328 = vcmask 1041409
    %v329 = vsel %vm328, %v327, %v325
    %330 = vrot.lane.b32.xlu0 %v329, 2
    %v331 = vpop.permute.xlu0 %330
    %vm332 = vcmask 228368
    %s333 = scalar_lea.vmem [#allocation0], 8
    %334 = vst.msk [vmem:[%s333] sm:$0x3] %vm332, %v331
    %s336 = ssub.s32 4, 1
    %v337 = vld [vmem:[#allocation0] sm:%s336]
    %s339 = ssub.s32 4, 1
    %340 = vst [vmem:[%s1] sm:%s339] %v337
    %s341 = scalar_lea.vmem [#allocation0], 8
    %v342 = vld [vmem:[%s341] sm:%s336]
    %s344 = ssub.s32 4, 1
    %s345 = scalar_lea.vmem %s1, 2
    %346 = vst [vmem:[%s345] sm:%s344] %v342
    %s347 = scalar_lea.vmem [#allocation0], 16
    %v348 = vld [vmem:[%s347] sm:%s336]
    %s350 = ssub.s32 4, 1
    %s351 = scalar_lea.vmem %s1, 4
    %352 = vst [vmem:[%s351] sm:%s350] %v348
    %s353 = scalar_lea.vmem [#allocation0], 24
    %v354 = vld [vmem:[%s353] sm:%s336]
    %s356 = ssub.s32 4, 1
    %s357 = scalar_lea.vmem %s1, 6
    %358 = vst [vmem:[%s357] sm:%s356] %v354
    %s359 = scalar_lea.vmem [#allocation0], 32
    %v360 = vld [vmem:[%s359] sm:%s336]
    %s362 = ssub.s32 4, 1
    %s363 = scalar_lea.vmem %s1, 8
    %364 = vst [vmem:[%s363] sm:%s362] %v360
    %s365 = scalar_lea.vmem [#allocation0], 40
    %v366 = vld [vmem:[%s365] sm:%s336]
    %s368 = ssub.s32 4, 1
    %s369 = scalar_lea.vmem %s1, 10
    %370 = vst [vmem:[%s369] sm:%s368] %v366

// kernel: cnn_forward.1
$region0: #{cnn_forward.1}
  #allocation0 [shape = 'u32[]', space=smem, size = 0x4, offset = 0x4, fixed_abs, tag = 'smem constant byte address 0x4 - core index']
  #allocation1 [shape = 'u32[72,128]{1,0:T(1,128)}', space=vmem, size = 0x9000, scoped, tag = 'internal scratch']
  #allocation2 [shape = 'f32[2,128]{1,0:T(2,128)}', space=vmem, size = 0x400, scoped, tag = 'scratch operand']
  #allocation3 [shape = 'bf16[16,2,676]{2,1,0:T(2,128)(2,1)}', space=vmem, size = 0xc000, scoped, tag = 'scratch operand']
  %s0 = inlined_call_operand.vmem [shape: f32[9,2,676], index: 0, kind: input, shape index: {}]
  %s1 = inlined_call_operand.vmem [shape: f32[32,9], index: 1, kind: input, shape index: {}]
  %s2 = inlined_call_operand.vmem [shape: f32[32], index: 2, kind: input, shape index: {}]
  %s3 = inlined_call_operand.vmem [shape: bf16[32,676,128], index: 3, kind: input, shape index: {}]
  %s4 = inlined_call_operand.vmem [shape: f32[1,128], index: 4, kind: input, shape index: {}]
  %s5 = inlined_call_operand.vmem [shape: f32[128,10], index: 5, kind: input, shape index: {}]
  %s6 = inlined_call_operand.vmem [shape: f32[1,10], index: 6, kind: input, shape index: {}]
  %s7 = inlined_call_operand.hbm [shape: f32[2,10], index: 7, kind: output, shape index: {}]
  %s8 = sld [smem:[#allocation0]]
  $region77: #{cnn_forward.1} parent=0
    _
  %s10 = ssub.s32 1, %s8
  %s11 = scalar_select 0, %s10, %s8
  $region1: #{cnn_forward.1} parent=0
    #allocation4 [shape = 'u8[16384]{0}', space=smem, size = 0x4000, scoped, tag = 'input window, operand 1, single buffered']
    #allocation5 [shape = 's32[2]{0}', space=sflag, size = 0x8, scoped, tag = 'scoped memory for cnn_forward.1']
    #allocation6 [shape = 's32[2]{0}', space=sflag, size = 0x8, scoped, tag = 'scoped memory for cnn_forward.1']
    #allocation7 [shape = 'u8[512]{0}', space=smem, size = 0x200, scoped, tag = 'input window, operand 2, single buffered']
    #allocation8 [shape = 's32[1]{0}', space=sflag, size = 0x4, scoped, tag = 'scoped memory for cnn_forward.1']
    #allocation9 [shape = 'u8[1024]{0}', space=vmem, size = 0x400, scoped, tag = 'output window, operand 0, single buffered']
    %12 = vsyncpa [#allocation6], 0
    %13 = vsyncpa [#allocation8], 0
    %14 = vsyncpa [#allocation5], 0
    loop: start=0, step=1, limit=4
    $region2: #{cnn_forward.1} parent=1 // loop_pre_header
      _
    $region3: #{cnn_forward.1} parent=1 // loop_header
      %s16 = sphi 0, %s20
      %p17 = scmp.ge.s32.totalorder %s16, 4
      %s24 = sphi 0, %s24
      %s26 = sphi 0, %s24
      %s27 = sphi 0, %s26
      %s41 = sphi 0, %s27
      %s45 = sphi 0, %s45
      %s47 = sphi 0, %s45
      %s48 = sphi 0, %s47
      %s62 = sphi 0, %s48
      %s66 = sphi 0, %s66
      %s68 = sphi 0, %s66
      %s69 = sphi 0, %s68
      %s83 = sphi 0, %s69
      %s89 = sphi 0, %s91
      %s92 = sphi 0, %s89
      %s93 = sphi 0, %s92
      %s109 = sphi 0, %s93
      %s113 = sphi 0, %s113
      %s115 = sphi 0, %s113
      %s116 = sphi 0, %s115
      %s130 = sphi 0, %s116
      %s134 = sphi 0, %s134
      %s136 = sphi 0, %s134
      %s137 = sphi 0, %s136
      %s151 = sphi 0, %s137
      %s155 = sphi 0, %s155
      %s157 = sphi 0, %s155
      %s158 = sphi 0, %s157
      %s172 = sphi 0, %s158
      %s176 = sphi 0, %s176
      %s178 = sphi 0, %s176
      %s179 = sphi 0, %s178
      %s193 = sphi 0, %s179
    $region4: #{cnn_forward.1} parent=1 // loop_header_branch
      %19 = sbr.rel (%p17) target = $region8
    $region5: #{cnn_forward.1} parent=1 // loop_body
      %s21 = ssub.s32 %s16, 1
      %s22 = ssub.s32 %s16, 2
      %s23 = sadd.s32 %s16, 1
      %s25 = sadd.s32 %s24, 1
      %p28 = scmp.eq.s32.totalorder %s16, 1
      %p29 = scmp.ne.s32.totalorder %s24, %s26
      %p30 = scmp.eq.s32.totalorder %s16, 0
      %p31 = por %p29, %p30
      %p32 = scmp.ne.s32.totalorder %s24, %s26
      %p33 = scmp.eq.s32.totalorder %s21, 1
      %p34 = por %p32, %p33
      %p35 = scmp.ne.s32.totalorder %s26, %s27
      %p36 = scmp.eq.s32.totalorder %s21, 0
      %p37 = por %p35, %p36
      %p38 = scmp.ne.s32.totalorder %s26, %s27
      %p39 = scmp.eq.s32.totalorder %s22, 1
      %p40 = por %p38, %p39
      %p42 = scmp.ne.s32.totalorder %s27, %s41
      %p43 = scmp.eq.s32.totalorder %s22, 0
      %p44 = por %p42, %p43
      %s46 = sadd.s32 %s45, 1
      %p49 = scmp.eq.s32.totalorder %s16, 1
      %p50 = scmp.ne.s32.totalorder %s45, %s47
      %p51 = scmp.eq.s32.totalorder %s16, 0
      %p52 = por %p50, %p51
      %p53 = scmp.ne.s32.totalorder %s45, %s47
      %p54 = scmp.eq.s32.totalorder %s21, 1
      %p55 = por %p53, %p54
      %p56 = scmp.ne.s32.totalorder %s47, %s48
      %p57 = scmp.eq.s32.totalorder %s21, 0
      %p58 = por %p56, %p57
      %p59 = scmp.ne.s32.totalorder %s47, %s48
      %p60 = scmp.eq.s32.totalorder %s22, 1
      %p61 = por %p59, %p60
      %p63 = scmp.ne.s32.totalorder %s48, %s62
      %p64 = scmp.eq.s32.totalorder %s22, 0
      %p65 = por %p63, %p64
      %s67 = sadd.s32 %s66, 1
      %p70 = scmp.eq.s32.totalorder %s16, 1
      %p71 = scmp.ne.s32.totalorder %s66, %s68
      %p72 = scmp.eq.s32.totalorder %s16, 0
      %p73 = por %p71, %p72
      %p74 = scmp.ne.s32.totalorder %s66, %s68
      %p75 = scmp.eq.s32.totalorder %s21, 1
      %p76 = por %p74, %p75
      %p77 = scmp.ne.s32.totalorder %s68, %s69
      %p78 = scmp.eq.s32.totalorder %s21, 0
      %p79 = por %p77, %p78
      %p80 = scmp.ne.s32.totalorder %s68, %s69
      %p81 = scmp.eq.s32.totalorder %s22, 1
      %p82 = por %p80, %p81
      %p84 = scmp.ne.s32.totalorder %s69, %s83
      %p85 = scmp.eq.s32.totalorder %s22, 0
      %p86 = por %p84, %p85
      %s87 = ssub.s32 %s16, %s23
      %p88 = scmp.eq.s32.totalorder %s87, 0
      %s90 = sadd.s32 %s89, 1
      %s91 = scalar_select %p88, %s89, %s90
      %p94 = pneg %p88
      %p95 = scmp.eq.s32.totalorder %s16, 1
      %p96 = por %p94, %p95
      %p97 = scmp.ne.s32.totalorder %s89, %s92
      %p98 = scmp.eq.s32.totalorder %s16, 0
      %p99 = por %p97, %p98
      %p100 = scmp.ne.s32.totalorder %s89, %s92
      %p101 = scmp.eq.s32.totalorder %s21, 1
      %p102 = por %p100, %p101
      %p103 = scmp.ne.s32.totalorder %s92, %s93
      %p104 = scmp.eq.s32.totalorder %s21, 0
      %p105 = por %p103, %p104
      %p106 = scmp.ne.s32.totalorder %s92, %s93
      %p107 = scmp.eq.s32.totalorder %s22, 1
      %p108 = por %p106, %p107
      %p110 = scmp.ne.s32.totalorder %s93, %s109
      %p111 = scmp.eq.s32.totalorder %s22, 0
      %p112 = por %p110, %p111
      %s114 = sadd.s32 %s113, 1
      %p117 = scmp.eq.s32.totalorder %s16, 1
      %p118 = scmp.ne.s32.totalorder %s113, %s115
      %p119 = scmp.eq.s32.totalorder %s16, 0
      %p120 = por %p118, %p119
      %p121 = scmp.ne.s32.totalorder %s113, %s115
      %p122 = scmp.eq.s32.totalorder %s21, 1
      %p123 = por %p121, %p122
      %p124 = scmp.ne.s32.totalorder %s115, %s116
      %p125 = scmp.eq.s32.totalorder %s21, 0
      %p126 = por %p124, %p125
      %p127 = scmp.ne.s32.totalorder %s115, %s116
      %p128 = scmp.eq.s32.totalorder %s22, 1
      %p129 = por %p127, %p128
      %p131 = scmp.ne.s32.totalorder %s116, %s130
      %p132 = scmp.eq.s32.totalorder %s22, 0
      %p133 = por %p131, %p132
      %s135 = sadd.s32 %s134, 1
      %p138 = scmp.eq.s32.totalorder %s16, 1
      %p139 = scmp.ne.s32.totalorder %s134, %s136
      %p140 = scmp.eq.s32.totalorder %s16, 0
      %p141 = por %p139, %p140
      %p142 = scmp.ne.s32.totalorder %s134, %s136
      %p143 = scmp.eq.s32.totalorder %s21, 1
      %p144 = por %p142, %p143
      %p145 = scmp.ne.s32.totalorder %s136, %s137
      %p146 = scmp.eq.s32.totalorder %s21, 0
      %p147 = por %p145, %p146
      %p148 = scmp.ne.s32.totalorder %s136, %s137
      %p149 = scmp.eq.s32.totalorder %s22, 1
      %p150 = por %p148, %p149
      %p152 = scmp.ne.s32.totalorder %s137, %s151
      %p153 = scmp.eq.s32.totalorder %s22, 0
      %p154 = por %p152, %p153
      %s156 = sadd.s32 %s155, 1
      %p159 = scmp.eq.s32.totalorder %s16, 1
      %p160 = scmp.ne.s32.totalorder %s155, %s157
      %p161 = scmp.eq.s32.totalorder %s16, 0
      %p162 = por %p160, %p161
      %p163 = scmp.ne.s32.totalorder %s155, %s157
      %p164 = scmp.eq.s32.totalorder %s21, 1
      %p165 = por %p163, %p164
      %p166 = scmp.ne.s32.totalorder %s157, %s158
      %p167 = scmp.eq.s32.totalorder %s21, 0
      %p168 = por %p166, %p167
      %p169 = scmp.ne.s32.totalorder %s157, %s158
      %p170 = scmp.eq.s32.totalorder %s22, 1
      %p171 = por %p169, %p170
      %p173 = scmp.ne.s32.totalorder %s158, %s172
      %p174 = scmp.eq.s32.totalorder %s22, 0
      %p175 = por %p173, %p174
      %s177 = sadd.s32 %s176, 1
      %p180 = scmp.eq.s32.totalorder %s16, 1
      %p181 = scmp.ne.s32.totalorder %s176, %s178
      %p182 = scmp.eq.s32.totalorder %s16, 0
      %p183 = por %p181, %p182
      %p184 = scmp.ne.s32.totalorder %s176, %s178
      %p185 = scmp.eq.s32.totalorder %s21, 1
      %p186 = por %p184, %p185
      %p187 = scmp.ne.s32.totalorder %s178, %s179
      %p188 = scmp.eq.s32.totalorder %s21, 0
      %p189 = por %p187, %p188
      %p190 = scmp.ne.s32.totalorder %s178, %s179
      %p191 = scmp.eq.s32.totalorder %s22, 1
      %p192 = por %p190, %p191
      %p194 = scmp.ne.s32.totalorder %s179, %s193
      %p195 = scmp.eq.s32.totalorder %s22, 0
      %p196 = por %p194, %p195
      %p197 = scmp.le.s32.totalorder 1, %s16
      %p198 = scmp.lt.s32.totalorder %s16, 3
      %p199 = pnand %p197, %p198
      %p200 = pneg %p199
      // Predicated region
      $region9: #{cnn_forward.1} parent=5 // pred_check
        _
      $region10: #{cnn_forward.1} parent=5 // pred_check_branch
        %202 = sbr.rel (%p199) target = $region12
      $region11: #{cnn_forward.1} parent=5 // pred_region
        %s203 = ssub.s32 %s16, 1
        // Predicated region
        $region13: #{cnn_forward.1} parent=11 // pred_check
          %p204 = pneg %p37
        $region14: #{cnn_forward.1} parent=11 // pred_check_branch
          %206 = sbr.rel (%p204) target = $region16
        $region15: #{cnn_forward.1} parent=11 // pred_region
          _
        $region16: #{cnn_forward.1} parent=11 // pred_fallthru
          _
        // Predicated region
        $region17: #{cnn_forward.1} parent=11 // pred_check
          %p207 = pneg %p58
        $region18: #{cnn_forward.1} parent=11 // pred_check_branch
          %209 = sbr.rel (%p207) target = $region20
        $region19: #{cnn_forward.1} parent=11 // pred_region
          %211 = vsyncadd [#allocation6], 0
          %s212 = sshll.u32 %s1, 4
          %s213 = int_to_ptr.vmem [resolvable:$true] %s212
          %218 = dma.vmem_to_smem %s213, 512, [#allocation4], [#allocation6], 128, 128, 8
        $region20: #{cnn_forward.1} parent=11 // pred_fallthru
          _
        // Predicated region
        $region21: #{cnn_forward.1} parent=11 // pred_check
          %p219 = pneg %p79
        $region22: #{cnn_forward.1} parent=11 // pred_check_branch
          %221 = sbr.rel (%p219) target = $region24
        $region23: #{cnn_forward.1} parent=11 // pred_region
          %223 = vsyncadd [#allocation8], 0
          %s225 = sshll.u32 %s2, 4
          %s226 = int_to_ptr.vmem [resolvable:$true] %s225
          %228 = dma.vmem_to_smem %s226, 16, [#allocation7], [#allocation8]
        $region24: #{cnn_forward.1} parent=11 // pred_fallthru
          _
        // Predicated region
        $region25: #{cnn_forward.1} parent=11 // pred_check
          %p229 = pneg %p126
        $region26: #{cnn_forward.1} parent=11 // pred_check_branch
          %231 = sbr.rel (%p229) target = $region28
        $region27: #{cnn_forward.1} parent=11 // pred_region
          _
        $region28: #{cnn_forward.1} parent=11 // pred_fallthru
          _
        // Predicated region
        $region29: #{cnn_forward.1} parent=11 // pred_check
          %p232 = pneg %p147
        $region30: #{cnn_forward.1} parent=11 // pred_check_branch
          %234 = sbr.rel (%p232) target = $region32
        $region31: #{cnn_forward.1} parent=11 // pred_region
          _
        $region32: #{cnn_forward.1} parent=11 // pred_fallthru
          _
        // Predicated region
        $region33: #{cnn_forward.1} parent=11 // pred_check
          %p235 = pneg %p168
        $region34: #{cnn_forward.1} parent=11 // pred_check_branch
          %237 = sbr.rel (%p235) target = $region36
        $region35: #{cnn_forward.1} parent=11 // pred_region
          _
        $region36: #{cnn_forward.1} parent=11 // pred_fallthru
          _
      $region12: #{cnn_forward.1} parent=5 // pred_fallthru
        _
      %p238 = scmp.lt.s32.totalorder %s16, 2
      // Predicated region
      $region37: #{cnn_forward.1} parent=5 // pred_check
        %p239 = pneg %p238
      $region38: #{cnn_forward.1} parent=5 // pred_check_branch
        %241 = sbr.rel (%p239) target = $region40
      $region39: #{cnn_forward.1} parent=5 // pred_region
        // Predicated region
        $region41: #{cnn_forward.1} parent=39 // pred_check
          %p242 = pneg %p99
        $region42: #{cnn_forward.1} parent=39 // pred_check_branch
          %244 = sbr.rel (%p242) target = $region44
        $region43: #{cnn_forward.1} parent=39 // pred_region
          %s245 = smul.u32 16, %s16
          %p246 = scmp.lt.s32.totalorder %s245, 31
          %s247 = scalar_select %p246, %s245, 31
          %s248 = smul.addr %s247, 85
          %s249 = smul.addr %s248, 4
          %s250 = scalar_lea.vmem %s3, %s249
          %s251 = smul.u32 16, %s16
        $region44: #{cnn_forward.1} parent=39 // pred_fallthru
          _
      $region40: #{cnn_forward.1} parent=5 // pred_fallthru
        _
      %p252 = scmp.le.s32.totalorder 1, %s16
      %p253 = scmp.lt.s32.totalorder %s16, 3
      %p254 = pnand %p252, %p253
      %p255 = pneg %p254
      // Predicated region
      $region45: #{cnn_forward.1} parent=5 // pred_check
        _
      $region46: #{cnn_forward.1} parent=5 // pred_check_branch
        %257 = sbr.rel (%p254) target = $region48
      $region47: #{cnn_forward.1} parent=5 // pred_region
        %s258 = ssub.s32 %s16, 1
        // Predicated region
        $region49: #{cnn_forward.1} parent=47 // pred_check
          %p259 = pneg %p58
        $region50: #{cnn_forward.1} parent=47 // pred_check_branch
          %261 = sbr.rel (%p259) target = $region52
        $region51: #{cnn_forward.1} parent=47 // pred_region
          %263 = dma.done [#allocation6], 512
        $region52: #{cnn_forward.1} parent=47 // pred_fallthru
          _
        // Predicated region
        $region53: #{cnn_forward.1} parent=47 // pred_check
          %p264 = pneg %p79
        $region54: #{cnn_forward.1} parent=47 // pred_check_branch
          %266 = sbr.rel (%p264) target = $region56
        $region55: #{cnn_forward.1} parent=47 // pred_region
          %268 = dma.done [#allocation8], 16
        $region56: #{cnn_forward.1} parent=47 // pred_fallthru
          _
        %269 = sfence
        %p270 = pneg %p37
        %p271 = pneg %p34
        %p272 = pneg %p58
        %p273 = pneg %p55
        %p274 = pneg %p79
        %p275 = pneg %p76
        %s276 = smul.u32 16, %s21
        %p277 = scmp.lt.s32.totalorder %s276, 31
        %s278 = scalar_select %p277, %s276, 31
        %s279 = smul.addr %s278, 85
        %s280 = smul.addr %s279, 4
        %s281 = scalar_lea.vmem %s3, %s280
        %p282 = pneg %p105
        %p283 = pneg %p102
        %p284 = pneg %p126
        %p285 = pneg %p123
        %p286 = pneg %p147
        %p287 = pneg %p144
        %p288 = pneg %p168
        %p289 = pneg %p165
        %p290 = pneg %p189
        %p291 = pneg %p186
        %s292 = smul.u32 16, %s21
        %p293 = scmp.lt.s32.totalorder %s292, 31
        %s294 = scalar_select %p293, %s292, 31
        %s295 = smul.addr %s294, 85
        %s296 = smul.addr %s295, 4
        %s297 = scalar_lea.vmem %s3, %s296
        %s298 = smul.u32 16, %s21
        %p300 = scmp.eq.s32.totalorder %s21, 0
        // Predicated region
        $region57: #{cnn_forward.1} parent=47 // pred_check
          %p301 = pneg %p300
        $region58: #{cnn_forward.1} parent=47 // pred_check_branch
          %303 = sbr.rel (%p301) target = $region60
        $region59: #{cnn_forward.1} parent=47 // pred_region
          %304 = vst [vmem:[#allocation2] sm:$0x3] 0.0
        $region60: #{cnn_forward.1} parent=47 // pred_fallthru
          _
        %v305 = vld [vmem:[%s0] sm:$0xff]
        %v306 = vld [vmem:[%s0 + $0x8] sm:$0xf]
        %v307 = vld [vmem:[%s0 + $0xc] sm:$0xff]
        %v308 = vld [vmem:[%s0 + $0x14] sm:$0xf]
        %v309 = vld [vmem:[%s0 + $0x18] sm:$0xff]
        %v310 = vld [vmem:[%s0 + $0x20] sm:$0xf]
        %v311 = vld [vmem:[%s0 + $0x24] sm:$0xff]
        %v312 = vld [vmem:[%s0 + $0x2c] sm:$0xf]
        %v313 = vld [vmem:[%s0 + $0x30] sm:$0xff]
        %v314 = vld [vmem:[%s0 + $0x38] sm:$0xf]
        %v315 = vld [vmem:[%s0 + $0x3c] sm:$0xff]
        %v316 = vld [vmem:[%s0 + $0x44] sm:$0xf]
        %v317 = vld [vmem:[%s0 + $0x48] sm:$0xff]
        %v318 = vld [vmem:[%s0 + $0x50] sm:$0xf]
        %v319 = vld [vmem:[%s0 + $0x54] sm:$0xff]
        %v320 = vld [vmem:[%s0 + $0x5c] sm:$0xf]
        %v321 = vld [vmem:[%s0 + $0x60] sm:$0xff]
        %v322 = vld [vmem:[%s0 + $0x68] sm:$0xf]
        %s323 = smul.u32 %s21, 16
        %s324 = smul.u32 %s323, 128
        %s325 = sld [smem:[#allocation4 + %s324]]
        %s326 = sadd.s32 %s324, 1
        %s327 = sld [smem:[#allocation4 + %s326]]
        %s328 = sadd.s32 %s324, 2
        %s329 = sld [smem:[#allocation4 + %s328]]
        %s330 = sadd.s32 %s324, 3
        %s331 = sld [smem:[#allocation4 + %s330]]
        %s332 = sadd.s32 %s324, 4
        %s333 = sld [smem:[#allocation4 + %s332]]
        %s334 = sadd.s32 %s324, 5
        %s335 = sld [smem:[#allocation4 + %s334]]
        %s336 = sadd.s32 %s324, 6
        %s337 = sld [smem:[#allocation4 + %s336]]
        %s338 = sadd.s32 %s324, 7
        %s339 = sld [smem:[#allocation4 + %s338]]
        %s340 = sadd.s32 %s324, 8
        %s341 = sld [smem:[#allocation4 + %s340]]
        %s342 = sld [smem:[#allocation7 + %s323]]
        %v343 = vstv %s325
        %v344 = vmul.f32 %v343, %v305
        %v345 = vmul.f32 %v343, %v306
        %v346 = vstv %s327
        %v347 = vmul.f32 %v346, %v307
        %v348 = vmul.f32 %v346, %v308
        %v349 = vadd.f32 %v344, %v347
        %v350 = vadd.f32 %v345, %v348
        %v351 = vstv %s329
        %v352 = vmul.f32 %v351, %v309
        %v353 = vmul.f32 %v351, %v310
        %v354 = vadd.f32 %v349, %v352
        %v355 = vadd.f32 %v350, %v353
        %v356 = vstv %s331
        %v357 = vmul.f32 %v356, %v311
        %v358 = vmul.f32 %v356, %v312
        %v359 = vadd.f32 %v354, %v357
        %v360 = vadd.f32 %v355, %v358
        %v361 = vstv %s333
        %v362 = vmul.f32 %v361, %v313
        %v363 = vmul.f32 %v361, %v314
        %v364 = vadd.f32 %v359, %v362
        %v365 = vadd.f32 %v360, %v363
        %v366 = vstv %s335
        %v367 = vmul.f32 %v366, %v315
        %v368 = vmul.f32 %v366, %v316
        %v369 = vadd.f32 %v364, %v367
        %v370 = vadd.f32 %v365, %v368
        %v371 = vstv %s337
        %v372 = vmul.f32 %v371, %v317
        %v373 = vmul.f32 %v371, %v318
        %v374 = vadd.f32 %v369, %v372
        %v375 = vadd.f32 %v370, %v373
        %v376 = vstv %s339
        %v377 = vmul.f32 %v376, %v319
        %v378 = vmul.f32 %v376, %v320
        %v379 = vadd.f32 %v374, %v377
        %v380 = vadd.f32 %v375, %v378
        %v381 = vstv %s341
        %v382 = vmul.f32 %v381, %v321
        %v383 = vmul.f32 %v381, %v322
        %v384 = vadd.f32 %v379, %v382
        %v385 = vadd.f32 %v380, %v383
        %v386 = vstv %s342
        %v387 = vadd.f32 %v384, %v386
        %v388 = vadd.f32 %v385, %v386
        %v389 = vmax.f32 %v387, 0.0
        %v390 = vmax.f32 %v388, 0.0
        %393 = vst [vmem:[#allocation1] ss:$4 sm:$0xff] %v389
        %s394 = scalar_lea.vmem [#allocation1], 32
        %395 = vst [vmem:[%s394] ss:$4 sm:$0xff] %v390
        %v396 = vld.sshfl [vmem:[#allocation1] sm:$0xff pattern:$0x73625140]
        %v397 = vld.sshfl [vmem:[#allocation1 + $0x8] sm:$0xff pattern:$0x73625140]
        %v398 = vld.sshfl [vmem:[#allocation1 + $0x10] sm:$0xff pattern:$0x73625140]
        %v399 = vld.sshfl [vmem:[#allocation1 + $0x18] sm:$0xff pattern:$0x73625140]
        %v400 = vld.sshfl [vmem:[#allocation1 + $0x20] sm:$0xff pattern:$0x73625140]
        %v401 = vld.sshfl [vmem:[#allocation1 + $0x28] sm:$0xff pattern:$0x73625140]
        %v408 = vpack.c.bf16 %v397, %v396
        %v409 = vpack.c.bf16 %v399, %v398
        %v410 = vpack.c.bf16 %v401, %v400
        %v414 = vrot.slane %v408, 3
        %v415 = vrot.slane %v409, 6
        %v416 = vrot.slane %v409, 1
        %v417 = vrot.slane %v410, 4
        %v418 = vrot.slane %v410, 7
        %vm419 = vcmask 1040384
        %v422 = vsel %vm419, %v408, %v414
        %vm423 = vcmask 1041408
        %v425 = vsel %vm423, %v422, %v415
        %vm426 = vcmask 1043459
        %v429 = vsel %vm426, %v416, %v417
        %vm430 = vcmask 1044483
        %v432 = vsel %vm430, %v429, %v418
        %vm433 = vcmask 1042432
        %v434 = vsel %vm433, %v425, %v432
        %vm436 = vcmask 1041409
        %vm437 = vmor %vm436, %vm419
        %vm438 = vcmask 1042434
        %vm439 = vmor %vm438, %vm437
        %vm440 = vmor %vm426, %vm439
        %vm441 = vcmask 1044484
        %vm442 = vmor %vm441, %vm440
        %vm443 = vcmask 291845
        %vm444 = vmor %vm443, %vm442
        %445 = vst.msk [vmem:[#allocation3] sm:$0x3f] %vm444, %v434
        %s446 = sadd.s32 %s323, 1
        %s447 = smul.u32 %s446, 128
        %s448 = sld [smem:[#allocation4 + %s447]]
        %s449 = sadd.s32 %s447, 1
        %s450 = sld [smem:[#allocation4 + %s449]]
        %s451 = sadd.s32 %s447, 2
        %s452 = sld [smem:[#allocation4 + %s451]]
        %s453 = sadd.s32 %s447, 3
        %s454 = sld [smem:[#allocation4 + %s453]]
        %s455 = sadd.s32 %s447, 4
        %s456 = sld [smem:[#allocation4 + %s455]]
        %s457 = sadd.s32 %s447, 5
        %s458 = sld [smem:[#allocation4 + %s457]]
        %s459 = sadd.s32 %s447, 6
        %s460 = sld [smem:[#allocation4 + %s459]]
        %s461 = sadd.s32 %s447, 7
        %s462 = sld [smem:[#allocation4 + %s461]]
        %s463 = sadd.s32 %s447, 8
        %s464 = sld [smem:[#allocation4 + %s463]]
        %s465 = sld [smem:[#allocation7 + %s446]]
        %v466 = vstv %s448
        %v467 = vmul.f32 %v466, %v305
        %v468 = vmul.f32 %v466, %v306
        %v469 = vstv %s450
        %v470 = vmul.f32 %v469, %v307
        %v471 = vmul.f32 %v469, %v308
        %v472 = vadd.f32 %v467, %v470
        %v473 = vadd.f32 %v468, %v471
        %v474 = vstv %s452
        %v475 = vmul.f32 %v474, %v309
        %v476 = vmul.f32 %v474, %v310
        %v477 = vadd.f32 %v472, %v475
        %v478 = vadd.f32 %v473, %v476
        %v479 = vstv %s454
        %v480 = vmul.f32 %v479, %v311
        %v481 = vmul.f32 %v479, %v312
        %v482 = vadd.f32 %v477, %v480
        %v483 = vadd.f32 %v478, %v481
        %v484 = vstv %s456
        %v485 = vmul.f32 %v484, %v313
        %v486 = vmul.f32 %v484, %v314
        %v487 = vadd.f32 %v482, %v485
        %v488 = vadd.f32 %v483, %v486
        %v489 = vstv %s458
        %v490 = vmul.f32 %v489, %v315
        %v491 = vmul.f32 %v489, %v316
        %v492 = vadd.f32 %v487, %v490
        %v493 = vadd.f32 %v488, %v491
        %v494 = vstv %s460
        %v495 = vmul.f32 %v494, %v317
        %v496 = vmul.f32 %v494, %v318
        %v497 = vadd.f32 %v492, %v495
        %v498 = vadd.f32 %v493, %v496
        %v499 = vstv %s462
        %v500 = vmul.f32 %v499, %v319
        %v501 = vmul.f32 %v499, %v320
        %v502 = vadd.f32 %v497, %v500
        %v503 = vadd.f32 %v498, %v501
        %v504 = vstv %s464
        %v505 = vmul.f32 %v504, %v321
        %v506 = vmul.f32 %v504, %v322
        %v507 = vadd.f32 %v502, %v505
        %v508 = vadd.f32 %v503, %v506
        %v509 = vstv %s465
        %v510 = vadd.f32 %v507, %v509
        %v511 = vadd.f32 %v508, %v509
        %v512 = vmax.f32 %v510, 0.0
        %v513 = vmax.f32 %v511, 0.0
        %516 = vst [vmem:[#allocation1] ss:$4 sm:$0xff] %v512
        %s517 = scalar_lea.vmem [#allocation1], 32
        %518 = vst [vmem:[%s517] ss:$4 sm:$0xff] %v513
        %v519 = vld.sshfl [vmem:[#allocation1] sm:$0xff pattern:$0x73625140]
        %v520 = vld.sshfl [vmem:[#allocation1 + $0x8] sm:$0xff pattern:$0x73625140]
        %v521 = vld.sshfl [vmem:[#allocation1 + $0x10] sm:$0xff pattern:$0x73625140]
        %v522 = vld.sshfl [vmem:[#allocation1 + $0x18] sm:$0xff pattern:$0x73625140]
        %v523 = vld.sshfl [vmem:[#allocation1 + $0x20] sm:$0xff pattern:$0x73625140]
        %v524 = vld.sshfl [vmem:[#allocation1 + $0x28] sm:$0xff pattern:$0x73625140]
        %v531 = vpack.c.bf16 %v520, %v519
        %v532 = vpack.c.bf16 %v522, %v521
        %v533 = vpack.c.bf16 %v524, %v523
        %v537 = vrot.slane %v531, 3
        %v538 = vrot.slane %v532, 6
        %v539 = vrot.slane %v532, 1
        %v540 = vrot.slane %v533, 4
        %v541 = vrot.slane %v533, 7
        %v544 = vsel %vm419, %v531, %v537
        %v546 = vsel %vm423, %v544, %v538
        %v549 = vsel %vm426, %v539, %v540
        %v551 = vsel %vm430, %v549, %v541
        %v552 = vsel %vm433, %v546, %v551
        %s554 = scalar_lea.vmem [#allocation3], 6
        %555 = vst.msk [vmem:[%s554] sm:$0x3f] %vm444, %v552
        %s556 = sadd.s32 %s323, 2
        %s557 = smul.u32 %s556, 128
        %s558 = sld [smem:[#allocation4 + %s557]]
        %s559 = sadd.s32 %s557, 1
        %s560 = sld [smem:[#allocation4 + %s559]]
        %s561 = sadd.s32 %s557, 2
        %s562 = sld [smem:[#allocation4 + %s561]]
        %s563 = sadd.s32 %s557, 3
        %s564 = sld [smem:[#allocation4 + %s563]]
        %s565 = sadd.s32 %s557, 4
        %s566 = sld [smem:[#allocation4 + %s565]]
        %s567 = sadd.s32 %s557, 5
        %s568 = sld [smem:[#allocation4 + %s567]]
        %s569 = sadd.s32 %s557, 6
        %s570 = sld [smem:[#allocation4 + %s569]]
        %s571 = sadd.s32 %s557, 7
        %s572 = sld [smem:[#allocation4 + %s571]]
        %s573 = sadd.s32 %s557, 8
        %s574 = sld [smem:[#allocation4 + %s573]]
        %s575 = sld [smem:[#allocation7 + %s556]]
        %v576 = vstv %s558
        %v577 = vmul.f32 %v576, %v305
        %v578 = vmul.f32 %v576, %v306
        %v579 = vstv %s560
        %v580 = vmul.f32 %v579, %v307
        %v581 = vmul.f32 %v579, %v308
        %v582 = vadd.f32 %v577, %v580
        %v583 = vadd.f32 %v578, %v581
        %v584 = vstv %s562
        %v585 = vmul.f32 %v584, %v309
        %v586 = vmul.f32 %v584, %v310
        %v587 = vadd.f32 %v582, %v585
        %v588 = vadd.f32 %v583, %v586
        %v589 = vstv %s564
        %v590 = vmul.f32 %v589, %v311
        %v591 = vmul.f32 %v589, %v312
        %v592 = vadd.f32 %v587, %v590
        %v593 = vadd.f32 %v588, %v591
        %v594 = vstv %s566
        %v595 = vmul.f32 %v594, %v313
        %v596 = vmul.f32 %v594, %v314
        %v597 = vadd.f32 %v592, %v595
        %v598 = vadd.f32 %v593, %v596
        %v599 = vstv %s568
        %v600 = vmul.f32 %v599, %v315
        %v601 = vmul.f32 %v599, %v316
        %v602 = vadd.f32 %v597, %v600
        %v603 = vadd.f32 %v598, %v601
        %v604 = vstv %s570
        %v605 = vmul.f32 %v604, %v317
        %v606 = vmul.f32 %v604, %v318
        %v607 = vadd.f32 %v602, %v605
        %v608 = vadd.f32 %v603, %v606
        %v609 = vstv %s572
        %v610 = vmul.f32 %v609, %v319
        %v611 = vmul.f32 %v609, %v320
        %v612 = vadd.f32 %v607, %v610
        %v613 = vadd.f32 %v608, %v611
        %v614 = vstv %s574
        %v615 = vmul.f32 %v614, %v321
        %v616 = vmul.f32 %v614, %v322
        %v617 = vadd.f32 %v612, %v615
        %v618 = vadd.f32 %v613, %v616
        %v619 = vstv %s575
        %v620 = vadd.f32 %v617, %v619
        %v621 = vadd.f32 %v618, %v619
        %v622 = vmax.f32 %v620, 0.0
        %v623 = vmax.f32 %v621, 0.0
        %626 = vst [vmem:[#allocation1] ss:$4 sm:$0xff] %v622
        %s627 = scalar_lea.vmem [#allocation1], 32
        %628 = vst [vmem:[%s627] ss:$4 sm:$0xff] %v623
        %v629 = vld.sshfl [vmem:[#allocation1] sm:$0xff pattern:$0x73625140]
        %v630 = vld.sshfl [vmem:[#allocation1 + $0x8] sm:$0xff pattern:$0x73625140]
        %v631 = vld.sshfl [vmem:[#allocation1 + $0x10] sm:$0xff pattern:$0x73625140]
        %v632 = vld.sshfl [vmem:[#allocation1 + $0x18] sm:$0xff pattern:$0x73625140]
        %v633 = vld.sshfl [vmem:[#allocation1 + $0x20] sm:$0xff pattern:$0x73625140]
        %v634 = vld.sshfl [vmem:[#allocation1 + $0x28] sm:$0xff pattern:$0x73625140]
        %v641 = vpack.c.bf16 %v630, %v629
        %v642 = vpack.c.bf16 %v632, %v631
        %v643 = vpack.c.bf16 %v634, %v633
        %v647 = vrot.slane %v641, 3
        %v648 = vrot.slane %v642, 6
        %v649 = vrot.slane %v642, 1
        %v650 = vrot.slane %v643, 4
        %v651 = vrot.slane %v643, 7
        %v654 = vsel %vm419, %v641, %v647
        %v656 = vsel %vm423, %v654, %v648
        %v659 = vsel %vm426, %v649, %v650
        %v661 = vsel %vm430, %v659, %v651
        %v662 = vsel %vm433, %v656, %v661
        %s664 = scalar_lea.vmem [#allocation3], 12
        %665 = vst.msk [vmem:[%s664] sm:$0x3f] %vm444, %v662
        %s666 = sadd.s32 %s323, 3
        %s667 = smul.u32 %s666, 128
        %s668 = sld [smem:[#allocation4 + %s667]]
        %s669 = sadd.s32 %s667, 1
        %s670 = sld [smem:[#allocation4 + %s669]]
        %s671 = sadd.s32 %s667, 2
        %s672 = sld [smem:[#allocation4 + %s671]]
        %s673 = sadd.s32 %s667, 3
        %s674 = sld [smem:[#allocation4 + %s673]]
        %s675 = sadd.s32 %s667, 4
        %s676 = sld [smem:[#allocation4 + %s675]]
        %s677 = sadd.s32 %s667, 5
        %s678 = sld [smem:[#allocation4 + %s677]]
        %s679 = sadd.s32 %s667, 6
        %s680 = sld [smem:[#allocation4 + %s679]]
        %s681 = sadd.s32 %s667, 7
        %s682 = sld [smem:[#allocation4 + %s681]]
        %s683 = sadd.s32 %s667, 8
        %s684 = sld [smem:[#allocation4 + %s683]]
        %s685 = sld [smem:[#allocation7 + %s666]]
        %v686 = vstv %s668
        %v687 = vmul.f32 %v686, %v305
        %v688 = vmul.f32 %v686, %v306
        %v689 = vstv %s670
        %v690 = vmul.f32 %v689, %v307
        %v691 = vmul.f32 %v689, %v308
        %v692 = vadd.f32 %v687, %v690
        %v693 = vadd.f32 %v688, %v691
        %v694 = vstv %s672
        %v695 = vmul.f32 %v694, %v309
        %v696 = vmul.f32 %v694, %v310
        %v697 = vadd.f32 %v692, %v695
        %v698 = vadd.f32 %v693, %v696
        %v699 = vstv %s674
        %v700 = vmul.f32 %v699, %v311
        %v701 = vmul.f32 %v699, %v312
        %v702 = vadd.f32 %v697, %v700
        %v703 = vadd.f32 %v698, %v701
        %v704 = vstv %s676
        %v705 = vmul.f32 %v704, %v313
        %v706 = vmul.f32 %v704, %v314
        %v707 = vadd.f32 %v702, %v705
        %v708 = vadd.f32 %v703, %v706
        %v709 = vstv %s678
        %v710 = vmul.f32 %v709, %v315
        %v711 = vmul.f32 %v709, %v316
        %v712 = vadd.f32 %v707, %v710
        %v713 = vadd.f32 %v708, %v711
        %v714 = vstv %s680
        %v715 = vmul.f32 %v714, %v317
        %v716 = vmul.f32 %v714, %v318
        %v717 = vadd.f32 %v712, %v715
        %v718 = vadd.f32 %v713, %v716
        %v719 = vstv %s682
        %v720 = vmul.f32 %v719, %v319
        %v721 = vmul.f32 %v719, %v320
        %v722 = vadd.f32 %v717, %v720
        %v723 = vadd.f32 %v718, %v721
        %v724 = vstv %s684
        %v725 = vmul.f32 %v724, %v321
        %v726 = vmul.f32 %v724, %v322
        %v727 = vadd.f32 %v722, %v725
        %v728 = vadd.f32 %v723, %v726
        %v729 = vstv %s685
        %v730 = vadd.f32 %v727, %v729
        %v731 = vadd.f32 %v728, %v729
        %v732 = vmax.f32 %v730, 0.0
        %v733 = vmax.f32 %v731, 0.0
        %736 = vst [vmem:[#allocation1] ss:$4 sm:$0xff] %v732
        %s737 = scalar_lea.vmem [#allocation1], 32
        %738 = vst [vmem:[%s737] ss:$4 sm:$0xff] %v733
        %v739 = vld.sshfl [vmem:[#allocation1] sm:$0xff pattern:$0x73625140]
        %v740 = vld.sshfl [vmem:[#allocation1 + $0x8] sm:$0xff pattern:$0x73625140]
        %v741 = vld.sshfl [vmem:[#allocation1 + $0x10] sm:$0xff pattern:$0x73625140]
        %v742 = vld.sshfl [vmem:[#allocation1 + $0x18] sm:$0xff pattern:$0x73625140]
        %v743 = vld.sshfl [vmem:[#allocation1 + $0x20] sm:$0xff pattern:$0x73625140]
        %v744 = vld.sshfl [vmem:[#allocation1 + $0x28] sm:$0xff pattern:$0x73625140]
        %v751 = vpack.c.bf16 %v740, %v739
        %v752 = vpack.c.bf16 %v742, %v741
        %v753 = vpack.c.bf16 %v744, %v743
        %v757 = vrot.slane %v751, 3
        %v758 = vrot.slane %v752, 6
        %v759 = vrot.slane %v752, 1
        %v760 = vrot.slane %v753, 4
        %v761 = vrot.slane %v753, 7
        %v764 = vsel %vm419, %v751, %v757
        %v766 = vsel %vm423, %v764, %v758
        %v769 = vsel %vm426, %v759, %v760
        %v771 = vsel %vm430, %v769, %v761
        %v772 = vsel %vm433, %v766, %v771
        %s774 = scalar_lea.vmem [#allocation3], 18
        %775 = vst.msk [vmem:[%s774] sm:$0x3f] %vm444, %v772
        %s776 = sadd.s32 %s323, 4
        %s777 = smul.u32 %s776, 128
        %s778 = sld [smem:[#allocation4 + %s777]]
        %s779 = sadd.s32 %s777, 1
        %s780 = sld [smem:[#allocation4 + %s779]]
        %s781 = sadd.s32 %s777, 2
        %s782 = sld [smem:[#allocation4 + %s781]]
        %s783 = sadd.s32 %s777, 3
        %s784 = sld [smem:[#allocation4 + %s783]]
        %s785 = sadd.s32 %s777, 4
        %s786 = sld [smem:[#allocation4 + %s785]]
        %s787 = sadd.s32 %s777, 5
        %s788 = sld [smem:[#allocation4 + %s787]]
        %s789 = sadd.s32 %s777, 6
        %s790 = sld [smem:[#allocation4 + %s789]]
        %s791 = sadd.s32 %s777, 7
        %s792 = sld [smem:[#allocation4 + %s791]]
        %s793 = sadd.s32 %s777, 8
        %s794 = sld [smem:[#allocation4 + %s793]]
        %s795 = sld [smem:[#allocation7 + %s776]]
        %v796 = vstv %s778
        %v797 = vmul.f32 %v796, %v305
        %v798 = vmul.f32 %v796, %v306
        %v799 = vstv %s780
        %v800 = vmul.f32 %v799, %v307
        %v801 = vmul.f32 %v799, %v308
        %v802 = vadd.f32 %v797, %v800
        %v803 = vadd.f32 %v798, %v801
        %v804 = vstv %s782
        %v805 = vmul.f32 %v804, %v309
        %v806 = vmul.f32 %v804, %v310
        %v807 = vadd.f32 %v802, %v805
        %v808 = vadd.f32 %v803, %v806
        %v809 = vstv %s784
        %v810 = vmul.f32 %v809, %v311
        %v811 = vmul.f32 %v809, %v312
        %v812 = vadd.f32 %v807, %v810
        %v813 = vadd.f32 %v808, %v811
        %v814 = vstv %s786
        %v815 = vmul.f32 %v814, %v313
        %v816 = vmul.f32 %v814, %v314
        %v817 = vadd.f32 %v812, %v815
        %v818 = vadd.f32 %v813, %v816
        %v819 = vstv %s788
        %v820 = vmul.f32 %v819, %v315
        %v821 = vmul.f32 %v819, %v316
        %v822 = vadd.f32 %v817, %v820
        %v823 = vadd.f32 %v818, %v821
        %v824 = vstv %s790
        %v825 = vmul.f32 %v824, %v317
        %v826 = vmul.f32 %v824, %v318
        %v827 = vadd.f32 %v822, %v825
        %v828 = vadd.f32 %v823, %v826
        %v829 = vstv %s792
        %v830 = vmul.f32 %v829, %v319
        %v831 = vmul.f32 %v829, %v320
        %v832 = vadd.f32 %v827, %v830
        %v833 = vadd.f32 %v828, %v831
        %v834 = vstv %s794
        %v835 = vmul.f32 %v834, %v321
        %v836 = vmul.f32 %v834, %v322
        %v837 = vadd.f32 %v832, %v835
        %v838 = vadd.f32 %v833, %v836
        %v839 = vstv %s795
        %v840 = vadd.f32 %v837, %v839
        %v841 = vadd.f32 %v838, %v839
        %v842 = vmax.f32 %v840, 0.0
        %v843 = vmax.f32 %v841, 0.0
        %846 = vst [vmem:[#allocation1] ss:$4 sm:$0xff] %v842
        %s847 = scalar_lea.vmem [#allocation1], 32
        %848 = vst [vmem:[%s847] ss:$4 sm:$0xff] %v843
        %v849 = vld.sshfl [vmem:[#allocation1] sm:$0xff pattern:$0x73625140]
        %v850 = vld.sshfl [vmem:[#allocation1 + $0x8] sm:$0xff pattern:$0x73625140]
        %v851 = vld.sshfl [vmem:[#allocation1 + $0x10] sm:$0xff pattern:$0x73625140]
        %v852 = vld.sshfl [vmem:[#allocation1 + $0x18] sm:$0xff pattern:$0x73625140]
        %v853 = vld.sshfl [vmem:[#allocation1 + $0x20] sm:$0xff pattern:$0x73625140]
        %v854 = vld.sshfl [vmem:[#allocation1 + $0x28] sm:$0xff pattern:$0x73625140]
        %v861 = vpack.c.bf16 %v850, %v849
        %v862 = vpack.c.bf16 %v852, %v851
        %v863 = vpack.c.bf16 %v854, %v853
        %v867 = vrot.slane %v861, 3
        %v868 = vrot.slane %v862, 6
        %v869 = vrot.slane %v862, 1
        %v870 = vrot.slane %v863, 4
        %v871 = vrot.slane %v863, 7
        %v874 = vsel %vm419, %v861, %v867
        %v876 = vsel %vm423, %v874, %v868
        %v879 = vsel %vm426, %v869, %v870
        %v881 = vsel %vm430, %v879, %v871
        %v882 = vsel %vm433, %v876, %v881
        %s884 = scalar_lea.vmem [#allocation3], 24
        %885 = vst.msk [vmem:[%s884] sm:$0x3f] %vm444, %v882
        %s886 = sadd.s32 %s323, 5
        %s887 = smul.u32 %s886, 128
        %s888 = sld [smem:[#allocation4 + %s887]]
        %s889 = sadd.s32 %s887, 1
        %s890 = sld [smem:[#allocation4 + %s889]]
        %s891 = sadd.s32 %s887, 2
        %s892 = sld [smem:[#allocation4 + %s891]]
        %s893 = sadd.s32 %s887, 3
        %s894 = sld [smem:[#allocation4 + %s893]]
        %s895 = sadd.s32 %s887, 4
        %s896 = sld [smem:[#allocation4 + %s895]]
        %s897 = sadd.s32 %s887, 5
        %s898 = sld [smem:[#allocation4 + %s897]]
        %s899 = sadd.s32 %s887, 6
        %s900 = sld [smem:[#allocation4 + %s899]]
        %s901 = sadd.s32 %s887, 7
        %s902 = sld [smem:[#allocation4 + %s901]]
        %s903 = sadd.s32 %s887, 8
        %s904 = sld [smem:[#allocation4 + %s903]]
        %s905 = sld [smem:[#allocation7 + %s886]]
        %v906 = vstv %s888
        %v907 = vmul.f32 %v906, %v305
        %v908 = vmul.f32 %v906, %v306
        %v909 = vstv %s890
        %v910 = vmul.f32 %v909, %v307
        %v911 = vmul.f32 %v909, %v308
        %v912 = vadd.f32 %v907, %v910
        %v913 = vadd.f32 %v908, %v911
        %v914 = vstv %s892
        %v915 = vmul.f32 %v914, %v309
        %v916 = vmul.f32 %v914, %v310
        %v917 = vadd.f32 %v912, %v915
        %v918 = vadd.f32 %v913, %v916
        %v919 = vstv %s894
        %v920 = vmul.f32 %v919, %v311
        %v921 = vmul.f32 %v919, %v312
        %v922 = vadd.f32 %v917, %v920
        %v923 = vadd.f32 %v918, %v921
        %v924 = vstv %s896
        %v925 = vmul.f32 %v924, %v313
        %v926 = vmul.f32 %v924, %v314
        %v927 = vadd.f32 %v922, %v925
        %v928 = vadd.f32 %v923, %v926
        %v929 = vstv %s898
        %v930 = vmul.f32 %v929, %v315
        %v931 = vmul.f32 %v929, %v316
        %v932 = vadd.f32 %v927, %v930
        %v933 = vadd.f32 %v928, %v931
        %v934 = vstv %s900
        %v935 = vmul.f32 %v934, %v317
        %v936 = vmul.f32 %v934, %v318
        %v937 = vadd.f32 %v932, %v935
        %v938 = vadd.f32 %v933, %v936
        %v939 = vstv %s902
        %v940 = vmul.f32 %v939, %v319
        %v941 = vmul.f32 %v939, %v320
        %v942 = vadd.f32 %v937, %v940
        %v943 = vadd.f32 %v938, %v941
        %v944 = vstv %s904
        %v945 = vmul.f32 %v944, %v321
        %v946 = vmul.f32 %v944, %v322
        %v947 = vadd.f32 %v942, %v945
        %v948 = vadd.f32 %v943, %v946
        %v949 = vstv %s905
        %v950 = vadd.f32 %v947, %v949
        %v951 = vadd.f32 %v948, %v949
        %v952 = vmax.f32 %v950, 0.0
        %v953 = vmax.f32 %v951, 0.0
        %956 = vst [vmem:[#allocation1] ss:$4 sm:$0xff] %v952
        %s957 = scalar_lea.vmem [#allocation1], 32
        %958 = vst [vmem:[%s957] ss:$4 sm:$0xff] %v953
        %v959 = vld.sshfl [vmem:[#allocation1] sm:$0xff pattern:$0x73625140]
        %v960 = vld.sshfl [vmem:[#allocation1 + $0x8] sm:$0xff pattern:$0x73625140]
        %v961 = vld.sshfl [vmem:[#allocation1 + $0x10] sm:$0xff pattern:$0x73625140]
        %v962 = vld.sshfl [vmem:[#allocation1 + $0x18] sm:$0xff pattern:$0x73625140]
        %v963 = vld.sshfl [vmem:[#allocation1 + $0x20] sm:$0xff pattern:$0x73625140]
        %v964 = vld.sshfl [vmem:[#allocation1 + $0x28] sm:$0xff pattern:$0x73625140]
        %v971 = vpack.c.bf16 %v960, %v959
        %v972 = vpack.c.bf16 %v962, %v961
        %v973 = vpack.c.bf16 %v964, %v963
        %v977 = vrot.slane %v971, 3
        %v978 = vrot.slane %v972, 6
        %v979 = vrot.slane %v972, 1
        %v980 = vrot.slane %v973, 4
        %v981 = vrot.slane %v973, 7
        %v984 = vsel %vm419, %v971, %v977
        %v986 = vsel %vm423, %v984, %v978
        %v989 = vsel %vm426, %v979, %v980
        %v991 = vsel %vm430, %v989, %v981
        %v992 = vsel %vm433, %v986, %v991
        %s994 = scalar_lea.vmem [#allocation3], 30
        %995 = vst.msk [vmem:[%s994] sm:$0x3f] %vm444, %v992
        %s996 = sadd.s32 %s323, 6
        %s997 = smul.u32 %s996, 128
        %s998 = sld [smem:[#allocation4 + %s997]]
        %s999 = sadd.s32 %s997, 1
        %s1000 = sld [smem:[#allocation4 + %s999]]
        %s1001 = sadd.s32 %s997, 2
        %s1002 = sld [smem:[#allocation4 + %s1001]]
        %s1003 = sadd.s32 %s997, 3
        %s1004 = sld [smem:[#allocation4 + %s1003]]
        %s1005 = sadd.s32 %s997, 4
        %s1006 = sld [smem:[#allocation4 + %s1005]]
        %s1007 = sadd.s32 %s997, 5
        %s1008 = sld [smem:[#allocation4 + %s1007]]
        %s1009 = sadd.s32 %s997, 6
        %s1010 = sld [smem:[#allocation4 + %s1009]]
        %s1011 = sadd.s32 %s997, 7
        %s1012 = sld [smem:[#allocation4 + %s1011]]
        %s1013 = sadd.s32 %s997, 8
        %s1014 = sld [smem:[#allocation4 + %s1013]]
        %s1015 = sld [smem:[#allocation7 + %s996]]
        %v1016 = vstv %s998
        %v1017 = vmul.f32 %v1016, %v305
        %v1018 = vmul.f32 %v1016, %v306
        %v1019 = vstv %s1000
        %v1020 = vmul.f32 %v1019, %v307
        %v1021 = vmul.f32 %v1019, %v308
        %v1022 = vadd.f32 %v1017, %v1020
        %v1023 = vadd.f32 %v1018, %v1021
        %v1024 = vstv %s1002
        %v1025 = vmul.f32 %v1024, %v309
        %v1026 = vmul.f32 %v1024, %v310
        %v1027 = vadd.f32 %v1022, %v1025
        %v1028 = vadd.f32 %v1023, %v1026
        %v1029 = vstv %s1004
        %v1030 = vmul.f32 %v1029, %v311
        %v1031 = vmul.f32 %v1029, %v312
        %v1032 = vadd.f32 %v1027, %v1030
        %v1033 = vadd.f32 %v1028, %v1031
        %v1034 = vstv %s1006
        %v1035 = vmul.f32 %v1034, %v313
        %v1036 = vmul.f32 %v1034, %v314
        %v1037 = vadd.f32 %v1032, %v1035
        %v1038 = vadd.f32 %v1033, %v1036
        %v1039 = vstv %s1008
        %v1040 = vmul.f32 %v1039, %v315
        %v1041 = vmul.f32 %v1039, %v316
        %v1042 = vadd.f32 %v1037, %v1040
        %v1043 = vadd.f32 %v1038, %v1041
        %v1044 = vstv %s1010
        %v1045 = vmul.f32 %v1044, %v317
        %v1046 = vmul.f32 %v1044, %v318
        %v1047 = vadd.f32 %v1042, %v1045
        %v1048 = vadd.f32 %v1043, %v1046
        %v1049 = vstv %s1012
        %v1050 = vmul.f32 %v1049, %v319
        %v1051 = vmul.f32 %v1049, %v320
        %v1052 = vadd.f32 %v1047, %v1050
        %v1053 = vadd.f32 %v1048, %v1051
        %v1054 = vstv %s1014
        %v1055 = vmul.f32 %v1054, %v321
        %v1056 = vmul.f32 %v1054, %v322
        %v1057 = vadd.f32 %v1052, %v1055
        %v1058 = vadd.f32 %v1053, %v1056
        %v1059 = vstv %s1015
        %v1060 = vadd.f32 %v1057, %v1059
        %v1061 = vadd.f32 %v1058, %v1059
        %v1062 = vmax.f32 %v1060, 0.0
        %v1063 = vmax.f32 %v1061, 0.0
        %1066 = vst [vmem:[#allocation1] ss:$4 sm:$0xff] %v1062
        %s1067 = scalar_lea.vmem [#allocation1], 32
        %1068 = vst [vmem:[%s1067] ss:$4 sm:$0xff] %v1063
        %v1069 = vld.sshfl [vmem:[#allocation1] sm:$0xff pattern:$0x73625140]
        %v1070 = vld.sshfl [vmem:[#allocation1 + $0x8] sm:$0xff pattern:$0x73625140]
        %v1071 = vld.sshfl [vmem:[#allocation1 + $0x10] sm:$0xff pattern:$0x73625140]
        %v1072 = vld.sshfl [vmem:[#allocation1 + $0x18] sm:$0xff pattern:$0x73625140]
        %v1073 = vld.sshfl [vmem:[#allocation1 + $0x20] sm:$0xff pattern:$0x73625140]
        %v1074 = vld.sshfl [vmem:[#allocation1 + $0x28] sm:$0xff pattern:$0x73625140]
        %v1081 = vpack.c.bf16 %v1070, %v1069
        %v1082 = vpack.c.bf16 %v1072, %v1071
        %v1083 = vpack.c.bf16 %v1074, %v1073
        %v1087 = vrot.slane %v1081, 3
        %v1088 = vrot.slane %v1082, 6
        %v1089 = vrot.slane %v1082, 1
        %v1090 = vrot.slane %v1083, 4
        %v1091 = vrot.slane %v1083, 7
        %v1094 = vsel %vm419, %v1081, %v1087
        %v1096 = vsel %vm423, %v1094, %v1088
        %v1099 = vsel %vm426, %v1089, %v1090
        %v1101 = vsel %vm430, %v1099, %v1091
        %v1102 = vsel %vm433, %v1096, %v1101
        %s1104 = scalar_lea.vmem [#allocation3], 36
        %1105 = vst.msk [vmem:[%s1104] sm:$0x3f] %vm444, %v1102
        %s1106 = sadd.s32 %s323, 7
        %s1107 = smul.u32 %s1106, 128
        %s1108 = sld [smem:[#allocation4 + %s1107]]
        %s1109 = sadd.s32 %s1107, 1
        %s1110 = sld [smem:[#allocation4 + %s1109]]
        %s1111 = sadd.s32 %s1107, 2
        %s1112 = sld [smem:[#allocation4 + %s1111]]
        %s1113 = sadd.s32 %s1107, 3
        %s1114 = sld [smem:[#allocation4 + %s1113]]
        %s1115 = sadd.s32 %s1107, 4
        %s1116 = sld [smem:[#allocation4 + %s1115]]
        %s1117 = sadd.s32 %s1107, 5
        %s1118 = sld [smem:[#allocation4 + %s1117]]
        %s1119 = sadd.s32 %s1107, 6
        %s1120 = sld [smem:[#allocation4 + %s1119]]
        %s1121 = sadd.s32 %s1107, 7
        %s1122 = sld [smem:[#allocation4 + %s1121]]
        %s1123 = sadd.s32 %s1107, 8
        %s1124 = sld [smem:[#allocation4 + %s1123]]
        %s1125 = sld [smem:[#allocation7 + %s1106]]
        %v1126 = vstv %s1108
        %v1127 = vmul.f32 %v1126, %v305
        %v1128 = vmul.f32 %v1126, %v306
        %v1129 = vstv %s1110
        %v1130 = vmul.f32 %v1129, %v307
        %v1131 = vmul.f32 %v1129, %v308
        %v1132 = vadd.f32 %v1127, %v1130
        %v1133 = vadd.f32 %v1128, %v1131
        %v1134 = vstv %s1112
        %v1135 = vmul.f32 %v1134, %v309
        %v1136 = vmul.f32 %v1134, %v310
        %v1137 = vadd.f32 %v1132, %v1135
        %v1138 = vadd.f32 %v1133, %v1136
        %v1139 = vstv %s1114
        %v1140 = vmul.f32 %v1139, %v311
        %v1141 = vmul.f32 %v1139, %v312
        %v1142 = vadd.f32 %v1137, %v1140
        %v1143 = vadd.f32 %v1138, %v1141
        %v1144 = vstv %s1116
        %v1145 = vmul.f32 %v1144, %v313
        %v1146 = vmul.f32 %v1144, %v314
        %v1147 = vadd.f32 %v1142, %v1145
        %v1148 = vadd.f32 %v1143, %v1146
        %v1149 = vstv %s1118
        %v1150 = vmul.f32 %v1149, %v315
        %v1151 = vmul.f32 %v1149, %v316
        %v1152 = vadd.f32 %v1147, %v1150
        %v1153 = vadd.f32 %v1148, %v1151
        %v1154 = vstv %s1120
        %v1155 = vmul.f32 %v1154, %v317
        %v1156 = vmul.f32 %v1154, %v318
        %v1157 = vadd.f32 %v1152, %v1155
        %v1158 = vadd.f32 %v1153, %v1156
        %v1159 = vstv %s1122
        %v1160 = vmul.f32 %v1159, %v319
        %v1161 = vmul.f32 %v1159, %v320
        %v1162 = vadd.f32 %v1157, %v1160
        %v1163 = vadd.f32 %v1158, %v1161
        %v1164 = vstv %s1124
        %v1165 = vmul.f32 %v1164, %v321
        %v1166 = vmul.f32 %v1164, %v322
        %v1167 = vadd.f32 %v1162, %v1165
        %v1168 = vadd.f32 %v1163, %v1166
        %v1169 = vstv %s1125
        %v1170 = vadd.f32 %v1167, %v1169
        %v1171 = vadd.f32 %v1168, %v1169
        %v1172 = vmax.f32 %v1170, 0.0
        %v1173 = vmax.f32 %v1171, 0.0
        %1176 = vst [vmem:[#allocation1] ss:$4 sm:$0xff] %v1172
        %s1177 = scalar_lea.vmem [#allocation1], 32
        %1178 = vst [vmem:[%s1177] ss:$4 sm:$0xff] %v1173
        %v1179 = vld.sshfl [vmem:[#allocation1] sm:$0xff pattern:$0x73625140]
        %v1180 = vld.sshfl [vmem:[#allocation1 + $0x8] sm:$0xff pattern:$0x73625140]
        %v1181 = vld.sshfl [vmem:[#allocation1 + $0x10] sm:$0xff pattern:$0x73625140]
        %v1182 = vld.sshfl [vmem:[#allocation1 + $0x18] sm:$0xff pattern:$0x73625140]
        %v1183 = vld.sshfl [vmem:[#allocation1 + $0x20] sm:$0xff pattern:$0x73625140]
        %v1184 = vld.sshfl [vmem:[#allocation1 + $0x28] sm:$0xff pattern:$0x73625140]
        %v1191 = vpack.c.bf16 %v1180, %v1179
        %v1192 = vpack.c.bf16 %v1182, %v1181
        %v1193 = vpack.c.bf16 %v1184, %v1183
        %v1197 = vrot.slane %v1191, 3
        %v1198 = vrot.slane %v1192, 6
        %v1199 = vrot.slane %v1192, 1
        %v1200 = vrot.slane %v1193, 4
        %v1201 = vrot.slane %v1193, 7
        %v1204 = vsel %vm419, %v1191, %v1197
        %v1206 = vsel %vm423, %v1204, %v1198
        %v1209 = vsel %vm426, %v1199, %v1200
        %v1211 = vsel %vm430, %v1209, %v1201
        %v1212 = vsel %vm433, %v1206, %v1211
        %s1214 = scalar_lea.vmem [#allocation3], 42
        %1215 = vst.msk [vmem:[%s1214] sm:$0x3f] %vm444, %v1212
        %s1216 = sadd.s32 %s323, 8
        %s1217 = smul.u32 %s1216, 128
        %s1218 = sld [smem:[#allocation4 + %s1217]]
        %s1219 = sadd.s32 %s1217, 1
        %s1220 = sld [smem:[#allocation4 + %s1219]]
        %s1221 = sadd.s32 %s1217, 2
        %s1222 = sld [smem:[#allocation4 + %s1221]]
        %s1223 = sadd.s32 %s1217, 3
        %s1224 = sld [smem:[#allocation4 + %s1223]]
        %s1225 = sadd.s32 %s1217, 4
        %s1226 = sld [smem:[#allocation4 + %s1225]]
        %s1227 = sadd.s32 %s1217, 5
        %s1228 = sld [smem:[#allocation4 + %s1227]]
        %s1229 = sadd.s32 %s1217, 6
        %s1230 = sld [smem:[#allocation4 + %s1229]]
        %s1231 = sadd.s32 %s1217, 7
        %s1232 = sld [smem:[#allocation4 + %s1231]]
        %s1233 = sadd.s32 %s1217, 8
        %s1234 = sld [smem:[#allocation4 + %s1233]]
        %s1235 = sld [smem:[#allocation7 + %s1216]]
        %v1236 = vstv %s1218
        %v1237 = vmul.f32 %v1236, %v305
        %v1238 = vmul.f32 %v1236, %v306
        %v1239 = vstv %s1220
        %v1240 = vmul.f32 %v1239, %v307
        %v1241 = vmul.f32 %v1239, %v308
        %v1242 = vadd.f32 %v1237, %v1240
        %v1243 = vadd.f32 %v1238, %v1241
        %v1244 = vstv %s1222
        %v1245 = vmul.f32 %v1244, %v309
        %v1246 = vmul.f32 %v1244, %v310
        %v1247 = vadd.f32 %v1242, %v1245
        %v1248 = vadd.f32 %v1243, %v1246
        %v1249 = vstv %s1224
        %v1250 = vmul.f32 %v1249, %v311
        %v1251 = vmul.f32 %v1249, %v312
        %v1252 = vadd.f32 %v1247, %v1250
        %v1253 = vadd.f32 %v1248, %v1251
        %v1254 = vstv %s1226
        %v1255 = vmul.f32 %v1254, %v313
        %v1256 = vmul.f32 %v1254, %v314
        %v1257 = vadd.f32 %v1252, %v1255
        %v1258 = vadd.f32 %v1253, %v1256
        %v1259 = vstv %s1228
        %v1260 = vmul.f32 %v1259, %v315
        %v1261 = vmul.f32 %v1259, %v316
        %v1262 = vadd.f32 %v1257, %v1260
        %v1263 = vadd.f32 %v1258, %v1261
        %v1264 = vstv %s1230
        %v1265 = vmul.f32 %v1264, %v317
        %v1266 = vmul.f32 %v1264, %v318
        %v1267 = vadd.f32 %v1262, %v1265
        %v1268 = vadd.f32 %v1263, %v1266
        %v1269 = vstv %s1232
        %v1270 = vmul.f32 %v1269, %v319
        %v1271 = vmul.f32 %v1269, %v320
        %v1272 = vadd.f32 %v1267, %v1270
        %v1273 = vadd.f32 %v1268, %v1271
        %v1274 = vstv %s1234
        %v1275 = vmul.f32 %v1274, %v321
        %v1276 = vmul.f32 %v1274, %v322
        %v1277 = vadd.f32 %v1272, %v1275
        %v1278 = vadd.f32 %v1273, %v1276
        %v1279 = vstv %s1235
        %v1280 = vadd.f32 %v1277, %v1279
        %v1281 = vadd.f32 %v1278, %v1279
        %v1282 = vmax.f32 %v1280, 0.0
        %v1283 = vmax.f32 %v1281, 0.0
        %1286 = vst [vmem:[#allocation1] ss:$4 sm:$0xff] %v1282
        %s1287 = scalar_lea.vmem [#allocation1], 32
        %1288 = vst [vmem:[%s1287] ss:$4 sm:$0xff] %v1283
        %v1289 = vld.sshfl [vmem:[#allocation1] sm:$0xff pattern:$0x73625140]
        %v1290 = vld.sshfl [vmem:[#allocation1 + $0x8] sm:$0xff pattern:$0x73625140]
        %v1291 = vld.sshfl [vmem:[#allocation1 + $0x10] sm:$0xff pattern:$0x73625140]
        %v1292 = vld.sshfl [vmem:[#allocation1 + $0x18] sm:$0xff pattern:$0x73625140]
        %v1293 = vld.sshfl [vmem:[#allocation1 + $0x20] sm:$0xff pattern:$0x73625140]
        %v1294 = vld.sshfl [vmem:[#allocation1 + $0x28] sm:$0xff pattern:$0x73625140]
        %v1301 = vpack.c.bf16 %v1290, %v1289
        %v1302 = vpack.c.bf16 %v1292, %v1291
        %v1303 = vpack.c.bf16 %v1294, %v1293
        %v1307 = vrot.slane %v1301, 3
        %v1308 = vrot.slane %v1302, 6
        %v1309 = vrot.slane %v1302, 1
        %v1310 = vrot.slane %v1303, 4
        %v1311 = vrot.slane %v1303, 7
        %v1314 = vsel %vm419, %v1301, %v1307
        %v1316 = vsel %vm423, %v1314, %v1308
        %v1319 = vsel %vm426, %v1309, %v1310
        %v1321 = vsel %vm430, %v1319, %v1311
        %v1322 = vsel %vm433, %v1316, %v1321
        %s1324 = scalar_lea.vmem [#allocation3], 48
        %1325 = vst.msk [vmem:[%s1324] sm:$0x3f] %vm444, %v1322
        %s1326 = sadd.s32 %s323, 9
        %s1327 = smul.u32 %s1326, 128
        %s1328 = sld [smem:[#allocation4 + %s1327]]
        %s1329 = sadd.s32 %s1327, 1
        %s1330 = sld [smem:[#allocation4 + %s1329]]
        %s1331 = sadd.s32 %s1327, 2
        %s1332 = sld [smem:[#allocation4 + %s1331]]
        %s1333 = sadd.s32 %s1327, 3
        %s1334 = sld [smem:[#allocation4 + %s1333]]
        %s1335 = sadd.s32 %s1327, 4
        %s1336 = sld [smem:[#allocation4 + %s1335]]
        %s1337 = sadd.s32 %s1327, 5
        %s1338 = sld [smem:[#allocation4 + %s1337]]
        %s1339 = sadd.s32 %s1327, 6
        %s1340 = sld [smem:[#allocation4 + %s1339]]
        %s1341 = sadd.s32 %s1327, 7
        %s1342 = sld [smem:[#allocation4 + %s1341]]
        %s1343 = sadd.s32 %s1327, 8
        %s1344 = sld [smem:[#allocation4 + %s1343]]
        %s1345 = sld [smem:[#allocation7 + %s1326]]
        %v1346 = vstv %s1328
        %v1347 = vmul.f32 %v1346, %v305
        %v1348 = vmul.f32 %v1346, %v306
        %v1349 = vstv %s1330
        %v1350 = vmul.f32 %v1349, %v307
        %v1351 = vmul.f32 %v1349, %v308
        %v1352 = vadd.f32 %v1347, %v1350
        %v1353 = vadd.f32 %v1348, %v1351
        %v1354 = vstv %s1332
        %v1355 = vmul.f32 %v1354, %v309
        %v1356 = vmul.f32 %v1354, %v310
        %v1357 = vadd.f32 %v1352, %v1355
        %v1358 = vadd.f32 %v1353, %v1356
        %v1359 = vstv %s1334
        %v1360 = vmul.f32 %v1359, %v311
        %v1361 = vmul.f32 %v1359, %v312
        %v1362 = vadd.f32 %v1357, %v1360
        %v1363 = vadd.f32 %v1358, %v1361
        %v1364 = vstv %s1336
        %v1365 = vmul.f32 %v1364, %v313
        %v1366 = vmul.f32 %v1364, %v314
        %v1367 = vadd.f32 %v1362, %v1365
        %v1368 = vadd.f32 %v1363, %v1366
        %v1369 = vstv %s1338
        %v1370 = vmul.f32 %v1369, %v315
        %v1371 = vmul.f32 %v1369, %v316
        %v1372 = vadd.f32 %v1367, %v1370
        %v1373 = vadd.f32 %v1368, %v1371
        %v1374 = vstv %s1340
        %v1375 = vmul.f32 %v1374, %v317
        %v1376 = vmul.f32 %v1374, %v318
        %v1377 = vadd.f32 %v1372, %v1375
        %v1378 = vadd.f32 %v1373, %v1376
        %v1379 = vstv %s1342
        %v1380 = vmul.f32 %v1379, %v319
        %v1381 = vmul.f32 %v1379, %v320
        %v1382 = vadd.f32 %v1377, %v1380
        %v1383 = vadd.f32 %v1378, %v1381
        %v1384 = vstv %s1344
        %v1385 = vmul.f32 %v1384, %v321
        %v1386 = vmul.f32 %v1384, %v322
        %v1387 = vadd.f32 %v1382, %v1385
        %v1388 = vadd.f32 %v1383, %v1386
        %v1389 = vstv %s1345
        %v1390 = vadd.f32 %v1387, %v1389
        %v1391 = vadd.f32 %v1388, %v1389
        %v1392 = vmax.f32 %v1390, 0.0
        %v1393 = vmax.f32 %v1391, 0.0
        %1396 = vst [vmem:[#allocation1] ss:$4 sm:$0xff] %v1392
        %s1397 = scalar_lea.vmem [#allocation1], 32
        %1398 = vst [vmem:[%s1397] ss:$4 sm:$0xff] %v1393
        %v1399 = vld.sshfl [vmem:[#allocation1] sm:$0xff pattern:$0x73625140]
        %v1400 = vld.sshfl [vmem:[#allocation1 + $0x8] sm:$0xff pattern:$0x73625140]
        %v1401 = vld.sshfl [vmem:[#allocation1 + $0x10] sm:$0xff pattern:$0x73625140]
        %v1402 = vld.sshfl [vmem:[#allocation1 + $0x18] sm:$0xff pattern:$0x73625140]
        %v1403 = vld.sshfl [vmem:[#allocation1 + $0x20] sm:$0xff pattern:$0x73625140]
        %v1404 = vld.sshfl [vmem:[#allocation1 + $0x28] sm:$0xff pattern:$0x73625140]
        %v1411 = vpack.c.bf16 %v1400, %v1399
        %v1412 = vpack.c.bf16 %v1402, %v1401
        %v1413 = vpack.c.bf16 %v1404, %v1403
        %v1417 = vrot.slane %v1411, 3
        %v1418 = vrot.slane %v1412, 6
        %v1419 = vrot.slane %v1412, 1
        %v1420 = vrot.slane %v1413, 4
        %v1421 = vrot.slane %v1413, 7
        %v1424 = vsel %vm419, %v1411, %v1417
        %v1426 = vsel %vm423, %v1424, %v1418
        %v1429 = vsel %vm426, %v1419, %v1420
        %v1431 = vsel %vm430, %v1429, %v1421
        %v1432 = vsel %vm433, %v1426, %v1431
        %s1434 = scalar_lea.vmem [#allocation3], 54
        %1435 = vst.msk [vmem:[%s1434] sm:$0x3f] %vm444, %v1432
        %s1436 = sadd.s32 %s323, 10
        %s1437 = smul.u32 %s1436, 128
        %s1438 = sld [smem:[#allocation4 + %s1437]]
        %s1439 = sadd.s32 %s1437, 1
        %s1440 = sld [smem:[#allocation4 + %s1439]]
        %s1441 = sadd.s32 %s1437, 2
        %s1442 = sld [smem:[#allocation4 + %s1441]]
        %s1443 = sadd.s32 %s1437, 3
        %s1444 = sld [smem:[#allocation4 + %s1443]]
        %s1445 = sadd.s32 %s1437, 4
        %s1446 = sld [smem:[#allocation4 + %s1445]]
        %s1447 = sadd.s32 %s1437, 5
        %s1448 = sld [smem:[#allocation4 + %s1447]]
        %s1449 = sadd.s32 %s1437, 6
        %s1450 = sld [smem:[#allocation4 + %s1449]]
        %s1451 = sadd.s32 %s1437, 7
        %s1452 = sld [smem:[#allocation4 + %s1451]]
        %s1453 = sadd.s32 %s1437, 8
        %s1454 = sld [smem:[#allocation4 + %s1453]]
        %s1455 = sld [smem:[#allocation7 + %s1436]]
        %v1456 = vstv %s1438
        %v1457 = vmul.f32 %v1456, %v305
        %v1458 = vmul.f32 %v1456, %v306
        %v1459 = vstv %s1440
        %v1460 = vmul.f32 %v1459, %v307
        %v1461 = vmul.f32 %v1459, %v308
        %v1462 = vadd.f32 %v1457, %v1460
        %v1463 = vadd.f32 %v1458, %v1461
        %v1464 = vstv %s1442
        %v1465 = vmul.f32 %v1464, %v309
        %v1466 = vmul.f32 %v1464, %v310
        %v1467 = vadd.f32 %v1462, %v1465
        %v1468 = vadd.f32 %v1463, %v1466
        %v1469 = vstv %s1444
        %v1470 = vmul.f32 %v1469, %v311
        %v1471 = vmul.f32 %v1469, %v312
        %v1472 = vadd.f32 %v1467, %v1470
        %v1473 = vadd.f32 %v1468, %v1471
        %v1474 = vstv %s1446
        %v1475 = vmul.f32 %v1474, %v313
        %v1476 = vmul.f32 %v1474, %v314
        %v1477 = vadd.f32 %v1472, %v1475
        %v1478 = vadd.f32 %v1473, %v1476
        %v1479 = vstv %s1448
        %v1480 = vmul.f32 %v1479, %v315
        %v1481 = vmul.f32 %v1479, %v316
        %v1482 = vadd.f32 %v1477, %v1480
        %v1483 = vadd.f32 %v1478, %v1481
        %v1484 = vstv %s1450
        %v1485 = vmul.f32 %v1484, %v317
        %v1486 = vmul.f32 %v1484, %v318
        %v1487 = vadd.f32 %v1482, %v1485
        %v1488 = vadd.f32 %v1483, %v1486
        %v1489 = vstv %s1452
        %v1490 = vmul.f32 %v1489, %v319
        %v1491 = vmul.f32 %v1489, %v320
        %v1492 = vadd.f32 %v1487, %v1490
        %v1493 = vadd.f32 %v1488, %v1491
        %v1494 = vstv %s1454
        %v1495 = vmul.f32 %v1494, %v321
        %v1496 = vmul.f32 %v1494, %v322
        %v1497 = vadd.f32 %v1492, %v1495
        %v1498 = vadd.f32 %v1493, %v1496
        %v1499 = vstv %s1455
        %v1500 = vadd.f32 %v1497, %v1499
        %v1501 = vadd.f32 %v1498, %v1499
        %v1502 = vmax.f32 %v1500, 0.0
        %v1503 = vmax.f32 %v1501, 0.0
        %1506 = vst [vmem:[#allocation1] ss:$4 sm:$0xff] %v1502
        %s1507 = scalar_lea.vmem [#allocation1], 32
        %1508 = vst [vmem:[%s1507] ss:$4 sm:$0xff] %v1503
        %v1509 = vld.sshfl [vmem:[#allocation1] sm:$0xff pattern:$0x73625140]
        %v1510 = vld.sshfl [vmem:[#allocation1 + $0x8] sm:$0xff pattern:$0x73625140]
        %v1511 = vld.sshfl [vmem:[#allocation1 + $0x10] sm:$0xff pattern:$0x73625140]
        %v1512 = vld.sshfl [vmem:[#allocation1 + $0x18] sm:$0xff pattern:$0x73625140]
        %v1513 = vld.sshfl [vmem:[#allocation1 + $0x20] sm:$0xff pattern:$0x73625140]
        %v1514 = vld.sshfl [vmem:[#allocation1 + $0x28] sm:$0xff pattern:$0x73625140]
        %v1521 = vpack.c.bf16 %v1510, %v1509
        %v1522 = vpack.c.bf16 %v1512, %v1511
        %v1523 = vpack.c.bf16 %v1514, %v1513
        %v1527 = vrot.slane %v1521, 3
        %v1528 = vrot.slane %v1522, 6
        %v1529 = vrot.slane %v1522, 1
        %v1530 = vrot.slane %v1523, 4
        %v1531 = vrot.slane %v1523, 7
        %v1534 = vsel %vm419, %v1521, %v1527
        %v1536 = vsel %vm423, %v1534, %v1528
        %v1539 = vsel %vm426, %v1529, %v1530
        %v1541 = vsel %vm430, %v1539, %v1531
        %v1542 = vsel %vm433, %v1536, %v1541
        %s1544 = scalar_lea.vmem [#allocation3], 60
        %1545 = vst.msk [vmem:[%s1544] sm:$0x3f] %vm444, %v1542
        %s1546 = sadd.s32 %s323, 11
        %s1547 = smul.u32 %s1546, 128
        %s1548 = sld [smem:[#allocation4 + %s1547]]
        %s1549 = sadd.s32 %s1547, 1
        %s1550 = sld [smem:[#allocation4 + %s1549]]
        %s1551 = sadd.s32 %s1547, 2
        %s1552 = sld [smem:[#allocation4 + %s1551]]
        %s1553 = sadd.s32 %s1547, 3
        %s1554 = sld [smem:[#allocation4 + %s1553]]
        %s1555 = sadd.s32 %s1547, 4
        %s1556 = sld [smem:[#allocation4 + %s1555]]
        %s1557 = sadd.s32 %s1547, 5
        %s1558 = sld [smem:[#allocation4 + %s1557]]
        %s1559 = sadd.s32 %s1547, 6
        %s1560 = sld [smem:[#allocation4 + %s1559]]
        %s1561 = sadd.s32 %s1547, 7
        %s1562 = sld [smem:[#allocation4 + %s1561]]
        %s1563 = sadd.s32 %s1547, 8
        %s1564 = sld [smem:[#allocation4 + %s1563]]
        %s1565 = sld [smem:[#allocation7 + %s1546]]
        %v1566 = vstv %s1548
        %v1567 = vmul.f32 %v1566, %v305
        %v1568 = vmul.f32 %v1566, %v306
        %v1569 = vstv %s1550
        %v1570 = vmul.f32 %v1569, %v307
        %v1571 = vmul.f32 %v1569, %v308
        %v1572 = vadd.f32 %v1567, %v1570
        %v1573 = vadd.f32 %v1568, %v1571
        %v1574 = vstv %s1552
        %v1575 = vmul.f32 %v1574, %v309
        %v1576 = vmul.f32 %v1574, %v310
        %v1577 = vadd.f32 %v1572, %v1575
        %v1578 = vadd.f32 %v1573, %v1576
        %v1579 = vstv %s1554
        %v1580 = vmul.f32 %v1579, %v311
        %v1581 = vmul.f32 %v1579, %v312
        %v1582 = vadd.f32 %v1577, %v1580
        %v1583 = vadd.f32 %v1578, %v1581
        %v1584 = vstv %s1556
        %v1585 = vmul.f32 %v1584, %v313
        %v1586 = vmul.f32 %v1584, %v314
        %v1587 = vadd.f32 %v1582, %v1585
        %v1588 = vadd.f32 %v1583, %v1586
        %v1589 = vstv %s1558
        %v1590 = vmul.f32 %v1589, %v315
        %v1591 = vmul.f32 %v1589, %v316
        %v1592 = vadd.f32 %v1587, %v1590
        %v1593 = vadd.f32 %v1588, %v1591
        %v1594 = vstv %s1560
        %v1595 = vmul.f32 %v1594, %v317
        %v1596 = vmul.f32 %v1594, %v318
        %v1597 = vadd.f32 %v1592, %v1595
        %v1598 = vadd.f32 %v1593, %v1596
        %v1599 = vstv %s1562
        %v1600 = vmul.f32 %v1599, %v319
        %v1601 = vmul.f32 %v1599, %v320
        %v1602 = vadd.f32 %v1597, %v1600
        %v1603 = vadd.f32 %v1598, %v1601
        %v1604 = vstv %s1564
        %v1605 = vmul.f32 %v1604, %v321
        %v1606 = vmul.f32 %v1604, %v322
        %v1607 = vadd.f32 %v1602, %v1605
        %v1608 = vadd.f32 %v1603, %v1606
        %v1609 = vstv %s1565
        %v1610 = vadd.f32 %v1607, %v1609
        %v1611 = vadd.f32 %v1608, %v1609
        %v1612 = vmax.f32 %v1610, 0.0
        %v1613 = vmax.f32 %v1611, 0.0
        %1616 = vst [vmem:[#allocation1] ss:$4 sm:$0xff] %v1612
        %s1617 = scalar_lea.vmem [#allocation1], 32
        %1618 = vst [vmem:[%s1617] ss:$4 sm:$0xff] %v1613
        %v1619 = vld.sshfl [vmem:[#allocation1] sm:$0xff pattern:$0x73625140]
        %v1620 = vld.sshfl [vmem:[#allocation1 + $0x8] sm:$0xff pattern:$0x73625140]
        %v1621 = vld.sshfl [vmem:[#allocation1 + $0x10] sm:$0xff pattern:$0x73625140]
        %v1622 = vld.sshfl [vmem:[#allocation1 + $0x18] sm:$0xff pattern:$0x73625140]
        %v1623 = vld.sshfl [vmem:[#allocation1 + $0x20] sm:$0xff pattern:$0x73625140]
        %v1624 = vld.sshfl [vmem:[#allocation1 + $0x28] sm:$0xff pattern:$0x73625140]
        %v1631 = vpack.c.bf16 %v1620, %v1619
        %v1632 = vpack.c.bf16 %v1622, %v1621
        %v1633 = vpack.c.bf16 %v1624, %v1623
        %v1637 = vrot.slane %v1631, 3
        %v1638 = vrot.slane %v1632, 6
        %v1639 = vrot.slane %v1632, 1
        %v1640 = vrot.slane %v1633, 4
        %v1641 = vrot.slane %v1633, 7
        %v1644 = vsel %vm419, %v1631, %v1637
        %v1646 = vsel %vm423, %v1644, %v1638
        %v1649 = vsel %vm426, %v1639, %v1640
        %v1651 = vsel %vm430, %v1649, %v1641
        %v1652 = vsel %vm433, %v1646, %v1651
        %s1654 = scalar_lea.vmem [#allocation3], 66
        %1655 = vst.msk [vmem:[%s1654] sm:$0x3f] %vm444, %v1652
        %s1656 = sadd.s32 %s323, 12
        %s1657 = smul.u32 %s1656, 128
        %s1658 = sld [smem:[#allocation4 + %s1657]]
        %s1659 = sadd.s32 %s1657, 1
        %s1660 = sld [smem:[#allocation4 + %s1659]]
        %s1661 = sadd.s32 %s1657, 2
        %s1662 = sld [smem:[#allocation4 + %s1661]]
        %s1663 = sadd.s32 %s1657, 3
        %s1664 = sld [smem:[#allocation4 + %s1663]]
        %s1665 = sadd.s32 %s1657, 4
        %s1666 = sld [smem:[#allocation4 + %s1665]]
        %s1667 = sadd.s32 %s1657, 5
        %s1668 = sld [smem:[#allocation4 + %s1667]]
        %s1669 = sadd.s32 %s1657, 6
        %s1670 = sld [smem:[#allocation4 + %s1669]]
        %s1671 = sadd.s32 %s1657, 7
        %s1672 = sld [smem:[#allocation4 + %s1671]]
        %s1673 = sadd.s32 %s1657, 8
        %s1674 = sld [smem:[#allocation4 + %s1673]]
        %s1675 = sld [smem:[#allocation7 + %s1656]]
        %v1676 = vstv %s1658
        %v1677 = vmul.f32 %v1676, %v305
        %v1678 = vmul.f32 %v1676, %v306
        %v1679 = vstv %s1660
        %v1680 = vmul.f32 %v1679, %v307
        %v1681 = vmul.f32 %v1679, %v308
        %v1682 = vadd.f32 %v1677, %v1680
        %v1683 = vadd.f32 %v1678, %v1681
        %v1684 = vstv %s1662
        %v1685 = vmul.f32 %v1684, %v309
        %v1686 = vmul.f32 %v1684, %v310
        %v1687 = vadd.f32 %v1682, %v1685
        %v1688 = vadd.f32 %v1683, %v1686
        %v1689 = vstv %s1664
        %v1690 = vmul.f32 %v1689, %v311
        %v1691 = vmul.f32 %v1689, %v312
        %v1692 = vadd.f32 %v1687, %v1690
        %v1693 = vadd.f32 %v1688, %v1691
        %v1694 = vstv %s1666
        %v1695 = vmul.f32 %v1694, %v313
        %v1696 = vmul.f32 %v1694, %v314
        %v1697 = vadd.f32 %v1692, %v1695
        %v1698 = vadd.f32 %v1693, %v1696
        %v1699 = vstv %s1668
        %v1700 = vmul.f32 %v1699, %v315
        %v1701 = vmul.f32 %v1699, %v316
        %v1702 = vadd.f32 %v1697, %v1700
        %v1703 = vadd.f32 %v1698, %v1701
        %v1704 = vstv %s1670
        %v1705 = vmul.f32 %v1704, %v317
        %v1706 = vmul.f32 %v1704, %v318
        %v1707 = vadd.f32 %v1702, %v1705
        %v1708 = vadd.f32 %v1703, %v1706
        %v1709 = vstv %s1672
        %v1710 = vmul.f32 %v1709, %v319
        %v1711 = vmul.f32 %v1709, %v320
        %v1712 = vadd.f32 %v1707, %v1710
        %v1713 = vadd.f32 %v1708, %v1711
        %v1714 = vstv %s1674
        %v1715 = vmul.f32 %v1714, %v321
        %v1716 = vmul.f32 %v1714, %v322
        %v1717 = vadd.f32 %v1712, %v1715
        %v1718 = vadd.f32 %v1713, %v1716
        %v1719 = vstv %s1675
        %v1720 = vadd.f32 %v1717, %v1719
        %v1721 = vadd.f32 %v1718, %v1719
        %v1722 = vmax.f32 %v1720, 0.0
        %v1723 = vmax.f32 %v1721, 0.0
        %1726 = vst [vmem:[#allocation1] ss:$4 sm:$0xff] %v1722
        %s1727 = scalar_lea.vmem [#allocation1], 32
        %1728 = vst [vmem:[%s1727] ss:$4 sm:$0xff] %v1723
        %v1729 = vld.sshfl [vmem:[#allocation1] sm:$0xff pattern:$0x73625140]
        %v1730 = vld.sshfl [vmem:[#allocation1 + $0x8] sm:$0xff pattern:$0x73625140]
        %v1731 = vld.sshfl [vmem:[#allocation1 + $0x10] sm:$0xff pattern:$0x73625140]
        %v1732 = vld.sshfl [vmem:[#allocation1 + $0x18] sm:$0xff pattern:$0x73625140]
        %v1733 = vld.sshfl [vmem:[#allocation1 + $0x20] sm:$0xff pattern:$0x73625140]
        %v1734 = vld.sshfl [vmem:[#allocation1 + $0x28] sm:$0xff pattern:$0x73625140]
        %v1741 = vpack.c.bf16 %v1730, %v1729
        %v1742 = vpack.c.bf16 %v1732, %v1731
        %v1743 = vpack.c.bf16 %v1734, %v1733
        %v1747 = vrot.slane %v1741, 3
        %v1748 = vrot.slane %v1742, 6
        %v1749 = vrot.slane %v1742, 1
        %v1750 = vrot.slane %v1743, 4
        %v1751 = vrot.slane %v1743, 7
        %v1754 = vsel %vm419, %v1741, %v1747
        %v1756 = vsel %vm423, %v1754, %v1748
        %v1759 = vsel %vm426, %v1749, %v1750
        %v1761 = vsel %vm430, %v1759, %v1751
        %v1762 = vsel %vm433, %v1756, %v1761
        %s1764 = scalar_lea.vmem [#allocation3], 72
        %1765 = vst.msk [vmem:[%s1764] sm:$0x3f] %vm444, %v1762
        %s1766 = sadd.s32 %s323, 13
        %s1767 = smul.u32 %s1766, 128
        %s1768 = sld [smem:[#allocation4 + %s1767]]
        %s1769 = sadd.s32 %s1767, 1
        %s1770 = sld [smem:[#allocation4 + %s1769]]
        %s1771 = sadd.s32 %s1767, 2
        %s1772 = sld [smem:[#allocation4 + %s1771]]
        %s1773 = sadd.s32 %s1767, 3
        %s1774 = sld [smem:[#allocation4 + %s1773]]
        %s1775 = sadd.s32 %s1767, 4
        %s1776 = sld [smem:[#allocation4 + %s1775]]
        %s1777 = sadd.s32 %s1767, 5
        %s1778 = sld [smem:[#allocation4 + %s1777]]
        %s1779 = sadd.s32 %s1767, 6
        %s1780 = sld [smem:[#allocation4 + %s1779]]
        %s1781 = sadd.s32 %s1767, 7
        %s1782 = sld [smem:[#allocation4 + %s1781]]
        %s1783 = sadd.s32 %s1767, 8
        %s1784 = sld [smem:[#allocation4 + %s1783]]
        %s1785 = sld [smem:[#allocation7 + %s1766]]
        %v1786 = vstv %s1768
        %v1787 = vmul.f32 %v1786, %v305
        %v1788 = vmul.f32 %v1786, %v306
        %v1789 = vstv %s1770
        %v1790 = vmul.f32 %v1789, %v307
        %v1791 = vmul.f32 %v1789, %v308
        %v1792 = vadd.f32 %v1787, %v1790
        %v1793 = vadd.f32 %v1788, %v1791
        %v1794 = vstv %s1772
        %v1795 = vmul.f32 %v1794, %v309
        %v1796 = vmul.f32 %v1794, %v310
        %v1797 = vadd.f32 %v1792, %v1795
        %v1798 = vadd.f32 %v1793, %v1796
        %v1799 = vstv %s1774
        %v1800 = vmul.f32 %v1799, %v311
        %v1801 = vmul.f32 %v1799, %v312
        %v1802 = vadd.f32 %v1797, %v1800
        %v1803 = vadd.f32 %v1798, %v1801
        %v1804 = vstv %s1776
        %v1805 = vmul.f32 %v1804, %v313
        %v1806 = vmul.f32 %v1804, %v314
        %v1807 = vadd.f32 %v1802, %v1805
        %v1808 = vadd.f32 %v1803, %v1806
        %v1809 = vstv %s1778
        %v1810 = vmul.f32 %v1809, %v315
        %v1811 = vmul.f32 %v1809, %v316
        %v1812 = vadd.f32 %v1807, %v1810
        %v1813 = vadd.f32 %v1808, %v1811
        %v1814 = vstv %s1780
        %v1815 = vmul.f32 %v1814, %v317
        %v1816 = vmul.f32 %v1814, %v318
        %v1817 = vadd.f32 %v1812, %v1815
        %v1818 = vadd.f32 %v1813, %v1816
        %v1819 = vstv %s1782
        %v1820 = vmul.f32 %v1819, %v319
        %v1821 = vmul.f32 %v1819, %v320
        %v1822 = vadd.f32 %v1817, %v1820
        %v1823 = vadd.f32 %v1818, %v1821
        %v1824 = vstv %s1784
        %v1825 = vmul.f32 %v1824, %v321
        %v1826 = vmul.f32 %v1824, %v322
        %v1827 = vadd.f32 %v1822, %v1825
        %v1828 = vadd.f32 %v1823, %v1826
        %v1829 = vstv %s1785
        %v1830 = vadd.f32 %v1827, %v1829
        %v1831 = vadd.f32 %v1828, %v1829
        %v1832 = vmax.f32 %v1830, 0.0
        %v1833 = vmax.f32 %v1831, 0.0
        %1836 = vst [vmem:[#allocation1] ss:$4 sm:$0xff] %v1832
        %s1837 = scalar_lea.vmem [#allocation1], 32
        %1838 = vst [vmem:[%s1837] ss:$4 sm:$0xff] %v1833
        %v1839 = vld.sshfl [vmem:[#allocation1] sm:$0xff pattern:$0x73625140]
        %v1840 = vld.sshfl [vmem:[#allocation1 + $0x8] sm:$0xff pattern:$0x73625140]
        %v1841 = vld.sshfl [vmem:[#allocation1 + $0x10] sm:$0xff pattern:$0x73625140]
        %v1842 = vld.sshfl [vmem:[#allocation1 + $0x18] sm:$0xff pattern:$0x73625140]
        %v1843 = vld.sshfl [vmem:[#allocation1 + $0x20] sm:$0xff pattern:$0x73625140]
        %v1844 = vld.sshfl [vmem:[#allocation1 + $0x28] sm:$0xff pattern:$0x73625140]
        %v1851 = vpack.c.bf16 %v1840, %v1839
        %v1852 = vpack.c.bf16 %v1842, %v1841
        %v1853 = vpack.c.bf16 %v1844, %v1843
        %v1857 = vrot.slane %v1851, 3
        %v1858 = vrot.slane %v1852, 6
        %v1859 = vrot.slane %v1852, 1
        %v1860 = vrot.slane %v1853, 4
        %v1861 = vrot.slane %v1853, 7
        %v1864 = vsel %vm419, %v1851, %v1857
        %v1866 = vsel %vm423, %v1864, %v1858
        %v1869 = vsel %vm426, %v1859, %v1860
        %v1871 = vsel %vm430, %v1869, %v1861
        %v1872 = vsel %vm433, %v1866, %v1871
        %s1874 = scalar_lea.vmem [#allocation3], 78
        %1875 = vst.msk [vmem:[%s1874] sm:$0x3f] %vm444, %v1872
        %s1876 = sadd.s32 %s323, 14
        %s1877 = smul.u32 %s1876, 128
        %s1878 = sld [smem:[#allocation4 + %s1877]]
        %s1879 = sadd.s32 %s1877, 1
        %s1880 = sld [smem:[#allocation4 + %s1879]]
        %s1881 = sadd.s32 %s1877, 2
        %s1882 = sld [smem:[#allocation4 + %s1881]]
        %s1883 = sadd.s32 %s1877, 3
        %s1884 = sld [smem:[#allocation4 + %s1883]]
        %s1885 = sadd.s32 %s1877, 4
        %s1886 = sld [smem:[#allocation4 + %s1885]]
        %s1887 = sadd.s32 %s1877, 5
        %s1888 = sld [smem:[#allocation4 + %s1887]]
        %s1889 = sadd.s32 %s1877, 6
        %s1890 = sld [smem:[#allocation4 + %s1889]]
        %s1891 = sadd.s32 %s1877, 7
        %s1892 = sld [smem:[#allocation4 + %s1891]]
        %s1893 = sadd.s32 %s1877, 8
        %s1894 = sld [smem:[#allocation4 + %s1893]]
        %s1895 = sld [smem:[#allocation7 + %s1876]]
        %v1896 = vstv %s1878
        %v1897 = vmul.f32 %v1896, %v305
        %v1898 = vmul.f32 %v1896, %v306
        %v1899 = vstv %s1880
        %v1900 = vmul.f32 %v1899, %v307
        %v1901 = vmul.f32 %v1899, %v308
        %v1902 = vadd.f32 %v1897, %v1900
        %v1903 = vadd.f32 %v1898, %v1901
        %v1904 = vstv %s1882
        %v1905 = vmul.f32 %v1904, %v309
        %v1906 = vmul.f32 %v1904, %v310
        %v1907 = vadd.f32 %v1902, %v1905
        %v1908 = vadd.f32 %v1903, %v1906
        %v1909 = vstv %s1884
        %v1910 = vmul.f32 %v1909, %v311
        %v1911 = vmul.f32 %v1909, %v312
        %v1912 = vadd.f32 %v1907, %v1910
        %v1913 = vadd.f32 %v1908, %v1911
        %v1914 = vstv %s1886
        %v1915 = vmul.f32 %v1914, %v313
        %v1916 = vmul.f32 %v1914, %v314
        %v1917 = vadd.f32 %v1912, %v1915
        %v1918 = vadd.f32 %v1913, %v1916
        %v1919 = vstv %s1888
        %v1920 = vmul.f32 %v1919, %v315
        %v1921 = vmul.f32 %v1919, %v316
        %v1922 = vadd.f32 %v1917, %v1920
        %v1923 = vadd.f32 %v1918, %v1921
        %v1924 = vstv %s1890
        %v1925 = vmul.f32 %v1924, %v317
        %v1926 = vmul.f32 %v1924, %v318
        %v1927 = vadd.f32 %v1922, %v1925
        %v1928 = vadd.f32 %v1923, %v1926
        %v1929 = vstv %s1892
        %v1930 = vmul.f32 %v1929, %v319
        %v1931 = vmul.f32 %v1929, %v320
        %v1932 = vadd.f32 %v1927, %v1930
        %v1933 = vadd.f32 %v1928, %v1931
        %v1934 = vstv %s1894
        %v1935 = vmul.f32 %v1934, %v321
        %v1936 = vmul.f32 %v1934, %v322
        %v1937 = vadd.f32 %v1932, %v1935
        %v1938 = vadd.f32 %v1933, %v1936
        %v1939 = vstv %s1895
        %v1940 = vadd.f32 %v1937, %v1939
        %v1941 = vadd.f32 %v1938, %v1939
        %v1942 = vmax.f32 %v1940, 0.0
        %v1943 = vmax.f32 %v1941, 0.0
        %1946 = vst [vmem:[#allocation1] ss:$4 sm:$0xff] %v1942
        %s1947 = scalar_lea.vmem [#allocation1], 32
        %1948 = vst [vmem:[%s1947] ss:$4 sm:$0xff] %v1943
        %v1949 = vld.sshfl [vmem:[#allocation1] sm:$0xff pattern:$0x73625140]
        %v1950 = vld.sshfl [vmem:[#allocation1 + $0x8] sm:$0xff pattern:$0x73625140]
        %v1951 = vld.sshfl [vmem:[#allocation1 + $0x10] sm:$0xff pattern:$0x73625140]
        %v1952 = vld.sshfl [vmem:[#allocation1 + $0x18] sm:$0xff pattern:$0x73625140]
        %v1953 = vld.sshfl [vmem:[#allocation1 + $0x20] sm:$0xff pattern:$0x73625140]
        %v1954 = vld.sshfl [vmem:[#allocation1 + $0x28] sm:$0xff pattern:$0x73625140]
        %v1961 = vpack.c.bf16 %v1950, %v1949
        %v1962 = vpack.c.bf16 %v1952, %v1951
        %v1963 = vpack.c.bf16 %v1954, %v1953
        %v1967 = vrot.slane %v1961, 3
        %v1968 = vrot.slane %v1962, 6
        %v1969 = vrot.slane %v1962, 1
        %v1970 = vrot.slane %v1963, 4
        %v1971 = vrot.slane %v1963, 7
        %v1974 = vsel %vm419, %v1961, %v1967
        %v1976 = vsel %vm423, %v1974, %v1968
        %v1979 = vsel %vm426, %v1969, %v1970
        %v1981 = vsel %vm430, %v1979, %v1971
        %v1982 = vsel %vm433, %v1976, %v1981
        %s1984 = scalar_lea.vmem [#allocation3], 84
        %1985 = vst.msk [vmem:[%s1984] sm:$0x3f] %vm444, %v1982
        %s1986 = sadd.s32 %s323, 15
        %s1987 = smul.u32 %s1986, 128
        %s1988 = sld [smem:[#allocation4 + %s1987]]
        %s1989 = sadd.s32 %s1987, 1
        %s1990 = sld [smem:[#allocation4 + %s1989]]
        %s1991 = sadd.s32 %s1987, 2
        %s1992 = sld [smem:[#allocation4 + %s1991]]
        %s1993 = sadd.s32 %s1987, 3
        %s1994 = sld [smem:[#allocation4 + %s1993]]
        %s1995 = sadd.s32 %s1987, 4
        %s1996 = sld [smem:[#allocation4 + %s1995]]
        %s1997 = sadd.s32 %s1987, 5
        %s1998 = sld [smem:[#allocation4 + %s1997]]
        %s1999 = sadd.s32 %s1987, 6
        %s2000 = sld [smem:[#allocation4 + %s1999]]
        %s2001 = sadd.s32 %s1987, 7
        %s2002 = sld [smem:[#allocation4 + %s2001]]
        %s2003 = sadd.s32 %s1987, 8
        %s2004 = sld [smem:[#allocation4 + %s2003]]
        %s2005 = sld [smem:[#allocation7 + %s1986]]
        %v2006 = vstv %s1988
        %v2007 = vmul.f32 %v2006, %v305
        %v2008 = vmul.f32 %v2006, %v306
        %v2009 = vstv %s1990
        %v2010 = vmul.f32 %v2009, %v307
        %v2011 = vmul.f32 %v2009, %v308
        %v2012 = vadd.f32 %v2007, %v2010
        %v2013 = vadd.f32 %v2008, %v2011
        %v2014 = vstv %s1992
        %v2015 = vmul.f32 %v2014, %v309
        %v2016 = vmul.f32 %v2014, %v310
        %v2017 = vadd.f32 %v2012, %v2015
        %v2018 = vadd.f32 %v2013, %v2016
        %v2019 = vstv %s1994
        %v2020 = vmul.f32 %v2019, %v311
        %v2021 = vmul.f32 %v2019, %v312
        %v2022 = vadd.f32 %v2017, %v2020
        %v2023 = vadd.f32 %v2018, %v2021
        %v2024 = vstv %s1996
        %v2025 = vmul.f32 %v2024, %v313
        %v2026 = vmul.f32 %v2024, %v314
        %v2027 = vadd.f32 %v2022, %v2025
        %v2028 = vadd.f32 %v2023, %v2026
        %v2029 = vstv %s1998
        %v2030 = vmul.f32 %v2029, %v315
        %v2031 = vmul.f32 %v2029, %v316
        %v2032 = vadd.f32 %v2027, %v2030
        %v2033 = vadd.f32 %v2028, %v2031
        %v2034 = vstv %s2000
        %v2035 = vmul.f32 %v2034, %v317
        %v2036 = vmul.f32 %v2034, %v318
        %v2037 = vadd.f32 %v2032, %v2035
        %v2038 = vadd.f32 %v2033, %v2036
        %v2039 = vstv %s2002
        %v2040 = vmul.f32 %v2039, %v319
        %v2041 = vmul.f32 %v2039, %v320
        %v2042 = vadd.f32 %v2037, %v2040
        %v2043 = vadd.f32 %v2038, %v2041
        %v2044 = vstv %s2004
        %v2045 = vmul.f32 %v2044, %v321
        %v2046 = vmul.f32 %v2044, %v322
        %v2047 = vadd.f32 %v2042, %v2045
        %v2048 = vadd.f32 %v2043, %v2046
        %v2049 = vstv %s2005
        %v2050 = vadd.f32 %v2047, %v2049
        %v2051 = vadd.f32 %v2048, %v2049
        %v2052 = vmax.f32 %v2050, 0.0
        %v2053 = vmax.f32 %v2051, 0.0
        %2056 = vst [vmem:[#allocation1] ss:$4 sm:$0xff] %v2052
        %s2057 = scalar_lea.vmem [#allocation1], 32
        %2058 = vst [vmem:[%s2057] ss:$4 sm:$0xff] %v2053
        %v2059 = vld.sshfl [vmem:[#allocation1] sm:$0xff pattern:$0x73625140]
        %v2060 = vld.sshfl [vmem:[#allocation1 + $0x8] sm:$0xff pattern:$0x73625140]
        %v2061 = vld.sshfl [vmem:[#allocation1 + $0x10] sm:$0xff pattern:$0x73625140]
        %v2062 = vld.sshfl [vmem:[#allocation1 + $0x18] sm:$0xff pattern:$0x73625140]
        %v2063 = vld.sshfl [vmem:[#allocation1 + $0x20] sm:$0xff pattern:$0x73625140]
        %v2064 = vld.sshfl [vmem:[#allocation1 + $0x28] sm:$0xff pattern:$0x73625140]
        %v2071 = vpack.c.bf16 %v2060, %v2059
        %v2072 = vpack.c.bf16 %v2062, %v2061
        %v2073 = vpack.c.bf16 %v2064, %v2063
        %v2077 = vrot.slane %v2071, 3
        %v2078 = vrot.slane %v2072, 6
        %v2079 = vrot.slane %v2072, 1
        %v2080 = vrot.slane %v2073, 4
        %v2081 = vrot.slane %v2073, 7
        %v2084 = vsel %vm419, %v2071, %v2077
        %v2086 = vsel %vm423, %v2084, %v2078
        %v2089 = vsel %vm426, %v2079, %v2080
        %v2091 = vsel %vm430, %v2089, %v2081
        %v2092 = vsel %vm433, %v2086, %v2091
        %s2094 = scalar_lea.vmem [#allocation3], 90
        %2095 = vst.msk [vmem:[%s2094] sm:$0x3f] %vm444, %v2092
        %v2096 = vld [vmem:[#allocation3] sm:$0x3f]
        %v2097 = vld [vmem:[#allocation3 + $0x6] sm:$0x3f]
        %v2098 = vld [vmem:[#allocation3 + $0xc] sm:$0x3f]
        %v2099 = vld [vmem:[#allocation3 + $0x12] sm:$0x3f]
        %v2100 = vld [vmem:[#allocation3 + $0x18] sm:$0x3f]
        %v2101 = vld [vmem:[#allocation3 + $0x1e] sm:$0x3f]
        %v2102 = vld [vmem:[#allocation3 + $0x24] sm:$0x3f]
        %v2103 = vld [vmem:[#allocation3 + $0x2a] sm:$0x3f]
        %v2104 = vld [vmem:[#allocation3 + $0x30] sm:$0x3f]
        %v2105 = vld [vmem:[#allocation3 + $0x36] sm:$0x3f]
        %v2106 = vld [vmem:[#allocation3 + $0x3c] sm:$0x3f]
        %v2107 = vld [vmem:[#allocation3 + $0x42] sm:$0x3f]
        %v2108 = vld [vmem:[#allocation3 + $0x48] sm:$0x3f]
        %v2109 = vld [vmem:[#allocation3 + $0x4e] sm:$0x3f]
        %v2110 = vld [vmem:[#allocation3 + $0x54] sm:$0x3f]
        %v2111 = vld [vmem:[#allocation3 + $0x5a] sm:$0x3f]
        %v2112 = vld [vmem:[%s297] sm:$0xf]
        %v2113 = vld [vmem:[%s297 + $0x4] sm:$0xf]
        %v2114 = vld [vmem:[%s297 + $0x8] sm:$0xf]
        %v2115 = vld [vmem:[%s297 + $0xc] sm:$0xf]
        %v2116 = vld [vmem:[%s297 + $0x10] sm:$0xf]
        %v2117 = vld [vmem:[%s297 + $0x14] sm:$0xf]
        %v2118 = vld [vmem:[%s297 + $0x18] sm:$0xf]
        %v2119 = vld [vmem:[%s297 + $0x1c] sm:$0xf]
        %v2120 = vld [vmem:[%s297 + $0x20] sm:$0xf]
        %v2121 = vld [vmem:[%s297 + $0x24] sm:$0xf]
        %v2122 = vld [vmem:[%s297 + $0x28] sm:$0xf]
        %v2123 = vld [vmem:[%s297 + $0x2c] sm:$0xf]
        %v2124 = vld [vmem:[%s297 + $0x30] sm:$0xf]
        %v2125 = vld [vmem:[%s297 + $0x34] sm:$0xf]
        %v2126 = vld [vmem:[%s297 + $0x38] sm:$0xf]
        %v2127 = vld [vmem:[%s297 + $0x3c] sm:$0xf]
        %v2128 = vld [vmem:[%s297 + $0x40] sm:$0xf]
        %v2129 = vld [vmem:[%s297 + $0x44] sm:$0xf]
        %v2130 = vld [vmem:[%s297 + $0x48] sm:$0xf]
        %v2131 = vld [vmem:[%s297 + $0x4c] sm:$0xf]
        %v2132 = vld [vmem:[%s297 + $0x50] sm:$0xf]
        %v2133 = vld [vmem:[%s297 + $0x54] sm:$0xf]
        %v2134 = vld [vmem:[%s297 + $0x58] sm:$0xf]
        %v2135 = vld [vmem:[%s297 + $0x5c] sm:$0xf]
        %v2136 = vld [vmem:[%s297 + $0x60] sm:$0xf]
        %v2137 = vld [vmem:[%s297 + $0x64] sm:$0xf]
        %v2138 = vld [vmem:[%s297 + $0x68] sm:$0xf]
        %v2139 = vld [vmem:[%s297 + $0x6c] sm:$0xf]
        %v2140 = vld [vmem:[%s297 + $0x70] sm:$0xf]
        %v2141 = vld [vmem:[%s297 + $0x74] sm:$0xf]
        %v2142 = vld [vmem:[%s297 + $0x78] sm:$0xf]
        %v2143 = vld [vmem:[%s297 + $0x7c] sm:$0xf]
        %v2144 = vld [vmem:[%s297 + $0x80] sm:$0xf]
        %v2145 = vld [vmem:[%s297 + $0x84] sm:$0xf]
        %v2146 = vld [vmem:[%s297 + $0x88] sm:$0xf]
        %v2147 = vld [vmem:[%s297 + $0x8c] sm:$0xf]
        %v2148 = vld [vmem:[%s297 + $0x90] sm:$0xf]
        %v2149 = vld [vmem:[%s297 + $0x94] sm:$0xf]
        %v2150 = vld [vmem:[%s297 + $0x98] sm:$0xf]
        %v2151 = vld [vmem:[%s297 + $0x9c] sm:$0xf]
        %v2152 = vld [vmem:[%s297 + $0xa0] sm:$0xf]
        %v2153 = vld [vmem:[%s297 + $0xa4] sm:$0xf]
        %v2154 = vld [vmem:[%s297 + $0xa8] sm:$0xf]
        %v2155 = vld [vmem:[%s297 + $0xac] sm:$0xf]
        %v2156 = vld [vmem:[%s297 + $0xb0] sm:$0xf]
        %v2157 = vld [vmem:[%s297 + $0xb4] sm:$0xf]
        %v2158 = vld [vmem:[%s297 + $0xb8] sm:$0xf]
        %v2159 = vld [vmem:[%s297 + $0xbc] sm:$0xf]
        %v2160 = vld [vmem:[%s297 + $0xc0] sm:$0xf]
        %v2161 = vld [vmem:[%s297 + $0xc4] sm:$0xf]
        %v2162 = vld [vmem:[%s297 + $0xc8] sm:$0xf]
        %v2163 = vld [vmem:[%s297 + $0xcc] sm:$0xf]
        %v2164 = vld [vmem:[%s297 + $0xd0] sm:$0xf]
        %v2165 = vld [vmem:[%s297 + $0xd4] sm:$0xf]
        %v2166 = vld [vmem:[%s297 + $0xd8] sm:$0xf]
        %v2167 = vld [vmem:[%s297 + $0xdc] sm:$0xf]
        %v2168 = vld [vmem:[%s297 + $0xe0] sm:$0xf]
        %v2169 = vld [vmem:[%s297 + $0xe4] sm:$0xf]
        %v2170 = vld [vmem:[%s297 + $0xe8] sm:$0xf]
        %v2171 = vld [vmem:[%s297 + $0xec] sm:$0xf]
        %v2172 = vld [vmem:[%s297 + $0xf0] sm:$0xf]
        %v2173 = vld [vmem:[%s297 + $0xf4] sm:$0xf]
        %v2174 = vld [vmem:[%s297 + $0xf8] sm:$0xf]
        %v2175 = vld [vmem:[%s297 + $0xfc] sm:$0xf]
        %v2176 = vld [vmem:[%s297 + $0x100] sm:$0xf]
        %v2177 = vld [vmem:[%s297 + $0x104] sm:$0xf]
        %v2178 = vld [vmem:[%s297 + $0x108] sm:$0xf]
        %v2179 = vld [vmem:[%s297 + $0x10c] sm:$0xf]
        %v2180 = vld [vmem:[%s297 + $0x110] sm:$0xf]
        %v2181 = vld [vmem:[%s297 + $0x114] sm:$0xf]
        %v2182 = vld [vmem:[%s297 + $0x118] sm:$0xf]
        %v2183 = vld [vmem:[%s297 + $0x11c] sm:$0xf]
        %v2184 = vld [vmem:[%s297 + $0x120] sm:$0xf]
        %v2185 = vld [vmem:[%s297 + $0x124] sm:$0xf]
        %v2186 = vld [vmem:[%s297 + $0x128] sm:$0xf]
        %v2187 = vld [vmem:[%s297 + $0x12c] sm:$0xf]
        %v2188 = vld [vmem:[%s297 + $0x130] sm:$0xf]
        %v2189 = vld [vmem:[%s297 + $0x134] sm:$0xf]
        %v2190 = vld [vmem:[%s297 + $0x138] sm:$0xf]
        %v2191 = vld [vmem:[%s297 + $0x13c] sm:$0xf]
        %v2192 = vld [vmem:[%s297 + $0x140] sm:$0xf]
        %v2193 = vld [vmem:[%s297 + $0x144] sm:$0xf]
        %v2194 = vld [vmem:[%s297 + $0x148] sm:$0xf]
        %v2195 = vld [vmem:[%s297 + $0x14c] sm:$0xf]
        %v2196 = vld [vmem:[%s297 + $0x150] sm:$0x3]
        %v2197 = vld [vmem:[%s297 + $0x154] sm:$0xf]
        %v2198 = vld [vmem:[%s297 + $0x158] sm:$0xf]
        %v2199 = vld [vmem:[%s297 + $0x15c] sm:$0xf]
        %v2200 = vld [vmem:[%s297 + $0x160] sm:$0xf]
        %v2201 = vld [vmem:[%s297 + $0x164] sm:$0xf]
        %v2202 = vld [vmem:[%s297 + $0x168] sm:$0xf]
        %v2203 = vld [vmem:[%s297 + $0x16c] sm:$0xf]
        %v2204 = vld [vmem:[%s297 + $0x170] sm:$0xf]
        %v2205 = vld [vmem:[%s297 + $0x174] sm:$0xf]
        %v2206 = vld [vmem:[%s297 + $0x178] sm:$0xf]
        %v2207 = vld [vmem:[%s297 + $0x17c] sm:$0xf]
        %v2208 = vld [vmem:[%s297 + $0x180] sm:$0xf]
        %v2209 = vld [vmem:[%s297 + $0x184] sm:$0xf]
        %v2210 = vld [vmem:[%s297 + $0x188] sm:$0xf]
        %v2211 = vld [vmem:[%s297 + $0x18c] sm:$0xf]
        %v2212 = vld [vmem:[%s297 + $0x190] sm:$0xf]
        %v2213 = vld [vmem:[%s297 + $0x194] sm:$0xf]
        %v2214 = vld [vmem:[%s297 + $0x198] sm:$0xf]
        %v2215 = vld [vmem:[%s297 + $0x19c] sm:$0xf]
        %v2216 = vld [vmem:[%s297 + $0x1a0] sm:$0xf]
        %v2217 = vld [vmem:[%s297 + $0x1a4] sm:$0xf]
        %v2218 = vld [vmem:[%s297 + $0x1a8] sm:$0xf]
        %v2219 = vld [vmem:[%s297 + $0x1ac] sm:$0xf]
        %v2220 = vld [vmem:[%s297 + $0x1b0] sm:$0xf]
        %v2221 = vld [vmem:[%s297 + $0x1b4] sm:$0xf]
        %v2222 = vld [vmem:[%s297 + $0x1b8] sm:$0xf]
        %v2223 = vld [vmem:[%s297 + $0x1bc] sm:$0xf]
        %v2224 = vld [vmem:[%s297 + $0x1c0] sm:$0xf]
        %v2225 = vld [vmem:[%s297 + $0x1c4] sm:$0xf]
        %v2226 = vld [vmem:[%s297 + $0x1c8] sm:$0xf]
        %v2227 = vld [vmem:[%s297 + $0x1cc] sm:$0xf]
        %v2228 = vld [vmem:[%s297 + $0x1d0] sm:$0xf]
        %v2229 = vld [vmem:[%s297 + $0x1d4] sm:$0xf]
        %v2230 = vld [vmem:[%s297 + $0x1d8] sm:$0xf]
        %v2231 = vld [vmem:[%s297 + $0x1dc] sm:$0xf]
        %v2232 = vld [vmem:[%s297 + $0x1e0] sm:$0xf]
        %v2233 = vld [vmem:[%s297 + $0x1e4] sm:$0xf]
        %v2234 = vld [vmem:[%s297 + $0x1e8] sm:$0xf]
        %v2235 = vld [vmem:[%s297 + $0x1ec] sm:$0xf]
        %v2236 = vld [vmem:[%s297 + $0x1f0] sm:$0xf]
        %v2237 = vld [vmem:[%s297 + $0x1f4] sm:$0xf]
        %v2238 = vld [vmem:[%s297 + $0x1f8] sm:$0xf]
        %v2239 = vld [vmem:[%s297 + $0x1fc] sm:$0xf]
        %v2240 = vld [vmem:[%s297 + $0x200] sm:$0xf]
        %v2241 = vld [vmem:[%s297 + $0x204] sm:$0xf]
        %v2242 = vld [vmem:[%s297 + $0x208] sm:$0xf]
        %v2243 = vld [vmem:[%s297 + $0x20c] sm:$0xf]
        %v2244 = vld [vmem:[%s297 + $0x210] sm:$0xf]
        %v2245 = vld [vmem:[%s297 + $0x214] sm:$0xf]
        %v2246 = vld [vmem:[%s297 + $0x218] sm:$0xf]
        %v2247 = vld [vmem:[%s297 + $0x21c] sm:$0xf]
        %v2248 = vld [vmem:[%s297 + $0x220] sm:$0xf]
        %v2249 = vld [vmem:[%s297 + $0x224] sm:$0xf]
        %v2250 = vld [vmem:[%s297 + $0x228] sm:$0xf]
        %v2251 = vld [vmem:[%s297 + $0x22c] sm:$0xf]
        %v2252 = vld [vmem:[%s297 + $0x230] sm:$0xf]
        %v2253 = vld [vmem:[%s297 + $0x234] sm:$0xf]
        %v2254 = vld [vmem:[%s297 + $0x238] sm:$0xf]
        %v2255 = vld [vmem:[%s297 + $0x23c] sm:$0xf]
        %v2256 = vld [vmem:[%s297 + $0x240] sm:$0xf]
        %v2257 = vld [vmem:[%s297 + $0x244] sm:$0xf]
        %v2258 = vld [vmem:[%s297 + $0x248] sm:$0xf]
        %v2259 = vld [vmem:[%s297 + $0x24c] sm:$0xf]
        %v2260 = vld [vmem:[%s297 + $0x250] sm:$0xf]
        %v2261 = vld [vmem:[%s297 + $0x254] sm:$0xf]
        %v2262 = vld [vmem:[%s297 + $0x258] sm:$0xf]
        %v2263 = vld [vmem:[%s297 + $0x25c] sm:$0xf]
        %v2264 = vld [vmem:[%s297 + $0x260] sm:$0xf]
        %v2265 = vld [vmem:[%s297 + $0x264] sm:$0xf]
        %v2266 = vld [vmem:[%s297 + $0x268] sm:$0xf]
        %v2267 = vld [vmem:[%s297 + $0x26c] sm:$0xf]
        %v2268 = vld [vmem:[%s297 + $0x270] sm:$0xf]
        %v2269 = vld [vmem:[%s297 + $0x274] sm:$0xf]
        %v2270 = vld [vmem:[%s297 + $0x278] sm:$0xf]
        %v2271 = vld [vmem:[%s297 + $0x27c] sm:$0xf]
        %v2272 = vld [vmem:[%s297 + $0x280] sm:$0xf]
        %v2273 = vld [vmem:[%s297 + $0x284] sm:$0xf]
        %v2274 = vld [vmem:[%s297 + $0x288] sm:$0xf]
        %v2275 = vld [vmem:[%s297 + $0x28c] sm:$0xf]
        %v2276 = vld [vmem:[%s297 + $0x290] sm:$0xf]
        %v2277 = vld [vmem:[%s297 + $0x294] sm:$0xf]
        %v2278 = vld [vmem:[%s297 + $0x298] sm:$0xf]
        %v2279 = vld [vmem:[%s297 + $0x29c] sm:$0xf]
        %v2280 = vld [vmem:[%s297 + $0x2a0] sm:$0xf]
        %v2281 = vld [vmem:[%s297 + $0x2a4] sm:$0x3]
        %v2282 = vld [vmem:[%s297 + $0x2a8] sm:$0xf]
        %v2283 = vld [vmem:[%s297 + $0x2ac] sm:$0xf]
        %v2284 = vld [vmem:[%s297 + $0x2b0] sm:$0xf]
        %v2285 = vld [vmem:[%s297 + $0x2b4] sm:$0xf]
        %v2286 = vld [vmem:[%s297 + $0x2b8] sm:$0xf]
        %v2287 = vld [vmem:[%s297 + $0x2bc] sm:$0xf]
        %v2288 = vld [vmem:[%s297 + $0x2c0] sm:$0xf]
        %v2289 = vld [vmem:[%s297 + $0x2c4] sm:$0xf]
        %v2290 = vld [vmem:[%s297 + $0x2c8] sm:$0xf]
        %v2291 = vld [vmem:[%s297 + $0x2cc] sm:$0xf]
        %v2292 = vld [vmem:[%s297 + $0x2d0] sm:$0xf]
        %v2293 = vld [vmem:[%s297 + $0x2d4] sm:$0xf]
        %v2294 = vld [vmem:[%s297 + $0x2d8] sm:$0xf]
        %v2295 = vld [vmem:[%s297 + $0x2dc] sm:$0xf]
        %v2296 = vld [vmem:[%s297 + $0x2e0] sm:$0xf]
        %v2297 = vld [vmem:[%s297 + $0x2e4] sm:$0xf]
        %v2298 = vld [vmem:[%s297 + $0x2e8] sm:$0xf]
        %v2299 = vld [vmem:[%s297 + $0x2ec] sm:$0xf]
        %v2300 = vld [vmem:[%s297 + $0x2f0] sm:$0xf]
        %v2301 = vld [vmem:[%s297 + $0x2f4] sm:$0xf]
        %v2302 = vld [vmem:[%s297 + $0x2f8] sm:$0xf]
        %v2303 = vld [vmem:[%s297 + $0x2fc] sm:$0xf]
        %v2304 = vld [vmem:[%s297 + $0x300] sm:$0xf]
        %v2305 = vld [vmem:[%s297 + $0x304] sm:$0xf]
        %v2306 = vld [vmem:[%s297 + $0x308] sm:$0xf]
        %v2307 = vld [vmem:[%s297 + $0x30c] sm:$0xf]
        %v2308 = vld [vmem:[%s297 + $0x310] sm:$0xf]
        %v2309 = vld [vmem:[%s297 + $0x314] sm:$0xf]
        %v2310 = vld [vmem:[%s297 + $0x318] sm:$0xf]
        %v2311 = vld [vmem:[%s297 + $0x31c] sm:$0xf]
        %v2312 = vld [vmem:[%s297 + $0x320] sm:$0xf]
        %v2313 = vld [vmem:[%s297 + $0x324] sm:$0xf]
        %v2314 = vld [vmem:[%s297 + $0x328] sm:$0xf]
        %v2315 = vld [vmem:[%s297 + $0x32c] sm:$0xf]
        %v2316 = vld [vmem:[%s297 + $0x330] sm:$0xf]
        %v2317 = vld [vmem:[%s297 + $0x334] sm:$0xf]
        %v2318 = vld [vmem:[%s297 + $0x338] sm:$0xf]
        %v2319 = vld [vmem:[%s297 + $0x33c] sm:$0xf]
        %v2320 = vld [vmem:[%s297 + $0x340] sm:$0xf]
        %v2321 = vld [vmem:[%s297 + $0x344] sm:$0xf]
        %v2322 = vld [vmem:[%s297 + $0x348] sm:$0xf]
        %v2323 = vld [vmem:[%s297 + $0x34c] sm:$0xf]
        %v2324 = vld [vmem:[%s297 + $0x350] sm:$0xf]
        %v2325 = vld [vmem:[%s297 + $0x354] sm:$0xf]
        %v2326 = vld [vmem:[%s297 + $0x358] sm:$0xf]
        %v2327 = vld [vmem:[%s297 + $0x35c] sm:$0xf]
        %v2328 = vld [vmem:[%s297 + $0x360] sm:$0xf]
        %v2329 = vld [vmem:[%s297 + $0x364] sm:$0xf]
        %v2330 = vld [vmem:[%s297 + $0x368] sm:$0xf]
        %v2331 = vld [vmem:[%s297 + $0x36c] sm:$0xf]
        %v2332 = vld [vmem:[%s297 + $0x370] sm:$0xf]
        %v2333 = vld [vmem:[%s297 + $0x374] sm:$0xf]
        %v2334 = vld [vmem:[%s297 + $0x378] sm:$0xf]
        %v2335 = vld [vmem:[%s297 + $0x37c] sm:$0xf]
        %v2336 = vld [vmem:[%s297 + $0x380] sm:$0xf]
        %v2337 = vld [vmem:[%s297 + $0x384] sm:$0xf]
        %v2338 = vld [vmem:[%s297 + $0x388] sm:$0xf]
        %v2339 = vld [vmem:[%s297 + $0x38c] sm:$0xf]
        %v2340 = vld [vmem:[%s297 + $0x390] sm:$0xf]
        %v2341 = vld [vmem:[%s297 + $0x394] sm:$0xf]
        %v2342 = vld [vmem:[%s297 + $0x398] sm:$0xf]
        %v2343 = vld [vmem:[%s297 + $0x39c] sm:$0xf]
        %v2344 = vld [vmem:[%s297 + $0x3a0] sm:$0xf]
        %v2345 = vld [vmem:[%s297 + $0x3a4] sm:$0xf]
        %v2346 = vld [vmem:[%s297 + $0x3a8] sm:$0xf]
        %v2347 = vld [vmem:[%s297 + $0x3ac] sm:$0xf]
        %v2348 = vld [vmem:[%s297 + $0x3b0] sm:$0xf]
        %v2349 = vld [vmem:[%s297 + $0x3b4] sm:$0xf]
        %v2350 = vld [vmem:[%s297 + $0x3b8] sm:$0xf]
        %v2351 = vld [vmem:[%s297 + $0x3bc] sm:$0xf]
        %v2352 = vld [vmem:[%s297 + $0x3c0] sm:$0xf]
        %v2353 = vld [vmem:[%s297 + $0x3c4] sm:$0xf]
        %v2354 = vld [vmem:[%s297 + $0x3c8] sm:$0xf]
        %v2355 = vld [vmem:[%s297 + $0x3cc] sm:$0xf]
        %v2356 = vld [vmem:[%s297 + $0x3d0] sm:$0xf]
        %v2357 = vld [vmem:[%s297 + $0x3d4] sm:$0xf]
        %v2358 = vld [vmem:[%s297 + $0x3d8] sm:$0xf]
        %v2359 = vld [vmem:[%s297 + $0x3dc] sm:$0xf]
        %v2360 = vld [vmem:[%s297 + $0x3e0] sm:$0xf]
        %v2361 = vld [vmem:[%s297 + $0x3e4] sm:$0xf]
        %v2362 = vld [vmem:[%s297 + $0x3e8] sm:$0xf]
        %v2363 = vld [vmem:[%s297 + $0x3ec] sm:$0xf]
        %v2364 = vld [vmem:[%s297 + $0x3f0] sm:$0xf]
        %v2365 = vld [vmem:[%s297 + $0x3f4] sm:$0xf]
        %v2366 = vld [vmem:[%s297 + $0x3f8] sm:$0x3]
        %v2367 = vld [vmem:[%s297 + $0x3fc] sm:$0xf]
        %v2368 = vld [vmem:[%s297 + $0x400] sm:$0xf]
        %v2369 = vld [vmem:[%s297 + $0x404] sm:$0xf]
        %v2370 = vld [vmem:[%s297 + $0x408] sm:$0xf]
        %v2371 = vld [vmem:[%s297 + $0x40c] sm:$0xf]
        %v2372 = vld [vmem:[%s297 + $0x410] sm:$0xf]
        %v2373 = vld [vmem:[%s297 + $0x414] sm:$0xf]
        %v2374 = vld [vmem:[%s297 + $0x418] sm:$0xf]
        %v2375 = vld [vmem:[%s297 + $0x41c] sm:$0xf]
        %v2376 = vld [vmem:[%s297 + $0x420] sm:$0xf]
        %v2377 = vld [vmem:[%s297 + $0x424] sm:$0xf]
        %v2378 = vld [vmem:[%s297 + $0x428] sm:$0xf]
        %v2379 = vld [vmem:[%s297 + $0x42c] sm:$0xf]
        %v2380 = vld [vmem:[%s297 + $0x430] sm:$0xf]
        %v2381 = vld [vmem:[%s297 + $0x434] sm:$0xf]
        %v2382 = vld [vmem:[%s297 + $0x438] sm:$0xf]
        %v2383 = vld [vmem:[%s297 + $0x43c] sm:$0xf]
        %v2384 = vld [vmem:[%s297 + $0x440] sm:$0xf]
        %v2385 = vld [vmem:[%s297 + $0x444] sm:$0xf]
        %v2386 = vld [vmem:[%s297 + $0x448] sm:$0xf]
        %v2387 = vld [vmem:[%s297 + $0x44c] sm:$0xf]
        %v2388 = vld [vmem:[%s297 + $0x450] sm:$0xf]
        %v2389 = vld [vmem:[%s297 + $0x454] sm:$0xf]
        %v2390 = vld [vmem:[%s297 + $0x458] sm:$0xf]
        %v2391 = vld [vmem:[%s297 + $0x45c] sm:$0xf]
        %v2392 = vld [vmem:[%s297 + $0x460] sm:$0xf]
        %v2393 = vld [vmem:[%s297 + $0x464] sm:$0xf]
        %v2394 = vld [vmem:[%s297 + $0x468] sm:$0xf]
        %v2395 = vld [vmem:[%s297 + $0x46c] sm:$0xf]
        %v2396 = vld [vmem:[%s297 + $0x470] sm:$0xf]
        %v2397 = vld [vmem:[%s297 + $0x474] sm:$0xf]
        %v2398 = vld [vmem:[%s297 + $0x478] sm:$0xf]
        %v2399 = vld [vmem:[%s297 + $0x47c] sm:$0xf]
        %v2400 = vld [vmem:[%s297 + $0x480] sm:$0xf]
        %v2401 = vld [vmem:[%s297 + $0x484] sm:$0xf]
        %v2402 = vld [vmem:[%s297 + $0x488] sm:$0xf]
        %v2403 = vld [vmem:[%s297 + $0x48c] sm:$0xf]
        %v2404 = vld [vmem:[%s297 + $0x490] sm:$0xf]
        %v2405 = vld [vmem:[%s297 + $0x494] sm:$0xf]
        %v2406 = vld [vmem:[%s297 + $0x498] sm:$0xf]
        %v2407 = vld [vmem:[%s297 + $0x49c] sm:$0xf]
        %v2408 = vld [vmem:[%s297 + $0x4a0] sm:$0xf]
        %v2409 = vld [vmem:[%s297 + $0x4a4] sm:$0xf]
        %v2410 = vld [vmem:[%s297 + $0x4a8] sm:$0xf]
        %v2411 = vld [vmem:[%s297 + $0x4ac] sm:$0xf]
        %v2412 = vld [vmem:[%s297 + $0x4b0] sm:$0xf]
        %v2413 = vld [vmem:[%s297 + $0x4b4] sm:$0xf]
        %v2414 = vld [vmem:[%s297 + $0x4b8] sm:$0xf]
        %v2415 = vld [vmem:[%s297 + $0x4bc] sm:$0xf]
        %v2416 = vld [vmem:[%s297 + $0x4c0] sm:$0xf]
        %v2417 = vld [vmem:[%s297 + $0x4c4] sm:$0xf]
        %v2418 = vld [vmem:[%s297 + $0x4c8] sm:$0xf]
        %v2419 = vld [vmem:[%s297 + $0x4cc] sm:$0xf]
        %v2420 = vld [vmem:[%s297 + $0x4d0] sm:$0xf]
        %v2421 = vld [vmem:[%s297 + $0x4d4] sm:$0xf]
        %v2422 = vld [vmem:[%s297 + $0x4d8] sm:$0xf]
        %v2423 = vld [vmem:[%s297 + $0x4dc] sm:$0xf]
        %v2424 = vld [vmem:[%s297 + $0x4e0] sm:$0xf]
        %v2425 = vld [vmem:[%s297 + $0x4e4] sm:$0xf]
        %v2426 = vld [vmem:[%s297 + $0x4e8] sm:$0xf]
        %v2427 = vld [vmem:[%s297 + $0x4ec] sm:$0xf]
        %v2428 = vld [vmem:[%s297 + $0x4f0] sm:$0xf]
        %v2429 = vld [vmem:[%s297 + $0x4f4] sm:$0xf]
        %v2430 = vld [vmem:[%s297 + $0x4f8] sm:$0xf]
        %v2431 = vld [vmem:[%s297 + $0x4fc] sm:$0xf]
        %v2432 = vld [vmem:[%s297 + $0x500] sm:$0xf]
        %v2433 = vld [vmem:[%s297 + $0x504] sm:$0xf]
        %v2434 = vld [vmem:[%s297 + $0x508] sm:$0xf]
        %v2435 = vld [vmem:[%s297 + $0x50c] sm:$0xf]
        %v2436 = vld [vmem:[%s297 + $0x510] sm:$0xf]
        %v2437 = vld [vmem:[%s297 + $0x514] sm:$0xf]
        %v2438 = vld [vmem:[%s297 + $0x518] sm:$0xf]
        %v2439 = vld [vmem:[%s297 + $0x51c] sm:$0xf]
        %v2440 = vld [vmem:[%s297 + $0x520] sm:$0xf]
        %v2441 = vld [vmem:[%s297 + $0x524] sm:$0xf]
        %v2442 = vld [vmem:[%s297 + $0x528] sm:$0xf]
        %v2443 = vld [vmem:[%s297 + $0x52c] sm:$0xf]
        %v2444 = vld [vmem:[%s297 + $0x530] sm:$0xf]
        %v2445 = vld [vmem:[%s297 + $0x534] sm:$0xf]
        %v2446 = vld [vmem:[%s297 + $0x538] sm:$0xf]
        %v2447 = vld [vmem:[%s297 + $0x53c] sm:$0xf]
        %v2448 = vld [vmem:[%s297 + $0x540] sm:$0xf]
        %v2449 = vld [vmem:[%s297 + $0x544] sm:$0xf]
        %v2450 = vld [vmem:[%s297 + $0x548] sm:$0xf]
        %v2451 = vld [vmem:[%s297 + $0x54c] sm:$0x3]
        %v2452 = vld [vmem:[%s297 + $0x550] sm:$0xf]
        %v2453 = vld [vmem:[%s297 + $0x554] sm:$0xf]
        %v2454 = vld [vmem:[%s297 + $0x558] sm:$0xf]
        %v2455 = vld [vmem:[%s297 + $0x55c] sm:$0xf]
        %v2456 = vld [vmem:[%s297 + $0x560] sm:$0xf]
        %v2457 = vld [vmem:[%s297 + $0x564] sm:$0xf]
        %v2458 = vld [vmem:[%s297 + $0x568] sm:$0xf]
        %v2459 = vld [vmem:[%s297 + $0x56c] sm:$0xf]
        %v2460 = vld [vmem:[%s297 + $0x570] sm:$0xf]
        %v2461 = vld [vmem:[%s297 + $0x574] sm:$0xf]
        %v2462 = vld [vmem:[%s297 + $0x578] sm:$0xf]
        %v2463 = vld [vmem:[%s297 + $0x57c] sm:$0xf]
        %v2464 = vld [vmem:[%s297 + $0x580] sm:$0xf]
        %v2465 = vld [vmem:[%s297 + $0x584] sm:$0xf]
        %v2466 = vld [vmem:[%s297 + $0x588] sm:$0xf]
        %v2467 = vld [vmem:[%s297 + $0x58c] sm:$0xf]
        %v2468 = vld [vmem:[%s297 + $0x590] sm:$0xf]
        %v2469 = vld [vmem:[%s297 + $0x594] sm:$0xf]
        %v2470 = vld [vmem:[%s297 + $0x598] sm:$0xf]
        %v2471 = vld [vmem:[%s297 + $0x59c] sm:$0xf]
        %v2472 = vld [vmem:[%s297 + $0x5a0] sm:$0xf]
        %v2473 = vld [vmem:[%s297 + $0x5a4] sm:$0xf]
        %v2474 = vld [vmem:[%s297 + $0x5a8] sm:$0xf]
        %v2475 = vld [vmem:[%s297 + $0x5ac] sm:$0xf]
        %v2476 = vld [vmem:[%s297 + $0x5b0] sm:$0xf]
        %v2477 = vld [vmem:[%s297 + $0x5b4] sm:$0xf]
        %v2478 = vld [vmem:[%s297 + $0x5b8] sm:$0xf]
        %v2479 = vld [vmem:[%s297 + $0x5bc] sm:$0xf]
        %v2480 = vld [vmem:[%s297 + $0x5c0] sm:$0xf]
        %v2481 = vld [vmem:[%s297 + $0x5c4] sm:$0xf]
        %v2482 = vld [vmem:[%s297 + $0x5c8] sm:$0xf]
        %v2483 = vld [vmem:[%s297 + $0x5cc] sm:$0xf]
        %v2484 = vld [vmem:[%s297 + $0x5d0] sm:$0xf]
        %v2485 = vld [vmem:[%s297 + $0x5d4] sm:$0xf]
        %v2486 = vld [vmem:[%s297 + $0x5d8] sm:$0xf]
        %v2487 = vld [vmem:[%s297 + $0x5dc] sm:$0xf]
        %v2488 = vld [vmem:[%s297 + $0x5e0] sm:$0xf]
        %v2489 = vld [vmem:[%s297 + $0x5e4] sm:$0xf]
        %v2490 = vld [vmem:[%s297 + $0x5e8] sm:$0xf]
        %v2491 = vld [vmem:[%s297 + $0x5ec] sm:$0xf]
        %v2492 = vld [vmem:[%s297 + $0x5f0] sm:$0xf]
        %v2493 = vld [vmem:[%s297 + $0x5f4] sm:$0xf]
        %v2494 = vld [vmem:[%s297 + $0x5f8] sm:$0xf]
        %v2495 = vld [vmem:[%s297 + $0x5fc] sm:$0xf]
        %v2496 = vld [vmem:[%s297 + $0x600] sm:$0xf]
        %v2497 = vld [vmem:[%s297 + $0x604] sm:$0xf]
        %v2498 = vld [vmem:[%s297 + $0x608] sm:$0xf]
        %v2499 = vld [vmem:[%s297 + $0x60c] sm:$0xf]
        %v2500 = vld [vmem:[%s297 + $0x610] sm:$0xf]
        %v2501 = vld [vmem:[%s297 + $0x614] sm:$0xf]
        %v2502 = vld [vmem:[%s297 + $0x618] sm:$0xf]
        %v2503 = vld [vmem:[%s297 + $0x61c] sm:$0xf]
        %v2504 = vld [vmem:[%s297 + $0x620] sm:$0xf]
        %v2505 = vld [vmem:[%s297 + $0x624] sm:$0xf]
        %v2506 = vld [vmem:[%s297 + $0x628] sm:$0xf]
        %v2507 = vld [vmem:[%s297 + $0x62c] sm:$0xf]
        %v2508 = vld [vmem:[%s297 + $0x630] sm:$0xf]
        %v2509 = vld [vmem:[%s297 + $0x634] sm:$0xf]
        %v2510 = vld [vmem:[%s297 + $0x638] sm:$0xf]
        %v2511 = vld [vmem:[%s297 + $0x63c] sm:$0xf]
        %v2512 = vld [vmem:[%s297 + $0x640] sm:$0xf]
        %v2513 = vld [vmem:[%s297 + $0x644] sm:$0xf]
        %v2514 = vld [vmem:[%s297 + $0x648] sm:$0xf]
        %v2515 = vld [vmem:[%s297 + $0x64c] sm:$0xf]
        %v2516 = vld [vmem:[%s297 + $0x650] sm:$0xf]
        %v2517 = vld [vmem:[%s297 + $0x654] sm:$0xf]
        %v2518 = vld [vmem:[%s297 + $0x658] sm:$0xf]
        %v2519 = vld [vmem:[%s297 + $0x65c] sm:$0xf]
        %v2520 = vld [vmem:[%s297 + $0x660] sm:$0xf]
        %v2521 = vld [vmem:[%s297 + $0x664] sm:$0xf]
        %v2522 = vld [vmem:[%s297 + $0x668] sm:$0xf]
        %v2523 = vld [vmem:[%s297 + $0x66c] sm:$0xf]
        %v2524 = vld [vmem:[%s297 + $0x670] sm:$0xf]
        %v2525 = vld [vmem:[%s297 + $0x674] sm:$0xf]
        %v2526 = vld [vmem:[%s297 + $0x678] sm:$0xf]
        %v2527 = vld [vmem:[%s297 + $0x67c] sm:$0xf]
        %v2528 = vld [vmem:[%s297 + $0x680] sm:$0xf]
        %v2529 = vld [vmem:[%s297 + $0x684] sm:$0xf]
        %v2530 = vld [vmem:[%s297 + $0x688] sm:$0xf]
        %v2531 = vld [vmem:[%s297 + $0x68c] sm:$0xf]
        %v2532 = vld [vmem:[%s297 + $0x690] sm:$0xf]
        %v2533 = vld [vmem:[%s297 + $0x694] sm:$0xf]
        %v2534 = vld [vmem:[%s297 + $0x698] sm:$0xf]
        %v2535 = vld [vmem:[%s297 + $0x69c] sm:$0xf]
        %v2536 = vld [vmem:[%s297 + $0x6a0] sm:$0x3]
        %v2537 = vld [vmem:[%s297 + $0x6a4] sm:$0xf]
        %v2538 = vld [vmem:[%s297 + $0x6a8] sm:$0xf]
        %v2539 = vld [vmem:[%s297 + $0x6ac] sm:$0xf]
        %v2540 = vld [vmem:[%s297 + $0x6b0] sm:$0xf]
        %v2541 = vld [vmem:[%s297 + $0x6b4] sm:$0xf]
        %v2542 = vld [vmem:[%s297 + $0x6b8] sm:$0xf]
        %v2543 = vld [vmem:[%s297 + $0x6bc] sm:$0xf]
        %v2544 = vld [vmem:[%s297 + $0x6c0] sm:$0xf]
        %v2545 = vld [vmem:[%s297 + $0x6c4] sm:$0xf]
        %v2546 = vld [vmem:[%s297 + $0x6c8] sm:$0xf]
        %v2547 = vld [vmem:[%s297 + $0x6cc] sm:$0xf]
        %v2548 = vld [vmem:[%s297 + $0x6d0] sm:$0xf]
        %v2549 = vld [vmem:[%s297 + $0x6d4] sm:$0xf]
        %v2550 = vld [vmem:[%s297 + $0x6d8] sm:$0xf]
        %v2551 = vld [vmem:[%s297 + $0x6dc] sm:$0xf]
        %v2552 = vld [vmem:[%s297 + $0x6e0] sm:$0xf]
        %v2553 = vld [vmem:[%s297 + $0x6e4] sm:$0xf]
        %v2554 = vld [vmem:[%s297 + $0x6e8] sm:$0xf]
        %v2555 = vld [vmem:[%s297 + $0x6ec] sm:$0xf]
        %v2556 = vld [vmem:[%s297 + $0x6f0] sm:$0xf]
        %v2557 = vld [vmem:[%s297 + $0x6f4] sm:$0xf]
        %v2558 = vld [vmem:[%s297 + $0x6f8] sm:$0xf]
        %v2559 = vld [vmem:[%s297 + $0x6fc] sm:$0xf]
        %v2560 = vld [vmem:[%s297 + $0x700] sm:$0xf]
        %v2561 = vld [vmem:[%s297 + $0x704] sm:$0xf]
        %v2562 = vld [vmem:[%s297 + $0x708] sm:$0xf]
        %v2563 = vld [vmem:[%s297 + $0x70c] sm:$0xf]
        %v2564 = vld [vmem:[%s297 + $0x710] sm:$0xf]
        %v2565 = vld [vmem:[%s297 + $0x714] sm:$0xf]
        %v2566 = vld [vmem:[%s297 + $0x718] sm:$0xf]
        %v2567 = vld [vmem:[%s297 + $0x71c] sm:$0xf]
        %v2568 = vld [vmem:[%s297 + $0x720] sm:$0xf]
        %v2569 = vld [vmem:[%s297 + $0x724] sm:$0xf]
        %v2570 = vld [vmem:[%s297 + $0x728] sm:$0xf]
        %v2571 = vld [vmem:[%s297 + $0x72c] sm:$0xf]
        %v2572 = vld [vmem:[%s297 + $0x730] sm:$0xf]
        %v2573 = vld [vmem:[%s297 + $0x734] sm:$0xf]
        %v2574 = vld [vmem:[%s297 + $0x738] sm:$0xf]
        %v2575 = vld [vmem:[%s297 + $0x73c] sm:$0xf]
        %v2576 = vld [vmem:[%s297 + $0x740] sm:$0xf]
        %v2577 = vld [vmem:[%s297 + $0x744] sm:$0xf]
        %v2578 = vld [vmem:[%s297 + $0x748] sm:$0xf]
        %v2579 = vld [vmem:[%s297 + $0x74c] sm:$0xf]
        %v2580 = vld [vmem:[%s297 + $0x750] sm:$0xf]
        %v2581 = vld [vmem:[%s297 + $0x754] sm:$0xf]
        %v2582 = vld [vmem:[%s297 + $0x758] sm:$0xf]
        %v2583 = vld [vmem:[%s297 + $0x75c] sm:$0xf]
        %v2584 = vld [vmem:[%s297 + $0x760] sm:$0xf]
        %v2585 = vld [vmem:[%s297 + $0x764] sm:$0xf]
        %v2586 = vld [vmem:[%s297 + $0x768] sm:$0xf]
        %v2587 = vld [vmem:[%s297 + $0x76c] sm:$0xf]
        %v2588 = vld [vmem:[%s297 + $0x770] sm:$0xf]
        %v2589 = vld [vmem:[%s297 + $0x774] sm:$0xf]
        %v2590 = vld [vmem:[%s297 + $0x778] sm:$0xf]
        %v2591 = vld [vmem:[%s297 + $0x77c] sm:$0xf]
        %v2592 = vld [vmem:[%s297 + $0x780] sm:$0xf]
        %v2593 = vld [vmem:[%s297 + $0x784] sm:$0xf]
        %v2594 = vld [vmem:[%s297 + $0x788] sm:$0xf]
        %v2595 = vld [vmem:[%s297 + $0x78c] sm:$0xf]
        %v2596 = vld [vmem:[%s297 + $0x790] sm:$0xf]
        %v2597 = vld [vmem:[%s297 + $0x794] sm:$0xf]
        %v2598 = vld [vmem:[%s297 + $0x798] sm:$0xf]
        %v2599 = vld [vmem:[%s297 + $0x79c] sm:$0xf]
        %v2600 = vld [vmem:[%s297 + $0x7a0] sm:$0xf]
        %v2601 = vld [vmem:[%s297 + $0x7a4] sm:$0xf]
        %v2602 = vld [vmem:[%s297 + $0x7a8] sm:$0xf]
        %v2603 = vld [vmem:[%s297 + $0x7ac] sm:$0xf]
        %v2604 = vld [vmem:[%s297 + $0x7b0] sm:$0xf]
        %v2605 = vld [vmem:[%s297 + $0x7b4] sm:$0xf]
        %v2606 = vld [vmem:[%s297 + $0x7b8] sm:$0xf]
        %v2607 = vld [vmem:[%s297 + $0x7bc] sm:$0xf]
        %v2608 = vld [vmem:[%s297 + $0x7c0] sm:$0xf]
        %v2609 = vld [vmem:[%s297 + $0x7c4] sm:$0xf]
        %v2610 = vld [vmem:[%s297 + $0x7c8] sm:$0xf]
        %v2611 = vld [vmem:[%s297 + $0x7cc] sm:$0xf]
        %v2612 = vld [vmem:[%s297 + $0x7d0] sm:$0xf]
        %v2613 = vld [vmem:[%s297 + $0x7d4] sm:$0xf]
        %v2614 = vld [vmem:[%s297 + $0x7d8] sm:$0xf]
        %v2615 = vld [vmem:[%s297 + $0x7dc] sm:$0xf]
        %v2616 = vld [vmem:[%s297 + $0x7e0] sm:$0xf]
        %v2617 = vld [vmem:[%s297 + $0x7e4] sm:$0xf]
        %v2618 = vld [vmem:[%s297 + $0x7e8] sm:$0xf]
        %v2619 = vld [vmem:[%s297 + $0x7ec] sm:$0xf]
        %v2620 = vld [vmem:[%s297 + $0x7f0] sm:$0xf]
        %v2621 = vld [vmem:[%s297 + $0x7f4] sm:$0x3]
        %v2622 = vld [vmem:[%s297 + $0x7f8] sm:$0xf]
        %v2623 = vld [vmem:[%s297 + $0x7fc] sm:$0xf]
        %v2624 = vld [vmem:[%s297 + $0x800] sm:$0xf]
        %v2625 = vld [vmem:[%s297 + $0x804] sm:$0xf]
        %v2626 = vld [vmem:[%s297 + $0x808] sm:$0xf]
        %v2627 = vld [vmem:[%s297 + $0x80c] sm:$0xf]
        %v2628 = vld [vmem:[%s297 + $0x810] sm:$0xf]
        %v2629 = vld [vmem:[%s297 + $0x814] sm:$0xf]
        %v2630 = vld [vmem:[%s297 + $0x818] sm:$0xf]
        %v2631 = vld [vmem:[%s297 + $0x81c] sm:$0xf]
        %v2632 = vld [vmem:[%s297 + $0x820] sm:$0xf]
        %v2633 = vld [vmem:[%s297 + $0x824] sm:$0xf]
        %v2634 = vld [vmem:[%s297 + $0x828] sm:$0xf]
        %v2635 = vld [vmem:[%s297 + $0x82c] sm:$0xf]
        %v2636 = vld [vmem:[%s297 + $0x830] sm:$0xf]
        %v2637 = vld [vmem:[%s297 + $0x834] sm:$0xf]
        %v2638 = vld [vmem:[%s297 + $0x838] sm:$0xf]
        %v2639 = vld [vmem:[%s297 + $0x83c] sm:$0xf]
        %v2640 = vld [vmem:[%s297 + $0x840] sm:$0xf]
        %v2641 = vld [vmem:[%s297 + $0x844] sm:$0xf]
        %v2642 = vld [vmem:[%s297 + $0x848] sm:$0xf]
        %v2643 = vld [vmem:[%s297 + $0x84c] sm:$0xf]
        %v2644 = vld [vmem:[%s297 + $0x850] sm:$0xf]
        %v2645 = vld [vmem:[%s297 + $0x854] sm:$0xf]
        %v2646 = vld [vmem:[%s297 + $0x858] sm:$0xf]
        %v2647 = vld [vmem:[%s297 + $0x85c] sm:$0xf]
        %v2648 = vld [vmem:[%s297 + $0x860] sm:$0xf]
        %v2649 = vld [vmem:[%s297 + $0x864] sm:$0xf]
        %v2650 = vld [vmem:[%s297 + $0x868] sm:$0xf]
        %v2651 = vld [vmem:[%s297 + $0x86c] sm:$0xf]
        %v2652 = vld [vmem:[%s297 + $0x870] sm:$0xf]
        %v2653 = vld [vmem:[%s297 + $0x874] sm:$0xf]
        %v2654 = vld [vmem:[%s297 + $0x878] sm:$0xf]
        %v2655 = vld [vmem:[%s297 + $0x87c] sm:$0xf]
        %v2656 = vld [vmem:[%s297 + $0x880] sm:$0xf]
        %v2657 = vld [vmem:[%s297 + $0x884] sm:$0xf]
        %v2658 = vld [vmem:[%s297 + $0x888] sm:$0xf]
        %v2659 = vld [vmem:[%s297 + $0x88c] sm:$0xf]
        %v2660 = vld [vmem:[%s297 + $0x890] sm:$0xf]
        %v2661 = vld [vmem:[%s297 + $0x894] sm:$0xf]
        %v2662 = vld [vmem:[%s297 + $0x898] sm:$0xf]
        %v2663 = vld [vmem:[%s297 + $0x89c] sm:$0xf]
        %v2664 = vld [vmem:[%s297 + $0x8a0] sm:$0xf]
        %v2665 = vld [vmem:[%s297 + $0x8a4] sm:$0xf]
        %v2666 = vld [vmem:[%s297 + $0x8a8] sm:$0xf]
        %v2667 = vld [vmem:[%s297 + $0x8ac] sm:$0xf]
        %v2668 = vld [vmem:[%s297 + $0x8b0] sm:$0xf]
        %v2669 = vld [vmem:[%s297 + $0x8b4] sm:$0xf]
        %v2670 = vld [vmem:[%s297 + $0x8b8] sm:$0xf]
        %v2671 = vld [vmem:[%s297 + $0x8bc] sm:$0xf]
        %v2672 = vld [vmem:[%s297 + $0x8c0] sm:$0xf]
        %v2673 = vld [vmem:[%s297 + $0x8c4] sm:$0xf]
        %v2674 = vld [vmem:[%s297 + $0x8c8] sm:$0xf]
        %v2675 = vld [vmem:[%s297 + $0x8cc] sm:$0xf]
        %v2676 = vld [vmem:[%s297 + $0x8d0] sm:$0xf]
        %v2677 = vld [vmem:[%s297 + $0x8d4] sm:$0xf]
        %v2678 = vld [vmem:[%s297 + $0x8d8] sm:$0xf]
        %v2679 = vld [vmem:[%s297 + $0x8dc] sm:$0xf]
        %v2680 = vld [vmem:[%s297 + $0x8e0] sm:$0xf]
        %v2681 = vld [vmem:[%s297 + $0x8e4] sm:$0xf]
        %v2682 = vld [vmem:[%s297 + $0x8e8] sm:$0xf]
        %v2683 = vld [vmem:[%s297 + $0x8ec] sm:$0xf]
        %v2684 = vld [vmem:[%s297 + $0x8f0] sm:$0xf]
        %v2685 = vld [vmem:[%s297 + $0x8f4] sm:$0xf]
        %v2686 = vld [vmem:[%s297 + $0x8f8] sm:$0xf]
        %v2687 = vld [vmem:[%s297 + $0x8fc] sm:$0xf]
        %v2688 = vld [vmem:[%s297 + $0x900] sm:$0xf]
        %v2689 = vld [vmem:[%s297 + $0x904] sm:$0xf]
        %v2690 = vld [vmem:[%s297 + $0x908] sm:$0xf]
        %v2691 = vld [vmem:[%s297 + $0x90c] sm:$0xf]
        %v2692 = vld [vmem:[%s297 + $0x910] sm:$0xf]
        %v2693 = vld [vmem:[%s297 + $0x914] sm:$0xf]
        %v2694 = vld [vmem:[%s297 + $0x918] sm:$0xf]
        %v2695 = vld [vmem:[%s297 + $0x91c] sm:$0xf]
        %v2696 = vld [vmem:[%s297 + $0x920] sm:$0xf]
        %v2697 = vld [vmem:[%s297 + $0x924] sm:$0xf]
        %v2698 = vld [vmem:[%s297 + $0x928] sm:$0xf]
        %v2699 = vld [vmem:[%s297 + $0x92c] sm:$0xf]
        %v2700 = vld [vmem:[%s297 + $0x930] sm:$0xf]
        %v2701 = vld [vmem:[%s297 + $0x934] sm:$0xf]
        %v2702 = vld [vmem:[%s297 + $0x938] sm:$0xf]
        %v2703 = vld [vmem:[%s297 + $0x93c] sm:$0xf]
        %v2704 = vld [vmem:[%s297 + $0x940] sm:$0xf]
        %v2705 = vld [vmem:[%s297 + $0x944] sm:$0xf]
        %v2706 = vld [vmem:[%s297 + $0x948] sm:$0x3]
        %v2707 = vld [vmem:[%s297 + $0x94c] sm:$0xf]
        %v2708 = vld [vmem:[%s297 + $0x950] sm:$0xf]
        %v2709 = vld [vmem:[%s297 + $0x954] sm:$0xf]
        %v2710 = vld [vmem:[%s297 + $0x958] sm:$0xf]
        %v2711 = vld [vmem:[%s297 + $0x95c] sm:$0xf]
        %v2712 = vld [vmem:[%s297 + $0x960] sm:$0xf]
        %v2713 = vld [vmem:[%s297 + $0x964] sm:$0xf]
        %v2714 = vld [vmem:[%s297 + $0x968] sm:$0xf]
        %v2715 = vld [vmem:[%s297 + $0x96c] sm:$0xf]
        %v2716 = vld [vmem:[%s297 + $0x970] sm:$0xf]
        %v2717 = vld [vmem:[%s297 + $0x974] sm:$0xf]
        %v2718 = vld [vmem:[%s297 + $0x978] sm:$0xf]
        %v2719 = vld [vmem:[%s297 + $0x97c] sm:$0xf]
        %v2720 = vld [vmem:[%s297 + $0x980] sm:$0xf]
        %v2721 = vld [vmem:[%s297 + $0x984] sm:$0xf]
        %v2722 = vld [vmem:[%s297 + $0x988] sm:$0xf]
        %v2723 = vld [vmem:[%s297 + $0x98c] sm:$0xf]
        %v2724 = vld [vmem:[%s297 + $0x990] sm:$0xf]
        %v2725 = vld [vmem:[%s297 + $0x994] sm:$0xf]
        %v2726 = vld [vmem:[%s297 + $0x998] sm:$0xf]
        %v2727 = vld [vmem:[%s297 + $0x99c] sm:$0xf]
        %v2728 = vld [vmem:[%s297 + $0x9a0] sm:$0xf]
        %v2729 = vld [vmem:[%s297 + $0x9a4] sm:$0xf]
        %v2730 = vld [vmem:[%s297 + $0x9a8] sm:$0xf]
        %v2731 = vld [vmem:[%s297 + $0x9ac] sm:$0xf]
        %v2732 = vld [vmem:[%s297 + $0x9b0] sm:$0xf]
        %v2733 = vld [vmem:[%s297 + $0x9b4] sm:$0xf]
        %v2734 = vld [vmem:[%s297 + $0x9b8] sm:$0xf]
        %v2735 = vld [vmem:[%s297 + $0x9bc] sm:$0xf]
        %v2736 = vld [vmem:[%s297 + $0x9c0] sm:$0xf]
        %v2737 = vld [vmem:[%s297 + $0x9c4] sm:$0xf]
        %v2738 = vld [vmem:[%s297 + $0x9c8] sm:$0xf]
        %v2739 = vld [vmem:[%s297 + $0x9cc] sm:$0xf]
        %v2740 = vld [vmem:[%s297 + $0x9d0] sm:$0xf]
        %v2741 = vld [vmem:[%s297 + $0x9d4] sm:$0xf]
        %v2742 = vld [vmem:[%s297 + $0x9d8] sm:$0xf]
        %v2743 = vld [vmem:[%s297 + $0x9dc] sm:$0xf]
        %v2744 = vld [vmem:[%s297 + $0x9e0] sm:$0xf]
        %v2745 = vld [vmem:[%s297 + $0x9e4] sm:$0xf]
        %v2746 = vld [vmem:[%s297 + $0x9e8] sm:$0xf]
        %v2747 = vld [vmem:[%s297 + $0x9ec] sm:$0xf]
        %v2748 = vld [vmem:[%s297 + $0x9f0] sm:$0xf]
        %v2749 = vld [vmem:[%s297 + $0x9f4] sm:$0xf]
        %v2750 = vld [vmem:[%s297 + $0x9f8] sm:$0xf]
        %v2751 = vld [vmem:[%s297 + $0x9fc] sm:$0xf]
        %v2752 = vld [vmem:[%s297 + $0xa00] sm:$0xf]
        %v2753 = vld [vmem:[%s297 + $0xa04] sm:$0xf]
        %v2754 = vld [vmem:[%s297 + $0xa08] sm:$0xf]
        %v2755 = vld [vmem:[%s297 + $0xa0c] sm:$0xf]
        %v2756 = vld [vmem:[%s297 + $0xa10] sm:$0xf]
        %v2757 = vld [vmem:[%s297 + $0xa14] sm:$0xf]
        %v2758 = vld [vmem:[%s297 + $0xa18] sm:$0xf]
        %v2759 = vld [vmem:[%s297 + $0xa1c] sm:$0xf]
        %v2760 = vld [vmem:[%s297 + $0xa20] sm:$0xf]
        %v2761 = vld [vmem:[%s297 + $0xa24] sm:$0xf]
        %v2762 = vld [vmem:[%s297 + $0xa28] sm:$0xf]
        %v2763 = vld [vmem:[%s297 + $0xa2c] sm:$0xf]
        %v2764 = vld [vmem:[%s297 + $0xa30] sm:$0xf]
        %v2765 = vld [vmem:[%s297 + $0xa34] sm:$0xf]
        %v2766 = vld [vmem:[%s297 + $0xa38] sm:$0xf]
        %v2767 = vld [vmem:[%s297 + $0xa3c] sm:$0xf]
        %v2768 = vld [vmem:[%s297 + $0xa40] sm:$0xf]
        %v2769 = vld [vmem:[%s297 + $0xa44] sm:$0xf]
        %v2770 = vld [vmem:[%s297 + $0xa48] sm:$0xf]
        %v2771 = vld [vmem:[%s297 + $0xa4c] sm:$0xf]
        %v2772 = vld [vmem:[%s297 + $0xa50] sm:$0xf]
        %v2773 = vld [vmem:[%s297 + $0xa54] sm:$0xf]
        %v2774 = vld [vmem:[%s297 + $0xa58] sm:$0xf]
        %v2775 = vld [vmem:[%s297 + $0xa5c] sm:$0xf]
        %v2776 = vld [vmem:[%s297 + $0xa60] sm:$0xf]
        %v2777 = vld [vmem:[%s297 + $0xa64] sm:$0xf]
        %v2778 = vld [vmem:[%s297 + $0xa68] sm:$0xf]
        %v2779 = vld [vmem:[%s297 + $0xa6c] sm:$0xf]
        %v2780 = vld [vmem:[%s297 + $0xa70] sm:$0xf]
        %v2781 = vld [vmem:[%s297 + $0xa74] sm:$0xf]
        %v2782 = vld [vmem:[%s297 + $0xa78] sm:$0xf]
        %v2783 = vld [vmem:[%s297 + $0xa7c] sm:$0xf]
        %v2784 = vld [vmem:[%s297 + $0xa80] sm:$0xf]
        %v2785 = vld [vmem:[%s297 + $0xa84] sm:$0xf]
        %v2786 = vld [vmem:[%s297 + $0xa88] sm:$0xf]
        %v2787 = vld [vmem:[%s297 + $0xa8c] sm:$0xf]
        %v2788 = vld [vmem:[%s297 + $0xa90] sm:$0xf]
        %v2789 = vld [vmem:[%s297 + $0xa94] sm:$0xf]
        %v2790 = vld [vmem:[%s297 + $0xa98] sm:$0xf]
        %v2791 = vld [vmem:[%s297 + $0xa9c] sm:$0x3]
        %v2792 = vld [vmem:[%s297 + $0xaa0] sm:$0xf]
        %v2793 = vld [vmem:[%s297 + $0xaa4] sm:$0xf]
        %v2794 = vld [vmem:[%s297 + $0xaa8] sm:$0xf]
        %v2795 = vld [vmem:[%s297 + $0xaac] sm:$0xf]
        %v2796 = vld [vmem:[%s297 + $0xab0] sm:$0xf]
        %v2797 = vld [vmem:[%s297 + $0xab4] sm:$0xf]
        %v2798 = vld [vmem:[%s297 + $0xab8] sm:$0xf]
        %v2799 = vld [vmem:[%s297 + $0xabc] sm:$0xf]
        %v2800 = vld [vmem:[%s297 + $0xac0] sm:$0xf]
        %v2801 = vld [vmem:[%s297 + $0xac4] sm:$0xf]
        %v2802 = vld [vmem:[%s297 + $0xac8] sm:$0xf]
        %v2803 = vld [vmem:[%s297 + $0xacc] sm:$0xf]
        %v2804 = vld [vmem:[%s297 + $0xad0] sm:$0xf]
        %v2805 = vld [vmem:[%s297 + $0xad4] sm:$0xf]
        %v2806 = vld [vmem:[%s297 + $0xad8] sm:$0xf]
        %v2807 = vld [vmem:[%s297 + $0xadc] sm:$0xf]
        %v2808 = vld [vmem:[%s297 + $0xae0] sm:$0xf]
        %v2809 = vld [vmem:[%s297 + $0xae4] sm:$0xf]
        %v2810 = vld [vmem:[%s297 + $0xae8] sm:$0xf]
        %v2811 = vld [vmem:[%s297 + $0xaec] sm:$0xf]
        %v2812 = vld [vmem:[%s297 + $0xaf0] sm:$0xf]
        %v2813 = vld [vmem:[%s297 + $0xaf4] sm:$0xf]
        %v2814 = vld [vmem:[%s297 + $0xaf8] sm:$0xf]
        %v2815 = vld [vmem:[%s297 + $0xafc] sm:$0xf]
        %v2816 = vld [vmem:[%s297 + $0xb00] sm:$0xf]
        %v2817 = vld [vmem:[%s297 + $0xb04] sm:$0xf]
        %v2818 = vld [vmem:[%s297 + $0xb08] sm:$0xf]
        %v2819 = vld [vmem:[%s297 + $0xb0c] sm:$0xf]
        %v2820 = vld [vmem:[%s297 + $0xb10] sm:$0xf]
        %v2821 = vld [vmem:[%s297 + $0xb14] sm:$0xf]
        %v2822 = vld [vmem:[%s297 + $0xb18] sm:$0xf]
        %v2823 = vld [vmem:[%s297 + $0xb1c] sm:$0xf]
        %v2824 = vld [vmem:[%s297 + $0xb20] sm:$0xf]
        %v2825 = vld [vmem:[%s297 + $0xb24] sm:$0xf]
        %v2826 = vld [vmem:[%s297 + $0xb28] sm:$0xf]
        %v2827 = vld [vmem:[%s297 + $0xb2c] sm:$0xf]
        %v2828 = vld [vmem:[%s297 + $0xb30] sm:$0xf]
        %v2829 = vld [vmem:[%s297 + $0xb34] sm:$0xf]
        %v2830 = vld [vmem:[%s297 + $0xb38] sm:$0xf]
        %v2831 = vld [vmem:[%s297 + $0xb3c] sm:$0xf]
        %v2832 = vld [vmem:[%s297 + $0xb40] sm:$0xf]
        %v2833 = vld [vmem:[%s297 + $0xb44] sm:$0xf]
        %v2834 = vld [vmem:[%s297 + $0xb48] sm:$0xf]
        %v2835 = vld [vmem:[%s297 + $0xb4c] sm:$0xf]
        %v2836 = vld [vmem:[%s297 + $0xb50] sm:$0xf]
        %v2837 = vld [vmem:[%s297 + $0xb54] sm:$0xf]
        %v2838 = vld [vmem:[%s297 + $0xb58] sm:$0xf]
        %v2839 = vld [vmem:[%s297 + $0xb5c] sm:$0xf]
        %v2840 = vld [vmem:[%s297 + $0xb60] sm:$0xf]
        %v2841 = vld [vmem:[%s297 + $0xb64] sm:$0xf]
        %v2842 = vld [vmem:[%s297 + $0xb68] sm:$0xf]
        %v2843 = vld [vmem:[%s297 + $0xb6c] sm:$0xf]
        %v2844 = vld [vmem:[%s297 + $0xb70] sm:$0xf]
        %v2845 = vld [vmem:[%s297 + $0xb74] sm:$0xf]
        %v2846 = vld [vmem:[%s297 + $0xb78] sm:$0xf]
        %v2847 = vld [vmem:[%s297 + $0xb7c] sm:$0xf]
        %v2848 = vld [vmem:[%s297 + $0xb80] sm:$0xf]
        %v2849 = vld [vmem:[%s297 + $0xb84] sm:$0xf]
        %v2850 = vld [vmem:[%s297 + $0xb88] sm:$0xf]
        %v2851 = vld [vmem:[%s297 + $0xb8c] sm:$0xf]
        %v2852 = vld [vmem:[%s297 + $0xb90] sm:$0xf]
        %v2853 = vld [vmem:[%s297 + $0xb94] sm:$0xf]
        %v2854 = vld [vmem:[%s297 + $0xb98] sm:$0xf]
        %v2855 = vld [vmem:[%s297 + $0xb9c] sm:$0xf]
        %v2856 = vld [vmem:[%s297 + $0xba0] sm:$0xf]
        %v2857 = vld [vmem:[%s297 + $0xba4] sm:$0xf]
        %v2858 = vld [vmem:[%s297 + $0xba8] sm:$0xf]
        %v2859 = vld [vmem:[%s297 + $0xbac] sm:$0xf]
        %v2860 = vld [vmem:[%s297 + $0xbb0] sm:$0xf]
        %v2861 = vld [vmem:[%s297 + $0xbb4] sm:$0xf]
        %v2862 = vld [vmem:[%s297 + $0xbb8] sm:$0xf]
        %v2863 = vld [vmem:[%s297 + $0xbbc] sm:$0xf]
        %v2864 = vld [vmem:[%s297 + $0xbc0] sm:$0xf]
        %v2865 = vld [vmem:[%s297 + $0xbc4] sm:$0xf]
        %v2866 = vld [vmem:[%s297 + $0xbc8] sm:$0xf]
        %v2867 = vld [vmem:[%s297 + $0xbcc] sm:$0xf]
        %v2868 = vld [vmem:[%s297 + $0xbd0] sm:$0xf]
        %v2869 = vld [vmem:[%s297 + $0xbd4] sm:$0xf]
        %v2870 = vld [vmem:[%s297 + $0xbd8] sm:$0xf]
        %v2871 = vld [vmem:[%s297 + $0xbdc] sm:$0xf]
        %v2872 = vld [vmem:[%s297 + $0xbe0] sm:$0xf]
        %v2873 = vld [vmem:[%s297 + $0xbe4] sm:$0xf]
        %v2874 = vld [vmem:[%s297 + $0xbe8] sm:$0xf]
        %v2875 = vld [vmem:[%s297 + $0xbec] sm:$0xf]
        %v2876 = vld [vmem:[%s297 + $0xbf0] sm:$0x3]
        %v2877 = vld [vmem:[%s297 + $0xbf4] sm:$0xf]
        %v2878 = vld [vmem:[%s297 + $0xbf8] sm:$0xf]
        %v2879 = vld [vmem:[%s297 + $0xbfc] sm:$0xf]
        %v2880 = vld [vmem:[%s297 + $0xc00] sm:$0xf]
        %v2881 = vld [vmem:[%s297 + $0xc04] sm:$0xf]
        %v2882 = vld [vmem:[%s297 + $0xc08] sm:$0xf]
        %v2883 = vld [vmem:[%s297 + $0xc0c] sm:$0xf]
        %v2884 = vld [vmem:[%s297 + $0xc10] sm:$0xf]
        %v2885 = vld [vmem:[%s297 + $0xc14] sm:$0xf]
        %v2886 = vld [vmem:[%s297 + $0xc18] sm:$0xf]
        %v2887 = vld [vmem:[%s297 + $0xc1c] sm:$0xf]
        %v2888 = vld [vmem:[%s297 + $0xc20] sm:$0xf]
        %v2889 = vld [vmem:[%s297 + $0xc24] sm:$0xf]
        %v2890 = vld [vmem:[%s297 + $0xc28] sm:$0xf]
        %v2891 = vld [vmem:[%s297 + $0xc2c] sm:$0xf]
        %v2892 = vld [vmem:[%s297 + $0xc30] sm:$0xf]
        %v2893 = vld [vmem:[%s297 + $0xc34] sm:$0xf]
        %v2894 = vld [vmem:[%s297 + $0xc38] sm:$0xf]
        %v2895 = vld [vmem:[%s297 + $0xc3c] sm:$0xf]
        %v2896 = vld [vmem:[%s297 + $0xc40] sm:$0xf]
        %v2897 = vld [vmem:[%s297 + $0xc44] sm:$0xf]
        %v2898 = vld [vmem:[%s297 + $0xc48] sm:$0xf]
        %v2899 = vld [vmem:[%s297 + $0xc4c] sm:$0xf]
        %v2900 = vld [vmem:[%s297 + $0xc50] sm:$0xf]
        %v2901 = vld [vmem:[%s297 + $0xc54] sm:$0xf]
        %v2902 = vld [vmem:[%s297 + $0xc58] sm:$0xf]
        %v2903 = vld [vmem:[%s297 + $0xc5c] sm:$0xf]
        %v2904 = vld [vmem:[%s297 + $0xc60] sm:$0xf]
        %v2905 = vld [vmem:[%s297 + $0xc64] sm:$0xf]
        %v2906 = vld [vmem:[%s297 + $0xc68] sm:$0xf]
        %v2907 = vld [vmem:[%s297 + $0xc6c] sm:$0xf]
        %v2908 = vld [vmem:[%s297 + $0xc70] sm:$0xf]
        %v2909 = vld [vmem:[%s297 + $0xc74] sm:$0xf]
        %v2910 = vld [vmem:[%s297 + $0xc78] sm:$0xf]
        %v2911 = vld [vmem:[%s297 + $0xc7c] sm:$0xf]
        %v2912 = vld [vmem:[%s297 + $0xc80] sm:$0xf]
        %v2913 = vld [vmem:[%s297 + $0xc84] sm:$0xf]
        %v2914 = vld [vmem:[%s297 + $0xc88] sm:$0xf]
        %v2915 = vld [vmem:[%s297 + $0xc8c] sm:$0xf]
        %v2916 = vld [vmem:[%s297 + $0xc90] sm:$0xf]
        %v2917 = vld [vmem:[%s297 + $0xc94] sm:$0xf]
        %v2918 = vld [vmem:[%s297 + $0xc98] sm:$0xf]
        %v2919 = vld [vmem:[%s297 + $0xc9c] sm:$0xf]
        %v2920 = vld [vmem:[%s297 + $0xca0] sm:$0xf]
        %v2921 = vld [vmem:[%s297 + $0xca4] sm:$0xf]
        %v2922 = vld [vmem:[%s297 + $0xca8] sm:$0xf]
        %v2923 = vld [vmem:[%s297 + $0xcac] sm:$0xf]
        %v2924 = vld [vmem:[%s297 + $0xcb0] sm:$0xf]
        %v2925 = vld [vmem:[%s297 + $0xcb4] sm:$0xf]
        %v2926 = vld [vmem:[%s297 + $0xcb8] sm:$0xf]
        %v2927 = vld [vmem:[%s297 + $0xcbc] sm:$0xf]
        %v2928 = vld [vmem:[%s297 + $0xcc0] sm:$0xf]
        %v2929 = vld [vmem:[%s297 + $0xcc4] sm:$0xf]
        %v2930 = vld [vmem:[%s297 + $0xcc8] sm:$0xf]
        %v2931 = vld [vmem:[%s297 + $0xccc] sm:$0xf]
        %v2932 = vld [vmem:[%s297 + $0xcd0] sm:$0xf]
        %v2933 = vld [vmem:[%s297 + $0xcd4] sm:$0xf]
        %v2934 = vld [vmem:[%s297 + $0xcd8] sm:$0xf]
        %v2935 = vld [vmem:[%s297 + $0xcdc] sm:$0xf]
        %v2936 = vld [vmem:[%s297 + $0xce0] sm:$0xf]
        %v2937 = vld [vmem:[%s297 + $0xce4] sm:$0xf]
        %v2938 = vld [vmem:[%s297 + $0xce8] sm:$0xf]
        %v2939 = vld [vmem:[%s297 + $0xcec] sm:$0xf]
        %v2940 = vld [vmem:[%s297 + $0xcf0] sm:$0xf]
        %v2941 = vld [vmem:[%s297 + $0xcf4] sm:$0xf]
        %v2942 = vld [vmem:[%s297 + $0xcf8] sm:$0xf]
        %v2943 = vld [vmem:[%s297 + $0xcfc] sm:$0xf]
        %v2944 = vld [vmem:[%s297 + $0xd00] sm:$0xf]
        %v2945 = vld [vmem:[%s297 + $0xd04] sm:$0xf]
        %v2946 = vld [vmem:[%s297 + $0xd08] sm:$0xf]
        %v2947 = vld [vmem:[%s297 + $0xd0c] sm:$0xf]
        %v2948 = vld [vmem:[%s297 + $0xd10] sm:$0xf]
        %v2949 = vld [vmem:[%s297 + $0xd14] sm:$0xf]
        %v2950 = vld [vmem:[%s297 + $0xd18] sm:$0xf]
        %v2951 = vld [vmem:[%s297 + $0xd1c] sm:$0xf]
        %v2952 = vld [vmem:[%s297 + $0xd20] sm:$0xf]
        %v2953 = vld [vmem:[%s297 + $0xd24] sm:$0xf]
        %v2954 = vld [vmem:[%s297 + $0xd28] sm:$0xf]
        %v2955 = vld [vmem:[%s297 + $0xd2c] sm:$0xf]
        %v2956 = vld [vmem:[%s297 + $0xd30] sm:$0xf]
        %v2957 = vld [vmem:[%s297 + $0xd34] sm:$0xf]
        %v2958 = vld [vmem:[%s297 + $0xd38] sm:$0xf]
        %v2959 = vld [vmem:[%s297 + $0xd3c] sm:$0xf]
        %v2960 = vld [vmem:[%s297 + $0xd40] sm:$0xf]
        %v2961 = vld [vmem:[%s297 + $0xd44] sm:$0x3]
        %v2962 = vld [vmem:[%s297 + $0xd48] sm:$0xf]
        %v2963 = vld [vmem:[%s297 + $0xd4c] sm:$0xf]
        %v2964 = vld [vmem:[%s297 + $0xd50] sm:$0xf]
        %v2965 = vld [vmem:[%s297 + $0xd54] sm:$0xf]
        %v2966 = vld [vmem:[%s297 + $0xd58] sm:$0xf]
        %v2967 = vld [vmem:[%s297 + $0xd5c] sm:$0xf]
        %v2968 = vld [vmem:[%s297 + $0xd60] sm:$0xf]
        %v2969 = vld [vmem:[%s297 + $0xd64] sm:$0xf]
        %v2970 = vld [vmem:[%s297 + $0xd68] sm:$0xf]
        %v2971 = vld [vmem:[%s297 + $0xd6c] sm:$0xf]
        %v2972 = vld [vmem:[%s297 + $0xd70] sm:$0xf]
        %v2973 = vld [vmem:[%s297 + $0xd74] sm:$0xf]
        %v2974 = vld [vmem:[%s297 + $0xd78] sm:$0xf]
        %v2975 = vld [vmem:[%s297 + $0xd7c] sm:$0xf]
        %v2976 = vld [vmem:[%s297 + $0xd80] sm:$0xf]
        %v2977 = vld [vmem:[%s297 + $0xd84] sm:$0xf]
        %v2978 = vld [vmem:[%s297 + $0xd88] sm:$0xf]
        %v2979 = vld [vmem:[%s297 + $0xd8c] sm:$0xf]
        %v2980 = vld [vmem:[%s297 + $0xd90] sm:$0xf]
        %v2981 = vld [vmem:[%s297 + $0xd94] sm:$0xf]
        %v2982 = vld [vmem:[%s297 + $0xd98] sm:$0xf]
        %v2983 = vld [vmem:[%s297 + $0xd9c] sm:$0xf]
        %v2984 = vld [vmem:[%s297 + $0xda0] sm:$0xf]
        %v2985 = vld [vmem:[%s297 + $0xda4] sm:$0xf]
        %v2986 = vld [vmem:[%s297 + $0xda8] sm:$0xf]
        %v2987 = vld [vmem:[%s297 + $0xdac] sm:$0xf]
        %v2988 = vld [vmem:[%s297 + $0xdb0] sm:$0xf]
        %v2989 = vld [vmem:[%s297 + $0xdb4] sm:$0xf]
        %v2990 = vld [vmem:[%s297 + $0xdb8] sm:$0xf]
        %v2991 = vld [vmem:[%s297 + $0xdbc] sm:$0xf]
        %v2992 = vld [vmem:[%s297 + $0xdc0] sm:$0xf]
        %v2993 = vld [vmem:[%s297 + $0xdc4] sm:$0xf]
        %v2994 = vld [vmem:[%s297 + $0xdc8] sm:$0xf]
        %v2995 = vld [vmem:[%s297 + $0xdcc] sm:$0xf]
        %v2996 = vld [vmem:[%s297 + $0xdd0] sm:$0xf]
        %v2997 = vld [vmem:[%s297 + $0xdd4] sm:$0xf]
        %v2998 = vld [vmem:[%s297 + $0xdd8] sm:$0xf]
        %v2999 = vld [vmem:[%s297 + $0xddc] sm:$0xf]
        %v3000 = vld [vmem:[%s297 + $0xde0] sm:$0xf]
        %v3001 = vld [vmem:[%s297 + $0xde4] sm:$0xf]
        %v3002 = vld [vmem:[%s297 + $0xde8] sm:$0xf]
        %v3003 = vld [vmem:[%s297 + $0xdec] sm:$0xf]
        %v3004 = vld [vmem:[%s297 + $0xdf0] sm:$0xf]
        %v3005 = vld [vmem:[%s297 + $0xdf4] sm:$0xf]
        %v3006 = vld [vmem:[%s297 + $0xdf8] sm:$0xf]
        %v3007 = vld [vmem:[%s297 + $0xdfc] sm:$0xf]
        %v3008 = vld [vmem:[%s297 + $0xe00] sm:$0xf]
        %v3009 = vld [vmem:[%s297 + $0xe04] sm:$0xf]
        %v3010 = vld [vmem:[%s297 + $0xe08] sm:$0xf]
        %v3011 = vld [vmem:[%s297 + $0xe0c] sm:$0xf]
        %v3012 = vld [vmem:[%s297 + $0xe10] sm:$0xf]
        %v3013 = vld [vmem:[%s297 + $0xe14] sm:$0xf]
        %v3014 = vld [vmem:[%s297 + $0xe18] sm:$0xf]
        %v3015 = vld [vmem:[%s297 + $0xe1c] sm:$0xf]
        %v3016 = vld [vmem:[%s297 + $0xe20] sm:$0xf]
        %v3017 = vld [vmem:[%s297 + $0xe24] sm:$0xf]
        %v3018 = vld [vmem:[%s297 + $0xe28] sm:$0xf]
        %v3019 = vld [vmem:[%s297 + $0xe2c] sm:$0xf]
        %v3020 = vld [vmem:[%s297 + $0xe30] sm:$0xf]
        %v3021 = vld [vmem:[%s297 + $0xe34] sm:$0xf]
        %v3022 = vld [vmem:[%s297 + $0xe38] sm:$0xf]
        %v3023 = vld [vmem:[%s297 + $0xe3c] sm:$0xf]
        %v3024 = vld [vmem:[%s297 + $0xe40] sm:$0xf]
        %v3025 = vld [vmem:[%s297 + $0xe44] sm:$0xf]
        %v3026 = vld [vmem:[%s297 + $0xe48] sm:$0xf]
        %v3027 = vld [vmem:[%s297 + $0xe4c] sm:$0xf]
        %v3028 = vld [vmem:[%s297 + $0xe50] sm:$0xf]
        %v3029 = vld [vmem:[%s297 + $0xe54] sm:$0xf]
        %v3030 = vld [vmem:[%s297 + $0xe58] sm:$0xf]
        %v3031 = vld [vmem:[%s297 + $0xe5c] sm:$0xf]
        %v3032 = vld [vmem:[%s297 + $0xe60] sm:$0xf]
        %v3033 = vld [vmem:[%s297 + $0xe64] sm:$0xf]
        %v3034 = vld [vmem:[%s297 + $0xe68] sm:$0xf]
        %v3035 = vld [vmem:[%s297 + $0xe6c] sm:$0xf]
        %v3036 = vld [vmem:[%s297 + $0xe70] sm:$0xf]
        %v3037 = vld [vmem:[%s297 + $0xe74] sm:$0xf]
        %v3038 = vld [vmem:[%s297 + $0xe78] sm:$0xf]
        %v3039 = vld [vmem:[%s297 + $0xe7c] sm:$0xf]
        %v3040 = vld [vmem:[%s297 + $0xe80] sm:$0xf]
        %v3041 = vld [vmem:[%s297 + $0xe84] sm:$0xf]
        %v3042 = vld [vmem:[%s297 + $0xe88] sm:$0xf]
        %v3043 = vld [vmem:[%s297 + $0xe8c] sm:$0xf]
        %v3044 = vld [vmem:[%s297 + $0xe90] sm:$0xf]
        %v3045 = vld [vmem:[%s297 + $0xe94] sm:$0xf]
        %v3046 = vld [vmem:[%s297 + $0xe98] sm:$0x3]
        %v3047 = vld [vmem:[%s297 + $0xe9c] sm:$0xf]
        %v3048 = vld [vmem:[%s297 + $0xea0] sm:$0xf]
        %v3049 = vld [vmem:[%s297 + $0xea4] sm:$0xf]
        %v3050 = vld [vmem:[%s297 + $0xea8] sm:$0xf]
        %v3051 = vld [vmem:[%s297 + $0xeac] sm:$0xf]
        %v3052 = vld [vmem:[%s297 + $0xeb0] sm:$0xf]
        %v3053 = vld [vmem:[%s297 + $0xeb4] sm:$0xf]
        %v3054 = vld [vmem:[%s297 + $0xeb8] sm:$0xf]
        %v3055 = vld [vmem:[%s297 + $0xebc] sm:$0xf]
        %v3056 = vld [vmem:[%s297 + $0xec0] sm:$0xf]
        %v3057 = vld [vmem:[%s297 + $0xec4] sm:$0xf]
        %v3058 = vld [vmem:[%s297 + $0xec8] sm:$0xf]
        %v3059 = vld [vmem:[%s297 + $0xecc] sm:$0xf]
        %v3060 = vld [vmem:[%s297 + $0xed0] sm:$0xf]
        %v3061 = vld [vmem:[%s297 + $0xed4] sm:$0xf]
        %v3062 = vld [vmem:[%s297 + $0xed8] sm:$0xf]
        %v3063 = vld [vmem:[%s297 + $0xedc] sm:$0xf]
        %v3064 = vld [vmem:[%s297 + $0xee0] sm:$0xf]
        %v3065 = vld [vmem:[%s297 + $0xee4] sm:$0xf]
        %v3066 = vld [vmem:[%s297 + $0xee8] sm:$0xf]
        %v3067 = vld [vmem:[%s297 + $0xeec] sm:$0xf]
        %v3068 = vld [vmem:[%s297 + $0xef0] sm:$0xf]
        %v3069 = vld [vmem:[%s297 + $0xef4] sm:$0xf]
        %v3070 = vld [vmem:[%s297 + $0xef8] sm:$0xf]
        %v3071 = vld [vmem:[%s297 + $0xefc] sm:$0xf]
        %v3072 = vld [vmem:[%s297 + $0xf00] sm:$0xf]
        %v3073 = vld [vmem:[%s297 + $0xf04] sm:$0xf]
        %v3074 = vld [vmem:[%s297 + $0xf08] sm:$0xf]
        %v3075 = vld [vmem:[%s297 + $0xf0c] sm:$0xf]
        %v3076 = vld [vmem:[%s297 + $0xf10] sm:$0xf]
        %v3077 = vld [vmem:[%s297 + $0xf14] sm:$0xf]
        %v3078 = vld [vmem:[%s297 + $0xf18] sm:$0xf]
        %v3079 = vld [vmem:[%s297 + $0xf1c] sm:$0xf]
        %v3080 = vld [vmem:[%s297 + $0xf20] sm:$0xf]
        %v3081 = vld [vmem:[%s297 + $0xf24] sm:$0xf]
        %v3082 = vld [vmem:[%s297 + $0xf28] sm:$0xf]
        %v3083 = vld [vmem:[%s297 + $0xf2c] sm:$0xf]
        %v3084 = vld [vmem:[%s297 + $0xf30] sm:$0xf]
        %v3085 = vld [vmem:[%s297 + $0xf34] sm:$0xf]
        %v3086 = vld [vmem:[%s297 + $0xf38] sm:$0xf]
        %v3087 = vld [vmem:[%s297 + $0xf3c] sm:$0xf]
        %v3088 = vld [vmem:[%s297 + $0xf40] sm:$0xf]
        %v3089 = vld [vmem:[%s297 + $0xf44] sm:$0xf]
        %v3090 = vld [vmem:[%s297 + $0xf48] sm:$0xf]
        %v3091 = vld [vmem:[%s297 + $0xf4c] sm:$0xf]
        %v3092 = vld [vmem:[%s297 + $0xf50] sm:$0xf]
        %v3093 = vld [vmem:[%s297 + $0xf54] sm:$0xf]
        %v3094 = vld [vmem:[%s297 + $0xf58] sm:$0xf]
        %v3095 = vld [vmem:[%s297 + $0xf5c] sm:$0xf]
        %v3096 = vld [vmem:[%s297 + $0xf60] sm:$0xf]
        %v3097 = vld [vmem:[%s297 + $0xf64] sm:$0xf]
        %v3098 = vld [vmem:[%s297 + $0xf68] sm:$0xf]
        %v3099 = vld [vmem:[%s297 + $0xf6c] sm:$0xf]
        %v3100 = vld [vmem:[%s297 + $0xf70] sm:$0xf]
        %v3101 = vld [vmem:[%s297 + $0xf74] sm:$0xf]
        %v3102 = vld [vmem:[%s297 + $0xf78] sm:$0xf]
        %v3103 = vld [vmem:[%s297 + $0xf7c] sm:$0xf]
        %v3104 = vld [vmem:[%s297 + $0xf80] sm:$0xf]
        %v3105 = vld [vmem:[%s297 + $0xf84] sm:$0xf]
        %v3106 = vld [vmem:[%s297 + $0xf88] sm:$0xf]
        %v3107 = vld [vmem:[%s297 + $0xf8c] sm:$0xf]
        %v3108 = vld [vmem:[%s297 + $0xf90] sm:$0xf]
        %v3109 = vld [vmem:[%s297 + $0xf94] sm:$0xf]
        %v3110 = vld [vmem:[%s297 + $0xf98] sm:$0xf]
        %v3111 = vld [vmem:[%s297 + $0xf9c] sm:$0xf]
        %v3112 = vld [vmem:[%s297 + $0xfa0] sm:$0xf]
        %v3113 = vld [vmem:[%s297 + $0xfa4] sm:$0xf]
        %v3114 = vld [vmem:[%s297 + $0xfa8] sm:$0xf]
        %v3115 = vld [vmem:[%s297 + $0xfac] sm:$0xf]
        %v3116 = vld [vmem:[%s297 + $0xfb0] sm:$0xf]
        %v3117 = vld [vmem:[%s297 + $0xfb4] sm:$0xf]
        %v3118 = vld [vmem:[%s297 + $0xfb8] sm:$0xf]
        %v3119 = vld [vmem:[%s297 + $0xfbc] sm:$0xf]
        %v3120 = vld [vmem:[%s297 + $0xfc0] sm:$0xf]
        %v3121 = vld [vmem:[%s297 + $0xfc4] sm:$0xf]
        %v3122 = vld [vmem:[%s297 + $0xfc8] sm:$0xf]
        %v3123 = vld [vmem:[%s297 + $0xfcc] sm:$0xf]
        %v3124 = vld [vmem:[%s297 + $0xfd0] sm:$0xf]
        %v3125 = vld [vmem:[%s297 + $0xfd4] sm:$0xf]
        %v3126 = vld [vmem:[%s297 + $0xfd8] sm:$0xf]
        %v3127 = vld [vmem:[%s297 + $0xfdc] sm:$0xf]
        %v3128 = vld [vmem:[%s297 + $0xfe0] sm:$0xf]
        %v3129 = vld [vmem:[%s297 + $0xfe4] sm:$0xf]
        %v3130 = vld [vmem:[%s297 + $0xfe8] sm:$0xf]
        %v3131 = vld [vmem:[%s297 + $0xfec] sm:$0x3]
        %v3132 = vld [vmem:[%s297 + $0xff0] sm:$0xf]
        %v3133 = vld [vmem:[%s297 + $0xff4] sm:$0xf]
        %v3134 = vld [vmem:[%s297 + $0xff8] sm:$0xf]
        %v3135 = vld [vmem:[%s297 + $0xffc] sm:$0xf]
        %v3136 = vld [vmem:[%s297 + $0x1000] sm:$0xf]
        %v3137 = vld [vmem:[%s297 + $0x1004] sm:$0xf]
        %v3138 = vld [vmem:[%s297 + $0x1008] sm:$0xf]
        %v3139 = vld [vmem:[%s297 + $0x100c] sm:$0xf]
        %v3140 = vld [vmem:[%s297 + $0x1010] sm:$0xf]
        %v3141 = vld [vmem:[%s297 + $0x1014] sm:$0xf]
        %v3142 = vld [vmem:[%s297 + $0x1018] sm:$0xf]
        %v3143 = vld [vmem:[%s297 + $0x101c] sm:$0xf]
        %v3144 = vld [vmem:[%s297 + $0x1020] sm:$0xf]
        %v3145 = vld [vmem:[%s297 + $0x1024] sm:$0xf]
        %v3146 = vld [vmem:[%s297 + $0x1028] sm:$0xf]
        %v3147 = vld [vmem:[%s297 + $0x102c] sm:$0xf]
        %v3148 = vld [vmem:[%s297 + $0x1030] sm:$0xf]
        %v3149 = vld [vmem:[%s297 + $0x1034] sm:$0xf]
        %v3150 = vld [vmem:[%s297 + $0x1038] sm:$0xf]
        %v3151 = vld [vmem:[%s297 + $0x103c] sm:$0xf]
        %v3152 = vld [vmem:[%s297 + $0x1040] sm:$0xf]
        %v3153 = vld [vmem:[%s297 + $0x1044] sm:$0xf]
        %v3154 = vld [vmem:[%s297 + $0x1048] sm:$0xf]
        %v3155 = vld [vmem:[%s297 + $0x104c] sm:$0xf]
        %v3156 = vld [vmem:[%s297 + $0x1050] sm:$0xf]
        %v3157 = vld [vmem:[%s297 + $0x1054] sm:$0xf]
        %v3158 = vld [vmem:[%s297 + $0x1058] sm:$0xf]
        %v3159 = vld [vmem:[%s297 + $0x105c] sm:$0xf]
        %v3160 = vld [vmem:[%s297 + $0x1060] sm:$0xf]
        %v3161 = vld [vmem:[%s297 + $0x1064] sm:$0xf]
        %v3162 = vld [vmem:[%s297 + $0x1068] sm:$0xf]
        %v3163 = vld [vmem:[%s297 + $0x106c] sm:$0xf]
        %v3164 = vld [vmem:[%s297 + $0x1070] sm:$0xf]
        %v3165 = vld [vmem:[%s297 + $0x1074] sm:$0xf]
        %v3166 = vld [vmem:[%s297 + $0x1078] sm:$0xf]
        %v3167 = vld [vmem:[%s297 + $0x107c] sm:$0xf]
        %v3168 = vld [vmem:[%s297 + $0x1080] sm:$0xf]
        %v3169 = vld [vmem:[%s297 + $0x1084] sm:$0xf]
        %v3170 = vld [vmem:[%s297 + $0x1088] sm:$0xf]
        %v3171 = vld [vmem:[%s297 + $0x108c] sm:$0xf]
        %v3172 = vld [vmem:[%s297 + $0x1090] sm:$0xf]
        %v3173 = vld [vmem:[%s297 + $0x1094] sm:$0xf]
        %v3174 = vld [vmem:[%s297 + $0x1098] sm:$0xf]
        %v3175 = vld [vmem:[%s297 + $0x109c] sm:$0xf]
        %v3176 = vld [vmem:[%s297 + $0x10a0] sm:$0xf]
        %v3177 = vld [vmem:[%s297 + $0x10a4] sm:$0xf]
        %v3178 = vld [vmem:[%s297 + $0x10a8] sm:$0xf]
        %v3179 = vld [vmem:[%s297 + $0x10ac] sm:$0xf]
        %v3180 = vld [vmem:[%s297 + $0x10b0] sm:$0xf]
        %v3181 = vld [vmem:[%s297 + $0x10b4] sm:$0xf]
        %v3182 = vld [vmem:[%s297 + $0x10b8] sm:$0xf]
        %v3183 = vld [vmem:[%s297 + $0x10bc] sm:$0xf]
        %v3184 = vld [vmem:[%s297 + $0x10c0] sm:$0xf]
        %v3185 = vld [vmem:[%s297 + $0x10c4] sm:$0xf]
        %v3186 = vld [vmem:[%s297 + $0x10c8] sm:$0xf]
        %v3187 = vld [vmem:[%s297 + $0x10cc] sm:$0xf]
        %v3188 = vld [vmem:[%s297 + $0x10d0] sm:$0xf]
        %v3189 = vld [vmem:[%s297 + $0x10d4] sm:$0xf]
        %v3190 = vld [vmem:[%s297 + $0x10d8] sm:$0xf]
        %v3191 = vld [vmem:[%s297 + $0x10dc] sm:$0xf]
        %v3192 = vld [vmem:[%s297 + $0x10e0] sm:$0xf]
        %v3193 = vld [vmem:[%s297 + $0x10e4] sm:$0xf]
        %v3194 = vld [vmem:[%s297 + $0x10e8] sm:$0xf]
        %v3195 = vld [vmem:[%s297 + $0x10ec] sm:$0xf]
        %v3196 = vld [vmem:[%s297 + $0x10f0] sm:$0xf]
        %v3197 = vld [vmem:[%s297 + $0x10f4] sm:$0xf]
        %v3198 = vld [vmem:[%s297 + $0x10f8] sm:$0xf]
        %v3199 = vld [vmem:[%s297 + $0x10fc] sm:$0xf]
        %v3200 = vld [vmem:[%s297 + $0x1100] sm:$0xf]
        %v3201 = vld [vmem:[%s297 + $0x1104] sm:$0xf]
        %v3202 = vld [vmem:[%s297 + $0x1108] sm:$0xf]
        %v3203 = vld [vmem:[%s297 + $0x110c] sm:$0xf]
        %v3204 = vld [vmem:[%s297 + $0x1110] sm:$0xf]
        %v3205 = vld [vmem:[%s297 + $0x1114] sm:$0xf]
        %v3206 = vld [vmem:[%s297 + $0x1118] sm:$0xf]
        %v3207 = vld [vmem:[%s297 + $0x111c] sm:$0xf]
        %v3208 = vld [vmem:[%s297 + $0x1120] sm:$0xf]
        %v3209 = vld [vmem:[%s297 + $0x1124] sm:$0xf]
        %v3210 = vld [vmem:[%s297 + $0x1128] sm:$0xf]
        %v3211 = vld [vmem:[%s297 + $0x112c] sm:$0xf]
        %v3212 = vld [vmem:[%s297 + $0x1130] sm:$0xf]
        %v3213 = vld [vmem:[%s297 + $0x1134] sm:$0xf]
        %v3214 = vld [vmem:[%s297 + $0x1138] sm:$0xf]
        %v3215 = vld [vmem:[%s297 + $0x113c] sm:$0xf]
        %v3216 = vld [vmem:[%s297 + $0x1140] sm:$0x3]
        %v3217 = vld [vmem:[%s297 + $0x1144] sm:$0xf]
        %v3218 = vld [vmem:[%s297 + $0x1148] sm:$0xf]
        %v3219 = vld [vmem:[%s297 + $0x114c] sm:$0xf]
        %v3220 = vld [vmem:[%s297 + $0x1150] sm:$0xf]
        %v3221 = vld [vmem:[%s297 + $0x1154] sm:$0xf]
        %v3222 = vld [vmem:[%s297 + $0x1158] sm:$0xf]
        %v3223 = vld [vmem:[%s297 + $0x115c] sm:$0xf]
        %v3224 = vld [vmem:[%s297 + $0x1160] sm:$0xf]
        %v3225 = vld [vmem:[%s297 + $0x1164] sm:$0xf]
        %v3226 = vld [vmem:[%s297 + $0x1168] sm:$0xf]
        %v3227 = vld [vmem:[%s297 + $0x116c] sm:$0xf]
        %v3228 = vld [vmem:[%s297 + $0x1170] sm:$0xf]
        %v3229 = vld [vmem:[%s297 + $0x1174] sm:$0xf]
        %v3230 = vld [vmem:[%s297 + $0x1178] sm:$0xf]
        %v3231 = vld [vmem:[%s297 + $0x117c] sm:$0xf]
        %v3232 = vld [vmem:[%s297 + $0x1180] sm:$0xf]
        %v3233 = vld [vmem:[%s297 + $0x1184] sm:$0xf]
        %v3234 = vld [vmem:[%s297 + $0x1188] sm:$0xf]
        %v3235 = vld [vmem:[%s297 + $0x118c] sm:$0xf]
        %v3236 = vld [vmem:[%s297 + $0x1190] sm:$0xf]
        %v3237 = vld [vmem:[%s297 + $0x1194] sm:$0xf]
        %v3238 = vld [vmem:[%s297 + $0x1198] sm:$0xf]
        %v3239 = vld [vmem:[%s297 + $0x119c] sm:$0xf]
        %v3240 = vld [vmem:[%s297 + $0x11a0] sm:$0xf]
        %v3241 = vld [vmem:[%s297 + $0x11a4] sm:$0xf]
        %v3242 = vld [vmem:[%s297 + $0x11a8] sm:$0xf]
        %v3243 = vld [vmem:[%s297 + $0x11ac] sm:$0xf]
        %v3244 = vld [vmem:[%s297 + $0x11b0] sm:$0xf]
        %v3245 = vld [vmem:[%s297 + $0x11b4] sm:$0xf]
        %v3246 = vld [vmem:[%s297 + $0x11b8] sm:$0xf]
        %v3247 = vld [vmem:[%s297 + $0x11bc] sm:$0xf]
        %v3248 = vld [vmem:[%s297 + $0x11c0] sm:$0xf]
        %v3249 = vld [vmem:[%s297 + $0x11c4] sm:$0xf]
        %v3250 = vld [vmem:[%s297 + $0x11c8] sm:$0xf]
        %v3251 = vld [vmem:[%s297 + $0x11cc] sm:$0xf]
        %v3252 = vld [vmem:[%s297 + $0x11d0] sm:$0xf]
        %v3253 = vld [vmem:[%s297 + $0x11d4] sm:$0xf]
        %v3254 = vld [vmem:[%s297 + $0x11d8] sm:$0xf]
        %v3255 = vld [vmem:[%s297 + $0x11dc] sm:$0xf]
        %v3256 = vld [vmem:[%s297 + $0x11e0] sm:$0xf]
        %v3257 = vld [vmem:[%s297 + $0x11e4] sm:$0xf]
        %v3258 = vld [vmem:[%s297 + $0x11e8] sm:$0xf]
        %v3259 = vld [vmem:[%s297 + $0x11ec] sm:$0xf]
        %v3260 = vld [vmem:[%s297 + $0x11f0] sm:$0xf]
        %v3261 = vld [vmem:[%s297 + $0x11f4] sm:$0xf]
        %v3262 = vld [vmem:[%s297 + $0x11f8] sm:$0xf]
        %v3263 = vld [vmem:[%s297 + $0x11fc] sm:$0xf]
        %v3264 = vld [vmem:[%s297 + $0x1200] sm:$0xf]
        %v3265 = vld [vmem:[%s297 + $0x1204] sm:$0xf]
        %v3266 = vld [vmem:[%s297 + $0x1208] sm:$0xf]
        %v3267 = vld [vmem:[%s297 + $0x120c] sm:$0xf]
        %v3268 = vld [vmem:[%s297 + $0x1210] sm:$0xf]
        %v3269 = vld [vmem:[%s297 + $0x1214] sm:$0xf]
        %v3270 = vld [vmem:[%s297 + $0x1218] sm:$0xf]
        %v3271 = vld [vmem:[%s297 + $0x121c] sm:$0xf]
        %v3272 = vld [vmem:[%s297 + $0x1220] sm:$0xf]
        %v3273 = vld [vmem:[%s297 + $0x1224] sm:$0xf]
        %v3274 = vld [vmem:[%s297 + $0x1228] sm:$0xf]
        %v3275 = vld [vmem:[%s297 + $0x122c] sm:$0xf]
        %v3276 = vld [vmem:[%s297 + $0x1230] sm:$0xf]
        %v3277 = vld [vmem:[%s297 + $0x1234] sm:$0xf]
        %v3278 = vld [vmem:[%s297 + $0x1238] sm:$0xf]
        %v3279 = vld [vmem:[%s297 + $0x123c] sm:$0xf]
        %v3280 = vld [vmem:[%s297 + $0x1240] sm:$0xf]
        %v3281 = vld [vmem:[%s297 + $0x1244] sm:$0xf]
        %v3282 = vld [vmem:[%s297 + $0x1248] sm:$0xf]
        %v3283 = vld [vmem:[%s297 + $0x124c] sm:$0xf]
        %v3284 = vld [vmem:[%s297 + $0x1250] sm:$0xf]
        %v3285 = vld [vmem:[%s297 + $0x1254] sm:$0xf]
        %v3286 = vld [vmem:[%s297 + $0x1258] sm:$0xf]
        %v3287 = vld [vmem:[%s297 + $0x125c] sm:$0xf]
        %v3288 = vld [vmem:[%s297 + $0x1260] sm:$0xf]
        %v3289 = vld [vmem:[%s297 + $0x1264] sm:$0xf]
        %v3290 = vld [vmem:[%s297 + $0x1268] sm:$0xf]
        %v3291 = vld [vmem:[%s297 + $0x126c] sm:$0xf]
        %v3292 = vld [vmem:[%s297 + $0x1270] sm:$0xf]
        %v3293 = vld [vmem:[%s297 + $0x1274] sm:$0xf]
        %v3294 = vld [vmem:[%s297 + $0x1278] sm:$0xf]
        %v3295 = vld [vmem:[%s297 + $0x127c] sm:$0xf]
        %v3296 = vld [vmem:[%s297 + $0x1280] sm:$0xf]
        %v3297 = vld [vmem:[%s297 + $0x1284] sm:$0xf]
        %v3298 = vld [vmem:[%s297 + $0x1288] sm:$0xf]
        %v3299 = vld [vmem:[%s297 + $0x128c] sm:$0xf]
        %v3300 = vld [vmem:[%s297 + $0x1290] sm:$0xf]
        %v3301 = vld [vmem:[%s297 + $0x1294] sm:$0x3]
        %v3302 = vld [vmem:[%s297 + $0x1298] sm:$0xf]
        %v3303 = vld [vmem:[%s297 + $0x129c] sm:$0xf]
        %v3304 = vld [vmem:[%s297 + $0x12a0] sm:$0xf]
        %v3305 = vld [vmem:[%s297 + $0x12a4] sm:$0xf]
        %v3306 = vld [vmem:[%s297 + $0x12a8] sm:$0xf]
        %v3307 = vld [vmem:[%s297 + $0x12ac] sm:$0xf]
        %v3308 = vld [vmem:[%s297 + $0x12b0] sm:$0xf]
        %v3309 = vld [vmem:[%s297 + $0x12b4] sm:$0xf]
        %v3310 = vld [vmem:[%s297 + $0x12b8] sm:$0xf]
        %v3311 = vld [vmem:[%s297 + $0x12bc] sm:$0xf]
        %v3312 = vld [vmem:[%s297 + $0x12c0] sm:$0xf]
        %v3313 = vld [vmem:[%s297 + $0x12c4] sm:$0xf]
        %v3314 = vld [vmem:[%s297 + $0x12c8] sm:$0xf]
        %v3315 = vld [vmem:[%s297 + $0x12cc] sm:$0xf]
        %v3316 = vld [vmem:[%s297 + $0x12d0] sm:$0xf]
        %v3317 = vld [vmem:[%s297 + $0x12d4] sm:$0xf]
        %v3318 = vld [vmem:[%s297 + $0x12d8] sm:$0xf]
        %v3319 = vld [vmem:[%s297 + $0x12dc] sm:$0xf]
        %v3320 = vld [vmem:[%s297 + $0x12e0] sm:$0xf]
        %v3321 = vld [vmem:[%s297 + $0x12e4] sm:$0xf]
        %v3322 = vld [vmem:[%s297 + $0x12e8] sm:$0xf]
        %v3323 = vld [vmem:[%s297 + $0x12ec] sm:$0xf]
        %v3324 = vld [vmem:[%s297 + $0x12f0] sm:$0xf]
        %v3325 = vld [vmem:[%s297 + $0x12f4] sm:$0xf]
        %v3326 = vld [vmem:[%s297 + $0x12f8] sm:$0xf]
        %v3327 = vld [vmem:[%s297 + $0x12fc] sm:$0xf]
        %v3328 = vld [vmem:[%s297 + $0x1300] sm:$0xf]
        %v3329 = vld [vmem:[%s297 + $0x1304] sm:$0xf]
        %v3330 = vld [vmem:[%s297 + $0x1308] sm:$0xf]
        %v3331 = vld [vmem:[%s297 + $0x130c] sm:$0xf]
        %v3332 = vld [vmem:[%s297 + $0x1310] sm:$0xf]
        %v3333 = vld [vmem:[%s297 + $0x1314] sm:$0xf]
        %v3334 = vld [vmem:[%s297 + $0x1318] sm:$0xf]
        %v3335 = vld [vmem:[%s297 + $0x131c] sm:$0xf]
        %v3336 = vld [vmem:[%s297 + $0x1320] sm:$0xf]
        %v3337 = vld [vmem:[%s297 + $0x1324] sm:$0xf]
        %v3338 = vld [vmem:[%s297 + $0x1328] sm:$0xf]
        %v3339 = vld [vmem:[%s297 + $0x132c] sm:$0xf]
        %v3340 = vld [vmem:[%s297 + $0x1330] sm:$0xf]
        %v3341 = vld [vmem:[%s297 + $0x1334] sm:$0xf]
        %v3342 = vld [vmem:[%s297 + $0x1338] sm:$0xf]
        %v3343 = vld [vmem:[%s297 + $0x133c] sm:$0xf]
        %v3344 = vld [vmem:[%s297 + $0x1340] sm:$0xf]
        %v3345 = vld [vmem:[%s297 + $0x1344] sm:$0xf]
        %v3346 = vld [vmem:[%s297 + $0x1348] sm:$0xf]
        %v3347 = vld [vmem:[%s297 + $0x134c] sm:$0xf]
        %v3348 = vld [vmem:[%s297 + $0x1350] sm:$0xf]
        %v3349 = vld [vmem:[%s297 + $0x1354] sm:$0xf]
        %v3350 = vld [vmem:[%s297 + $0x1358] sm:$0xf]
        %v3351 = vld [vmem:[%s297 + $0x135c] sm:$0xf]
        %v3352 = vld [vmem:[%s297 + $0x1360] sm:$0xf]
        %v3353 = vld [vmem:[%s297 + $0x1364] sm:$0xf]
        %v3354 = vld [vmem:[%s297 + $0x1368] sm:$0xf]
        %v3355 = vld [vmem:[%s297 + $0x136c] sm:$0xf]
        %v3356 = vld [vmem:[%s297 + $0x1370] sm:$0xf]
        %v3357 = vld [vmem:[%s297 + $0x1374] sm:$0xf]
        %v3358 = vld [vmem:[%s297 + $0x1378] sm:$0xf]
        %v3359 = vld [vmem:[%s297 + $0x137c] sm:$0xf]
        %v3360 = vld [vmem:[%s297 + $0x1380] sm:$0xf]
        %v3361 = vld [vmem:[%s297 + $0x1384] sm:$0xf]
        %v3362 = vld [vmem:[%s297 + $0x1388] sm:$0xf]
        %v3363 = vld [vmem:[%s297 + $0x138c] sm:$0xf]
        %v3364 = vld [vmem:[%s297 + $0x1390] sm:$0xf]
        %v3365 = vld [vmem:[%s297 + $0x1394] sm:$0xf]
        %v3366 = vld [vmem:[%s297 + $0x1398] sm:$0xf]
        %v3367 = vld [vmem:[%s297 + $0x139c] sm:$0xf]
        %v3368 = vld [vmem:[%s297 + $0x13a0] sm:$0xf]
        %v3369 = vld [vmem:[%s297 + $0x13a4] sm:$0xf]
        %v3370 = vld [vmem:[%s297 + $0x13a8] sm:$0xf]
        %v3371 = vld [vmem:[%s297 + $0x13ac] sm:$0xf]
        %v3372 = vld [vmem:[%s297 + $0x13b0] sm:$0xf]
        %v3373 = vld [vmem:[%s297 + $0x13b4] sm:$0xf]
        %v3374 = vld [vmem:[%s297 + $0x13b8] sm:$0xf]
        %v3375 = vld [vmem:[%s297 + $0x13bc] sm:$0xf]
        %v3376 = vld [vmem:[%s297 + $0x13c0] sm:$0xf]
        %v3377 = vld [vmem:[%s297 + $0x13c4] sm:$0xf]
        %v3378 = vld [vmem:[%s297 + $0x13c8] sm:$0xf]
        %v3379 = vld [vmem:[%s297 + $0x13cc] sm:$0xf]
        %v3380 = vld [vmem:[%s297 + $0x13d0] sm:$0xf]
        %v3381 = vld [vmem:[%s297 + $0x13d4] sm:$0xf]
        %v3382 = vld [vmem:[%s297 + $0x13d8] sm:$0xf]
        %v3383 = vld [vmem:[%s297 + $0x13dc] sm:$0xf]
        %v3384 = vld [vmem:[%s297 + $0x13e0] sm:$0xf]
        %v3385 = vld [vmem:[%s297 + $0x13e4] sm:$0xf]
        %v3386 = vld [vmem:[%s297 + $0x13e8] sm:$0x3]
        %v3387 = vld [vmem:[%s297 + $0x13ec] sm:$0xf]
        %v3388 = vld [vmem:[%s297 + $0x13f0] sm:$0xf]
        %v3389 = vld [vmem:[%s297 + $0x13f4] sm:$0xf]
        %v3390 = vld [vmem:[%s297 + $0x13f8] sm:$0xf]
        %v3391 = vld [vmem:[%s297 + $0x13fc] sm:$0xf]
        %v3392 = vld [vmem:[%s297 + $0x1400] sm:$0xf]
        %v3393 = vld [vmem:[%s297 + $0x1404] sm:$0xf]
        %v3394 = vld [vmem:[%s297 + $0x1408] sm:$0xf]
        %v3395 = vld [vmem:[%s297 + $0x140c] sm:$0xf]
        %v3396 = vld [vmem:[%s297 + $0x1410] sm:$0xf]
        %v3397 = vld [vmem:[%s297 + $0x1414] sm:$0xf]
        %v3398 = vld [vmem:[%s297 + $0x1418] sm:$0xf]
        %v3399 = vld [vmem:[%s297 + $0x141c] sm:$0xf]
        %v3400 = vld [vmem:[%s297 + $0x1420] sm:$0xf]
        %v3401 = vld [vmem:[%s297 + $0x1424] sm:$0xf]
        %v3402 = vld [vmem:[%s297 + $0x1428] sm:$0xf]
        %v3403 = vld [vmem:[%s297 + $0x142c] sm:$0xf]
        %v3404 = vld [vmem:[%s297 + $0x1430] sm:$0xf]
        %v3405 = vld [vmem:[%s297 + $0x1434] sm:$0xf]
        %v3406 = vld [vmem:[%s297 + $0x1438] sm:$0xf]
        %v3407 = vld [vmem:[%s297 + $0x143c] sm:$0xf]
        %v3408 = vld [vmem:[%s297 + $0x1440] sm:$0xf]
        %v3409 = vld [vmem:[%s297 + $0x1444] sm:$0xf]
        %v3410 = vld [vmem:[%s297 + $0x1448] sm:$0xf]
        %v3411 = vld [vmem:[%s297 + $0x144c] sm:$0xf]
        %v3412 = vld [vmem:[%s297 + $0x1450] sm:$0xf]
        %v3413 = vld [vmem:[%s297 + $0x1454] sm:$0xf]
        %v3414 = vld [vmem:[%s297 + $0x1458] sm:$0xf]
        %v3415 = vld [vmem:[%s297 + $0x145c] sm:$0xf]
        %v3416 = vld [vmem:[%s297 + $0x1460] sm:$0xf]
        %v3417 = vld [vmem:[%s297 + $0x1464] sm:$0xf]
        %v3418 = vld [vmem:[%s297 + $0x1468] sm:$0xf]
        %v3419 = vld [vmem:[%s297 + $0x146c] sm:$0xf]
        %v3420 = vld [vmem:[%s297 + $0x1470] sm:$0xf]
        %v3421 = vld [vmem:[%s297 + $0x1474] sm:$0xf]
        %v3422 = vld [vmem:[%s297 + $0x1478] sm:$0xf]
        %v3423 = vld [vmem:[%s297 + $0x147c] sm:$0xf]
        %v3424 = vld [vmem:[%s297 + $0x1480] sm:$0xf]
        %v3425 = vld [vmem:[%s297 + $0x1484] sm:$0xf]
        %v3426 = vld [vmem:[%s297 + $0x1488] sm:$0xf]
        %v3427 = vld [vmem:[%s297 + $0x148c] sm:$0xf]
        %v3428 = vld [vmem:[%s297 + $0x1490] sm:$0xf]
        %v3429 = vld [vmem:[%s297 + $0x1494] sm:$0xf]
        %v3430 = vld [vmem:[%s297 + $0x1498] sm:$0xf]
        %v3431 = vld [vmem:[%s297 + $0x149c] sm:$0xf]
        %v3432 = vld [vmem:[%s297 + $0x14a0] sm:$0xf]
        %v3433 = vld [vmem:[%s297 + $0x14a4] sm:$0xf]
        %v3434 = vld [vmem:[%s297 + $0x14a8] sm:$0xf]
        %v3435 = vld [vmem:[%s297 + $0x14ac] sm:$0xf]
        %v3436 = vld [vmem:[%s297 + $0x14b0] sm:$0xf]
        %v3437 = vld [vmem:[%s297 + $0x14b4] sm:$0xf]
        %v3438 = vld [vmem:[%s297 + $0x14b8] sm:$0xf]
        %v3439 = vld [vmem:[%s297 + $0x14bc] sm:$0xf]
        %v3440 = vld [vmem:[%s297 + $0x14c0] sm:$0xf]
        %v3441 = vld [vmem:[%s297 + $0x14c4] sm:$0xf]
        %v3442 = vld [vmem:[%s297 + $0x14c8] sm:$0xf]
        %v3443 = vld [vmem:[%s297 + $0x14cc] sm:$0xf]
        %v3444 = vld [vmem:[%s297 + $0x14d0] sm:$0xf]
        %v3445 = vld [vmem:[%s297 + $0x14d4] sm:$0xf]
        %v3446 = vld [vmem:[%s297 + $0x14d8] sm:$0xf]
        %v3447 = vld [vmem:[%s297 + $0x14dc] sm:$0xf]
        %v3448 = vld [vmem:[%s297 + $0x14e0] sm:$0xf]
        %v3449 = vld [vmem:[%s297 + $0x14e4] sm:$0xf]
        %v3450 = vld [vmem:[%s297 + $0x14e8] sm:$0xf]
        %v3451 = vld [vmem:[%s297 + $0x14ec] sm:$0xf]
        %v3452 = vld [vmem:[%s297 + $0x14f0] sm:$0xf]
        %v3453 = vld [vmem:[%s297 + $0x14f4] sm:$0xf]
        %v3454 = vld [vmem:[%s297 + $0x14f8] sm:$0xf]
        %v3455 = vld [vmem:[%s297 + $0x14fc] sm:$0xf]
        %v3456 = vld [vmem:[%s297 + $0x1500] sm:$0xf]
        %v3457 = vld [vmem:[%s297 + $0x1504] sm:$0xf]
        %v3458 = vld [vmem:[%s297 + $0x1508] sm:$0xf]
        %v3459 = vld [vmem:[%s297 + $0x150c] sm:$0xf]
        %v3460 = vld [vmem:[%s297 + $0x1510] sm:$0xf]
        %v3461 = vld [vmem:[%s297 + $0x1514] sm:$0xf]
        %v3462 = vld [vmem:[%s297 + $0x1518] sm:$0xf]
        %v3463 = vld [vmem:[%s297 + $0x151c] sm:$0xf]
        %v3464 = vld [vmem:[%s297 + $0x1520] sm:$0xf]
        %v3465 = vld [vmem:[%s297 + $0x1524] sm:$0xf]
        %v3466 = vld [vmem:[%s297 + $0x1528] sm:$0xf]
        %v3467 = vld [vmem:[%s297 + $0x152c] sm:$0xf]
        %v3468 = vld [vmem:[%s297 + $0x1530] sm:$0xf]
        %v3469 = vld [vmem:[%s297 + $0x1534] sm:$0xf]
        %v3470 = vld [vmem:[%s297 + $0x1538] sm:$0xf]
        %v3471 = vld [vmem:[%s297 + $0x153c] sm:$0x3]
        %3473 = vst [vmem:[#allocation1] ss:$9 sm:$0xff] %v2096
        %v3474 = vld [vmem:[#allocation1] sm:$0xff]
        %v3475 = vld [vmem:[#allocation1 + $0x9] sm:$0xff]
        %v3476 = vld [vmem:[#allocation1 + $0x12] sm:$0xff]
        %v3477 = vld [vmem:[#allocation1 + $0x1b] sm:$0xff]
        %v3478 = vld [vmem:[#allocation1 + $0x24] sm:$0xff]
        %v3479 = vld [vmem:[#allocation1 + $0x2d] sm:$0xff]
        %v3570 = vunpack.c.l.b16 %v2112
        %v3571 = vunpack.c.l.b16 %v2113
        %v3572 = vunpack.c.l.b16 %v2114
        %v3573 = vunpack.c.l.b16 %v2115
        %v3574 = vunpack.c.l.b16 %v2116
        %v3575 = vunpack.c.l.b16 %v2117
        %v3576 = vunpack.c.l.b16 %v2118
        %v3577 = vunpack.c.l.b16 %v2119
        %v3578 = vunpack.c.l.b16 %v2120
        %v3579 = vunpack.c.l.b16 %v2121
        %v3580 = vunpack.c.l.b16 %v2122
        %v3581 = vunpack.c.l.b16 %v2123
        %v3582 = vunpack.c.l.b16 %v2124
        %v3583 = vunpack.c.l.b16 %v2125
        %v3584 = vunpack.c.l.b16 %v2126
        %v3585 = vunpack.c.l.b16 %v2127
        %v3586 = vunpack.c.l.b16 %v2128
        %v3587 = vunpack.c.l.b16 %v2129
        %v3588 = vunpack.c.l.b16 %v2130
        %v3589 = vunpack.c.l.b16 %v2131
        %v3590 = vunpack.c.l.b16 %v2132
        %v3591 = vunpack.c.l.b16 %v2133
        %v3592 = vunpack.c.l.b16 %v2134
        %v3593 = vunpack.c.l.b16 %v2135
        %v3594 = vunpack.c.l.b16 %v2136
        %v3595 = vunpack.c.l.b16 %v2137
        %v3596 = vunpack.c.l.b16 %v2138
        %v3597 = vunpack.c.l.b16 %v2139
        %v3598 = vunpack.c.l.b16 %v2140
        %v3599 = vunpack.c.l.b16 %v2141
        %v3600 = vunpack.c.l.b16 %v2142
        %v3601 = vunpack.c.l.b16 %v2143
        %v3602 = vunpack.c.l.b16 %v2144
        %v3603 = vunpack.c.l.b16 %v2145
        %v3604 = vunpack.c.l.b16 %v2146
        %v3605 = vunpack.c.l.b16 %v2147
        %v3606 = vunpack.c.l.b16 %v2148
        %v3607 = vunpack.c.l.b16 %v2149
        %v3608 = vunpack.c.l.b16 %v2150
        %v3609 = vunpack.c.l.b16 %v2151
        %v3610 = vunpack.c.l.b16 %v2152
        %v3611 = vunpack.c.l.b16 %v2153
        %v3612 = vunpack.c.l.b16 %v2154
        %v3613 = vunpack.c.l.b16 %v2155
        %v3614 = vunpack.c.l.b16 %v2156
        %v3615 = vunpack.c.l.b16 %v2157
        %v3616 = vunpack.c.l.b16 %v2158
        %v3617 = vunpack.c.l.b16 %v2159
        %v3618 = vunpack.c.l.b16 %v2160
        %v3619 = vunpack.c.l.b16 %v2161
        %v3620 = vunpack.c.l.b16 %v2162
        %v3621 = vunpack.c.l.b16 %v2163
        %v3622 = vunpack.c.l.b16 %v2164
        %v3623 = vunpack.c.l.b16 %v2165
        %v3624 = vunpack.c.l.b16 %v2166
        %v3625 = vunpack.c.l.b16 %v2167
        %v3626 = vunpack.c.l.b16 %v2168
        %v3627 = vunpack.c.l.b16 %v2169
        %v3628 = vunpack.c.l.b16 %v2170
        %v3629 = vunpack.c.l.b16 %v2171
        %v3630 = vunpack.c.l.b16 %v2172
        %v3631 = vunpack.c.l.b16 %v2173
        %v3632 = vunpack.c.l.b16 %v2174
        %v3633 = vunpack.c.l.b16 %v2175
        %v3634 = vunpack.c.l.b16 %v2176
        %v3635 = vunpack.c.l.b16 %v2177
        %v3636 = vunpack.c.l.b16 %v2178
        %v3637 = vunpack.c.l.b16 %v2179
        %v3638 = vunpack.c.l.b16 %v2180
        %v3639 = vunpack.c.l.b16 %v2181
        %v3640 = vunpack.c.l.b16 %v2182
        %v3641 = vunpack.c.l.b16 %v2183
        %v3642 = vunpack.c.l.b16 %v2184
        %v3643 = vunpack.c.l.b16 %v2185
        %v3644 = vunpack.c.l.b16 %v2186
        %v3645 = vunpack.c.l.b16 %v2187
        %v3646 = vunpack.c.l.b16 %v2188
        %v3647 = vunpack.c.l.b16 %v2189
        %v3648 = vunpack.c.l.b16 %v2190
        %v3649 = vunpack.c.l.b16 %v2191
        %v3650 = vunpack.c.l.b16 %v2192
        %v3651 = vunpack.c.l.b16 %v2193
        %v3652 = vunpack.c.l.b16 %v2194
        %v3653 = vunpack.c.l.b16 %v2195
        %v3654 = vunpack.c.l.b16 %v2196
        %v3655 = vpack.c.b16 %v3571, %v3570
        %v3656 = vpack.c.b16 %v3573, %v3572
        %v3657 = vpack.c.b16 %v3575, %v3574
        %v3658 = vpack.c.b16 %v3577, %v3576
        %v3659 = vpack.c.b16 %v3579, %v3578
        %v3660 = vpack.c.b16 %v3581, %v3580
        %v3661 = vpack.c.b16 %v3583, %v3582
        %v3662 = vpack.c.b16 %v3585, %v3584
        %v3663 = vpack.c.b16 %v3587, %v3586
        %v3664 = vpack.c.b16 %v3589, %v3588
        %v3665 = vpack.c.b16 %v3591, %v3590
        %v3666 = vpack.c.b16 %v3593, %v3592
        %v3667 = vpack.c.b16 %v3595, %v3594
        %v3668 = vpack.c.b16 %v3597, %v3596
        %v3669 = vpack.c.b16 %v3599, %v3598
        %v3670 = vpack.c.b16 %v3601, %v3600
        %v3671 = vpack.c.b16 %v3603, %v3602
        %v3672 = vpack.c.b16 %v3605, %v3604
        %v3673 = vpack.c.b16 %v3607, %v3606
        %v3674 = vpack.c.b16 %v3609, %v3608
        %v3675 = vpack.c.b16 %v3611, %v3610
        %v3676 = vpack.c.b16 %v3613, %v3612
        %v3677 = vpack.c.b16 %v3615, %v3614
        %v3678 = vpack.c.b16 %v3617, %v3616
        %v3679 = vpack.c.b16 %v3619, %v3618
        %v3680 = vpack.c.b16 %v3621, %v3620
        %v3681 = vpack.c.b16 %v3623, %v3622
        %v3682 = vpack.c.b16 %v3625, %v3624
        %v3683 = vpack.c.b16 %v3627, %v3626
        %v3684 = vpack.c.b16 %v3629, %v3628
        %v3685 = vpack.c.b16 %v3631, %v3630
        %v3686 = vpack.c.b16 %v3633, %v3632
        %v3687 = vpack.c.b16 %v3635, %v3634
        %v3688 = vpack.c.b16 %v3637, %v3636
        %v3689 = vpack.c.b16 %v3639, %v3638
        %v3690 = vpack.c.b16 %v3641, %v3640
        %v3691 = vpack.c.b16 %v3643, %v3642
        %v3692 = vpack.c.b16 %v3645, %v3644
        %v3693 = vpack.c.b16 %v3647, %v3646
        %v3694 = vpack.c.b16 %v3649, %v3648
        %v3695 = vpack.c.b16 %v3651, %v3650
        %v3696 = vpack.c.b16 %v3653, %v3652
        %v3697 = vpack.c.b16 %v3654, %v3654
        %vm3740 = vcmask 293888
        %v3741 = vsel %vm3740, %v3479, 0
        %v3744 = vsel %vm423, %v3697, 0
        %3746 = vmatpush.bf16.msra.mxu0 %v3662
        %3747 = vmatpush.bf16.msra.mxu0 %v3661
        %3748 = vmatpush.bf16.msra.mxu0 %v3660
        %3749 = vmatpush.bf16.msra.mxu0 %v3659
        %3750 = vmatpush.bf16.msra.mxu0 %v3658
        %3751 = vmatpush.bf16.msra.mxu0 %v3657
        %3752 = vmatpush.bf16.msra.mxu0 %v3656
        %3753 = vmatpush.bf16.msra.mxu0 %v3655
        %3754 = vmatmul.bf16.gmra.mxu0 %v3474
        %v3755 = vpop.f32.mrf.mxu0
        %v3756 = vadd.f32 0.0, %v3755
        %v3757 = vpop.f32.mrf.mxu0
        %3758 = vdwg.mxu0
        %3759 = vmatpush.bf16.msra.mxu0 %v3670
        %3760 = vmatpush.bf16.msra.mxu0 %v3669
        %3761 = vmatpush.bf16.msra.mxu0 %v3668
        %3762 = vmatpush.bf16.msra.mxu0 %v3667
        %3763 = vmatpush.bf16.msra.mxu0 %v3666
        %3764 = vmatpush.bf16.msra.mxu0 %v3665
        %3765 = vmatpush.bf16.msra.mxu0 %v3664
        %3766 = vmatpush.bf16.msra.mxu0 %v3663
        %3767 = vmatmul.bf16.gmra.mxu0 %v3475
        %v3768 = vpop.f32.mrf.mxu0
        %v3769 = vadd.f32 %v3756, %v3768
        %v3770 = vpop.f32.mrf.mxu0
        %3771 = vdwg.mxu0
        %3772 = vmatpush.bf16.msra.mxu0 %v3678
        %3773 = vmatpush.bf16.msra.mxu0 %v3677
        %3774 = vmatpush.bf16.msra.mxu0 %v3676
        %3775 = vmatpush.bf16.msra.mxu0 %v3675
        %3776 = vmatpush.bf16.msra.mxu0 %v3674
        %3777 = vmatpush.bf16.msra.mxu0 %v3673
        %3778 = vmatpush.bf16.msra.mxu0 %v3672
        %3779 = vmatpush.bf16.msra.mxu0 %v3671
        %3780 = vmatmul.bf16.gmra.mxu0 %v3476
        %v3781 = vpop.f32.mrf.mxu0
        %v3782 = vadd.f32 %v3769, %v3781
        %v3783 = vpop.f32.mrf.mxu0
        %3784 = vdwg.mxu0
        %3785 = vmatpush.bf16.msra.mxu0 %v3686
        %3786 = vmatpush.bf16.msra.mxu0 %v3685
        %3787 = vmatpush.bf16.msra.mxu0 %v3684
        %3788 = vmatpush.bf16.msra.mxu0 %v3683
        %3789 = vmatpush.bf16.msra.mxu0 %v3682
        %3790 = vmatpush.bf16.msra.mxu0 %v3681
        %3791 = vmatpush.bf16.msra.mxu0 %v3680
        %3792 = vmatpush.bf16.msra.mxu0 %v3679
        %3793 = vmatmul.bf16.gmra.mxu0 %v3477
        %v3794 = vpop.f32.mrf.mxu0
        %v3795 = vadd.f32 %v3782, %v3794
        %v3796 = vpop.f32.mrf.mxu0
        %3797 = vdwg.mxu0
        %3798 = vmatpush.bf16.msra.mxu0 %v3694
        %3799 = vmatpush.bf16.msra.mxu0 %v3693
        %3800 = vmatpush.bf16.msra.mxu0 %v3692
        %3801 = vmatpush.bf16.msra.mxu0 %v3691
        %3802 = vmatpush.bf16.msra.mxu0 %v3690
        %3803 = vmatpush.bf16.msra.mxu0 %v3689
        %3804 = vmatpush.bf16.msra.mxu0 %v3688
        %3805 = vmatpush.bf16.msra.mxu0 %v3687
        %3806 = vmatmul.bf16.gmra.mxu0 %v3478
        %v3807 = vpop.f32.mrf.mxu0
        %v3808 = vadd.f32 %v3795, %v3807
        %v3809 = vpop.f32.mrf.mxu0
        %3810 = vdwg.mxu0
        %3811 = vmatpush.bf16.msra.mxu0 0
        %3812 = vmatpush.bf16.msra.mxu0 0
        %3813 = vmatpush.bf16.msra.mxu0 0
        %3814 = vmatpush.bf16.msra.mxu0 0
        %3815 = vmatpush.bf16.msra.mxu0 0
        %3816 = vmatpush.bf16.msra.mxu0 %v3744
        %3817 = vmatpush.bf16.msra.mxu0 %v3696
        %3818 = vmatpush.bf16.msra.mxu0 %v3695
        %3819 = vmatmul.bf16.gmra.mxu0 %v3741
        %v3820 = vpop.f32.mrf.mxu0
        %v3821 = vadd.f32 %v3808, %v3820
        %v3822 = vpop.f32.mrf.mxu0
        %3823 = vdwg.mxu0
        %3825 = vst [vmem:[#allocation1] ss:$9 sm:$0xff] %v2097
        %v3826 = vld [vmem:[#allocation1] sm:$0xff]
        %v3827 = vld [vmem:[#allocation1 + $0x9] sm:$0xff]
        %v3828 = vld [vmem:[#allocation1 + $0x12] sm:$0xff]
        %v3829 = vld [vmem:[#allocation1 + $0x1b] sm:$0xff]
        %v3830 = vld [vmem:[#allocation1 + $0x24] sm:$0xff]
        %v3831 = vld [vmem:[#allocation1 + $0x2d] sm:$0xff]
        %v3922 = vunpack.c.l.b16 %v2197
        %v3923 = vunpack.c.l.b16 %v2198
        %v3924 = vunpack.c.l.b16 %v2199
        %v3925 = vunpack.c.l.b16 %v2200
        %v3926 = vunpack.c.l.b16 %v2201
        %v3927 = vunpack.c.l.b16 %v2202
        %v3928 = vunpack.c.l.b16 %v2203
        %v3929 = vunpack.c.l.b16 %v2204
        %v3930 = vunpack.c.l.b16 %v2205
        %v3931 = vunpack.c.l.b16 %v2206
        %v3932 = vunpack.c.l.b16 %v2207
        %v3933 = vunpack.c.l.b16 %v2208
        %v3934 = vunpack.c.l.b16 %v2209
        %v3935 = vunpack.c.l.b16 %v2210
        %v3936 = vunpack.c.l.b16 %v2211
        %v3937 = vunpack.c.l.b16 %v2212
        %v3938 = vunpack.c.l.b16 %v2213
        %v3939 = vunpack.c.l.b16 %v2214
        %v3940 = vunpack.c.l.b16 %v2215
        %v3941 = vunpack.c.l.b16 %v2216
        %v3942 = vunpack.c.l.b16 %v2217
        %v3943 = vunpack.c.l.b16 %v2218
        %v3944 = vunpack.c.l.b16 %v2219
        %v3945 = vunpack.c.l.b16 %v2220
        %v3946 = vunpack.c.l.b16 %v2221
        %v3947 = vunpack.c.l.b16 %v2222
        %v3948 = vunpack.c.l.b16 %v2223
        %v3949 = vunpack.c.l.b16 %v2224
        %v3950 = vunpack.c.l.b16 %v2225
        %v3951 = vunpack.c.l.b16 %v2226
        %v3952 = vunpack.c.l.b16 %v2227
        %v3953 = vunpack.c.l.b16 %v2228
        %v3954 = vunpack.c.l.b16 %v2229
        %v3955 = vunpack.c.l.b16 %v2230
        %v3956 = vunpack.c.l.b16 %v2231
        %v3957 = vunpack.c.l.b16 %v2232
        %v3958 = vunpack.c.l.b16 %v2233
        %v3959 = vunpack.c.l.b16 %v2234
        %v3960 = vunpack.c.l.b16 %v2235
        %v3961 = vunpack.c.l.b16 %v2236
        %v3962 = vunpack.c.l.b16 %v2237
        %v3963 = vunpack.c.l.b16 %v2238
        %v3964 = vunpack.c.l.b16 %v2239
        %v3965 = vunpack.c.l.b16 %v2240
        %v3966 = vunpack.c.l.b16 %v2241
        %v3967 = vunpack.c.l.b16 %v2242
        %v3968 = vunpack.c.l.b16 %v2243
        %v3969 = vunpack.c.l.b16 %v2244
        %v3970 = vunpack.c.l.b16 %v2245
        %v3971 = vunpack.c.l.b16 %v2246
        %v3972 = vunpack.c.l.b16 %v2247
        %v3973 = vunpack.c.l.b16 %v2248
        %v3974 = vunpack.c.l.b16 %v2249
        %v3975 = vunpack.c.l.b16 %v2250
        %v3976 = vunpack.c.l.b16 %v2251
        %v3977 = vunpack.c.l.b16 %v2252
        %v3978 = vunpack.c.l.b16 %v2253
        %v3979 = vunpack.c.l.b16 %v2254
        %v3980 = vunpack.c.l.b16 %v2255
        %v3981 = vunpack.c.l.b16 %v2256
        %v3982 = vunpack.c.l.b16 %v2257
        %v3983 = vunpack.c.l.b16 %v2258
        %v3984 = vunpack.c.l.b16 %v2259
        %v3985 = vunpack.c.l.b16 %v2260
        %v3986 = vunpack.c.l.b16 %v2261
        %v3987 = vunpack.c.l.b16 %v2262
        %v3988 = vunpack.c.l.b16 %v2263
        %v3989 = vunpack.c.l.b16 %v2264
        %v3990 = vunpack.c.l.b16 %v2265
        %v3991 = vunpack.c.l.b16 %v2266
        %v3992 = vunpack.c.l.b16 %v2267
        %v3993 = vunpack.c.l.b16 %v2268
        %v3994 = vunpack.c.l.b16 %v2269
        %v3995 = vunpack.c.l.b16 %v2270
        %v3996 = vunpack.c.l.b16 %v2271
        %v3997 = vunpack.c.l.b16 %v2272
        %v3998 = vunpack.c.l.b16 %v2273
        %v3999 = vunpack.c.l.b16 %v2274
        %v4000 = vunpack.c.l.b16 %v2275
        %v4001 = vunpack.c.l.b16 %v2276
        %v4002 = vunpack.c.l.b16 %v2277
        %v4003 = vunpack.c.l.b16 %v2278
        %v4004 = vunpack.c.l.b16 %v2279
        %v4005 = vunpack.c.l.b16 %v2280
        %v4006 = vunpack.c.l.b16 %v2281
        %v4007 = vpack.c.b16 %v3923, %v3922
        %v4008 = vpack.c.b16 %v3925, %v3924
        %v4009 = vpack.c.b16 %v3927, %v3926
        %v4010 = vpack.c.b16 %v3929, %v3928
        %v4011 = vpack.c.b16 %v3931, %v3930
        %v4012 = vpack.c.b16 %v3933, %v3932
        %v4013 = vpack.c.b16 %v3935, %v3934
        %v4014 = vpack.c.b16 %v3937, %v3936
        %v4015 = vpack.c.b16 %v3939, %v3938
        %v4016 = vpack.c.b16 %v3941, %v3940
        %v4017 = vpack.c.b16 %v3943, %v3942
        %v4018 = vpack.c.b16 %v3945, %v3944
        %v4019 = vpack.c.b16 %v3947, %v3946
        %v4020 = vpack.c.b16 %v3949, %v3948
        %v4021 = vpack.c.b16 %v3951, %v3950
        %v4022 = vpack.c.b16 %v3953, %v3952
        %v4023 = vpack.c.b16 %v3955, %v3954
        %v4024 = vpack.c.b16 %v3957, %v3956
        %v4025 = vpack.c.b16 %v3959, %v3958
        %v4026 = vpack.c.b16 %v3961, %v3960
        %v4027 = vpack.c.b16 %v3963, %v3962
        %v4028 = vpack.c.b16 %v3965, %v3964
        %v4029 = vpack.c.b16 %v3967, %v3966
        %v4030 = vpack.c.b16 %v3969, %v3968
        %v4031 = vpack.c.b16 %v3971, %v3970
        %v4032 = vpack.c.b16 %v3973, %v3972
        %v4033 = vpack.c.b16 %v3975, %v3974
        %v4034 = vpack.c.b16 %v3977, %v3976
        %v4035 = vpack.c.b16 %v3979, %v3978
        %v4036 = vpack.c.b16 %v3981, %v3980
        %v4037 = vpack.c.b16 %v3983, %v3982
        %v4038 = vpack.c.b16 %v3985, %v3984
        %v4039 = vpack.c.b16 %v3987, %v3986
        %v4040 = vpack.c.b16 %v3989, %v3988
        %v4041 = vpack.c.b16 %v3991, %v3990
        %v4042 = vpack.c.b16 %v3993, %v3992
        %v4043 = vpack.c.b16 %v3995, %v3994
        %v4044 = vpack.c.b16 %v3997, %v3996
        %v4045 = vpack.c.b16 %v3999, %v3998
        %v4046 = vpack.c.b16 %v4001, %v4000
        %v4047 = vpack.c.b16 %v4003, %v4002
        %v4048 = vpack.c.b16 %v4005, %v4004
        %v4049 = vpack.c.b16 %v4006, %v4006
        %v4092 = vsel %vm3740, %v3831, 0
        %v4095 = vsel %vm423, %v4049, 0
        %4097 = vmatpush.bf16.msra.mxu0 %v4014
        %4098 = vmatpush.bf16.msra.mxu0 %v4013
        %4099 = vmatpush.bf16.msra.mxu0 %v4012
        %4100 = vmatpush.bf16.msra.mxu0 %v4011
        %4101 = vmatpush.bf16.msra.mxu0 %v4010
        %4102 = vmatpush.bf16.msra.mxu0 %v4009
        %4103 = vmatpush.bf16.msra.mxu0 %v4008
        %4104 = vmatpush.bf16.msra.mxu0 %v4007
        %4105 = vmatmul.bf16.gmra.mxu0 %v3826
        %v4106 = vpop.f32.mrf.mxu0
        %v4107 = vadd.f32 0.0, %v4106
        %v4108 = vpop.f32.mrf.mxu0
        %4109 = vdwg.mxu0
        %4110 = vmatpush.bf16.msra.mxu0 %v4022
        %4111 = vmatpush.bf16.msra.mxu0 %v4021
        %4112 = vmatpush.bf16.msra.mxu0 %v4020
        %4113 = vmatpush.bf16.msra.mxu0 %v4019
        %4114 = vmatpush.bf16.msra.mxu0 %v4018
        %4115 = vmatpush.bf16.msra.mxu0 %v4017
        %4116 = vmatpush.bf16.msra.mxu0 %v4016
        %4117 = vmatpush.bf16.msra.mxu0 %v4015
        %4118 = vmatmul.bf16.gmra.mxu0 %v3827
        %v4119 = vpop.f32.mrf.mxu0
        %v4120 = vadd.f32 %v4107, %v4119
        %v4121 = vpop.f32.mrf.mxu0
        %4122 = vdwg.mxu0
        %4123 = vmatpush.bf16.msra.mxu0 %v4030
        %4124 = vmatpush.bf16.msra.mxu0 %v4029
        %4125 = vmatpush.bf16.msra.mxu0 %v4028
        %4126 = vmatpush.bf16.msra.mxu0 %v4027
        %4127 = vmatpush.bf16.msra.mxu0 %v4026
        %4128 = vmatpush.bf16.msra.mxu0 %v4025
        %4129 = vmatpush.bf16.msra.mxu0 %v4024
        %4130 = vmatpush.bf16.msra.mxu0 %v4023
        %4131 = vmatmul.bf16.gmra.mxu0 %v3828
        %v4132 = vpop.f32.mrf.mxu0
        %v4133 = vadd.f32 %v4120, %v4132
        %v4134 = vpop.f32.mrf.mxu0
        %4135 = vdwg.mxu0
        %4136 = vmatpush.bf16.msra.mxu0 %v4038
        %4137 = vmatpush.bf16.msra.mxu0 %v4037
        %4138 = vmatpush.bf16.msra.mxu0 %v4036
        %4139 = vmatpush.bf16.msra.mxu0 %v4035
        %4140 = vmatpush.bf16.msra.mxu0 %v4034
        %4141 = vmatpush.bf16.msra.mxu0 %v4033
        %4142 = vmatpush.bf16.msra.mxu0 %v4032
        %4143 = vmatpush.bf16.msra.mxu0 %v4031
        %4144 = vmatmul.bf16.gmra.mxu0 %v3829
        %v4145 = vpop.f32.mrf.mxu0
        %v4146 = vadd.f32 %v4133, %v4145
        %v4147 = vpop.f32.mrf.mxu0
        %4148 = vdwg.mxu0
        %4149 = vmatpush.bf16.msra.mxu0 %v4046
        %4150 = vmatpush.bf16.msra.mxu0 %v4045
        %4151 = vmatpush.bf16.msra.mxu0 %v4044
        %4152 = vmatpush.bf16.msra.mxu0 %v4043
        %4153 = vmatpush.bf16.msra.mxu0 %v4042
        %4154 = vmatpush.bf16.msra.mxu0 %v4041
        %4155 = vmatpush.bf16.msra.mxu0 %v4040
        %4156 = vmatpush.bf16.msra.mxu0 %v4039
        %4157 = vmatmul.bf16.gmra.mxu0 %v3830
        %v4158 = vpop.f32.mrf.mxu0
        %v4159 = vadd.f32 %v4146, %v4158
        %v4160 = vpop.f32.mrf.mxu0
        %4161 = vdwg.mxu0
        %4162 = vmatpush.bf16.msra.mxu0 0
        %4163 = vmatpush.bf16.msra.mxu0 0
        %4164 = vmatpush.bf16.msra.mxu0 0
        %4165 = vmatpush.bf16.msra.mxu0 0
        %4166 = vmatpush.bf16.msra.mxu0 0
        %4167 = vmatpush.bf16.msra.mxu0 %v4095
        %4168 = vmatpush.bf16.msra.mxu0 %v4048
        %4169 = vmatpush.bf16.msra.mxu0 %v4047
        %4170 = vmatmul.bf16.gmra.mxu0 %v4092
        %v4171 = vpop.f32.mrf.mxu0
        %v4172 = vadd.f32 %v4159, %v4171
        %v4173 = vpop.f32.mrf.mxu0
        %4174 = vdwg.mxu0
        %4176 = vst [vmem:[#allocation1] ss:$9 sm:$0xff] %v2098
        %v4177 = vld [vmem:[#allocation1] sm:$0xff]
        %v4178 = vld [vmem:[#allocation1 + $0x9] sm:$0xff]
        %v4179 = vld [vmem:[#allocation1 + $0x12] sm:$0xff]
        %v4180 = vld [vmem:[#allocation1 + $0x1b] sm:$0xff]
        %v4181 = vld [vmem:[#allocation1 + $0x24] sm:$0xff]
        %v4182 = vld [vmem:[#allocation1 + $0x2d] sm:$0xff]
        %v4273 = vunpack.c.l.b16 %v2282
        %v4274 = vunpack.c.l.b16 %v2283
        %v4275 = vunpack.c.l.b16 %v2284
        %v4276 = vunpack.c.l.b16 %v2285
        %v4277 = vunpack.c.l.b16 %v2286
        %v4278 = vunpack.c.l.b16 %v2287
        %v4279 = vunpack.c.l.b16 %v2288
        %v4280 = vunpack.c.l.b16 %v2289
        %v4281 = vunpack.c.l.b16 %v2290
        %v4282 = vunpack.c.l.b16 %v2291
        %v4283 = vunpack.c.l.b16 %v2292
        %v4284 = vunpack.c.l.b16 %v2293
        %v4285 = vunpack.c.l.b16 %v2294
        %v4286 = vunpack.c.l.b16 %v2295
        %v4287 = vunpack.c.l.b16 %v2296
        %v4288 = vunpack.c.l.b16 %v2297
        %v4289 = vunpack.c.l.b16 %v2298
        %v4290 = vunpack.c.l.b16 %v2299
        %v4291 = vunpack.c.l.b16 %v2300
        %v4292 = vunpack.c.l.b16 %v2301
        %v4293 = vunpack.c.l.b16 %v2302
        %v4294 = vunpack.c.l.b16 %v2303
        %v4295 = vunpack.c.l.b16 %v2304
        %v4296 = vunpack.c.l.b16 %v2305
        %v4297 = vunpack.c.l.b16 %v2306
        %v4298 = vunpack.c.l.b16 %v2307
        %v4299 = vunpack.c.l.b16 %v2308
        %v4300 = vunpack.c.l.b16 %v2309
        %v4301 = vunpack.c.l.b16 %v2310
        %v4302 = vunpack.c.l.b16 %v2311
        %v4303 = vunpack.c.l.b16 %v2312
        %v4304 = vunpack.c.l.b16 %v2313
        %v4305 = vunpack.c.l.b16 %v2314
        %v4306 = vunpack.c.l.b16 %v2315
        %v4307 = vunpack.c.l.b16 %v2316
        %v4308 = vunpack.c.l.b16 %v2317
        %v4309 = vunpack.c.l.b16 %v2318
        %v4310 = vunpack.c.l.b16 %v2319
        %v4311 = vunpack.c.l.b16 %v2320
        %v4312 = vunpack.c.l.b16 %v2321
        %v4313 = vunpack.c.l.b16 %v2322
        %v4314 = vunpack.c.l.b16 %v2323
        %v4315 = vunpack.c.l.b16 %v2324
        %v4316 = vunpack.c.l.b16 %v2325
        %v4317 = vunpack.c.l.b16 %v2326
        %v4318 = vunpack.c.l.b16 %v2327
        %v4319 = vunpack.c.l.b16 %v2328
        %v4320 = vunpack.c.l.b16 %v2329
        %v4321 = vunpack.c.l.b16 %v2330
        %v4322 = vunpack.c.l.b16 %v2331
        %v4323 = vunpack.c.l.b16 %v2332
        %v4324 = vunpack.c.l.b16 %v2333
        %v4325 = vunpack.c.l.b16 %v2334
        %v4326 = vunpack.c.l.b16 %v2335
        %v4327 = vunpack.c.l.b16 %v2336
        %v4328 = vunpack.c.l.b16 %v2337
        %v4329 = vunpack.c.l.b16 %v2338
        %v4330 = vunpack.c.l.b16 %v2339
        %v4331 = vunpack.c.l.b16 %v2340
        %v4332 = vunpack.c.l.b16 %v2341
        %v4333 = vunpack.c.l.b16 %v2342
        %v4334 = vunpack.c.l.b16 %v2343
        %v4335 = vunpack.c.l.b16 %v2344
        %v4336 = vunpack.c.l.b16 %v2345
        %v4337 = vunpack.c.l.b16 %v2346
        %v4338 = vunpack.c.l.b16 %v2347
        %v4339 = vunpack.c.l.b16 %v2348
        %v4340 = vunpack.c.l.b16 %v2349
        %v4341 = vunpack.c.l.b16 %v2350
        %v4342 = vunpack.c.l.b16 %v2351
        %v4343 = vunpack.c.l.b16 %v2352
        %v4344 = vunpack.c.l.b16 %v2353
        %v4345 = vunpack.c.l.b16 %v2354
        %v4346 = vunpack.c.l.b16 %v2355
        %v4347 = vunpack.c.l.b16 %v2356
        %v4348 = vunpack.c.l.b16 %v2357
        %v4349 = vunpack.c.l.b16 %v2358
        %v4350 = vunpack.c.l.b16 %v2359
        %v4351 = vunpack.c.l.b16 %v2360
        %v4352 = vunpack.c.l.b16 %v2361
        %v4353 = vunpack.c.l.b16 %v2362
        %v4354 = vunpack.c.l.b16 %v2363
        %v4355 = vunpack.c.l.b16 %v2364
        %v4356 = vunpack.c.l.b16 %v2365
        %v4357 = vunpack.c.l.b16 %v2366
        %v4358 = vpack.c.b16 %v4274, %v4273
        %v4359 = vpack.c.b16 %v4276, %v4275
        %v4360 = vpack.c.b16 %v4278, %v4277
        %v4361 = vpack.c.b16 %v4280, %v4279
        %v4362 = vpack.c.b16 %v4282, %v4281
        %v4363 = vpack.c.b16 %v4284, %v4283
        %v4364 = vpack.c.b16 %v4286, %v4285
        %v4365 = vpack.c.b16 %v4288, %v4287
        %v4366 = vpack.c.b16 %v4290, %v4289
        %v4367 = vpack.c.b16 %v4292, %v4291
        %v4368 = vpack.c.b16 %v4294, %v4293
        %v4369 = vpack.c.b16 %v4296, %v4295
        %v4370 = vpack.c.b16 %v4298, %v4297
        %v4371 = vpack.c.b16 %v4300, %v4299
        %v4372 = vpack.c.b16 %v4302, %v4301
        %v4373 = vpack.c.b16 %v4304, %v4303
        %v4374 = vpack.c.b16 %v4306, %v4305
        %v4375 = vpack.c.b16 %v4308, %v4307
        %v4376 = vpack.c.b16 %v4310, %v4309
        %v4377 = vpack.c.b16 %v4312, %v4311
        %v4378 = vpack.c.b16 %v4314, %v4313
        %v4379 = vpack.c.b16 %v4316, %v4315
        %v4380 = vpack.c.b16 %v4318, %v4317
        %v4381 = vpack.c.b16 %v4320, %v4319
        %v4382 = vpack.c.b16 %v4322, %v4321
        %v4383 = vpack.c.b16 %v4324, %v4323
        %v4384 = vpack.c.b16 %v4326, %v4325
        %v4385 = vpack.c.b16 %v4328, %v4327
        %v4386 = vpack.c.b16 %v4330, %v4329
        %v4387 = vpack.c.b16 %v4332, %v4331
        %v4388 = vpack.c.b16 %v4334, %v4333
        %v4389 = vpack.c.b16 %v4336, %v4335
        %v4390 = vpack.c.b16 %v4338, %v4337
        %v4391 = vpack.c.b16 %v4340, %v4339
        %v4392 = vpack.c.b16 %v4342, %v4341
        %v4393 = vpack.c.b16 %v4344, %v4343
        %v4394 = vpack.c.b16 %v4346, %v4345
        %v4395 = vpack.c.b16 %v4348, %v4347
        %v4396 = vpack.c.b16 %v4350, %v4349
        %v4397 = vpack.c.b16 %v4352, %v4351
        %v4398 = vpack.c.b16 %v4354, %v4353
        %v4399 = vpack.c.b16 %v4356, %v4355
        %v4400 = vpack.c.b16 %v4357, %v4357
        %v4443 = vsel %vm3740, %v4182, 0
        %v4446 = vsel %vm423, %v4400, 0
        %4448 = vmatpush.bf16.msra.mxu0 %v4365
        %4449 = vmatpush.bf16.msra.mxu0 %v4364
        %4450 = vmatpush.bf16.msra.mxu0 %v4363
        %4451 = vmatpush.bf16.msra.mxu0 %v4362
        %4452 = vmatpush.bf16.msra.mxu0 %v4361
        %4453 = vmatpush.bf16.msra.mxu0 %v4360
        %4454 = vmatpush.bf16.msra.mxu0 %v4359
        %4455 = vmatpush.bf16.msra.mxu0 %v4358
        %4456 = vmatmul.bf16.gmra.mxu0 %v4177
        %v4457 = vpop.f32.mrf.mxu0
        %v4458 = vadd.f32 0.0, %v4457
        %v4459 = vpop.f32.mrf.mxu0
        %4460 = vdwg.mxu0
        %4461 = vmatpush.bf16.msra.mxu0 %v4373
        %4462 = vmatpush.bf16.msra.mxu0 %v4372
        %4463 = vmatpush.bf16.msra.mxu0 %v4371
        %4464 = vmatpush.bf16.msra.mxu0 %v4370
        %4465 = vmatpush.bf16.msra.mxu0 %v4369
        %4466 = vmatpush.bf16.msra.mxu0 %v4368
        %4467 = vmatpush.bf16.msra.mxu0 %v4367
        %4468 = vmatpush.bf16.msra.mxu0 %v4366
        %4469 = vmatmul.bf16.gmra.mxu0 %v4178
        %v4470 = vpop.f32.mrf.mxu0
        %v4471 = vadd.f32 %v4458, %v4470
        %v4472 = vpop.f32.mrf.mxu0
        %4473 = vdwg.mxu0
        %4474 = vmatpush.bf16.msra.mxu0 %v4381
        %4475 = vmatpush.bf16.msra.mxu0 %v4380
        %4476 = vmatpush.bf16.msra.mxu0 %v4379
        %4477 = vmatpush.bf16.msra.mxu0 %v4378
        %4478 = vmatpush.bf16.msra.mxu0 %v4377
        %4479 = vmatpush.bf16.msra.mxu0 %v4376
        %4480 = vmatpush.bf16.msra.mxu0 %v4375
        %4481 = vmatpush.bf16.msra.mxu0 %v4374
        %4482 = vmatmul.bf16.gmra.mxu0 %v4179
        %v4483 = vpop.f32.mrf.mxu0
        %v4484 = vadd.f32 %v4471, %v4483
        %v4485 = vpop.f32.mrf.mxu0
        %4486 = vdwg.mxu0
        %4487 = vmatpush.bf16.msra.mxu0 %v4389
        %4488 = vmatpush.bf16.msra.mxu0 %v4388
        %4489 = vmatpush.bf16.msra.mxu0 %v4387
        %4490 = vmatpush.bf16.msra.mxu0 %v4386
        %4491 = vmatpush.bf16.msra.mxu0 %v4385
        %4492 = vmatpush.bf16.msra.mxu0 %v4384
        %4493 = vmatpush.bf16.msra.mxu0 %v4383
        %4494 = vmatpush.bf16.msra.mxu0 %v4382
        %4495 = vmatmul.bf16.gmra.mxu0 %v4180
        %v4496 = vpop.f32.mrf.mxu0
        %v4497 = vadd.f32 %v4484, %v4496
        %v4498 = vpop.f32.mrf.mxu0
        %4499 = vdwg.mxu0
        %4500 = vmatpush.bf16.msra.mxu0 %v4397
        %4501 = vmatpush.bf16.msra.mxu0 %v4396
        %4502 = vmatpush.bf16.msra.mxu0 %v4395
        %4503 = vmatpush.bf16.msra.mxu0 %v4394
        %4504 = vmatpush.bf16.msra.mxu0 %v4393
        %4505 = vmatpush.bf16.msra.mxu0 %v4392
        %4506 = vmatpush.bf16.msra.mxu0 %v4391
        %4507 = vmatpush.bf16.msra.mxu0 %v4390
        %4508 = vmatmul.bf16.gmra.mxu0 %v4181
        %v4509 = vpop.f32.mrf.mxu0
        %v4510 = vadd.f32 %v4497, %v4509
        %v4511 = vpop.f32.mrf.mxu0
        %4512 = vdwg.mxu0
        %4513 = vmatpush.bf16.msra.mxu0 0
        %4514 = vmatpush.bf16.msra.mxu0 0
        %4515 = vmatpush.bf16.msra.mxu0 0
        %4516 = vmatpush.bf16.msra.mxu0 0
        %4517 = vmatpush.bf16.msra.mxu0 0
        %4518 = vmatpush.bf16.msra.mxu0 %v4446
        %4519 = vmatpush.bf16.msra.mxu0 %v4399
        %4520 = vmatpush.bf16.msra.mxu0 %v4398
        %4521 = vmatmul.bf16.gmra.mxu0 %v4443
        %v4522 = vpop.f32.mrf.mxu0
        %v4523 = vadd.f32 %v4510, %v4522
        %v4524 = vpop.f32.mrf.mxu0
        %4525 = vdwg.mxu0
        %4527 = vst [vmem:[#allocation1] ss:$9 sm:$0xff] %v2099
        %v4528 = vld [vmem:[#allocation1] sm:$0xff]
        %v4529 = vld [vmem:[#allocation1 + $0x9] sm:$0xff]
        %v4530 = vld [vmem:[#allocation1 + $0x12] sm:$0xff]
        %v4531 = vld [vmem:[#allocation1 + $0x1b] sm:$0xff]
        %v4532 = vld [vmem:[#allocation1 + $0x24] sm:$0xff]
        %v4533 = vld [vmem:[#allocation1 + $0x2d] sm:$0xff]
        %v4624 = vunpack.c.l.b16 %v2367
        %v4625 = vunpack.c.l.b16 %v2368
        %v4626 = vunpack.c.l.b16 %v2369
        %v4627 = vunpack.c.l.b16 %v2370
        %v4628 = vunpack.c.l.b16 %v2371
        %v4629 = vunpack.c.l.b16 %v2372
        %v4630 = vunpack.c.l.b16 %v2373
        %v4631 = vunpack.c.l.b16 %v2374
        %v4632 = vunpack.c.l.b16 %v2375
        %v4633 = vunpack.c.l.b16 %v2376
        %v4634 = vunpack.c.l.b16 %v2377
        %v4635 = vunpack.c.l.b16 %v2378
        %v4636 = vunpack.c.l.b16 %v2379
        %v4637 = vunpack.c.l.b16 %v2380
        %v4638 = vunpack.c.l.b16 %v2381
        %v4639 = vunpack.c.l.b16 %v2382
        %v4640 = vunpack.c.l.b16 %v2383
        %v4641 = vunpack.c.l.b16 %v2384
        %v4642 = vunpack.c.l.b16 %v2385
        %v4643 = vunpack.c.l.b16 %v2386
        %v4644 = vunpack.c.l.b16 %v2387
        %v4645 = vunpack.c.l.b16 %v2388
        %v4646 = vunpack.c.l.b16 %v2389
        %v4647 = vunpack.c.l.b16 %v2390
        %v4648 = vunpack.c.l.b16 %v2391
        %v4649 = vunpack.c.l.b16 %v2392
        %v4650 = vunpack.c.l.b16 %v2393
        %v4651 = vunpack.c.l.b16 %v2394
        %v4652 = vunpack.c.l.b16 %v2395
        %v4653 = vunpack.c.l.b16 %v2396
        %v4654 = vunpack.c.l.b16 %v2397
        %v4655 = vunpack.c.l.b16 %v2398
        %v4656 = vunpack.c.l.b16 %v2399
        %v4657 = vunpack.c.l.b16 %v2400
        %v4658 = vunpack.c.l.b16 %v2401
        %v4659 = vunpack.c.l.b16 %v2402
        %v4660 = vunpack.c.l.b16 %v2403
        %v4661 = vunpack.c.l.b16 %v2404
        %v4662 = vunpack.c.l.b16 %v2405
        %v4663 = vunpack.c.l.b16 %v2406
        %v4664 = vunpack.c.l.b16 %v2407
        %v4665 = vunpack.c.l.b16 %v2408
        %v4666 = vunpack.c.l.b16 %v2409
        %v4667 = vunpack.c.l.b16 %v2410
        %v4668 = vunpack.c.l.b16 %v2411
        %v4669 = vunpack.c.l.b16 %v2412
        %v4670 = vunpack.c.l.b16 %v2413
        %v4671 = vunpack.c.l.b16 %v2414
        %v4672 = vunpack.c.l.b16 %v2415
        %v4673 = vunpack.c.l.b16 %v2416
        %v4674 = vunpack.c.l.b16 %v2417
        %v4675 = vunpack.c.l.b16 %v2418
        %v4676 = vunpack.c.l.b16 %v2419
        %v4677 = vunpack.c.l.b16 %v2420
        %v4678 = vunpack.c.l.b16 %v2421
        %v4679 = vunpack.c.l.b16 %v2422
        %v4680 = vunpack.c.l.b16 %v2423
        %v4681 = vunpack.c.l.b16 %v2424
        %v4682 = vunpack.c.l.b16 %v2425
        %v4683 = vunpack.c.l.b16 %v2426
        %v4684 = vunpack.c.l.b16 %v2427
        %v4685 = vunpack.c.l.b16 %v2428
        %v4686 = vunpack.c.l.b16 %v2429
        %v4687 = vunpack.c.l.b16 %v2430
        %v4688 = vunpack.c.l.b16 %v2431
        %v4689 = vunpack.c.l.b16 %v2432
        %v4690 = vunpack.c.l.b16 %v2433
        %v4691 = vunpack.c.l.b16 %v2434
        %v4692 = vunpack.c.l.b16 %v2435
        %v4693 = vunpack.c.l.b16 %v2436
        %v4694 = vunpack.c.l.b16 %v2437
        %v4695 = vunpack.c.l.b16 %v2438
        %v4696 = vunpack.c.l.b16 %v2439
        %v4697 = vunpack.c.l.b16 %v2440
        %v4698 = vunpack.c.l.b16 %v2441
        %v4699 = vunpack.c.l.b16 %v2442
        %v4700 = vunpack.c.l.b16 %v2443
        %v4701 = vunpack.c.l.b16 %v2444
        %v4702 = vunpack.c.l.b16 %v2445
        %v4703 = vunpack.c.l.b16 %v2446
        %v4704 = vunpack.c.l.b16 %v2447
        %v4705 = vunpack.c.l.b16 %v2448
        %v4706 = vunpack.c.l.b16 %v2449
        %v4707 = vunpack.c.l.b16 %v2450
        %v4708 = vunpack.c.l.b16 %v2451
        %v4709 = vpack.c.b16 %v4625, %v4624
        %v4710 = vpack.c.b16 %v4627, %v4626
        %v4711 = vpack.c.b16 %v4629, %v4628
        %v4712 = vpack.c.b16 %v4631, %v4630
        %v4713 = vpack.c.b16 %v4633, %v4632
        %v4714 = vpack.c.b16 %v4635, %v4634
        %v4715 = vpack.c.b16 %v4637, %v4636
        %v4716 = vpack.c.b16 %v4639, %v4638
        %v4717 = vpack.c.b16 %v4641, %v4640
        %v4718 = vpack.c.b16 %v4643, %v4642
        %v4719 = vpack.c.b16 %v4645, %v4644
        %v4720 = vpack.c.b16 %v4647, %v4646
        %v4721 = vpack.c.b16 %v4649, %v4648
        %v4722 = vpack.c.b16 %v4651, %v4650
        %v4723 = vpack.c.b16 %v4653, %v4652
        %v4724 = vpack.c.b16 %v4655, %v4654
        %v4725 = vpack.c.b16 %v4657, %v4656
        %v4726 = vpack.c.b16 %v4659, %v4658
        %v4727 = vpack.c.b16 %v4661, %v4660
        %v4728 = vpack.c.b16 %v4663, %v4662
        %v4729 = vpack.c.b16 %v4665, %v4664
        %v4730 = vpack.c.b16 %v4667, %v4666
        %v4731 = vpack.c.b16 %v4669, %v4668
        %v4732 = vpack.c.b16 %v4671, %v4670
        %v4733 = vpack.c.b16 %v4673, %v4672
        %v4734 = vpack.c.b16 %v4675, %v4674
        %v4735 = vpack.c.b16 %v4677, %v4676
        %v4736 = vpack.c.b16 %v4679, %v4678
        %v4737 = vpack.c.b16 %v4681, %v4680
        %v4738 = vpack.c.b16 %v4683, %v4682
        %v4739 = vpack.c.b16 %v4685, %v4684
        %v4740 = vpack.c.b16 %v4687, %v4686
        %v4741 = vpack.c.b16 %v4689, %v4688
        %v4742 = vpack.c.b16 %v4691, %v4690
        %v4743 = vpack.c.b16 %v4693, %v4692
        %v4744 = vpack.c.b16 %v4695, %v4694
        %v4745 = vpack.c.b16 %v4697, %v4696
        %v4746 = vpack.c.b16 %v4699, %v4698
        %v4747 = vpack.c.b16 %v4701, %v4700
        %v4748 = vpack.c.b16 %v4703, %v4702
        %v4749 = vpack.c.b16 %v4705, %v4704
        %v4750 = vpack.c.b16 %v4707, %v4706
        %v4751 = vpack.c.b16 %v4708, %v4708
        %v4794 = vsel %vm3740, %v4533, 0
        %v4797 = vsel %vm423, %v4751, 0
        %4799 = vmatpush.bf16.msra.mxu0 %v4716
        %4800 = vmatpush.bf16.msra.mxu0 %v4715
        %4801 = vmatpush.bf16.msra.mxu0 %v4714
        %4802 = vmatpush.bf16.msra.mxu0 %v4713
        %4803 = vmatpush.bf16.msra.mxu0 %v4712
        %4804 = vmatpush.bf16.msra.mxu0 %v4711
        %4805 = vmatpush.bf16.msra.mxu0 %v4710
        %4806 = vmatpush.bf16.msra.mxu0 %v4709
        %4807 = vmatmul.bf16.gmra.mxu0 %v4528
        %v4808 = vpop.f32.mrf.mxu0
        %v4809 = vadd.f32 0.0, %v4808
        %v4810 = vpop.f32.mrf.mxu0
        %4811 = vdwg.mxu0
        %4812 = vmatpush.bf16.msra.mxu0 %v4724
        %4813 = vmatpush.bf16.msra.mxu0 %v4723
        %4814 = vmatpush.bf16.msra.mxu0 %v4722
        %4815 = vmatpush.bf16.msra.mxu0 %v4721
        %4816 = vmatpush.bf16.msra.mxu0 %v4720
        %4817 = vmatpush.bf16.msra.mxu0 %v4719
        %4818 = vmatpush.bf16.msra.mxu0 %v4718
        %4819 = vmatpush.bf16.msra.mxu0 %v4717
        %4820 = vmatmul.bf16.gmra.mxu0 %v4529
        %v4821 = vpop.f32.mrf.mxu0
        %v4822 = vadd.f32 %v4809, %v4821
        %v4823 = vpop.f32.mrf.mxu0
        %4824 = vdwg.mxu0
        %4825 = vmatpush.bf16.msra.mxu0 %v4732
        %4826 = vmatpush.bf16.msra.mxu0 %v4731
        %4827 = vmatpush.bf16.msra.mxu0 %v4730
        %4828 = vmatpush.bf16.msra.mxu0 %v4729
        %4829 = vmatpush.bf16.msra.mxu0 %v4728
        %4830 = vmatpush.bf16.msra.mxu0 %v4727
        %4831 = vmatpush.bf16.msra.mxu0 %v4726
        %4832 = vmatpush.bf16.msra.mxu0 %v4725
        %4833 = vmatmul.bf16.gmra.mxu0 %v4530
        %v4834 = vpop.f32.mrf.mxu0
        %v4835 = vadd.f32 %v4822, %v4834
        %v4836 = vpop.f32.mrf.mxu0
        %4837 = vdwg.mxu0
        %4838 = vmatpush.bf16.msra.mxu0 %v4740
        %4839 = vmatpush.bf16.msra.mxu0 %v4739
        %4840 = vmatpush.bf16.msra.mxu0 %v4738
        %4841 = vmatpush.bf16.msra.mxu0 %v4737
        %4842 = vmatpush.bf16.msra.mxu0 %v4736
        %4843 = vmatpush.bf16.msra.mxu0 %v4735
        %4844 = vmatpush.bf16.msra.mxu0 %v4734
        %4845 = vmatpush.bf16.msra.mxu0 %v4733
        %4846 = vmatmul.bf16.gmra.mxu0 %v4531
        %v4847 = vpop.f32.mrf.mxu0
        %v4848 = vadd.f32 %v4835, %v4847
        %v4849 = vpop.f32.mrf.mxu0
        %4850 = vdwg.mxu0
        %4851 = vmatpush.bf16.msra.mxu0 %v4748
        %4852 = vmatpush.bf16.msra.mxu0 %v4747
        %4853 = vmatpush.bf16.msra.mxu0 %v4746
        %4854 = vmatpush.bf16.msra.mxu0 %v4745
        %4855 = vmatpush.bf16.msra.mxu0 %v4744
        %4856 = vmatpush.bf16.msra.mxu0 %v4743
        %4857 = vmatpush.bf16.msra.mxu0 %v4742
        %4858 = vmatpush.bf16.msra.mxu0 %v4741
        %4859 = vmatmul.bf16.gmra.mxu0 %v4532
        %v4860 = vpop.f32.mrf.mxu0
        %v4861 = vadd.f32 %v4848, %v4860
        %v4862 = vpop.f32.mrf.mxu0
        %4863 = vdwg.mxu0
        %4864 = vmatpush.bf16.msra.mxu0 0
        %4865 = vmatpush.bf16.msra.mxu0 0
        %4866 = vmatpush.bf16.msra.mxu0 0
        %4867 = vmatpush.bf16.msra.mxu0 0
        %4868 = vmatpush.bf16.msra.mxu0 0
        %4869 = vmatpush.bf16.msra.mxu0 %v4797
        %4870 = vmatpush.bf16.msra.mxu0 %v4750
        %4871 = vmatpush.bf16.msra.mxu0 %v4749
        %4872 = vmatmul.bf16.gmra.mxu0 %v4794
        %v4873 = vpop.f32.mrf.mxu0
        %v4874 = vadd.f32 %v4861, %v4873
        %v4875 = vpop.f32.mrf.mxu0
        %4876 = vdwg.mxu0
        %4878 = vst [vmem:[#allocation1] ss:$9 sm:$0xff] %v2100
        %v4879 = vld [vmem:[#allocation1] sm:$0xff]
        %v4880 = vld [vmem:[#allocation1 + $0x9] sm:$0xff]
        %v4881 = vld [vmem:[#allocation1 + $0x12] sm:$0xff]
        %v4882 = vld [vmem:[#allocation1 + $0x1b] sm:$0xff]
        %v4883 = vld [vmem:[#allocation1 + $0x24] sm:$0xff]
        %v4884 = vld [vmem:[#allocation1 + $0x2d] sm:$0xff]
        %v4975 = vunpack.c.l.b16 %v2452
        %v4976 = vunpack.c.l.b16 %v2453
        %v4977 = vunpack.c.l.b16 %v2454
        %v4978 = vunpack.c.l.b16 %v2455
        %v4979 = vunpack.c.l.b16 %v2456
        %v4980 = vunpack.c.l.b16 %v2457
        %v4981 = vunpack.c.l.b16 %v2458
        %v4982 = vunpack.c.l.b16 %v2459
        %v4983 = vunpack.c.l.b16 %v2460
        %v4984 = vunpack.c.l.b16 %v2461
        %v4985 = vunpack.c.l.b16 %v2462
        %v4986 = vunpack.c.l.b16 %v2463
        %v4987 = vunpack.c.l.b16 %v2464
        %v4988 = vunpack.c.l.b16 %v2465
        %v4989 = vunpack.c.l.b16 %v2466
        %v4990 = vunpack.c.l.b16 %v2467
        %v4991 = vunpack.c.l.b16 %v2468
        %v4992 = vunpack.c.l.b16 %v2469
        %v4993 = vunpack.c.l.b16 %v2470
        %v4994 = vunpack.c.l.b16 %v2471
        %v4995 = vunpack.c.l.b16 %v2472
        %v4996 = vunpack.c.l.b16 %v2473
        %v4997 = vunpack.c.l.b16 %v2474
        %v4998 = vunpack.c.l.b16 %v2475
        %v4999 = vunpack.c.l.b16 %v2476
        %v5000 = vunpack.c.l.b16 %v2477
        %v5001 = vunpack.c.l.b16 %v2478
        %v5002 = vunpack.c.l.b16 %v2479
        %v5003 = vunpack.c.l.b16 %v2480
        %v5004 = vunpack.c.l.b16 %v2481
        %v5005 = vunpack.c.l.b16 %v2482
        %v5006 = vunpack.c.l.b16 %v2483
        %v5007 = vunpack.c.l.b16 %v2484
        %v5008 = vunpack.c.l.b16 %v2485
        %v5009 = vunpack.c.l.b16 %v2486
        %v5010 = vunpack.c.l.b16 %v2487
        %v5011 = vunpack.c.l.b16 %v2488
        %v5012 = vunpack.c.l.b16 %v2489
        %v5013 = vunpack.c.l.b16 %v2490
        %v5014 = vunpack.c.l.b16 %v2491
        %v5015 = vunpack.c.l.b16 %v2492
        %v5016 = vunpack.c.l.b16 %v2493
        %v5017 = vunpack.c.l.b16 %v2494
        %v5018 = vunpack.c.l.b16 %v2495
        %v5019 = vunpack.c.l.b16 %v2496
        %v5020 = vunpack.c.l.b16 %v2497
        %v5021 = vunpack.c.l.b16 %v2498
        %v5022 = vunpack.c.l.b16 %v2499
        %v5023 = vunpack.c.l.b16 %v2500
        %v5024 = vunpack.c.l.b16 %v2501
        %v5025 = vunpack.c.l.b16 %v2502
        %v5026 = vunpack.c.l.b16 %v2503
        %v5027 = vunpack.c.l.b16 %v2504
        %v5028 = vunpack.c.l.b16 %v2505
        %v5029 = vunpack.c.l.b16 %v2506
        %v5030 = vunpack.c.l.b16 %v2507
        %v5031 = vunpack.c.l.b16 %v2508
        %v5032 = vunpack.c.l.b16 %v2509
        %v5033 = vunpack.c.l.b16 %v2510
        %v5034 = vunpack.c.l.b16 %v2511
        %v5035 = vunpack.c.l.b16 %v2512
        %v5036 = vunpack.c.l.b16 %v2513
        %v5037 = vunpack.c.l.b16 %v2514
        %v5038 = vunpack.c.l.b16 %v2515
        %v5039 = vunpack.c.l.b16 %v2516
        %v5040 = vunpack.c.l.b16 %v2517
        %v5041 = vunpack.c.l.b16 %v2518
        %v5042 = vunpack.c.l.b16 %v2519
        %v5043 = vunpack.c.l.b16 %v2520
        %v5044 = vunpack.c.l.b16 %v2521
        %v5045 = vunpack.c.l.b16 %v2522
        %v5046 = vunpack.c.l.b16 %v2523
        %v5047 = vunpack.c.l.b16 %v2524
        %v5048 = vunpack.c.l.b16 %v2525
        %v5049 = vunpack.c.l.b16 %v2526
        %v5050 = vunpack.c.l.b16 %v2527
        %v5051 = vunpack.c.l.b16 %v2528
        %v5052 = vunpack.c.l.b16 %v2529
        %v5053 = vunpack.c.l.b16 %v2530
        %v5054 = vunpack.c.l.b16 %v2531
        %v5055 = vunpack.c.l.b16 %v2532
        %v5056 = vunpack.c.l.b16 %v2533
        %v5057 = vunpack.c.l.b16 %v2534
        %v5058 = vunpack.c.l.b16 %v2535
        %v5059 = vunpack.c.l.b16 %v2536
        %v5060 = vpack.c.b16 %v4976, %v4975
        %v5061 = vpack.c.b16 %v4978, %v4977
        %v5062 = vpack.c.b16 %v4980, %v4979
        %v5063 = vpack.c.b16 %v4982, %v4981
        %v5064 = vpack.c.b16 %v4984, %v4983
        %v5065 = vpack.c.b16 %v4986, %v4985
        %v5066 = vpack.c.b16 %v4988, %v4987
        %v5067 = vpack.c.b16 %v4990, %v4989
        %v5068 = vpack.c.b16 %v4992, %v4991
        %v5069 = vpack.c.b16 %v4994, %v4993
        %v5070 = vpack.c.b16 %v4996, %v4995
        %v5071 = vpack.c.b16 %v4998, %v4997
        %v5072 = vpack.c.b16 %v5000, %v4999
        %v5073 = vpack.c.b16 %v5002, %v5001
        %v5074 = vpack.c.b16 %v5004, %v5003
        %v5075 = vpack.c.b16 %v5006, %v5005
        %v5076 = vpack.c.b16 %v5008, %v5007
        %v5077 = vpack.c.b16 %v5010, %v5009
        %v5078 = vpack.c.b16 %v5012, %v5011
        %v5079 = vpack.c.b16 %v5014, %v5013
        %v5080 = vpack.c.b16 %v5016, %v5015
        %v5081 = vpack.c.b16 %v5018, %v5017
        %v5082 = vpack.c.b16 %v5020, %v5019
        %v5083 = vpack.c.b16 %v5022, %v5021
        %v5084 = vpack.c.b16 %v5024, %v5023
        %v5085 = vpack.c.b16 %v5026, %v5025
        %v5086 = vpack.c.b16 %v5028, %v5027
        %v5087 = vpack.c.b16 %v5030, %v5029
        %v5088 = vpack.c.b16 %v5032, %v5031
        %v5089 = vpack.c.b16 %v5034, %v5033
        %v5090 = vpack.c.b16 %v5036, %v5035
        %v5091 = vpack.c.b16 %v5038, %v5037
        %v5092 = vpack.c.b16 %v5040, %v5039
        %v5093 = vpack.c.b16 %v5042, %v5041
        %v5094 = vpack.c.b16 %v5044, %v5043
        %v5095 = vpack.c.b16 %v5046, %v5045
        %v5096 = vpack.c.b16 %v5048, %v5047
        %v5097 = vpack.c.b16 %v5050, %v5049
        %v5098 = vpack.c.b16 %v5052, %v5051
        %v5099 = vpack.c.b16 %v5054, %v5053
        %v5100 = vpack.c.b16 %v5056, %v5055
        %v5101 = vpack.c.b16 %v5058, %v5057
        %v5102 = vpack.c.b16 %v5059, %v5059
        %v5145 = vsel %vm3740, %v4884, 0
        %v5148 = vsel %vm423, %v5102, 0
        %5150 = vmatpush.bf16.msra.mxu0 %v5067
        %5151 = vmatpush.bf16.msra.mxu0 %v5066
        %5152 = vmatpush.bf16.msra.mxu0 %v5065
        %5153 = vmatpush.bf16.msra.mxu0 %v5064
        %5154 = vmatpush.bf16.msra.mxu0 %v5063
        %5155 = vmatpush.bf16.msra.mxu0 %v5062
        %5156 = vmatpush.bf16.msra.mxu0 %v5061
        %5157 = vmatpush.bf16.msra.mxu0 %v5060
        %5158 = vmatmul.bf16.gmra.mxu0 %v4879
        %v5159 = vpop.f32.mrf.mxu0
        %v5160 = vadd.f32 0.0, %v5159
        %v5161 = vpop.f32.mrf.mxu0
        %5162 = vdwg.mxu0
        %5163 = vmatpush.bf16.msra.mxu0 %v5075
        %5164 = vmatpush.bf16.msra.mxu0 %v5074
        %5165 = vmatpush.bf16.msra.mxu0 %v5073
        %5166 = vmatpush.bf16.msra.mxu0 %v5072
        %5167 = vmatpush.bf16.msra.mxu0 %v5071
        %5168 = vmatpush.bf16.msra.mxu0 %v5070
        %5169 = vmatpush.bf16.msra.mxu0 %v5069
        %5170 = vmatpush.bf16.msra.mxu0 %v5068
        %5171 = vmatmul.bf16.gmra.mxu0 %v4880
        %v5172 = vpop.f32.mrf.mxu0
        %v5173 = vadd.f32 %v5160, %v5172
        %v5174 = vpop.f32.mrf.mxu0
        %5175 = vdwg.mxu0
        %5176 = vmatpush.bf16.msra.mxu0 %v5083
        %5177 = vmatpush.bf16.msra.mxu0 %v5082
        %5178 = vmatpush.bf16.msra.mxu0 %v5081
        %5179 = vmatpush.bf16.msra.mxu0 %v5080
        %5180 = vmatpush.bf16.msra.mxu0 %v5079
        %5181 = vmatpush.bf16.msra.mxu0 %v5078
        %5182 = vmatpush.bf16.msra.mxu0 %v5077
        %5183 = vmatpush.bf16.msra.mxu0 %v5076
        %5184 = vmatmul.bf16.gmra.mxu0 %v4881
        %v5185 = vpop.f32.mrf.mxu0
        %v5186 = vadd.f32 %v5173, %v5185
        %v5187 = vpop.f32.mrf.mxu0
        %5188 = vdwg.mxu0
        %5189 = vmatpush.bf16.msra.mxu0 %v5091
        %5190 = vmatpush.bf16.msra.mxu0 %v5090
        %5191 = vmatpush.bf16.msra.mxu0 %v5089
        %5192 = vmatpush.bf16.msra.mxu0 %v5088
        %5193 = vmatpush.bf16.msra.mxu0 %v5087
        %5194 = vmatpush.bf16.msra.mxu0 %v5086
        %5195 = vmatpush.bf16.msra.mxu0 %v5085
        %5196 = vmatpush.bf16.msra.mxu0 %v5084
        %5197 = vmatmul.bf16.gmra.mxu0 %v4882
        %v5198 = vpop.f32.mrf.mxu0
        %v5199 = vadd.f32 %v5186, %v5198
        %v5200 = vpop.f32.mrf.mxu0
        %5201 = vdwg.mxu0
        %5202 = vmatpush.bf16.msra.mxu0 %v5099
        %5203 = vmatpush.bf16.msra.mxu0 %v5098
        %5204 = vmatpush.bf16.msra.mxu0 %v5097
        %5205 = vmatpush.bf16.msra.mxu0 %v5096
        %5206 = vmatpush.bf16.msra.mxu0 %v5095
        %5207 = vmatpush.bf16.msra.mxu0 %v5094
        %5208 = vmatpush.bf16.msra.mxu0 %v5093
        %5209 = vmatpush.bf16.msra.mxu0 %v5092
        %5210 = vmatmul.bf16.gmra.mxu0 %v4883
        %v5211 = vpop.f32.mrf.mxu0
        %v5212 = vadd.f32 %v5199, %v5211
        %v5213 = vpop.f32.mrf.mxu0
        %5214 = vdwg.mxu0
        %5215 = vmatpush.bf16.msra.mxu0 0
        %5216 = vmatpush.bf16.msra.mxu0 0
        %5217 = vmatpush.bf16.msra.mxu0 0
        %5218 = vmatpush.bf16.msra.mxu0 0
        %5219 = vmatpush.bf16.msra.mxu0 0
        %5220 = vmatpush.bf16.msra.mxu0 %v5148
        %5221 = vmatpush.bf16.msra.mxu0 %v5101
        %5222 = vmatpush.bf16.msra.mxu0 %v5100
        %5223 = vmatmul.bf16.gmra.mxu0 %v5145
        %v5224 = vpop.f32.mrf.mxu0
        %v5225 = vadd.f32 %v5212, %v5224
        %v5226 = vpop.f32.mrf.mxu0
        %5227 = vdwg.mxu0
        %5229 = vst [vmem:[#allocation1] ss:$9 sm:$0xff] %v2101
        %v5230 = vld [vmem:[#allocation1] sm:$0xff]
        %v5231 = vld [vmem:[#allocation1 + $0x9] sm:$0xff]
        %v5232 = vld [vmem:[#allocation1 + $0x12] sm:$0xff]
        %v5233 = vld [vmem:[#allocation1 + $0x1b] sm:$0xff]
        %v5234 = vld [vmem:[#allocation1 + $0x24] sm:$0xff]
        %v5235 = vld [vmem:[#allocation1 + $0x2d] sm:$0xff]
        %v5326 = vunpack.c.l.b16 %v2537
        %v5327 = vunpack.c.l.b16 %v2538
        %v5328 = vunpack.c.l.b16 %v2539
        %v5329 = vunpack.c.l.b16 %v2540
        %v5330 = vunpack.c.l.b16 %v2541
        %v5331 = vunpack.c.l.b16 %v2542
        %v5332 = vunpack.c.l.b16 %v2543
        %v5333 = vunpack.c.l.b16 %v2544
        %v5334 = vunpack.c.l.b16 %v2545
        %v5335 = vunpack.c.l.b16 %v2546
        %v5336 = vunpack.c.l.b16 %v2547
        %v5337 = vunpack.c.l.b16 %v2548
        %v5338 = vunpack.c.l.b16 %v2549
        %v5339 = vunpack.c.l.b16 %v2550
        %v5340 = vunpack.c.l.b16 %v2551
        %v5341 = vunpack.c.l.b16 %v2552
        %v5342 = vunpack.c.l.b16 %v2553
        %v5343 = vunpack.c.l.b16 %v2554
        %v5344 = vunpack.c.l.b16 %v2555
        %v5345 = vunpack.c.l.b16 %v2556
        %v5346 = vunpack.c.l.b16 %v2557
        %v5347 = vunpack.c.l.b16 %v2558
        %v5348 = vunpack.c.l.b16 %v2559
        %v5349 = vunpack.c.l.b16 %v2560
        %v5350 = vunpack.c.l.b16 %v2561
        %v5351 = vunpack.c.l.b16 %v2562
        %v5352 = vunpack.c.l.b16 %v2563
        %v5353 = vunpack.c.l.b16 %v2564
        %v5354 = vunpack.c.l.b16 %v2565
        %v5355 = vunpack.c.l.b16 %v2566
        %v5356 = vunpack.c.l.b16 %v2567
        %v5357 = vunpack.c.l.b16 %v2568
        %v5358 = vunpack.c.l.b16 %v2569
        %v5359 = vunpack.c.l.b16 %v2570
        %v5360 = vunpack.c.l.b16 %v2571
        %v5361 = vunpack.c.l.b16 %v2572
        %v5362 = vunpack.c.l.b16 %v2573
        %v5363 = vunpack.c.l.b16 %v2574
        %v5364 = vunpack.c.l.b16 %v2575
        %v5365 = vunpack.c.l.b16 %v2576
        %v5366 = vunpack.c.l.b16 %v2577
        %v5367 = vunpack.c.l.b16 %v2578
        %v5368 = vunpack.c.l.b16 %v2579
        %v5369 = vunpack.c.l.b16 %v2580
        %v5370 = vunpack.c.l.b16 %v2581
        %v5371 = vunpack.c.l.b16 %v2582
        %v5372 = vunpack.c.l.b16 %v2583
        %v5373 = vunpack.c.l.b16 %v2584
        %v5374 = vunpack.c.l.b16 %v2585
        %v5375 = vunpack.c.l.b16 %v2586
        %v5376 = vunpack.c.l.b16 %v2587
        %v5377 = vunpack.c.l.b16 %v2588
        %v5378 = vunpack.c.l.b16 %v2589
        %v5379 = vunpack.c.l.b16 %v2590
        %v5380 = vunpack.c.l.b16 %v2591
        %v5381 = vunpack.c.l.b16 %v2592
        %v5382 = vunpack.c.l.b16 %v2593
        %v5383 = vunpack.c.l.b16 %v2594
        %v5384 = vunpack.c.l.b16 %v2595
        %v5385 = vunpack.c.l.b16 %v2596
        %v5386 = vunpack.c.l.b16 %v2597
        %v5387 = vunpack.c.l.b16 %v2598
        %v5388 = vunpack.c.l.b16 %v2599
        %v5389 = vunpack.c.l.b16 %v2600
        %v5390 = vunpack.c.l.b16 %v2601
        %v5391 = vunpack.c.l.b16 %v2602
        %v5392 = vunpack.c.l.b16 %v2603
        %v5393 = vunpack.c.l.b16 %v2604
        %v5394 = vunpack.c.l.b16 %v2605
        %v5395 = vunpack.c.l.b16 %v2606
        %v5396 = vunpack.c.l.b16 %v2607
        %v5397 = vunpack.c.l.b16 %v2608
        %v5398 = vunpack.c.l.b16 %v2609
        %v5399 = vunpack.c.l.b16 %v2610
        %v5400 = vunpack.c.l.b16 %v2611
        %v5401 = vunpack.c.l.b16 %v2612
        %v5402 = vunpack.c.l.b16 %v2613
        %v5403 = vunpack.c.l.b16 %v2614
        %v5404 = vunpack.c.l.b16 %v2615
        %v5405 = vunpack.c.l.b16 %v2616
        %v5406 = vunpack.c.l.b16 %v2617
        %v5407 = vunpack.c.l.b16 %v2618
        %v5408 = vunpack.c.l.b16 %v2619
        %v5409 = vunpack.c.l.b16 %v2620
        %v5410 = vunpack.c.l.b16 %v2621
        %v5411 = vpack.c.b16 %v5327, %v5326
        %v5412 = vpack.c.b16 %v5329, %v5328
        %v5413 = vpack.c.b16 %v5331, %v5330
        %v5414 = vpack.c.b16 %v5333, %v5332
        %v5415 = vpack.c.b16 %v5335, %v5334
        %v5416 = vpack.c.b16 %v5337, %v5336
        %v5417 = vpack.c.b16 %v5339, %v5338
        %v5418 = vpack.c.b16 %v5341, %v5340
        %v5419 = vpack.c.b16 %v5343, %v5342
        %v5420 = vpack.c.b16 %v5345, %v5344
        %v5421 = vpack.c.b16 %v5347, %v5346
        %v5422 = vpack.c.b16 %v5349, %v5348
        %v5423 = vpack.c.b16 %v5351, %v5350
        %v5424 = vpack.c.b16 %v5353, %v5352
        %v5425 = vpack.c.b16 %v5355, %v5354
        %v5426 = vpack.c.b16 %v5357, %v5356
        %v5427 = vpack.c.b16 %v5359, %v5358
        %v5428 = vpack.c.b16 %v5361, %v5360
        %v5429 = vpack.c.b16 %v5363, %v5362
        %v5430 = vpack.c.b16 %v5365, %v5364
        %v5431 = vpack.c.b16 %v5367, %v5366
        %v5432 = vpack.c.b16 %v5369, %v5368
        %v5433 = vpack.c.b16 %v5371, %v5370
        %v5434 = vpack.c.b16 %v5373, %v5372
        %v5435 = vpack.c.b16 %v5375, %v5374
        %v5436 = vpack.c.b16 %v5377, %v5376
        %v5437 = vpack.c.b16 %v5379, %v5378
        %v5438 = vpack.c.b16 %v5381, %v5380
        %v5439 = vpack.c.b16 %v5383, %v5382
        %v5440 = vpack.c.b16 %v5385, %v5384
        %v5441 = vpack.c.b16 %v5387, %v5386
        %v5442 = vpack.c.b16 %v5389, %v5388
        %v5443 = vpack.c.b16 %v5391, %v5390
        %v5444 = vpack.c.b16 %v5393, %v5392
        %v5445 = vpack.c.b16 %v5395, %v5394
        %v5446 = vpack.c.b16 %v5397, %v5396
        %v5447 = vpack.c.b16 %v5399, %v5398
        %v5448 = vpack.c.b16 %v5401, %v5400
        %v5449 = vpack.c.b16 %v5403, %v5402
        %v5450 = vpack.c.b16 %v5405, %v5404
        %v5451 = vpack.c.b16 %v5407, %v5406
        %v5452 = vpack.c.b16 %v5409, %v5408
        %v5453 = vpack.c.b16 %v5410, %v5410
        %v5496 = vsel %vm3740, %v5235, 0
        %v5499 = vsel %vm423, %v5453, 0
        %5501 = vmatpush.bf16.msra.mxu0 %v5418
        %5502 = vmatpush.bf16.msra.mxu0 %v5417
        %5503 = vmatpush.bf16.msra.mxu0 %v5416
        %5504 = vmatpush.bf16.msra.mxu0 %v5415
        %5505 = vmatpush.bf16.msra.mxu0 %v5414
        %5506 = vmatpush.bf16.msra.mxu0 %v5413
        %5507 = vmatpush.bf16.msra.mxu0 %v5412
        %5508 = vmatpush.bf16.msra.mxu0 %v5411
        %5509 = vmatmul.bf16.gmra.mxu0 %v5230
        %v5510 = vpop.f32.mrf.mxu0
        %v5511 = vadd.f32 0.0, %v5510
        %v5512 = vpop.f32.mrf.mxu0
        %5513 = vdwg.mxu0
        %5514 = vmatpush.bf16.msra.mxu0 %v5426
        %5515 = vmatpush.bf16.msra.mxu0 %v5425
        %5516 = vmatpush.bf16.msra.mxu0 %v5424
        %5517 = vmatpush.bf16.msra.mxu0 %v5423
        %5518 = vmatpush.bf16.msra.mxu0 %v5422
        %5519 = vmatpush.bf16.msra.mxu0 %v5421
        %5520 = vmatpush.bf16.msra.mxu0 %v5420
        %5521 = vmatpush.bf16.msra.mxu0 %v5419
        %5522 = vmatmul.bf16.gmra.mxu0 %v5231
        %v5523 = vpop.f32.mrf.mxu0
        %v5524 = vadd.f32 %v5511, %v5523
        %v5525 = vpop.f32.mrf.mxu0
        %5526 = vdwg.mxu0
        %5527 = vmatpush.bf16.msra.mxu0 %v5434
        %5528 = vmatpush.bf16.msra.mxu0 %v5433
        %5529 = vmatpush.bf16.msra.mxu0 %v5432
        %5530 = vmatpush.bf16.msra.mxu0 %v5431
        %5531 = vmatpush.bf16.msra.mxu0 %v5430
        %5532 = vmatpush.bf16.msra.mxu0 %v5429
        %5533 = vmatpush.bf16.msra.mxu0 %v5428
        %5534 = vmatpush.bf16.msra.mxu0 %v5427
        %5535 = vmatmul.bf16.gmra.mxu0 %v5232
        %v5536 = vpop.f32.mrf.mxu0
        %v5537 = vadd.f32 %v5524, %v5536
        %v5538 = vpop.f32.mrf.mxu0
        %5539 = vdwg.mxu0
        %5540 = vmatpush.bf16.msra.mxu0 %v5442
        %5541 = vmatpush.bf16.msra.mxu0 %v5441
        %5542 = vmatpush.bf16.msra.mxu0 %v5440
        %5543 = vmatpush.bf16.msra.mxu0 %v5439
        %5544 = vmatpush.bf16.msra.mxu0 %v5438
        %5545 = vmatpush.bf16.msra.mxu0 %v5437
        %5546 = vmatpush.bf16.msra.mxu0 %v5436
        %5547 = vmatpush.bf16.msra.mxu0 %v5435
        %5548 = vmatmul.bf16.gmra.mxu0 %v5233
        %v5549 = vpop.f32.mrf.mxu0
        %v5550 = vadd.f32 %v5537, %v5549
        %v5551 = vpop.f32.mrf.mxu0
        %5552 = vdwg.mxu0
        %5553 = vmatpush.bf16.msra.mxu0 %v5450
        %5554 = vmatpush.bf16.msra.mxu0 %v5449
        %5555 = vmatpush.bf16.msra.mxu0 %v5448
        %5556 = vmatpush.bf16.msra.mxu0 %v5447
        %5557 = vmatpush.bf16.msra.mxu0 %v5446
        %5558 = vmatpush.bf16.msra.mxu0 %v5445
        %5559 = vmatpush.bf16.msra.mxu0 %v5444
        %5560 = vmatpush.bf16.msra.mxu0 %v5443
        %5561 = vmatmul.bf16.gmra.mxu0 %v5234
        %v5562 = vpop.f32.mrf.mxu0
        %v5563 = vadd.f32 %v5550, %v5562
        %v5564 = vpop.f32.mrf.mxu0
        %5565 = vdwg.mxu0
        %5566 = vmatpush.bf16.msra.mxu0 0
        %5567 = vmatpush.bf16.msra.mxu0 0
        %5568 = vmatpush.bf16.msra.mxu0 0
        %5569 = vmatpush.bf16.msra.mxu0 0
        %5570 = vmatpush.bf16.msra.mxu0 0
        %5571 = vmatpush.bf16.msra.mxu0 %v5499
        %5572 = vmatpush.bf16.msra.mxu0 %v5452
        %5573 = vmatpush.bf16.msra.mxu0 %v5451
        %5574 = vmatmul.bf16.gmra.mxu0 %v5496
        %v5575 = vpop.f32.mrf.mxu0
        %v5576 = vadd.f32 %v5563, %v5575
        %v5577 = vpop.f32.mrf.mxu0
        %5578 = vdwg.mxu0
        %5580 = vst [vmem:[#allocation1] ss:$9 sm:$0xff] %v2102
        %v5581 = vld [vmem:[#allocation1] sm:$0xff]
        %v5582 = vld [vmem:[#allocation1 + $0x9] sm:$0xff]
        %v5583 = vld [vmem:[#allocation1 + $0x12] sm:$0xff]
        %v5584 = vld [vmem:[#allocation1 + $0x1b] sm:$0xff]
        %v5585 = vld [vmem:[#allocation1 + $0x24] sm:$0xff]
        %v5586 = vld [vmem:[#allocation1 + $0x2d] sm:$0xff]
        %v5677 = vunpack.c.l.b16 %v2622
        %v5678 = vunpack.c.l.b16 %v2623
        %v5679 = vunpack.c.l.b16 %v2624
        %v5680 = vunpack.c.l.b16 %v2625
        %v5681 = vunpack.c.l.b16 %v2626
        %v5682 = vunpack.c.l.b16 %v2627
        %v5683 = vunpack.c.l.b16 %v2628
        %v5684 = vunpack.c.l.b16 %v2629
        %v5685 = vunpack.c.l.b16 %v2630
        %v5686 = vunpack.c.l.b16 %v2631
        %v5687 = vunpack.c.l.b16 %v2632
        %v5688 = vunpack.c.l.b16 %v2633
        %v5689 = vunpack.c.l.b16 %v2634
        %v5690 = vunpack.c.l.b16 %v2635
        %v5691 = vunpack.c.l.b16 %v2636
        %v5692 = vunpack.c.l.b16 %v2637
        %v5693 = vunpack.c.l.b16 %v2638
        %v5694 = vunpack.c.l.b16 %v2639
        %v5695 = vunpack.c.l.b16 %v2640
        %v5696 = vunpack.c.l.b16 %v2641
        %v5697 = vunpack.c.l.b16 %v2642
        %v5698 = vunpack.c.l.b16 %v2643
        %v5699 = vunpack.c.l.b16 %v2644
        %v5700 = vunpack.c.l.b16 %v2645
        %v5701 = vunpack.c.l.b16 %v2646
        %v5702 = vunpack.c.l.b16 %v2647
        %v5703 = vunpack.c.l.b16 %v2648
        %v5704 = vunpack.c.l.b16 %v2649
        %v5705 = vunpack.c.l.b16 %v2650
        %v5706 = vunpack.c.l.b16 %v2651
        %v5707 = vunpack.c.l.b16 %v2652
        %v5708 = vunpack.c.l.b16 %v2653
        %v5709 = vunpack.c.l.b16 %v2654
        %v5710 = vunpack.c.l.b16 %v2655
        %v5711 = vunpack.c.l.b16 %v2656
        %v5712 = vunpack.c.l.b16 %v2657
        %v5713 = vunpack.c.l.b16 %v2658
        %v5714 = vunpack.c.l.b16 %v2659
        %v5715 = vunpack.c.l.b16 %v2660
        %v5716 = vunpack.c.l.b16 %v2661
        %v5717 = vunpack.c.l.b16 %v2662
        %v5718 = vunpack.c.l.b16 %v2663
        %v5719 = vunpack.c.l.b16 %v2664
        %v5720 = vunpack.c.l.b16 %v2665
        %v5721 = vunpack.c.l.b16 %v2666
        %v5722 = vunpack.c.l.b16 %v2667
        %v5723 = vunpack.c.l.b16 %v2668
        %v5724 = vunpack.c.l.b16 %v2669
        %v5725 = vunpack.c.l.b16 %v2670
        %v5726 = vunpack.c.l.b16 %v2671
        %v5727 = vunpack.c.l.b16 %v2672
        %v5728 = vunpack.c.l.b16 %v2673
        %v5729 = vunpack.c.l.b16 %v2674
        %v5730 = vunpack.c.l.b16 %v2675
        %v5731 = vunpack.c.l.b16 %v2676
        %v5732 = vunpack.c.l.b16 %v2677
        %v5733 = vunpack.c.l.b16 %v2678
        %v5734 = vunpack.c.l.b16 %v2679
        %v5735 = vunpack.c.l.b16 %v2680
        %v5736 = vunpack.c.l.b16 %v2681
        %v5737 = vunpack.c.l.b16 %v2682
        %v5738 = vunpack.c.l.b16 %v2683
        %v5739 = vunpack.c.l.b16 %v2684
        %v5740 = vunpack.c.l.b16 %v2685
        %v5741 = vunpack.c.l.b16 %v2686
        %v5742 = vunpack.c.l.b16 %v2687
        %v5743 = vunpack.c.l.b16 %v2688
        %v5744 = vunpack.c.l.b16 %v2689
        %v5745 = vunpack.c.l.b16 %v2690
        %v5746 = vunpack.c.l.b16 %v2691
        %v5747 = vunpack.c.l.b16 %v2692
        %v5748 = vunpack.c.l.b16 %v2693
        %v5749 = vunpack.c.l.b16 %v2694
        %v5750 = vunpack.c.l.b16 %v2695
        %v5751 = vunpack.c.l.b16 %v2696
        %v5752 = vunpack.c.l.b16 %v2697
        %v5753 = vunpack.c.l.b16 %v2698
        %v5754 = vunpack.c.l.b16 %v2699
        %v5755 = vunpack.c.l.b16 %v2700
        %v5756 = vunpack.c.l.b16 %v2701
        %v5757 = vunpack.c.l.b16 %v2702
        %v5758 = vunpack.c.l.b16 %v2703
        %v5759 = vunpack.c.l.b16 %v2704
        %v5760 = vunpack.c.l.b16 %v2705
        %v5761 = vunpack.c.l.b16 %v2706
        %v5762 = vpack.c.b16 %v5678, %v5677
        %v5763 = vpack.c.b16 %v5680, %v5679
        %v5764 = vpack.c.b16 %v5682, %v5681
        %v5765 = vpack.c.b16 %v5684, %v5683
        %v5766 = vpack.c.b16 %v5686, %v5685
        %v5767 = vpack.c.b16 %v5688, %v5687
        %v5768 = vpack.c.b16 %v5690, %v5689
        %v5769 = vpack.c.b16 %v5692, %v5691
        %v5770 = vpack.c.b16 %v5694, %v5693
        %v5771 = vpack.c.b16 %v5696, %v5695
        %v5772 = vpack.c.b16 %v5698, %v5697
        %v5773 = vpack.c.b16 %v5700, %v5699
        %v5774 = vpack.c.b16 %v5702, %v5701
        %v5775 = vpack.c.b16 %v5704, %v5703
        %v5776 = vpack.c.b16 %v5706, %v5705
        %v5777 = vpack.c.b16 %v5708, %v5707
        %v5778 = vpack.c.b16 %v5710, %v5709
        %v5779 = vpack.c.b16 %v5712, %v5711
        %v5780 = vpack.c.b16 %v5714, %v5713
        %v5781 = vpack.c.b16 %v5716, %v5715
        %v5782 = vpack.c.b16 %v5718, %v5717
        %v5783 = vpack.c.b16 %v5720, %v5719
        %v5784 = vpack.c.b16 %v5722, %v5721
        %v5785 = vpack.c.b16 %v5724, %v5723
        %v5786 = vpack.c.b16 %v5726, %v5725
        %v5787 = vpack.c.b16 %v5728, %v5727
        %v5788 = vpack.c.b16 %v5730, %v5729
        %v5789 = vpack.c.b16 %v5732, %v5731
        %v5790 = vpack.c.b16 %v5734, %v5733
        %v5791 = vpack.c.b16 %v5736, %v5735
        %v5792 = vpack.c.b16 %v5738, %v5737
        %v5793 = vpack.c.b16 %v5740, %v5739
        %v5794 = vpack.c.b16 %v5742, %v5741
        %v5795 = vpack.c.b16 %v5744, %v5743
        %v5796 = vpack.c.b16 %v5746, %v5745
        %v5797 = vpack.c.b16 %v5748, %v5747
        %v5798 = vpack.c.b16 %v5750, %v5749
        %v5799 = vpack.c.b16 %v5752, %v5751
        %v5800 = vpack.c.b16 %v5754, %v5753
        %v5801 = vpack.c.b16 %v5756, %v5755
        %v5802 = vpack.c.b16 %v5758, %v5757
        %v5803 = vpack.c.b16 %v5760, %v5759
        %v5804 = vpack.c.b16 %v5761, %v5761
        %v5847 = vsel %vm3740, %v5586, 0
        %v5850 = vsel %vm423, %v5804, 0
        %5852 = vmatpush.bf16.msra.mxu0 %v5769
        %5853 = vmatpush.bf16.msra.mxu0 %v5768
        %5854 = vmatpush.bf16.msra.mxu0 %v5767
        %5855 = vmatpush.bf16.msra.mxu0 %v5766
        %5856 = vmatpush.bf16.msra.mxu0 %v5765
        %5857 = vmatpush.bf16.msra.mxu0 %v5764
        %5858 = vmatpush.bf16.msra.mxu0 %v5763
        %5859 = vmatpush.bf16.msra.mxu0 %v5762
        %5860 = vmatmul.bf16.gmra.mxu0 %v5581
        %v5861 = vpop.f32.mrf.mxu0
        %v5862 = vadd.f32 0.0, %v5861
        %v5863 = vpop.f32.mrf.mxu0
        %5864 = vdwg.mxu0
        %5865 = vmatpush.bf16.msra.mxu0 %v5777
        %5866 = vmatpush.bf16.msra.mxu0 %v5776
        %5867 = vmatpush.bf16.msra.mxu0 %v5775
        %5868 = vmatpush.bf16.msra.mxu0 %v5774
        %5869 = vmatpush.bf16.msra.mxu0 %v5773
        %5870 = vmatpush.bf16.msra.mxu0 %v5772
        %5871 = vmatpush.bf16.msra.mxu0 %v5771
        %5872 = vmatpush.bf16.msra.mxu0 %v5770
        %5873 = vmatmul.bf16.gmra.mxu0 %v5582
        %v5874 = vpop.f32.mrf.mxu0
        %v5875 = vadd.f32 %v5862, %v5874
        %v5876 = vpop.f32.mrf.mxu0
        %5877 = vdwg.mxu0
        %5878 = vmatpush.bf16.msra.mxu0 %v5785
        %5879 = vmatpush.bf16.msra.mxu0 %v5784
        %5880 = vmatpush.bf16.msra.mxu0 %v5783
        %5881 = vmatpush.bf16.msra.mxu0 %v5782
        %5882 = vmatpush.bf16.msra.mxu0 %v5781
        %5883 = vmatpush.bf16.msra.mxu0 %v5780
        %5884 = vmatpush.bf16.msra.mxu0 %v5779
        %5885 = vmatpush.bf16.msra.mxu0 %v5778
        %5886 = vmatmul.bf16.gmra.mxu0 %v5583
        %v5887 = vpop.f32.mrf.mxu0
        %v5888 = vadd.f32 %v5875, %v5887
        %v5889 = vpop.f32.mrf.mxu0
        %5890 = vdwg.mxu0
        %5891 = vmatpush.bf16.msra.mxu0 %v5793
        %5892 = vmatpush.bf16.msra.mxu0 %v5792
        %5893 = vmatpush.bf16.msra.mxu0 %v5791
        %5894 = vmatpush.bf16.msra.mxu0 %v5790
        %5895 = vmatpush.bf16.msra.mxu0 %v5789
        %5896 = vmatpush.bf16.msra.mxu0 %v5788
        %5897 = vmatpush.bf16.msra.mxu0 %v5787
        %5898 = vmatpush.bf16.msra.mxu0 %v5786
        %5899 = vmatmul.bf16.gmra.mxu0 %v5584
        %v5900 = vpop.f32.mrf.mxu0
        %v5901 = vadd.f32 %v5888, %v5900
        %v5902 = vpop.f32.mrf.mxu0
        %5903 = vdwg.mxu0
        %5904 = vmatpush.bf16.msra.mxu0 %v5801
        %5905 = vmatpush.bf16.msra.mxu0 %v5800
        %5906 = vmatpush.bf16.msra.mxu0 %v5799
        %5907 = vmatpush.bf16.msra.mxu0 %v5798
        %5908 = vmatpush.bf16.msra.mxu0 %v5797
        %5909 = vmatpush.bf16.msra.mxu0 %v5796
        %5910 = vmatpush.bf16.msra.mxu0 %v5795
        %5911 = vmatpush.bf16.msra.mxu0 %v5794
        %5912 = vmatmul.bf16.gmra.mxu0 %v5585
        %v5913 = vpop.f32.mrf.mxu0
        %v5914 = vadd.f32 %v5901, %v5913
        %v5915 = vpop.f32.mrf.mxu0
        %5916 = vdwg.mxu0
        %5917 = vmatpush.bf16.msra.mxu0 0
        %5918 = vmatpush.bf16.msra.mxu0 0
        %5919 = vmatpush.bf16.msra.mxu0 0
        %5920 = vmatpush.bf16.msra.mxu0 0
        %5921 = vmatpush.bf16.msra.mxu0 0
        %5922 = vmatpush.bf16.msra.mxu0 %v5850
        %5923 = vmatpush.bf16.msra.mxu0 %v5803
        %5924 = vmatpush.bf16.msra.mxu0 %v5802
        %5925 = vmatmul.bf16.gmra.mxu0 %v5847
        %v5926 = vpop.f32.mrf.mxu0
        %v5927 = vadd.f32 %v5914, %v5926
        %v5928 = vpop.f32.mrf.mxu0
        %5929 = vdwg.mxu0
        %5931 = vst [vmem:[#allocation1] ss:$9 sm:$0xff] %v2103
        %v5932 = vld [vmem:[#allocation1] sm:$0xff]
        %v5933 = vld [vmem:[#allocation1 + $0x9] sm:$0xff]
        %v5934 = vld [vmem:[#allocation1 + $0x12] sm:$0xff]
        %v5935 = vld [vmem:[#allocation1 + $0x1b] sm:$0xff]
        %v5936 = vld [vmem:[#allocation1 + $0x24] sm:$0xff]
        %v5937 = vld [vmem:[#allocation1 + $0x2d] sm:$0xff]
        %v6028 = vunpack.c.l.b16 %v2707
        %v6029 = vunpack.c.l.b16 %v2708
        %v6030 = vunpack.c.l.b16 %v2709
        %v6031 = vunpack.c.l.b16 %v2710
        %v6032 = vunpack.c.l.b16 %v2711
        %v6033 = vunpack.c.l.b16 %v2712
        %v6034 = vunpack.c.l.b16 %v2713
        %v6035 = vunpack.c.l.b16 %v2714
        %v6036 = vunpack.c.l.b16 %v2715
        %v6037 = vunpack.c.l.b16 %v2716
        %v6038 = vunpack.c.l.b16 %v2717
        %v6039 = vunpack.c.l.b16 %v2718
        %v6040 = vunpack.c.l.b16 %v2719
        %v6041 = vunpack.c.l.b16 %v2720
        %v6042 = vunpack.c.l.b16 %v2721
        %v6043 = vunpack.c.l.b16 %v2722
        %v6044 = vunpack.c.l.b16 %v2723
        %v6045 = vunpack.c.l.b16 %v2724
        %v6046 = vunpack.c.l.b16 %v2725
        %v6047 = vunpack.c.l.b16 %v2726
        %v6048 = vunpack.c.l.b16 %v2727
        %v6049 = vunpack.c.l.b16 %v2728
        %v6050 = vunpack.c.l.b16 %v2729
        %v6051 = vunpack.c.l.b16 %v2730
        %v6052 = vunpack.c.l.b16 %v2731
        %v6053 = vunpack.c.l.b16 %v2732
        %v6054 = vunpack.c.l.b16 %v2733
        %v6055 = vunpack.c.l.b16 %v2734
        %v6056 = vunpack.c.l.b16 %v2735
        %v6057 = vunpack.c.l.b16 %v2736
        %v6058 = vunpack.c.l.b16 %v2737
        %v6059 = vunpack.c.l.b16 %v2738
        %v6060 = vunpack.c.l.b16 %v2739
        %v6061 = vunpack.c.l.b16 %v2740
        %v6062 = vunpack.c.l.b16 %v2741
        %v6063 = vunpack.c.l.b16 %v2742
        %v6064 = vunpack.c.l.b16 %v2743
        %v6065 = vunpack.c.l.b16 %v2744
        %v6066 = vunpack.c.l.b16 %v2745
        %v6067 = vunpack.c.l.b16 %v2746
        %v6068 = vunpack.c.l.b16 %v2747
        %v6069 = vunpack.c.l.b16 %v2748
        %v6070 = vunpack.c.l.b16 %v2749
        %v6071 = vunpack.c.l.b16 %v2750
        %v6072 = vunpack.c.l.b16 %v2751
        %v6073 = vunpack.c.l.b16 %v2752
        %v6074 = vunpack.c.l.b16 %v2753
        %v6075 = vunpack.c.l.b16 %v2754
        %v6076 = vunpack.c.l.b16 %v2755
        %v6077 = vunpack.c.l.b16 %v2756
        %v6078 = vunpack.c.l.b16 %v2757
        %v6079 = vunpack.c.l.b16 %v2758
        %v6080 = vunpack.c.l.b16 %v2759
        %v6081 = vunpack.c.l.b16 %v2760
        %v6082 = vunpack.c.l.b16 %v2761
        %v6083 = vunpack.c.l.b16 %v2762
        %v6084 = vunpack.c.l.b16 %v2763
        %v6085 = vunpack.c.l.b16 %v2764
        %v6086 = vunpack.c.l.b16 %v2765
        %v6087 = vunpack.c.l.b16 %v2766
        %v6088 = vunpack.c.l.b16 %v2767
        %v6089 = vunpack.c.l.b16 %v2768
        %v6090 = vunpack.c.l.b16 %v2769
        %v6091 = vunpack.c.l.b16 %v2770
        %v6092 = vunpack.c.l.b16 %v2771
        %v6093 = vunpack.c.l.b16 %v2772
        %v6094 = vunpack.c.l.b16 %v2773
        %v6095 = vunpack.c.l.b16 %v2774
        %v6096 = vunpack.c.l.b16 %v2775
        %v6097 = vunpack.c.l.b16 %v2776
        %v6098 = vunpack.c.l.b16 %v2777
        %v6099 = vunpack.c.l.b16 %v2778
        %v6100 = vunpack.c.l.b16 %v2779
        %v6101 = vunpack.c.l.b16 %v2780
        %v6102 = vunpack.c.l.b16 %v2781
        %v6103 = vunpack.c.l.b16 %v2782
        %v6104 = vunpack.c.l.b16 %v2783
        %v6105 = vunpack.c.l.b16 %v2784
        %v6106 = vunpack.c.l.b16 %v2785
        %v6107 = vunpack.c.l.b16 %v2786
        %v6108 = vunpack.c.l.b16 %v2787
        %v6109 = vunpack.c.l.b16 %v2788
        %v6110 = vunpack.c.l.b16 %v2789
        %v6111 = vunpack.c.l.b16 %v2790
        %v6112 = vunpack.c.l.b16 %v2791
        %v6113 = vpack.c.b16 %v6029, %v6028
        %v6114 = vpack.c.b16 %v6031, %v6030
        %v6115 = vpack.c.b16 %v6033, %v6032
        %v6116 = vpack.c.b16 %v6035, %v6034
        %v6117 = vpack.c.b16 %v6037, %v6036
        %v6118 = vpack.c.b16 %v6039, %v6038
        %v6119 = vpack.c.b16 %v6041, %v6040
        %v6120 = vpack.c.b16 %v6043, %v6042
        %v6121 = vpack.c.b16 %v6045, %v6044
        %v6122 = vpack.c.b16 %v6047, %v6046
        %v6123 = vpack.c.b16 %v6049, %v6048
        %v6124 = vpack.c.b16 %v6051, %v6050
        %v6125 = vpack.c.b16 %v6053, %v6052
        %v6126 = vpack.c.b16 %v6055, %v6054
        %v6127 = vpack.c.b16 %v6057, %v6056
        %v6128 = vpack.c.b16 %v6059, %v6058
        %v6129 = vpack.c.b16 %v6061, %v6060
        %v6130 = vpack.c.b16 %v6063, %v6062
        %v6131 = vpack.c.b16 %v6065, %v6064
        %v6132 = vpack.c.b16 %v6067, %v6066
        %v6133 = vpack.c.b16 %v6069, %v6068
        %v6134 = vpack.c.b16 %v6071, %v6070
        %v6135 = vpack.c.b16 %v6073, %v6072
        %v6136 = vpack.c.b16 %v6075, %v6074
        %v6137 = vpack.c.b16 %v6077, %v6076
        %v6138 = vpack.c.b16 %v6079, %v6078
        %v6139 = vpack.c.b16 %v6081, %v6080
        %v6140 = vpack.c.b16 %v6083, %v6082
        %v6141 = vpack.c.b16 %v6085, %v6084
        %v6142 = vpack.c.b16 %v6087, %v6086
        %v6143 = vpack.c.b16 %v6089, %v6088
        %v6144 = vpack.c.b16 %v6091, %v6090
        %v6145 = vpack.c.b16 %v6093, %v6092
        %v6146 = vpack.c.b16 %v6095, %v6094
        %v6147 = vpack.c.b16 %v6097, %v6096
        %v6148 = vpack.c.b16 %v6099, %v6098
        %v6149 = vpack.c.b16 %v6101, %v6100
        %v6150 = vpack.c.b16 %v6103, %v6102
        %v6151 = vpack.c.b16 %v6105, %v6104
        %v6152 = vpack.c.b16 %v6107, %v6106
        %v6153 = vpack.c.b16 %v6109, %v6108
        %v6154 = vpack.c.b16 %v6111, %v6110
        %v6155 = vpack.c.b16 %v6112, %v6112
        %v6198 = vsel %vm3740, %v5937, 0
        %v6201 = vsel %vm423, %v6155, 0
        %6203 = vmatpush.bf16.msra.mxu0 %v6120
        %6204 = vmatpush.bf16.msra.mxu0 %v6119
        %6205 = vmatpush.bf16.msra.mxu0 %v6118
        %6206 = vmatpush.bf16.msra.mxu0 %v6117
        %6207 = vmatpush.bf16.msra.mxu0 %v6116
        %6208 = vmatpush.bf16.msra.mxu0 %v6115
        %6209 = vmatpush.bf16.msra.mxu0 %v6114
        %6210 = vmatpush.bf16.msra.mxu0 %v6113
        %6211 = vmatmul.bf16.gmra.mxu0 %v5932
        %v6212 = vpop.f32.mrf.mxu0
        %v6213 = vadd.f32 0.0, %v6212
        %v6214 = vpop.f32.mrf.mxu0
        %6215 = vdwg.mxu0
        %6216 = vmatpush.bf16.msra.mxu0 %v6128
        %6217 = vmatpush.bf16.msra.mxu0 %v6127
        %6218 = vmatpush.bf16.msra.mxu0 %v6126
        %6219 = vmatpush.bf16.msra.mxu0 %v6125
        %6220 = vmatpush.bf16.msra.mxu0 %v6124
        %6221 = vmatpush.bf16.msra.mxu0 %v6123
        %6222 = vmatpush.bf16.msra.mxu0 %v6122
        %6223 = vmatpush.bf16.msra.mxu0 %v6121
        %6224 = vmatmul.bf16.gmra.mxu0 %v5933
        %v6225 = vpop.f32.mrf.mxu0
        %v6226 = vadd.f32 %v6213, %v6225
        %v6227 = vpop.f32.mrf.mxu0
        %6228 = vdwg.mxu0
        %6229 = vmatpush.bf16.msra.mxu0 %v6136
        %6230 = vmatpush.bf16.msra.mxu0 %v6135
        %6231 = vmatpush.bf16.msra.mxu0 %v6134
        %6232 = vmatpush.bf16.msra.mxu0 %v6133
        %6233 = vmatpush.bf16.msra.mxu0 %v6132
        %6234 = vmatpush.bf16.msra.mxu0 %v6131
        %6235 = vmatpush.bf16.msra.mxu0 %v6130
        %6236 = vmatpush.bf16.msra.mxu0 %v6129
        %6237 = vmatmul.bf16.gmra.mxu0 %v5934
        %v6238 = vpop.f32.mrf.mxu0
        %v6239 = vadd.f32 %v6226, %v6238
        %v6240 = vpop.f32.mrf.mxu0
        %6241 = vdwg.mxu0
        %6242 = vmatpush.bf16.msra.mxu0 %v6144
        %6243 = vmatpush.bf16.msra.mxu0 %v6143
        %6244 = vmatpush.bf16.msra.mxu0 %v6142
        %6245 = vmatpush.bf16.msra.mxu0 %v6141
        %6246 = vmatpush.bf16.msra.mxu0 %v6140
        %6247 = vmatpush.bf16.msra.mxu0 %v6139
        %6248 = vmatpush.bf16.msra.mxu0 %v6138
        %6249 = vmatpush.bf16.msra.mxu0 %v6137
        %6250 = vmatmul.bf16.gmra.mxu0 %v5935
        %v6251 = vpop.f32.mrf.mxu0
        %v6252 = vadd.f32 %v6239, %v6251
        %v6253 = vpop.f32.mrf.mxu0
        %6254 = vdwg.mxu0
        %6255 = vmatpush.bf16.msra.mxu0 %v6152
        %6256 = vmatpush.bf16.msra.mxu0 %v6151
        %6257 = vmatpush.bf16.msra.mxu0 %v6150
        %6258 = vmatpush.bf16.msra.mxu0 %v6149
        %6259 = vmatpush.bf16.msra.mxu0 %v6148
        %6260 = vmatpush.bf16.msra.mxu0 %v6147
        %6261 = vmatpush.bf16.msra.mxu0 %v6146
        %6262 = vmatpush.bf16.msra.mxu0 %v6145
        %6263 = vmatmul.bf16.gmra.mxu0 %v5936
        %v6264 = vpop.f32.mrf.mxu0
        %v6265 = vadd.f32 %v6252, %v6264
        %v6266 = vpop.f32.mrf.mxu0
        %6267 = vdwg.mxu0
        %6268 = vmatpush.bf16.msra.mxu0 0
        %6269 = vmatpush.bf16.msra.mxu0 0
        %6270 = vmatpush.bf16.msra.mxu0 0
        %6271 = vmatpush.bf16.msra.mxu0 0
        %6272 = vmatpush.bf16.msra.mxu0 0
        %6273 = vmatpush.bf16.msra.mxu0 %v6201
        %6274 = vmatpush.bf16.msra.mxu0 %v6154
        %6275 = vmatpush.bf16.msra.mxu0 %v6153
        %6276 = vmatmul.bf16.gmra.mxu0 %v6198
        %v6277 = vpop.f32.mrf.mxu0
        %v6278 = vadd.f32 %v6265, %v6277
        %v6279 = vpop.f32.mrf.mxu0
        %6280 = vdwg.mxu0
        %6282 = vst [vmem:[#allocation1] ss:$9 sm:$0xff] %v2104
        %v6283 = vld [vmem:[#allocation1] sm:$0xff]
        %v6284 = vld [vmem:[#allocation1 + $0x9] sm:$0xff]
        %v6285 = vld [vmem:[#allocation1 + $0x12] sm:$0xff]
        %v6286 = vld [vmem:[#allocation1 + $0x1b] sm:$0xff]
        %v6287 = vld [vmem:[#allocation1 + $0x24] sm:$0xff]
        %v6288 = vld [vmem:[#allocation1 + $0x2d] sm:$0xff]
        %v6379 = vunpack.c.l.b16 %v2792
        %v6380 = vunpack.c.l.b16 %v2793
        %v6381 = vunpack.c.l.b16 %v2794
        %v6382 = vunpack.c.l.b16 %v2795
        %v6383 = vunpack.c.l.b16 %v2796
        %v6384 = vunpack.c.l.b16 %v2797
        %v6385 = vunpack.c.l.b16 %v2798
        %v6386 = vunpack.c.l.b16 %v2799
        %v6387 = vunpack.c.l.b16 %v2800
        %v6388 = vunpack.c.l.b16 %v2801
        %v6389 = vunpack.c.l.b16 %v2802
        %v6390 = vunpack.c.l.b16 %v2803
        %v6391 = vunpack.c.l.b16 %v2804
        %v6392 = vunpack.c.l.b16 %v2805
        %v6393 = vunpack.c.l.b16 %v2806
        %v6394 = vunpack.c.l.b16 %v2807
        %v6395 = vunpack.c.l.b16 %v2808
        %v6396 = vunpack.c.l.b16 %v2809
        %v6397 = vunpack.c.l.b16 %v2810
        %v6398 = vunpack.c.l.b16 %v2811
        %v6399 = vunpack.c.l.b16 %v2812
        %v6400 = vunpack.c.l.b16 %v2813
        %v6401 = vunpack.c.l.b16 %v2814
        %v6402 = vunpack.c.l.b16 %v2815
        %v6403 = vunpack.c.l.b16 %v2816
        %v6404 = vunpack.c.l.b16 %v2817
        %v6405 = vunpack.c.l.b16 %v2818
        %v6406 = vunpack.c.l.b16 %v2819
        %v6407 = vunpack.c.l.b16 %v2820
        %v6408 = vunpack.c.l.b16 %v2821
        %v6409 = vunpack.c.l.b16 %v2822
        %v6410 = vunpack.c.l.b16 %v2823
        %v6411 = vunpack.c.l.b16 %v2824
        %v6412 = vunpack.c.l.b16 %v2825
        %v6413 = vunpack.c.l.b16 %v2826
        %v6414 = vunpack.c.l.b16 %v2827
        %v6415 = vunpack.c.l.b16 %v2828
        %v6416 = vunpack.c.l.b16 %v2829
        %v6417 = vunpack.c.l.b16 %v2830
        %v6418 = vunpack.c.l.b16 %v2831
        %v6419 = vunpack.c.l.b16 %v2832
        %v6420 = vunpack.c.l.b16 %v2833
        %v6421 = vunpack.c.l.b16 %v2834
        %v6422 = vunpack.c.l.b16 %v2835
        %v6423 = vunpack.c.l.b16 %v2836
        %v6424 = vunpack.c.l.b16 %v2837
        %v6425 = vunpack.c.l.b16 %v2838
        %v6426 = vunpack.c.l.b16 %v2839
        %v6427 = vunpack.c.l.b16 %v2840
        %v6428 = vunpack.c.l.b16 %v2841
        %v6429 = vunpack.c.l.b16 %v2842
        %v6430 = vunpack.c.l.b16 %v2843
        %v6431 = vunpack.c.l.b16 %v2844
        %v6432 = vunpack.c.l.b16 %v2845
        %v6433 = vunpack.c.l.b16 %v2846
        %v6434 = vunpack.c.l.b16 %v2847
        %v6435 = vunpack.c.l.b16 %v2848
        %v6436 = vunpack.c.l.b16 %v2849
        %v6437 = vunpack.c.l.b16 %v2850
        %v6438 = vunpack.c.l.b16 %v2851
        %v6439 = vunpack.c.l.b16 %v2852
        %v6440 = vunpack.c.l.b16 %v2853
        %v6441 = vunpack.c.l.b16 %v2854
        %v6442 = vunpack.c.l.b16 %v2855
        %v6443 = vunpack.c.l.b16 %v2856
        %v6444 = vunpack.c.l.b16 %v2857
        %v6445 = vunpack.c.l.b16 %v2858
        %v6446 = vunpack.c.l.b16 %v2859
        %v6447 = vunpack.c.l.b16 %v2860
        %v6448 = vunpack.c.l.b16 %v2861
        %v6449 = vunpack.c.l.b16 %v2862
        %v6450 = vunpack.c.l.b16 %v2863
        %v6451 = vunpack.c.l.b16 %v2864
        %v6452 = vunpack.c.l.b16 %v2865
        %v6453 = vunpack.c.l.b16 %v2866
        %v6454 = vunpack.c.l.b16 %v2867
        %v6455 = vunpack.c.l.b16 %v2868
        %v6456 = vunpack.c.l.b16 %v2869
        %v6457 = vunpack.c.l.b16 %v2870
        %v6458 = vunpack.c.l.b16 %v2871
        %v6459 = vunpack.c.l.b16 %v2872
        %v6460 = vunpack.c.l.b16 %v2873
        %v6461 = vunpack.c.l.b16 %v2874
        %v6462 = vunpack.c.l.b16 %v2875
        %v6463 = vunpack.c.l.b16 %v2876
        %v6464 = vpack.c.b16 %v6380, %v6379
        %v6465 = vpack.c.b16 %v6382, %v6381
        %v6466 = vpack.c.b16 %v6384, %v6383
        %v6467 = vpack.c.b16 %v6386, %v6385
        %v6468 = vpack.c.b16 %v6388, %v6387
        %v6469 = vpack.c.b16 %v6390, %v6389
        %v6470 = vpack.c.b16 %v6392, %v6391
        %v6471 = vpack.c.b16 %v6394, %v6393
        %v6472 = vpack.c.b16 %v6396, %v6395
        %v6473 = vpack.c.b16 %v6398, %v6397
        %v6474 = vpack.c.b16 %v6400, %v6399
        %v6475 = vpack.c.b16 %v6402, %v6401
        %v6476 = vpack.c.b16 %v6404, %v6403
        %v6477 = vpack.c.b16 %v6406, %v6405
        %v6478 = vpack.c.b16 %v6408, %v6407
        %v6479 = vpack.c.b16 %v6410, %v6409
        %v6480 = vpack.c.b16 %v6412, %v6411
        %v6481 = vpack.c.b16 %v6414, %v6413
        %v6482 = vpack.c.b16 %v6416, %v6415
        %v6483 = vpack.c.b16 %v6418, %v6417
        %v6484 = vpack.c.b16 %v6420, %v6419
        %v6485 = vpack.c.b16 %v6422, %v6421
        %v6486 = vpack.c.b16 %v6424, %v6423
        %v6487 = vpack.c.b16 %v6426, %v6425
        %v6488 = vpack.c.b16 %v6428, %v6427
        %v6489 = vpack.c.b16 %v6430, %v6429
        %v6490 = vpack.c.b16 %v6432, %v6431
        %v6491 = vpack.c.b16 %v6434, %v6433
        %v6492 = vpack.c.b16 %v6436, %v6435
        %v6493 = vpack.c.b16 %v6438, %v6437
        %v6494 = vpack.c.b16 %v6440, %v6439
        %v6495 = vpack.c.b16 %v6442, %v6441
        %v6496 = vpack.c.b16 %v6444, %v6443
        %v6497 = vpack.c.b16 %v6446, %v6445
        %v6498 = vpack.c.b16 %v6448, %v6447
        %v6499 = vpack.c.b16 %v6450, %v6449
        %v6500 = vpack.c.b16 %v6452, %v6451
        %v6501 = vpack.c.b16 %v6454, %v6453
        %v6502 = vpack.c.b16 %v6456, %v6455
        %v6503 = vpack.c.b16 %v6458, %v6457
        %v6504 = vpack.c.b16 %v6460, %v6459
        %v6505 = vpack.c.b16 %v6462, %v6461
        %v6506 = vpack.c.b16 %v6463, %v6463
        %v6549 = vsel %vm3740, %v6288, 0
        %v6552 = vsel %vm423, %v6506, 0
        %6554 = vmatpush.bf16.msra.mxu0 %v6471
        %6555 = vmatpush.bf16.msra.mxu0 %v6470
        %6556 = vmatpush.bf16.msra.mxu0 %v6469
        %6557 = vmatpush.bf16.msra.mxu0 %v6468
        %6558 = vmatpush.bf16.msra.mxu0 %v6467
        %6559 = vmatpush.bf16.msra.mxu0 %v6466
        %6560 = vmatpush.bf16.msra.mxu0 %v6465
        %6561 = vmatpush.bf16.msra.mxu0 %v6464
        %6562 = vmatmul.bf16.gmra.mxu0 %v6283
        %v6563 = vpop.f32.mrf.mxu0
        %v6564 = vadd.f32 0.0, %v6563
        %v6565 = vpop.f32.mrf.mxu0
        %6566 = vdwg.mxu0
        %6567 = vmatpush.bf16.msra.mxu0 %v6479
        %6568 = vmatpush.bf16.msra.mxu0 %v6478
        %6569 = vmatpush.bf16.msra.mxu0 %v6477
        %6570 = vmatpush.bf16.msra.mxu0 %v6476
        %6571 = vmatpush.bf16.msra.mxu0 %v6475
        %6572 = vmatpush.bf16.msra.mxu0 %v6474
        %6573 = vmatpush.bf16.msra.mxu0 %v6473
        %6574 = vmatpush.bf16.msra.mxu0 %v6472
        %6575 = vmatmul.bf16.gmra.mxu0 %v6284
        %v6576 = vpop.f32.mrf.mxu0
        %v6577 = vadd.f32 %v6564, %v6576
        %v6578 = vpop.f32.mrf.mxu0
        %6579 = vdwg.mxu0
        %6580 = vmatpush.bf16.msra.mxu0 %v6487
        %6581 = vmatpush.bf16.msra.mxu0 %v6486
        %6582 = vmatpush.bf16.msra.mxu0 %v6485
        %6583 = vmatpush.bf16.msra.mxu0 %v6484
        %6584 = vmatpush.bf16.msra.mxu0 %v6483
        %6585 = vmatpush.bf16.msra.mxu0 %v6482
        %6586 = vmatpush.bf16.msra.mxu0 %v6481
        %6587 = vmatpush.bf16.msra.mxu0 %v6480
        %6588 = vmatmul.bf16.gmra.mxu0 %v6285
        %v6589 = vpop.f32.mrf.mxu0
        %v6590 = vadd.f32 %v6577, %v6589
        %v6591 = vpop.f32.mrf.mxu0
        %6592 = vdwg.mxu0
        %6593 = vmatpush.bf16.msra.mxu0 %v6495
        %6594 = vmatpush.bf16.msra.mxu0 %v6494
        %6595 = vmatpush.bf16.msra.mxu0 %v6493
        %6596 = vmatpush.bf16.msra.mxu0 %v6492
        %6597 = vmatpush.bf16.msra.mxu0 %v6491
        %6598 = vmatpush.bf16.msra.mxu0 %v6490
        %6599 = vmatpush.bf16.msra.mxu0 %v6489
        %6600 = vmatpush.bf16.msra.mxu0 %v6488
        %6601 = vmatmul.bf16.gmra.mxu0 %v6286
        %v6602 = vpop.f32.mrf.mxu0
        %v6603 = vadd.f32 %v6590, %v6602
        %v6604 = vpop.f32.mrf.mxu0
        %6605 = vdwg.mxu0
        %6606 = vmatpush.bf16.msra.mxu0 %v6503
        %6607 = vmatpush.bf16.msra.mxu0 %v6502
        %6608 = vmatpush.bf16.msra.mxu0 %v6501
        %6609 = vmatpush.bf16.msra.mxu0 %v6500
        %6610 = vmatpush.bf16.msra.mxu0 %v6499
        %6611 = vmatpush.bf16.msra.mxu0 %v6498
        %6612 = vmatpush.bf16.msra.mxu0 %v6497
        %6613 = vmatpush.bf16.msra.mxu0 %v6496
        %6614 = vmatmul.bf16.gmra.mxu0 %v6287
        %v6615 = vpop.f32.mrf.mxu0
        %v6616 = vadd.f32 %v6603, %v6615
        %v6617 = vpop.f32.mrf.mxu0
        %6618 = vdwg.mxu0
        %6619 = vmatpush.bf16.msra.mxu0 0
        %6620 = vmatpush.bf16.msra.mxu0 0
        %6621 = vmatpush.bf16.msra.mxu0 0
        %6622 = vmatpush.bf16.msra.mxu0 0
        %6623 = vmatpush.bf16.msra.mxu0 0
        %6624 = vmatpush.bf16.msra.mxu0 %v6552
        %6625 = vmatpush.bf16.msra.mxu0 %v6505
        %6626 = vmatpush.bf16.msra.mxu0 %v6504
        %6627 = vmatmul.bf16.gmra.mxu0 %v6549
        %v6628 = vpop.f32.mrf.mxu0
        %v6629 = vadd.f32 %v6616, %v6628
        %v6630 = vpop.f32.mrf.mxu0
        %6631 = vdwg.mxu0
        %6633 = vst [vmem:[#allocation1] ss:$9 sm:$0xff] %v2105
        %v6634 = vld [vmem:[#allocation1] sm:$0xff]
        %v6635 = vld [vmem:[#allocation1 + $0x9] sm:$0xff]
        %v6636 = vld [vmem:[#allocation1 + $0x12] sm:$0xff]
        %v6637 = vld [vmem:[#allocation1 + $0x1b] sm:$0xff]
        %v6638 = vld [vmem:[#allocation1 + $0x24] sm:$0xff]
        %v6639 = vld [vmem:[#allocation1 + $0x2d] sm:$0xff]
        %v6730 = vunpack.c.l.b16 %v2877
        %v6731 = vunpack.c.l.b16 %v2878
        %v6732 = vunpack.c.l.b16 %v2879
        %v6733 = vunpack.c.l.b16 %v2880
        %v6734 = vunpack.c.l.b16 %v2881
        %v6735 = vunpack.c.l.b16 %v2882
        %v6736 = vunpack.c.l.b16 %v2883
        %v6737 = vunpack.c.l.b16 %v2884
        %v6738 = vunpack.c.l.b16 %v2885
        %v6739 = vunpack.c.l.b16 %v2886
        %v6740 = vunpack.c.l.b16 %v2887
        %v6741 = vunpack.c.l.b16 %v2888
        %v6742 = vunpack.c.l.b16 %v2889
        %v6743 = vunpack.c.l.b16 %v2890
        %v6744 = vunpack.c.l.b16 %v2891
        %v6745 = vunpack.c.l.b16 %v2892
        %v6746 = vunpack.c.l.b16 %v2893
        %v6747 = vunpack.c.l.b16 %v2894
        %v6748 = vunpack.c.l.b16 %v2895
        %v6749 = vunpack.c.l.b16 %v2896
        %v6750 = vunpack.c.l.b16 %v2897
        %v6751 = vunpack.c.l.b16 %v2898
        %v6752 = vunpack.c.l.b16 %v2899
        %v6753 = vunpack.c.l.b16 %v2900
        %v6754 = vunpack.c.l.b16 %v2901
        %v6755 = vunpack.c.l.b16 %v2902
        %v6756 = vunpack.c.l.b16 %v2903
        %v6757 = vunpack.c.l.b16 %v2904
        %v6758 = vunpack.c.l.b16 %v2905
        %v6759 = vunpack.c.l.b16 %v2906
        %v6760 = vunpack.c.l.b16 %v2907
        %v6761 = vunpack.c.l.b16 %v2908
        %v6762 = vunpack.c.l.b16 %v2909
        %v6763 = vunpack.c.l.b16 %v2910
        %v6764 = vunpack.c.l.b16 %v2911
        %v6765 = vunpack.c.l.b16 %v2912
        %v6766 = vunpack.c.l.b16 %v2913
        %v6767 = vunpack.c.l.b16 %v2914
        %v6768 = vunpack.c.l.b16 %v2915
        %v6769 = vunpack.c.l.b16 %v2916
        %v6770 = vunpack.c.l.b16 %v2917
        %v6771 = vunpack.c.l.b16 %v2918
        %v6772 = vunpack.c.l.b16 %v2919
        %v6773 = vunpack.c.l.b16 %v2920
        %v6774 = vunpack.c.l.b16 %v2921
        %v6775 = vunpack.c.l.b16 %v2922
        %v6776 = vunpack.c.l.b16 %v2923
        %v6777 = vunpack.c.l.b16 %v2924
        %v6778 = vunpack.c.l.b16 %v2925
        %v6779 = vunpack.c.l.b16 %v2926
        %v6780 = vunpack.c.l.b16 %v2927
        %v6781 = vunpack.c.l.b16 %v2928
        %v6782 = vunpack.c.l.b16 %v2929
        %v6783 = vunpack.c.l.b16 %v2930
        %v6784 = vunpack.c.l.b16 %v2931
        %v6785 = vunpack.c.l.b16 %v2932
        %v6786 = vunpack.c.l.b16 %v2933
        %v6787 = vunpack.c.l.b16 %v2934
        %v6788 = vunpack.c.l.b16 %v2935
        %v6789 = vunpack.c.l.b16 %v2936
        %v6790 = vunpack.c.l.b16 %v2937
        %v6791 = vunpack.c.l.b16 %v2938
        %v6792 = vunpack.c.l.b16 %v2939
        %v6793 = vunpack.c.l.b16 %v2940
        %v6794 = vunpack.c.l.b16 %v2941
        %v6795 = vunpack.c.l.b16 %v2942
        %v6796 = vunpack.c.l.b16 %v2943
        %v6797 = vunpack.c.l.b16 %v2944
        %v6798 = vunpack.c.l.b16 %v2945
        %v6799 = vunpack.c.l.b16 %v2946
        %v6800 = vunpack.c.l.b16 %v2947
        %v6801 = vunpack.c.l.b16 %v2948
        %v6802 = vunpack.c.l.b16 %v2949
        %v6803 = vunpack.c.l.b16 %v2950
        %v6804 = vunpack.c.l.b16 %v2951
        %v6805 = vunpack.c.l.b16 %v2952
        %v6806 = vunpack.c.l.b16 %v2953
        %v6807 = vunpack.c.l.b16 %v2954
        %v6808 = vunpack.c.l.b16 %v2955
        %v6809 = vunpack.c.l.b16 %v2956
        %v6810 = vunpack.c.l.b16 %v2957
        %v6811 = vunpack.c.l.b16 %v2958
        %v6812 = vunpack.c.l.b16 %v2959
        %v6813 = vunpack.c.l.b16 %v2960
        %v6814 = vunpack.c.l.b16 %v2961
        %v6815 = vpack.c.b16 %v6731, %v6730
        %v6816 = vpack.c.b16 %v6733, %v6732
        %v6817 = vpack.c.b16 %v6735, %v6734
        %v6818 = vpack.c.b16 %v6737, %v6736
        %v6819 = vpack.c.b16 %v6739, %v6738
        %v6820 = vpack.c.b16 %v6741, %v6740
        %v6821 = vpack.c.b16 %v6743, %v6742
        %v6822 = vpack.c.b16 %v6745, %v6744
        %v6823 = vpack.c.b16 %v6747, %v6746
        %v6824 = vpack.c.b16 %v6749, %v6748
        %v6825 = vpack.c.b16 %v6751, %v6750
        %v6826 = vpack.c.b16 %v6753, %v6752
        %v6827 = vpack.c.b16 %v6755, %v6754
        %v6828 = vpack.c.b16 %v6757, %v6756
        %v6829 = vpack.c.b16 %v6759, %v6758
        %v6830 = vpack.c.b16 %v6761, %v6760
        %v6831 = vpack.c.b16 %v6763, %v6762
        %v6832 = vpack.c.b16 %v6765, %v6764
        %v6833 = vpack.c.b16 %v6767, %v6766
        %v6834 = vpack.c.b16 %v6769, %v6768
        %v6835 = vpack.c.b16 %v6771, %v6770
        %v6836 = vpack.c.b16 %v6773, %v6772
        %v6837 = vpack.c.b16 %v6775, %v6774
        %v6838 = vpack.c.b16 %v6777, %v6776
        %v6839 = vpack.c.b16 %v6779, %v6778
        %v6840 = vpack.c.b16 %v6781, %v6780
        %v6841 = vpack.c.b16 %v6783, %v6782
        %v6842 = vpack.c.b16 %v6785, %v6784
        %v6843 = vpack.c.b16 %v6787, %v6786
        %v6844 = vpack.c.b16 %v6789, %v6788
        %v6845 = vpack.c.b16 %v6791, %v6790
        %v6846 = vpack.c.b16 %v6793, %v6792
        %v6847 = vpack.c.b16 %v6795, %v6794
        %v6848 = vpack.c.b16 %v6797, %v6796
        %v6849 = vpack.c.b16 %v6799, %v6798
        %v6850 = vpack.c.b16 %v6801, %v6800
        %v6851 = vpack.c.b16 %v6803, %v6802
        %v6852 = vpack.c.b16 %v6805, %v6804
        %v6853 = vpack.c.b16 %v6807, %v6806
        %v6854 = vpack.c.b16 %v6809, %v6808
        %v6855 = vpack.c.b16 %v6811, %v6810
        %v6856 = vpack.c.b16 %v6813, %v6812
        %v6857 = vpack.c.b16 %v6814, %v6814
        %v6900 = vsel %vm3740, %v6639, 0
        %v6903 = vsel %vm423, %v6857, 0
        %6905 = vmatpush.bf16.msra.mxu0 %v6822
        %6906 = vmatpush.bf16.msra.mxu0 %v6821
        %6907 = vmatpush.bf16.msra.mxu0 %v6820
        %6908 = vmatpush.bf16.msra.mxu0 %v6819
        %6909 = vmatpush.bf16.msra.mxu0 %v6818
        %6910 = vmatpush.bf16.msra.mxu0 %v6817
        %6911 = vmatpush.bf16.msra.mxu0 %v6816
        %6912 = vmatpush.bf16.msra.mxu0 %v6815
        %6913 = vmatmul.bf16.gmra.mxu0 %v6634
        %v6914 = vpop.f32.mrf.mxu0
        %v6915 = vadd.f32 0.0, %v6914
        %v6916 = vpop.f32.mrf.mxu0
        %6917 = vdwg.mxu0
        %6918 = vmatpush.bf16.msra.mxu0 %v6830
        %6919 = vmatpush.bf16.msra.mxu0 %v6829
        %6920 = vmatpush.bf16.msra.mxu0 %v6828
        %6921 = vmatpush.bf16.msra.mxu0 %v6827
        %6922 = vmatpush.bf16.msra.mxu0 %v6826
        %6923 = vmatpush.bf16.msra.mxu0 %v6825
        %6924 = vmatpush.bf16.msra.mxu0 %v6824
        %6925 = vmatpush.bf16.msra.mxu0 %v6823
        %6926 = vmatmul.bf16.gmra.mxu0 %v6635
        %v6927 = vpop.f32.mrf.mxu0
        %v6928 = vadd.f32 %v6915, %v6927
        %v6929 = vpop.f32.mrf.mxu0
        %6930 = vdwg.mxu0
        %6931 = vmatpush.bf16.msra.mxu0 %v6838
        %6932 = vmatpush.bf16.msra.mxu0 %v6837
        %6933 = vmatpush.bf16.msra.mxu0 %v6836
        %6934 = vmatpush.bf16.msra.mxu0 %v6835
        %6935 = vmatpush.bf16.msra.mxu0 %v6834
        %6936 = vmatpush.bf16.msra.mxu0 %v6833
        %6937 = vmatpush.bf16.msra.mxu0 %v6832
        %6938 = vmatpush.bf16.msra.mxu0 %v6831
        %6939 = vmatmul.bf16.gmra.mxu0 %v6636
        %v6940 = vpop.f32.mrf.mxu0
        %v6941 = vadd.f32 %v6928, %v6940
        %v6942 = vpop.f32.mrf.mxu0
        %6943 = vdwg.mxu0
        %6944 = vmatpush.bf16.msra.mxu0 %v6846
        %6945 = vmatpush.bf16.msra.mxu0 %v6845
        %6946 = vmatpush.bf16.msra.mxu0 %v6844
        %6947 = vmatpush.bf16.msra.mxu0 %v6843
        %6948 = vmatpush.bf16.msra.mxu0 %v6842
        %6949 = vmatpush.bf16.msra.mxu0 %v6841
        %6950 = vmatpush.bf16.msra.mxu0 %v6840
        %6951 = vmatpush.bf16.msra.mxu0 %v6839
        %6952 = vmatmul.bf16.gmra.mxu0 %v6637
        %v6953 = vpop.f32.mrf.mxu0
        %v6954 = vadd.f32 %v6941, %v6953
        %v6955 = vpop.f32.mrf.mxu0
        %6956 = vdwg.mxu0
        %6957 = vmatpush.bf16.msra.mxu0 %v6854
        %6958 = vmatpush.bf16.msra.mxu0 %v6853
        %6959 = vmatpush.bf16.msra.mxu0 %v6852
        %6960 = vmatpush.bf16.msra.mxu0 %v6851
        %6961 = vmatpush.bf16.msra.mxu0 %v6850
        %6962 = vmatpush.bf16.msra.mxu0 %v6849
        %6963 = vmatpush.bf16.msra.mxu0 %v6848
        %6964 = vmatpush.bf16.msra.mxu0 %v6847
        %6965 = vmatmul.bf16.gmra.mxu0 %v6638
        %v6966 = vpop.f32.mrf.mxu0
        %v6967 = vadd.f32 %v6954, %v6966
        %v6968 = vpop.f32.mrf.mxu0
        %6969 = vdwg.mxu0
        %6970 = vmatpush.bf16.msra.mxu0 0
        %6971 = vmatpush.bf16.msra.mxu0 0
        %6972 = vmatpush.bf16.msra.mxu0 0
        %6973 = vmatpush.bf16.msra.mxu0 0
        %6974 = vmatpush.bf16.msra.mxu0 0
        %6975 = vmatpush.bf16.msra.mxu0 %v6903
        %6976 = vmatpush.bf16.msra.mxu0 %v6856
        %6977 = vmatpush.bf16.msra.mxu0 %v6855
        %6978 = vmatmul.bf16.gmra.mxu0 %v6900
        %v6979 = vpop.f32.mrf.mxu0
        %v6980 = vadd.f32 %v6967, %v6979
        %v6981 = vpop.f32.mrf.mxu0
        %6982 = vdwg.mxu0
        %6984 = vst [vmem:[#allocation1] ss:$9 sm:$0xff] %v2106
        %v6985 = vld [vmem:[#allocation1] sm:$0xff]
        %v6986 = vld [vmem:[#allocation1 + $0x9] sm:$0xff]
        %v6987 = vld [vmem:[#allocation1 + $0x12] sm:$0xff]
        %v6988 = vld [vmem:[#allocation1 + $0x1b] sm:$0xff]
        %v6989 = vld [vmem:[#allocation1 + $0x24] sm:$0xff]
        %v6990 = vld [vmem:[#allocation1 + $0x2d] sm:$0xff]
        %v7081 = vunpack.c.l.b16 %v2962
        %v7082 = vunpack.c.l.b16 %v2963
        %v7083 = vunpack.c.l.b16 %v2964
        %v7084 = vunpack.c.l.b16 %v2965
        %v7085 = vunpack.c.l.b16 %v2966
        %v7086 = vunpack.c.l.b16 %v2967
        %v7087 = vunpack.c.l.b16 %v2968
        %v7088 = vunpack.c.l.b16 %v2969
        %v7089 = vunpack.c.l.b16 %v2970
        %v7090 = vunpack.c.l.b16 %v2971
        %v7091 = vunpack.c.l.b16 %v2972
        %v7092 = vunpack.c.l.b16 %v2973
        %v7093 = vunpack.c.l.b16 %v2974
        %v7094 = vunpack.c.l.b16 %v2975
        %v7095 = vunpack.c.l.b16 %v2976
        %v7096 = vunpack.c.l.b16 %v2977
        %v7097 = vunpack.c.l.b16 %v2978
        %v7098 = vunpack.c.l.b16 %v2979
        %v7099 = vunpack.c.l.b16 %v2980
        %v7100 = vunpack.c.l.b16 %v2981
        %v7101 = vunpack.c.l.b16 %v2982
        %v7102 = vunpack.c.l.b16 %v2983
        %v7103 = vunpack.c.l.b16 %v2984
        %v7104 = vunpack.c.l.b16 %v2985
        %v7105 = vunpack.c.l.b16 %v2986
        %v7106 = vunpack.c.l.b16 %v2987
        %v7107 = vunpack.c.l.b16 %v2988
        %v7108 = vunpack.c.l.b16 %v2989
        %v7109 = vunpack.c.l.b16 %v2990
        %v7110 = vunpack.c.l.b16 %v2991
        %v7111 = vunpack.c.l.b16 %v2992
        %v7112 = vunpack.c.l.b16 %v2993
        %v7113 = vunpack.c.l.b16 %v2994
        %v7114 = vunpack.c.l.b16 %v2995
        %v7115 = vunpack.c.l.b16 %v2996
        %v7116 = vunpack.c.l.b16 %v2997
        %v7117 = vunpack.c.l.b16 %v2998
        %v7118 = vunpack.c.l.b16 %v2999
        %v7119 = vunpack.c.l.b16 %v3000
        %v7120 = vunpack.c.l.b16 %v3001
        %v7121 = vunpack.c.l.b16 %v3002
        %v7122 = vunpack.c.l.b16 %v3003
        %v7123 = vunpack.c.l.b16 %v3004
        %v7124 = vunpack.c.l.b16 %v3005
        %v7125 = vunpack.c.l.b16 %v3006
        %v7126 = vunpack.c.l.b16 %v3007
        %v7127 = vunpack.c.l.b16 %v3008
        %v7128 = vunpack.c.l.b16 %v3009
        %v7129 = vunpack.c.l.b16 %v3010
        %v7130 = vunpack.c.l.b16 %v3011
        %v7131 = vunpack.c.l.b16 %v3012
        %v7132 = vunpack.c.l.b16 %v3013
        %v7133 = vunpack.c.l.b16 %v3014
        %v7134 = vunpack.c.l.b16 %v3015
        %v7135 = vunpack.c.l.b16 %v3016
        %v7136 = vunpack.c.l.b16 %v3017
        %v7137 = vunpack.c.l.b16 %v3018
        %v7138 = vunpack.c.l.b16 %v3019
        %v7139 = vunpack.c.l.b16 %v3020
        %v7140 = vunpack.c.l.b16 %v3021
        %v7141 = vunpack.c.l.b16 %v3022
        %v7142 = vunpack.c.l.b16 %v3023
        %v7143 = vunpack.c.l.b16 %v3024
        %v7144 = vunpack.c.l.b16 %v3025
        %v7145 = vunpack.c.l.b16 %v3026
        %v7146 = vunpack.c.l.b16 %v3027
        %v7147 = vunpack.c.l.b16 %v3028
        %v7148 = vunpack.c.l.b16 %v3029
        %v7149 = vunpack.c.l.b16 %v3030
        %v7150 = vunpack.c.l.b16 %v3031
        %v7151 = vunpack.c.l.b16 %v3032
        %v7152 = vunpack.c.l.b16 %v3033
        %v7153 = vunpack.c.l.b16 %v3034
        %v7154 = vunpack.c.l.b16 %v3035
        %v7155 = vunpack.c.l.b16 %v3036
        %v7156 = vunpack.c.l.b16 %v3037
        %v7157 = vunpack.c.l.b16 %v3038
        %v7158 = vunpack.c.l.b16 %v3039
        %v7159 = vunpack.c.l.b16 %v3040
        %v7160 = vunpack.c.l.b16 %v3041
        %v7161 = vunpack.c.l.b16 %v3042
        %v7162 = vunpack.c.l.b16 %v3043
        %v7163 = vunpack.c.l.b16 %v3044
        %v7164 = vunpack.c.l.b16 %v3045
        %v7165 = vunpack.c.l.b16 %v3046
        %v7166 = vpack.c.b16 %v7082, %v7081
        %v7167 = vpack.c.b16 %v7084, %v7083
        %v7168 = vpack.c.b16 %v7086, %v7085
        %v7169 = vpack.c.b16 %v7088, %v7087
        %v7170 = vpack.c.b16 %v7090, %v7089
        %v7171 = vpack.c.b16 %v7092, %v7091
        %v7172 = vpack.c.b16 %v7094, %v7093
        %v7173 = vpack.c.b16 %v7096, %v7095
        %v7174 = vpack.c.b16 %v7098, %v7097
        %v7175 = vpack.c.b16 %v7100, %v7099
        %v7176 = vpack.c.b16 %v7102, %v7101
        %v7177 = vpack.c.b16 %v7104, %v7103
        %v7178 = vpack.c.b16 %v7106, %v7105
        %v7179 = vpack.c.b16 %v7108, %v7107
        %v7180 = vpack.c.b16 %v7110, %v7109
        %v7181 = vpack.c.b16 %v7112, %v7111
        %v7182 = vpack.c.b16 %v7114, %v7113
        %v7183 = vpack.c.b16 %v7116, %v7115
        %v7184 = vpack.c.b16 %v7118, %v7117
        %v7185 = vpack.c.b16 %v7120, %v7119
        %v7186 = vpack.c.b16 %v7122, %v7121
        %v7187 = vpack.c.b16 %v7124, %v7123
        %v7188 = vpack.c.b16 %v7126, %v7125
        %v7189 = vpack.c.b16 %v7128, %v7127
        %v7190 = vpack.c.b16 %v7130, %v7129
        %v7191 = vpack.c.b16 %v7132, %v7131
        %v7192 = vpack.c.b16 %v7134, %v7133
        %v7193 = vpack.c.b16 %v7136, %v7135
        %v7194 = vpack.c.b16 %v7138, %v7137
        %v7195 = vpack.c.b16 %v7140, %v7139
        %v7196 = vpack.c.b16 %v7142, %v7141
        %v7197 = vpack.c.b16 %v7144, %v7143
        %v7198 = vpack.c.b16 %v7146, %v7145
        %v7199 = vpack.c.b16 %v7148, %v7147
        %v7200 = vpack.c.b16 %v7150, %v7149
        %v7201 = vpack.c.b16 %v7152, %v7151
        %v7202 = vpack.c.b16 %v7154, %v7153
        %v7203 = vpack.c.b16 %v7156, %v7155
        %v7204 = vpack.c.b16 %v7158, %v7157
        %v7205 = vpack.c.b16 %v7160, %v7159
        %v7206 = vpack.c.b16 %v7162, %v7161
        %v7207 = vpack.c.b16 %v7164, %v7163
        %v7208 = vpack.c.b16 %v7165, %v7165
        %v7251 = vsel %vm3740, %v6990, 0
        %v7254 = vsel %vm423, %v7208, 0
        %7256 = vmatpush.bf16.msra.mxu0 %v7173
        %7257 = vmatpush.bf16.msra.mxu0 %v7172
        %7258 = vmatpush.bf16.msra.mxu0 %v7171
        %7259 = vmatpush.bf16.msra.mxu0 %v7170
        %7260 = vmatpush.bf16.msra.mxu0 %v7169
        %7261 = vmatpush.bf16.msra.mxu0 %v7168
        %7262 = vmatpush.bf16.msra.mxu0 %v7167
        %7263 = vmatpush.bf16.msra.mxu0 %v7166
        %7264 = vmatmul.bf16.gmra.mxu0 %v6985
        %v7265 = vpop.f32.mrf.mxu0
        %v7266 = vadd.f32 0.0, %v7265
        %v7267 = vpop.f32.mrf.mxu0
        %7268 = vdwg.mxu0
        %7269 = vmatpush.bf16.msra.mxu0 %v7181
        %7270 = vmatpush.bf16.msra.mxu0 %v7180
        %7271 = vmatpush.bf16.msra.mxu0 %v7179
        %7272 = vmatpush.bf16.msra.mxu0 %v7178
        %7273 = vmatpush.bf16.msra.mxu0 %v7177
        %7274 = vmatpush.bf16.msra.mxu0 %v7176
        %7275 = vmatpush.bf16.msra.mxu0 %v7175
        %7276 = vmatpush.bf16.msra.mxu0 %v7174
        %7277 = vmatmul.bf16.gmra.mxu0 %v6986
        %v7278 = vpop.f32.mrf.mxu0
        %v7279 = vadd.f32 %v7266, %v7278
        %v7280 = vpop.f32.mrf.mxu0
        %7281 = vdwg.mxu0
        %7282 = vmatpush.bf16.msra.mxu0 %v7189
        %7283 = vmatpush.bf16.msra.mxu0 %v7188
        %7284 = vmatpush.bf16.msra.mxu0 %v7187
        %7285 = vmatpush.bf16.msra.mxu0 %v7186
        %7286 = vmatpush.bf16.msra.mxu0 %v7185
        %7287 = vmatpush.bf16.msra.mxu0 %v7184
        %7288 = vmatpush.bf16.msra.mxu0 %v7183
        %7289 = vmatpush.bf16.msra.mxu0 %v7182
        %7290 = vmatmul.bf16.gmra.mxu0 %v6987
        %v7291 = vpop.f32.mrf.mxu0
        %v7292 = vadd.f32 %v7279, %v7291
        %v7293 = vpop.f32.mrf.mxu0
        %7294 = vdwg.mxu0
        %7295 = vmatpush.bf16.msra.mxu0 %v7197
        %7296 = vmatpush.bf16.msra.mxu0 %v7196
        %7297 = vmatpush.bf16.msra.mxu0 %v7195
        %7298 = vmatpush.bf16.msra.mxu0 %v7194
        %7299 = vmatpush.bf16.msra.mxu0 %v7193
        %7300 = vmatpush.bf16.msra.mxu0 %v7192
        %7301 = vmatpush.bf16.msra.mxu0 %v7191
        %7302 = vmatpush.bf16.msra.mxu0 %v7190
        %7303 = vmatmul.bf16.gmra.mxu0 %v6988
        %v7304 = vpop.f32.mrf.mxu0
        %v7305 = vadd.f32 %v7292, %v7304
        %v7306 = vpop.f32.mrf.mxu0
        %7307 = vdwg.mxu0
        %7308 = vmatpush.bf16.msra.mxu0 %v7205
        %7309 = vmatpush.bf16.msra.mxu0 %v7204
        %7310 = vmatpush.bf16.msra.mxu0 %v7203
        %7311 = vmatpush.bf16.msra.mxu0 %v7202
        %7312 = vmatpush.bf16.msra.mxu0 %v7201
        %7313 = vmatpush.bf16.msra.mxu0 %v7200
        %7314 = vmatpush.bf16.msra.mxu0 %v7199
        %7315 = vmatpush.bf16.msra.mxu0 %v7198
        %7316 = vmatmul.bf16.gmra.mxu0 %v6989
        %v7317 = vpop.f32.mrf.mxu0
        %v7318 = vadd.f32 %v7305, %v7317
        %v7319 = vpop.f32.mrf.mxu0
        %7320 = vdwg.mxu0
        %7321 = vmatpush.bf16.msra.mxu0 0
        %7322 = vmatpush.bf16.msra.mxu0 0
        %7323 = vmatpush.bf16.msra.mxu0 0
        %7324 = vmatpush.bf16.msra.mxu0 0
        %7325 = vmatpush.bf16.msra.mxu0 0
        %7326 = vmatpush.bf16.msra.mxu0 %v7254
        %7327 = vmatpush.bf16.msra.mxu0 %v7207
        %7328 = vmatpush.bf16.msra.mxu0 %v7206
        %7329 = vmatmul.bf16.gmra.mxu0 %v7251
        %v7330 = vpop.f32.mrf.mxu0
        %v7331 = vadd.f32 %v7318, %v7330
        %v7332 = vpop.f32.mrf.mxu0
        %7333 = vdwg.mxu0
        %7335 = vst [vmem:[#allocation1] ss:$9 sm:$0xff] %v2107
        %v7336 = vld [vmem:[#allocation1] sm:$0xff]
        %v7337 = vld [vmem:[#allocation1 + $0x9] sm:$0xff]
        %v7338 = vld [vmem:[#allocation1 + $0x12] sm:$0xff]
        %v7339 = vld [vmem:[#allocation1 + $0x1b] sm:$0xff]
        %v7340 = vld [vmem:[#allocation1 + $0x24] sm:$0xff]
        %v7341 = vld [vmem:[#allocation1 + $0x2d] sm:$0xff]
        %v7432 = vunpack.c.l.b16 %v3047
        %v7433 = vunpack.c.l.b16 %v3048
        %v7434 = vunpack.c.l.b16 %v3049
        %v7435 = vunpack.c.l.b16 %v3050
        %v7436 = vunpack.c.l.b16 %v3051
        %v7437 = vunpack.c.l.b16 %v3052
        %v7438 = vunpack.c.l.b16 %v3053
        %v7439 = vunpack.c.l.b16 %v3054
        %v7440 = vunpack.c.l.b16 %v3055
        %v7441 = vunpack.c.l.b16 %v3056
        %v7442 = vunpack.c.l.b16 %v3057
        %v7443 = vunpack.c.l.b16 %v3058
        %v7444 = vunpack.c.l.b16 %v3059
        %v7445 = vunpack.c.l.b16 %v3060
        %v7446 = vunpack.c.l.b16 %v3061
        %v7447 = vunpack.c.l.b16 %v3062
        %v7448 = vunpack.c.l.b16 %v3063
        %v7449 = vunpack.c.l.b16 %v3064
        %v7450 = vunpack.c.l.b16 %v3065
        %v7451 = vunpack.c.l.b16 %v3066
        %v7452 = vunpack.c.l.b16 %v3067
        %v7453 = vunpack.c.l.b16 %v3068
        %v7454 = vunpack.c.l.b16 %v3069
        %v7455 = vunpack.c.l.b16 %v3070
        %v7456 = vunpack.c.l.b16 %v3071
        %v7457 = vunpack.c.l.b16 %v3072
        %v7458 = vunpack.c.l.b16 %v3073
        %v7459 = vunpack.c.l.b16 %v3074
        %v7460 = vunpack.c.l.b16 %v3075
        %v7461 = vunpack.c.l.b16 %v3076
        %v7462 = vunpack.c.l.b16 %v3077
        %v7463 = vunpack.c.l.b16 %v3078
        %v7464 = vunpack.c.l.b16 %v3079
        %v7465 = vunpack.c.l.b16 %v3080
        %v7466 = vunpack.c.l.b16 %v3081
        %v7467 = vunpack.c.l.b16 %v3082
        %v7468 = vunpack.c.l.b16 %v3083
        %v7469 = vunpack.c.l.b16 %v3084
        %v7470 = vunpack.c.l.b16 %v3085
        %v7471 = vunpack.c.l.b16 %v3086
        %v7472 = vunpack.c.l.b16 %v3087
        %v7473 = vunpack.c.l.b16 %v3088
        %v7474 = vunpack.c.l.b16 %v3089
        %v7475 = vunpack.c.l.b16 %v3090
        %v7476 = vunpack.c.l.b16 %v3091
        %v7477 = vunpack.c.l.b16 %v3092
        %v7478 = vunpack.c.l.b16 %v3093
        %v7479 = vunpack.c.l.b16 %v3094
        %v7480 = vunpack.c.l.b16 %v3095
        %v7481 = vunpack.c.l.b16 %v3096
        %v7482 = vunpack.c.l.b16 %v3097
        %v7483 = vunpack.c.l.b16 %v3098
        %v7484 = vunpack.c.l.b16 %v3099
        %v7485 = vunpack.c.l.b16 %v3100
        %v7486 = vunpack.c.l.b16 %v3101
        %v7487 = vunpack.c.l.b16 %v3102
        %v7488 = vunpack.c.l.b16 %v3103
        %v7489 = vunpack.c.l.b16 %v3104
        %v7490 = vunpack.c.l.b16 %v3105
        %v7491 = vunpack.c.l.b16 %v3106
        %v7492 = vunpack.c.l.b16 %v3107
        %v7493 = vunpack.c.l.b16 %v3108
        %v7494 = vunpack.c.l.b16 %v3109
        %v7495 = vunpack.c.l.b16 %v3110
        %v7496 = vunpack.c.l.b16 %v3111
        %v7497 = vunpack.c.l.b16 %v3112
        %v7498 = vunpack.c.l.b16 %v3113
        %v7499 = vunpack.c.l.b16 %v3114
        %v7500 = vunpack.c.l.b16 %v3115
        %v7501 = vunpack.c.l.b16 %v3116
        %v7502 = vunpack.c.l.b16 %v3117
        %v7503 = vunpack.c.l.b16 %v3118
        %v7504 = vunpack.c.l.b16 %v3119
        %v7505 = vunpack.c.l.b16 %v3120
        %v7506 = vunpack.c.l.b16 %v3121
        %v7507 = vunpack.c.l.b16 %v3122
        %v7508 = vunpack.c.l.b16 %v3123
        %v7509 = vunpack.c.l.b16 %v3124
        %v7510 = vunpack.c.l.b16 %v3125
        %v7511 = vunpack.c.l.b16 %v3126
        %v7512 = vunpack.c.l.b16 %v3127
        %v7513 = vunpack.c.l.b16 %v3128
        %v7514 = vunpack.c.l.b16 %v3129
        %v7515 = vunpack.c.l.b16 %v3130
        %v7516 = vunpack.c.l.b16 %v3131
        %v7517 = vpack.c.b16 %v7433, %v7432
        %v7518 = vpack.c.b16 %v7435, %v7434
        %v7519 = vpack.c.b16 %v7437, %v7436
        %v7520 = vpack.c.b16 %v7439, %v7438
        %v7521 = vpack.c.b16 %v7441, %v7440
        %v7522 = vpack.c.b16 %v7443, %v7442
        %v7523 = vpack.c.b16 %v7445, %v7444
        %v7524 = vpack.c.b16 %v7447, %v7446
        %v7525 = vpack.c.b16 %v7449, %v7448
        %v7526 = vpack.c.b16 %v7451, %v7450
        %v7527 = vpack.c.b16 %v7453, %v7452
        %v7528 = vpack.c.b16 %v7455, %v7454
        %v7529 = vpack.c.b16 %v7457, %v7456
        %v7530 = vpack.c.b16 %v7459, %v7458
        %v7531 = vpack.c.b16 %v7461, %v7460
        %v7532 = vpack.c.b16 %v7463, %v7462
        %v7533 = vpack.c.b16 %v7465, %v7464
        %v7534 = vpack.c.b16 %v7467, %v7466
        %v7535 = vpack.c.b16 %v7469, %v7468
        %v7536 = vpack.c.b16 %v7471, %v7470
        %v7537 = vpack.c.b16 %v7473, %v7472
        %v7538 = vpack.c.b16 %v7475, %v7474
        %v7539 = vpack.c.b16 %v7477, %v7476
        %v7540 = vpack.c.b16 %v7479, %v7478
        %v7541 = vpack.c.b16 %v7481, %v7480
        %v7542 = vpack.c.b16 %v7483, %v7482
        %v7543 = vpack.c.b16 %v7485, %v7484
        %v7544 = vpack.c.b16 %v7487, %v7486
        %v7545 = vpack.c.b16 %v7489, %v7488
        %v7546 = vpack.c.b16 %v7491, %v7490
        %v7547 = vpack.c.b16 %v7493, %v7492
        %v7548 = vpack.c.b16 %v7495, %v7494
        %v7549 = vpack.c.b16 %v7497, %v7496
        %v7550 = vpack.c.b16 %v7499, %v7498
        %v7551 = vpack.c.b16 %v7501, %v7500
        %v7552 = vpack.c.b16 %v7503, %v7502
        %v7553 = vpack.c.b16 %v7505, %v7504
        %v7554 = vpack.c.b16 %v7507, %v7506
        %v7555 = vpack.c.b16 %v7509, %v7508
        %v7556 = vpack.c.b16 %v7511, %v7510
        %v7557 = vpack.c.b16 %v7513, %v7512
        %v7558 = vpack.c.b16 %v7515, %v7514
        %v7559 = vpack.c.b16 %v7516, %v7516
        %v7602 = vsel %vm3740, %v7341, 0
        %v7605 = vsel %vm423, %v7559, 0
        %7607 = vmatpush.bf16.msra.mxu0 %v7524
        %7608 = vmatpush.bf16.msra.mxu0 %v7523
        %7609 = vmatpush.bf16.msra.mxu0 %v7522
        %7610 = vmatpush.bf16.msra.mxu0 %v7521
        %7611 = vmatpush.bf16.msra.mxu0 %v7520
        %7612 = vmatpush.bf16.msra.mxu0 %v7519
        %7613 = vmatpush.bf16.msra.mxu0 %v7518
        %7614 = vmatpush.bf16.msra.mxu0 %v7517
        %7615 = vmatmul.bf16.gmra.mxu0 %v7336
        %v7616 = vpop.f32.mrf.mxu0
        %v7617 = vadd.f32 0.0, %v7616
        %v7618 = vpop.f32.mrf.mxu0
        %7619 = vdwg.mxu0
        %7620 = vmatpush.bf16.msra.mxu0 %v7532
        %7621 = vmatpush.bf16.msra.mxu0 %v7531
        %7622 = vmatpush.bf16.msra.mxu0 %v7530
        %7623 = vmatpush.bf16.msra.mxu0 %v7529
        %7624 = vmatpush.bf16.msra.mxu0 %v7528
        %7625 = vmatpush.bf16.msra.mxu0 %v7527
        %7626 = vmatpush.bf16.msra.mxu0 %v7526
        %7627 = vmatpush.bf16.msra.mxu0 %v7525
        %7628 = vmatmul.bf16.gmra.mxu0 %v7337
        %v7629 = vpop.f32.mrf.mxu0
        %v7630 = vadd.f32 %v7617, %v7629
        %v7631 = vpop.f32.mrf.mxu0
        %7632 = vdwg.mxu0
        %7633 = vmatpush.bf16.msra.mxu0 %v7540
        %7634 = vmatpush.bf16.msra.mxu0 %v7539
        %7635 = vmatpush.bf16.msra.mxu0 %v7538
        %7636 = vmatpush.bf16.msra.mxu0 %v7537
        %7637 = vmatpush.bf16.msra.mxu0 %v7536
        %7638 = vmatpush.bf16.msra.mxu0 %v7535
        %7639 = vmatpush.bf16.msra.mxu0 %v7534
        %7640 = vmatpush.bf16.msra.mxu0 %v7533
        %7641 = vmatmul.bf16.gmra.mxu0 %v7338
        %v7642 = vpop.f32.mrf.mxu0
        %v7643 = vadd.f32 %v7630, %v7642
        %v7644 = vpop.f32.mrf.mxu0
        %7645 = vdwg.mxu0
        %7646 = vmatpush.bf16.msra.mxu0 %v7548
        %7647 = vmatpush.bf16.msra.mxu0 %v7547
        %7648 = vmatpush.bf16.msra.mxu0 %v7546
        %7649 = vmatpush.bf16.msra.mxu0 %v7545
        %7650 = vmatpush.bf16.msra.mxu0 %v7544
        %7651 = vmatpush.bf16.msra.mxu0 %v7543
        %7652 = vmatpush.bf16.msra.mxu0 %v7542
        %7653 = vmatpush.bf16.msra.mxu0 %v7541
        %7654 = vmatmul.bf16.gmra.mxu0 %v7339
        %v7655 = vpop.f32.mrf.mxu0
        %v7656 = vadd.f32 %v7643, %v7655
        %v7657 = vpop.f32.mrf.mxu0
        %7658 = vdwg.mxu0
        %7659 = vmatpush.bf16.msra.mxu0 %v7556
        %7660 = vmatpush.bf16.msra.mxu0 %v7555
        %7661 = vmatpush.bf16.msra.mxu0 %v7554
        %7662 = vmatpush.bf16.msra.mxu0 %v7553
        %7663 = vmatpush.bf16.msra.mxu0 %v7552
        %7664 = vmatpush.bf16.msra.mxu0 %v7551
        %7665 = vmatpush.bf16.msra.mxu0 %v7550
        %7666 = vmatpush.bf16.msra.mxu0 %v7549
        %7667 = vmatmul.bf16.gmra.mxu0 %v7340
        %v7668 = vpop.f32.mrf.mxu0
        %v7669 = vadd.f32 %v7656, %v7668
        %v7670 = vpop.f32.mrf.mxu0
        %7671 = vdwg.mxu0
        %7672 = vmatpush.bf16.msra.mxu0 0
        %7673 = vmatpush.bf16.msra.mxu0 0
        %7674 = vmatpush.bf16.msra.mxu0 0
        %7675 = vmatpush.bf16.msra.mxu0 0
        %7676 = vmatpush.bf16.msra.mxu0 0
        %7677 = vmatpush.bf16.msra.mxu0 %v7605
        %7678 = vmatpush.bf16.msra.mxu0 %v7558
        %7679 = vmatpush.bf16.msra.mxu0 %v7557
        %7680 = vmatmul.bf16.gmra.mxu0 %v7602
        %v7681 = vpop.f32.mrf.mxu0
        %v7682 = vadd.f32 %v7669, %v7681
        %v7683 = vpop.f32.mrf.mxu0
        %7684 = vdwg.mxu0
        %7686 = vst [vmem:[#allocation1] ss:$9 sm:$0xff] %v2108
        %v7687 = vld [vmem:[#allocation1] sm:$0xff]
        %v7688 = vld [vmem:[#allocation1 + $0x9] sm:$0xff]
        %v7689 = vld [vmem:[#allocation1 + $0x12] sm:$0xff]
        %v7690 = vld [vmem:[#allocation1 + $0x1b] sm:$0xff]
        %v7691 = vld [vmem:[#allocation1 + $0x24] sm:$0xff]
        %v7692 = vld [vmem:[#allocation1 + $0x2d] sm:$0xff]
        %v7783 = vunpack.c.l.b16 %v3132
        %v7784 = vunpack.c.l.b16 %v3133
        %v7785 = vunpack.c.l.b16 %v3134
        %v7786 = vunpack.c.l.b16 %v3135
        %v7787 = vunpack.c.l.b16 %v3136
        %v7788 = vunpack.c.l.b16 %v3137
        %v7789 = vunpack.c.l.b16 %v3138
        %v7790 = vunpack.c.l.b16 %v3139
        %v7791 = vunpack.c.l.b16 %v3140
        %v7792 = vunpack.c.l.b16 %v3141
        %v7793 = vunpack.c.l.b16 %v3142
        %v7794 = vunpack.c.l.b16 %v3143
        %v7795 = vunpack.c.l.b16 %v3144
        %v7796 = vunpack.c.l.b16 %v3145
        %v7797 = vunpack.c.l.b16 %v3146
        %v7798 = vunpack.c.l.b16 %v3147
        %v7799 = vunpack.c.l.b16 %v3148
        %v7800 = vunpack.c.l.b16 %v3149
        %v7801 = vunpack.c.l.b16 %v3150
        %v7802 = vunpack.c.l.b16 %v3151
        %v7803 = vunpack.c.l.b16 %v3152
        %v7804 = vunpack.c.l.b16 %v3153
        %v7805 = vunpack.c.l.b16 %v3154
        %v7806 = vunpack.c.l.b16 %v3155
        %v7807 = vunpack.c.l.b16 %v3156
        %v7808 = vunpack.c.l.b16 %v3157
        %v7809 = vunpack.c.l.b16 %v3158
        %v7810 = vunpack.c.l.b16 %v3159
        %v7811 = vunpack.c.l.b16 %v3160
        %v7812 = vunpack.c.l.b16 %v3161
        %v7813 = vunpack.c.l.b16 %v3162
        %v7814 = vunpack.c.l.b16 %v3163
        %v7815 = vunpack.c.l.b16 %v3164
        %v7816 = vunpack.c.l.b16 %v3165
        %v7817 = vunpack.c.l.b16 %v3166
        %v7818 = vunpack.c.l.b16 %v3167
        %v7819 = vunpack.c.l.b16 %v3168
        %v7820 = vunpack.c.l.b16 %v3169
        %v7821 = vunpack.c.l.b16 %v3170
        %v7822 = vunpack.c.l.b16 %v3171
        %v7823 = vunpack.c.l.b16 %v3172
        %v7824 = vunpack.c.l.b16 %v3173
        %v7825 = vunpack.c.l.b16 %v3174
        %v7826 = vunpack.c.l.b16 %v3175
        %v7827 = vunpack.c.l.b16 %v3176
        %v7828 = vunpack.c.l.b16 %v3177
        %v7829 = vunpack.c.l.b16 %v3178
        %v7830 = vunpack.c.l.b16 %v3179
        %v7831 = vunpack.c.l.b16 %v3180
        %v7832 = vunpack.c.l.b16 %v3181
        %v7833 = vunpack.c.l.b16 %v3182
        %v7834 = vunpack.c.l.b16 %v3183
        %v7835 = vunpack.c.l.b16 %v3184
        %v7836 = vunpack.c.l.b16 %v3185
        %v7837 = vunpack.c.l.b16 %v3186
        %v7838 = vunpack.c.l.b16 %v3187
        %v7839 = vunpack.c.l.b16 %v3188
        %v7840 = vunpack.c.l.b16 %v3189
        %v7841 = vunpack.c.l.b16 %v3190
        %v7842 = vunpack.c.l.b16 %v3191
        %v7843 = vunpack.c.l.b16 %v3192
        %v7844 = vunpack.c.l.b16 %v3193
        %v7845 = vunpack.c.l.b16 %v3194
        %v7846 = vunpack.c.l.b16 %v3195
        %v7847 = vunpack.c.l.b16 %v3196
        %v7848 = vunpack.c.l.b16 %v3197
        %v7849 = vunpack.c.l.b16 %v3198
        %v7850 = vunpack.c.l.b16 %v3199
        %v7851 = vunpack.c.l.b16 %v3200
        %v7852 = vunpack.c.l.b16 %v3201
        %v7853 = vunpack.c.l.b16 %v3202
        %v7854 = vunpack.c.l.b16 %v3203
        %v7855 = vunpack.c.l.b16 %v3204
        %v7856 = vunpack.c.l.b16 %v3205
        %v7857 = vunpack.c.l.b16 %v3206
        %v7858 = vunpack.c.l.b16 %v3207
        %v7859 = vunpack.c.l.b16 %v3208
        %v7860 = vunpack.c.l.b16 %v3209
        %v7861 = vunpack.c.l.b16 %v3210
        %v7862 = vunpack.c.l.b16 %v3211
        %v7863 = vunpack.c.l.b16 %v3212
        %v7864 = vunpack.c.l.b16 %v3213
        %v7865 = vunpack.c.l.b16 %v3214
        %v7866 = vunpack.c.l.b16 %v3215
        %v7867 = vunpack.c.l.b16 %v3216
        %v7868 = vpack.c.b16 %v7784, %v7783
        %v7869 = vpack.c.b16 %v7786, %v7785
        %v7870 = vpack.c.b16 %v7788, %v7787
        %v7871 = vpack.c.b16 %v7790, %v7789
        %v7872 = vpack.c.b16 %v7792, %v7791
        %v7873 = vpack.c.b16 %v7794, %v7793
        %v7874 = vpack.c.b16 %v7796, %v7795
        %v7875 = vpack.c.b16 %v7798, %v7797
        %v7876 = vpack.c.b16 %v7800, %v7799
        %v7877 = vpack.c.b16 %v7802, %v7801
        %v7878 = vpack.c.b16 %v7804, %v7803
        %v7879 = vpack.c.b16 %v7806, %v7805
        %v7880 = vpack.c.b16 %v7808, %v7807
        %v7881 = vpack.c.b16 %v7810, %v7809
        %v7882 = vpack.c.b16 %v7812, %v7811
        %v7883 = vpack.c.b16 %v7814, %v7813
        %v7884 = vpack.c.b16 %v7816, %v7815
        %v7885 = vpack.c.b16 %v7818, %v7817
        %v7886 = vpack.c.b16 %v7820, %v7819
        %v7887 = vpack.c.b16 %v7822, %v7821
        %v7888 = vpack.c.b16 %v7824, %v7823
        %v7889 = vpack.c.b16 %v7826, %v7825
        %v7890 = vpack.c.b16 %v7828, %v7827
        %v7891 = vpack.c.b16 %v7830, %v7829
        %v7892 = vpack.c.b16 %v7832, %v7831
        %v7893 = vpack.c.b16 %v7834, %v7833
        %v7894 = vpack.c.b16 %v7836, %v7835
        %v7895 = vpack.c.b16 %v7838, %v7837
        %v7896 = vpack.c.b16 %v7840, %v7839
        %v7897 = vpack.c.b16 %v7842, %v7841
        %v7898 = vpack.c.b16 %v7844, %v7843
        %v7899 = vpack.c.b16 %v7846, %v7845
        %v7900 = vpack.c.b16 %v7848, %v7847
        %v7901 = vpack.c.b16 %v7850, %v7849
        %v7902 = vpack.c.b16 %v7852, %v7851
        %v7903 = vpack.c.b16 %v7854, %v7853
        %v7904 = vpack.c.b16 %v7856, %v7855
        %v7905 = vpack.c.b16 %v7858, %v7857
        %v7906 = vpack.c.b16 %v7860, %v7859
        %v7907 = vpack.c.b16 %v7862, %v7861
        %v7908 = vpack.c.b16 %v7864, %v7863
        %v7909 = vpack.c.b16 %v7866, %v7865
        %v7910 = vpack.c.b16 %v7867, %v7867
        %v7953 = vsel %vm3740, %v7692, 0
        %v7956 = vsel %vm423, %v7910, 0
        %7958 = vmatpush.bf16.msra.mxu0 %v7875
        %7959 = vmatpush.bf16.msra.mxu0 %v7874
        %7960 = vmatpush.bf16.msra.mxu0 %v7873
        %7961 = vmatpush.bf16.msra.mxu0 %v7872
        %7962 = vmatpush.bf16.msra.mxu0 %v7871
        %7963 = vmatpush.bf16.msra.mxu0 %v7870
        %7964 = vmatpush.bf16.msra.mxu0 %v7869
        %7965 = vmatpush.bf16.msra.mxu0 %v7868
        %7966 = vmatmul.bf16.gmra.mxu0 %v7687
        %v7967 = vpop.f32.mrf.mxu0
        %v7968 = vadd.f32 0.0, %v7967
        %v7969 = vpop.f32.mrf.mxu0
        %7970 = vdwg.mxu0
        %7971 = vmatpush.bf16.msra.mxu0 %v7883
        %7972 = vmatpush.bf16.msra.mxu0 %v7882
        %7973 = vmatpush.bf16.msra.mxu0 %v7881
        %7974 = vmatpush.bf16.msra.mxu0 %v7880
        %7975 = vmatpush.bf16.msra.mxu0 %v7879
        %7976 = vmatpush.bf16.msra.mxu0 %v7878
        %7977 = vmatpush.bf16.msra.mxu0 %v7877
        %7978 = vmatpush.bf16.msra.mxu0 %v7876
        %7979 = vmatmul.bf16.gmra.mxu0 %v7688
        %v7980 = vpop.f32.mrf.mxu0
        %v7981 = vadd.f32 %v7968, %v7980
        %v7982 = vpop.f32.mrf.mxu0
        %7983 = vdwg.mxu0
        %7984 = vmatpush.bf16.msra.mxu0 %v7891
        %7985 = vmatpush.bf16.msra.mxu0 %v7890
        %7986 = vmatpush.bf16.msra.mxu0 %v7889
        %7987 = vmatpush.bf16.msra.mxu0 %v7888
        %7988 = vmatpush.bf16.msra.mxu0 %v7887
        %7989 = vmatpush.bf16.msra.mxu0 %v7886
        %7990 = vmatpush.bf16.msra.mxu0 %v7885
        %7991 = vmatpush.bf16.msra.mxu0 %v7884
        %7992 = vmatmul.bf16.gmra.mxu0 %v7689
        %v7993 = vpop.f32.mrf.mxu0
        %v7994 = vadd.f32 %v7981, %v7993
        %v7995 = vpop.f32.mrf.mxu0
        %7996 = vdwg.mxu0
        %7997 = vmatpush.bf16.msra.mxu0 %v7899
        %7998 = vmatpush.bf16.msra.mxu0 %v7898
        %7999 = vmatpush.bf16.msra.mxu0 %v7897
        %8000 = vmatpush.bf16.msra.mxu0 %v7896
        %8001 = vmatpush.bf16.msra.mxu0 %v7895
        %8002 = vmatpush.bf16.msra.mxu0 %v7894
        %8003 = vmatpush.bf16.msra.mxu0 %v7893
        %8004 = vmatpush.bf16.msra.mxu0 %v7892
        %8005 = vmatmul.bf16.gmra.mxu0 %v7690
        %v8006 = vpop.f32.mrf.mxu0
        %v8007 = vadd.f32 %v7994, %v8006
        %v8008 = vpop.f32.mrf.mxu0
        %8009 = vdwg.mxu0
        %8010 = vmatpush.bf16.msra.mxu0 %v7907
        %8011 = vmatpush.bf16.msra.mxu0 %v7906
        %8012 = vmatpush.bf16.msra.mxu0 %v7905
        %8013 = vmatpush.bf16.msra.mxu0 %v7904
        %8014 = vmatpush.bf16.msra.mxu0 %v7903
        %8015 = vmatpush.bf16.msra.mxu0 %v7902
        %8016 = vmatpush.bf16.msra.mxu0 %v7901
        %8017 = vmatpush.bf16.msra.mxu0 %v7900
        %8018 = vmatmul.bf16.gmra.mxu0 %v7691
        %v8019 = vpop.f32.mrf.mxu0
        %v8020 = vadd.f32 %v8007, %v8019
        %v8021 = vpop.f32.mrf.mxu0
        %8022 = vdwg.mxu0
        %8023 = vmatpush.bf16.msra.mxu0 0
        %8024 = vmatpush.bf16.msra.mxu0 0
        %8025 = vmatpush.bf16.msra.mxu0 0
        %8026 = vmatpush.bf16.msra.mxu0 0
        %8027 = vmatpush.bf16.msra.mxu0 0
        %8028 = vmatpush.bf16.msra.mxu0 %v7956
        %8029 = vmatpush.bf16.msra.mxu0 %v7909
        %8030 = vmatpush.bf16.msra.mxu0 %v7908
        %8031 = vmatmul.bf16.gmra.mxu0 %v7953
        %v8032 = vpop.f32.mrf.mxu0
        %v8033 = vadd.f32 %v8020, %v8032
        %v8034 = vpop.f32.mrf.mxu0
        %8035 = vdwg.mxu0
        %8037 = vst [vmem:[#allocation1] ss:$9 sm:$0xff] %v2109
        %v8038 = vld [vmem:[#allocation1] sm:$0xff]
        %v8039 = vld [vmem:[#allocation1 + $0x9] sm:$0xff]
        %v8040 = vld [vmem:[#allocation1 + $0x12] sm:$0xff]
        %v8041 = vld [vmem:[#allocation1 + $0x1b] sm:$0xff]
        %v8042 = vld [vmem:[#allocation1 + $0x24] sm:$0xff]
        %v8043 = vld [vmem:[#allocation1 + $0x2d] sm:$0xff]
        %v8134 = vunpack.c.l.b16 %v3217
        %v8135 = vunpack.c.l.b16 %v3218
        %v8136 = vunpack.c.l.b16 %v3219
        %v8137 = vunpack.c.l.b16 %v3220
        %v8138 = vunpack.c.l.b16 %v3221
        %v8139 = vunpack.c.l.b16 %v3222
        %v8140 = vunpack.c.l.b16 %v3223
        %v8141 = vunpack.c.l.b16 %v3224
        %v8142 = vunpack.c.l.b16 %v3225
        %v8143 = vunpack.c.l.b16 %v3226
        %v8144 = vunpack.c.l.b16 %v3227
        %v8145 = vunpack.c.l.b16 %v3228
        %v8146 = vunpack.c.l.b16 %v3229
        %v8147 = vunpack.c.l.b16 %v3230
        %v8148 = vunpack.c.l.b16 %v3231
        %v8149 = vunpack.c.l.b16 %v3232
        %v8150 = vunpack.c.l.b16 %v3233
        %v8151 = vunpack.c.l.b16 %v3234
        %v8152 = vunpack.c.l.b16 %v3235
        %v8153 = vunpack.c.l.b16 %v3236
        %v8154 = vunpack.c.l.b16 %v3237
        %v8155 = vunpack.c.l.b16 %v3238
        %v8156 = vunpack.c.l.b16 %v3239
        %v8157 = vunpack.c.l.b16 %v3240
        %v8158 = vunpack.c.l.b16 %v3241
        %v8159 = vunpack.c.l.b16 %v3242
        %v8160 = vunpack.c.l.b16 %v3243
        %v8161 = vunpack.c.l.b16 %v3244
        %v8162 = vunpack.c.l.b16 %v3245
        %v8163 = vunpack.c.l.b16 %v3246
        %v8164 = vunpack.c.l.b16 %v3247
        %v8165 = vunpack.c.l.b16 %v3248
        %v8166 = vunpack.c.l.b16 %v3249
        %v8167 = vunpack.c.l.b16 %v3250
        %v8168 = vunpack.c.l.b16 %v3251
        %v8169 = vunpack.c.l.b16 %v3252
        %v8170 = vunpack.c.l.b16 %v3253
        %v8171 = vunpack.c.l.b16 %v3254
        %v8172 = vunpack.c.l.b16 %v3255
        %v8173 = vunpack.c.l.b16 %v3256
        %v8174 = vunpack.c.l.b16 %v3257
        %v8175 = vunpack.c.l.b16 %v3258
        %v8176 = vunpack.c.l.b16 %v3259
        %v8177 = vunpack.c.l.b16 %v3260
        %v8178 = vunpack.c.l.b16 %v3261
        %v8179 = vunpack.c.l.b16 %v3262
        %v8180 = vunpack.c.l.b16 %v3263
        %v8181 = vunpack.c.l.b16 %v3264
        %v8182 = vunpack.c.l.b16 %v3265
        %v8183 = vunpack.c.l.b16 %v3266
        %v8184 = vunpack.c.l.b16 %v3267
        %v8185 = vunpack.c.l.b16 %v3268
        %v8186 = vunpack.c.l.b16 %v3269
        %v8187 = vunpack.c.l.b16 %v3270
        %v8188 = vunpack.c.l.b16 %v3271
        %v8189 = vunpack.c.l.b16 %v3272
        %v8190 = vunpack.c.l.b16 %v3273
        %v8191 = vunpack.c.l.b16 %v3274
        %v8192 = vunpack.c.l.b16 %v3275
        %v8193 = vunpack.c.l.b16 %v3276
        %v8194 = vunpack.c.l.b16 %v3277
        %v8195 = vunpack.c.l.b16 %v3278
        %v8196 = vunpack.c.l.b16 %v3279
        %v8197 = vunpack.c.l.b16 %v3280
        %v8198 = vunpack.c.l.b16 %v3281
        %v8199 = vunpack.c.l.b16 %v3282
        %v8200 = vunpack.c.l.b16 %v3283
        %v8201 = vunpack.c.l.b16 %v3284
        %v8202 = vunpack.c.l.b16 %v3285
        %v8203 = vunpack.c.l.b16 %v3286
        %v8204 = vunpack.c.l.b16 %v3287
        %v8205 = vunpack.c.l.b16 %v3288
        %v8206 = vunpack.c.l.b16 %v3289
        %v8207 = vunpack.c.l.b16 %v3290
        %v8208 = vunpack.c.l.b16 %v3291
        %v8209 = vunpack.c.l.b16 %v3292
        %v8210 = vunpack.c.l.b16 %v3293
        %v8211 = vunpack.c.l.b16 %v3294
        %v8212 = vunpack.c.l.b16 %v3295
        %v8213 = vunpack.c.l.b16 %v3296
        %v8214 = vunpack.c.l.b16 %v3297
        %v8215 = vunpack.c.l.b16 %v3298
        %v8216 = vunpack.c.l.b16 %v3299
        %v8217 = vunpack.c.l.b16 %v3300
        %v8218 = vunpack.c.l.b16 %v3301
        %v8219 = vpack.c.b16 %v8135, %v8134
        %v8220 = vpack.c.b16 %v8137, %v8136
        %v8221 = vpack.c.b16 %v8139, %v8138
        %v8222 = vpack.c.b16 %v8141, %v8140
        %v8223 = vpack.c.b16 %v8143, %v8142
        %v8224 = vpack.c.b16 %v8145, %v8144
        %v8225 = vpack.c.b16 %v8147, %v8146
        %v8226 = vpack.c.b16 %v8149, %v8148
        %v8227 = vpack.c.b16 %v8151, %v8150
        %v8228 = vpack.c.b16 %v8153, %v8152
        %v8229 = vpack.c.b16 %v8155, %v8154
        %v8230 = vpack.c.b16 %v8157, %v8156
        %v8231 = vpack.c.b16 %v8159, %v8158
        %v8232 = vpack.c.b16 %v8161, %v8160
        %v8233 = vpack.c.b16 %v8163, %v8162
        %v8234 = vpack.c.b16 %v8165, %v8164
        %v8235 = vpack.c.b16 %v8167, %v8166
        %v8236 = vpack.c.b16 %v8169, %v8168
        %v8237 = vpack.c.b16 %v8171, %v8170
        %v8238 = vpack.c.b16 %v8173, %v8172
        %v8239 = vpack.c.b16 %v8175, %v8174
        %v8240 = vpack.c.b16 %v8177, %v8176
        %v8241 = vpack.c.b16 %v8179, %v8178
        %v8242 = vpack.c.b16 %v8181, %v8180
        %v8243 = vpack.c.b16 %v8183, %v8182
        %v8244 = vpack.c.b16 %v8185, %v8184
        %v8245 = vpack.c.b16 %v8187, %v8186
        %v8246 = vpack.c.b16 %v8189, %v8188
        %v8247 = vpack.c.b16 %v8191, %v8190
        %v8248 = vpack.c.b16 %v8193, %v8192
        %v8249 = vpack.c.b16 %v8195, %v8194
        %v8250 = vpack.c.b16 %v8197, %v8196
        %v8251 = vpack.c.b16 %v8199, %v8198
        %v8252 = vpack.c.b16 %v8201, %v8200
        %v8253 = vpack.c.b16 %v8203, %v8202
        %v8254 = vpack.c.b16 %v8205, %v8204
        %v8255 = vpack.c.b16 %v8207, %v8206
        %v8256 = vpack.c.b16 %v8209, %v8208
        %v8257 = vpack.c.b16 %v8211, %v8210
        %v8258 = vpack.c.b16 %v8213, %v8212
        %v8259 = vpack.c.b16 %v8215, %v8214
        %v8260 = vpack.c.b16 %v8217, %v8216
        %v8261 = vpack.c.b16 %v8218, %v8218
        %v8304 = vsel %vm3740, %v8043, 0
        %v8307 = vsel %vm423, %v8261, 0
        %8309 = vmatpush.bf16.msra.mxu0 %v8226
        %8310 = vmatpush.bf16.msra.mxu0 %v8225
        %8311 = vmatpush.bf16.msra.mxu0 %v8224
        %8312 = vmatpush.bf16.msra.mxu0 %v8223
        %8313 = vmatpush.bf16.msra.mxu0 %v8222
        %8314 = vmatpush.bf16.msra.mxu0 %v8221
        %8315 = vmatpush.bf16.msra.mxu0 %v8220
        %8316 = vmatpush.bf16.msra.mxu0 %v8219
        %8317 = vmatmul.bf16.gmra.mxu0 %v8038
        %v8318 = vpop.f32.mrf.mxu0
        %v8319 = vadd.f32 0.0, %v8318
        %v8320 = vpop.f32.mrf.mxu0
        %8321 = vdwg.mxu0
        %8322 = vmatpush.bf16.msra.mxu0 %v8234
        %8323 = vmatpush.bf16.msra.mxu0 %v8233
        %8324 = vmatpush.bf16.msra.mxu0 %v8232
        %8325 = vmatpush.bf16.msra.mxu0 %v8231
        %8326 = vmatpush.bf16.msra.mxu0 %v8230
        %8327 = vmatpush.bf16.msra.mxu0 %v8229
        %8328 = vmatpush.bf16.msra.mxu0 %v8228
        %8329 = vmatpush.bf16.msra.mxu0 %v8227
        %8330 = vmatmul.bf16.gmra.mxu0 %v8039
        %v8331 = vpop.f32.mrf.mxu0
        %v8332 = vadd.f32 %v8319, %v8331
        %v8333 = vpop.f32.mrf.mxu0
        %8334 = vdwg.mxu0
        %8335 = vmatpush.bf16.msra.mxu0 %v8242
        %8336 = vmatpush.bf16.msra.mxu0 %v8241
        %8337 = vmatpush.bf16.msra.mxu0 %v8240
        %8338 = vmatpush.bf16.msra.mxu0 %v8239
        %8339 = vmatpush.bf16.msra.mxu0 %v8238
        %8340 = vmatpush.bf16.msra.mxu0 %v8237
        %8341 = vmatpush.bf16.msra.mxu0 %v8236
        %8342 = vmatpush.bf16.msra.mxu0 %v8235
        %8343 = vmatmul.bf16.gmra.mxu0 %v8040
        %v8344 = vpop.f32.mrf.mxu0
        %v8345 = vadd.f32 %v8332, %v8344
        %v8346 = vpop.f32.mrf.mxu0
        %8347 = vdwg.mxu0
        %8348 = vmatpush.bf16.msra.mxu0 %v8250
        %8349 = vmatpush.bf16.msra.mxu0 %v8249
        %8350 = vmatpush.bf16.msra.mxu0 %v8248
        %8351 = vmatpush.bf16.msra.mxu0 %v8247
        %8352 = vmatpush.bf16.msra.mxu0 %v8246
        %8353 = vmatpush.bf16.msra.mxu0 %v8245
        %8354 = vmatpush.bf16.msra.mxu0 %v8244
        %8355 = vmatpush.bf16.msra.mxu0 %v8243
        %8356 = vmatmul.bf16.gmra.mxu0 %v8041
        %v8357 = vpop.f32.mrf.mxu0
        %v8358 = vadd.f32 %v8345, %v8357
        %v8359 = vpop.f32.mrf.mxu0
        %8360 = vdwg.mxu0
        %8361 = vmatpush.bf16.msra.mxu0 %v8258
        %8362 = vmatpush.bf16.msra.mxu0 %v8257
        %8363 = vmatpush.bf16.msra.mxu0 %v8256
        %8364 = vmatpush.bf16.msra.mxu0 %v8255
        %8365 = vmatpush.bf16.msra.mxu0 %v8254
        %8366 = vmatpush.bf16.msra.mxu0 %v8253
        %8367 = vmatpush.bf16.msra.mxu0 %v8252
        %8368 = vmatpush.bf16.msra.mxu0 %v8251
        %8369 = vmatmul.bf16.gmra.mxu0 %v8042
        %v8370 = vpop.f32.mrf.mxu0
        %v8371 = vadd.f32 %v8358, %v8370
        %v8372 = vpop.f32.mrf.mxu0
        %8373 = vdwg.mxu0
        %8374 = vmatpush.bf16.msra.mxu0 0
        %8375 = vmatpush.bf16.msra.mxu0 0
        %8376 = vmatpush.bf16.msra.mxu0 0
        %8377 = vmatpush.bf16.msra.mxu0 0
        %8378 = vmatpush.bf16.msra.mxu0 0
        %8379 = vmatpush.bf16.msra.mxu0 %v8307
        %8380 = vmatpush.bf16.msra.mxu0 %v8260
        %8381 = vmatpush.bf16.msra.mxu0 %v8259
        %8382 = vmatmul.bf16.gmra.mxu0 %v8304
        %v8383 = vpop.f32.mrf.mxu0
        %v8384 = vadd.f32 %v8371, %v8383
        %v8385 = vpop.f32.mrf.mxu0
        %8386 = vdwg.mxu0
        %8388 = vst [vmem:[#allocation1] ss:$9 sm:$0xff] %v2110
        %v8389 = vld [vmem:[#allocation1] sm:$0xff]
        %v8390 = vld [vmem:[#allocation1 + $0x9] sm:$0xff]
        %v8391 = vld [vmem:[#allocation1 + $0x12] sm:$0xff]
        %v8392 = vld [vmem:[#allocation1 + $0x1b] sm:$0xff]
        %v8393 = vld [vmem:[#allocation1 + $0x24] sm:$0xff]
        %v8394 = vld [vmem:[#allocation1 + $0x2d] sm:$0xff]
        %v8485 = vunpack.c.l.b16 %v3302
        %v8486 = vunpack.c.l.b16 %v3303
        %v8487 = vunpack.c.l.b16 %v3304
        %v8488 = vunpack.c.l.b16 %v3305
        %v8489 = vunpack.c.l.b16 %v3306
        %v8490 = vunpack.c.l.b16 %v3307
        %v8491 = vunpack.c.l.b16 %v3308
        %v8492 = vunpack.c.l.b16 %v3309
        %v8493 = vunpack.c.l.b16 %v3310
        %v8494 = vunpack.c.l.b16 %v3311
        %v8495 = vunpack.c.l.b16 %v3312
        %v8496 = vunpack.c.l.b16 %v3313
        %v8497 = vunpack.c.l.b16 %v3314
        %v8498 = vunpack.c.l.b16 %v3315
        %v8499 = vunpack.c.l.b16 %v3316
        %v8500 = vunpack.c.l.b16 %v3317
        %v8501 = vunpack.c.l.b16 %v3318
        %v8502 = vunpack.c.l.b16 %v3319
        %v8503 = vunpack.c.l.b16 %v3320
        %v8504 = vunpack.c.l.b16 %v3321
        %v8505 = vunpack.c.l.b16 %v3322
        %v8506 = vunpack.c.l.b16 %v3323
        %v8507 = vunpack.c.l.b16 %v3324
        %v8508 = vunpack.c.l.b16 %v3325
        %v8509 = vunpack.c.l.b16 %v3326
        %v8510 = vunpack.c.l.b16 %v3327
        %v8511 = vunpack.c.l.b16 %v3328
        %v8512 = vunpack.c.l.b16 %v3329
        %v8513 = vunpack.c.l.b16 %v3330
        %v8514 = vunpack.c.l.b16 %v3331
        %v8515 = vunpack.c.l.b16 %v3332
        %v8516 = vunpack.c.l.b16 %v3333
        %v8517 = vunpack.c.l.b16 %v3334
        %v8518 = vunpack.c.l.b16 %v3335
        %v8519 = vunpack.c.l.b16 %v3336
        %v8520 = vunpack.c.l.b16 %v3337
        %v8521 = vunpack.c.l.b16 %v3338
        %v8522 = vunpack.c.l.b16 %v3339
        %v8523 = vunpack.c.l.b16 %v3340
        %v8524 = vunpack.c.l.b16 %v3341
        %v8525 = vunpack.c.l.b16 %v3342
        %v8526 = vunpack.c.l.b16 %v3343
        %v8527 = vunpack.c.l.b16 %v3344
        %v8528 = vunpack.c.l.b16 %v3345
        %v8529 = vunpack.c.l.b16 %v3346
        %v8530 = vunpack.c.l.b16 %v3347
        %v8531 = vunpack.c.l.b16 %v3348
        %v8532 = vunpack.c.l.b16 %v3349
        %v8533 = vunpack.c.l.b16 %v3350
        %v8534 = vunpack.c.l.b16 %v3351
        %v8535 = vunpack.c.l.b16 %v3352
        %v8536 = vunpack.c.l.b16 %v3353
        %v8537 = vunpack.c.l.b16 %v3354
        %v8538 = vunpack.c.l.b16 %v3355
        %v8539 = vunpack.c.l.b16 %v3356
        %v8540 = vunpack.c.l.b16 %v3357
        %v8541 = vunpack.c.l.b16 %v3358
        %v8542 = vunpack.c.l.b16 %v3359
        %v8543 = vunpack.c.l.b16 %v3360
        %v8544 = vunpack.c.l.b16 %v3361
        %v8545 = vunpack.c.l.b16 %v3362
        %v8546 = vunpack.c.l.b16 %v3363
        %v8547 = vunpack.c.l.b16 %v3364
        %v8548 = vunpack.c.l.b16 %v3365
        %v8549 = vunpack.c.l.b16 %v3366
        %v8550 = vunpack.c.l.b16 %v3367
        %v8551 = vunpack.c.l.b16 %v3368
        %v8552 = vunpack.c.l.b16 %v3369
        %v8553 = vunpack.c.l.b16 %v3370
        %v8554 = vunpack.c.l.b16 %v3371
        %v8555 = vunpack.c.l.b16 %v3372
        %v8556 = vunpack.c.l.b16 %v3373
        %v8557 = vunpack.c.l.b16 %v3374
        %v8558 = vunpack.c.l.b16 %v3375
        %v8559 = vunpack.c.l.b16 %v3376
        %v8560 = vunpack.c.l.b16 %v3377
        %v8561 = vunpack.c.l.b16 %v3378
        %v8562 = vunpack.c.l.b16 %v3379
        %v8563 = vunpack.c.l.b16 %v3380
        %v8564 = vunpack.c.l.b16 %v3381
        %v8565 = vunpack.c.l.b16 %v3382
        %v8566 = vunpack.c.l.b16 %v3383
        %v8567 = vunpack.c.l.b16 %v3384
        %v8568 = vunpack.c.l.b16 %v3385
        %v8569 = vunpack.c.l.b16 %v3386
        %v8570 = vpack.c.b16 %v8486, %v8485
        %v8571 = vpack.c.b16 %v8488, %v8487
        %v8572 = vpack.c.b16 %v8490, %v8489
        %v8573 = vpack.c.b16 %v8492, %v8491
        %v8574 = vpack.c.b16 %v8494, %v8493
        %v8575 = vpack.c.b16 %v8496, %v8495
        %v8576 = vpack.c.b16 %v8498, %v8497
        %v8577 = vpack.c.b16 %v8500, %v8499
        %v8578 = vpack.c.b16 %v8502, %v8501
        %v8579 = vpack.c.b16 %v8504, %v8503
        %v8580 = vpack.c.b16 %v8506, %v8505
        %v8581 = vpack.c.b16 %v8508, %v8507
        %v8582 = vpack.c.b16 %v8510, %v8509
        %v8583 = vpack.c.b16 %v8512, %v8511
        %v8584 = vpack.c.b16 %v8514, %v8513
        %v8585 = vpack.c.b16 %v8516, %v8515
        %v8586 = vpack.c.b16 %v8518, %v8517
        %v8587 = vpack.c.b16 %v8520, %v8519
        %v8588 = vpack.c.b16 %v8522, %v8521
        %v8589 = vpack.c.b16 %v8524, %v8523
        %v8590 = vpack.c.b16 %v8526, %v8525
        %v8591 = vpack.c.b16 %v8528, %v8527
        %v8592 = vpack.c.b16 %v8530, %v8529
        %v8593 = vpack.c.b16 %v8532, %v8531
        %v8594 = vpack.c.b16 %v8534, %v8533
        %v8595 = vpack.c.b16 %v8536, %v8535
        %v8596 = vpack.c.b16 %v8538, %v8537
        %v8597 = vpack.c.b16 %v8540, %v8539
        %v8598 = vpack.c.b16 %v8542, %v8541
        %v8599 = vpack.c.b16 %v8544, %v8543
        %v8600 = vpack.c.b16 %v8546, %v8545
        %v8601 = vpack.c.b16 %v8548, %v8547
        %v8602 = vpack.c.b16 %v8550, %v8549
        %v8603 = vpack.c.b16 %v8552, %v8551
        %v8604 = vpack.c.b16 %v8554, %v8553
        %v8605 = vpack.c.b16 %v8556, %v8555
        %v8606 = vpack.c.b16 %v8558, %v8557
        %v8607 = vpack.c.b16 %v8560, %v8559
        %v8608 = vpack.c.b16 %v8562, %v8561
        %v8609 = vpack.c.b16 %v8564, %v8563
        %v8610 = vpack.c.b16 %v8566, %v8565
        %v8611 = vpack.c.b16 %v8568, %v8567
        %v8612 = vpack.c.b16 %v8569, %v8569
        %v8655 = vsel %vm3740, %v8394, 0
        %v8658 = vsel %vm423, %v8612, 0
        %8660 = vmatpush.bf16.msra.mxu0 %v8577
        %8661 = vmatpush.bf16.msra.mxu0 %v8576
        %8662 = vmatpush.bf16.msra.mxu0 %v8575
        %8663 = vmatpush.bf16.msra.mxu0 %v8574
        %8664 = vmatpush.bf16.msra.mxu0 %v8573
        %8665 = vmatpush.bf16.msra.mxu0 %v8572
        %8666 = vmatpush.bf16.msra.mxu0 %v8571
        %8667 = vmatpush.bf16.msra.mxu0 %v8570
        %8668 = vmatmul.bf16.gmra.mxu0 %v8389
        %v8669 = vpop.f32.mrf.mxu0
        %v8670 = vadd.f32 0.0, %v8669
        %v8671 = vpop.f32.mrf.mxu0
        %8672 = vdwg.mxu0
        %8673 = vmatpush.bf16.msra.mxu0 %v8585
        %8674 = vmatpush.bf16.msra.mxu0 %v8584
        %8675 = vmatpush.bf16.msra.mxu0 %v8583
        %8676 = vmatpush.bf16.msra.mxu0 %v8582
        %8677 = vmatpush.bf16.msra.mxu0 %v8581
        %8678 = vmatpush.bf16.msra.mxu0 %v8580
        %8679 = vmatpush.bf16.msra.mxu0 %v8579
        %8680 = vmatpush.bf16.msra.mxu0 %v8578
        %8681 = vmatmul.bf16.gmra.mxu0 %v8390
        %v8682 = vpop.f32.mrf.mxu0
        %v8683 = vadd.f32 %v8670, %v8682
        %v8684 = vpop.f32.mrf.mxu0
        %8685 = vdwg.mxu0
        %8686 = vmatpush.bf16.msra.mxu0 %v8593
        %8687 = vmatpush.bf16.msra.mxu0 %v8592
        %8688 = vmatpush.bf16.msra.mxu0 %v8591
        %8689 = vmatpush.bf16.msra.mxu0 %v8590
        %8690 = vmatpush.bf16.msra.mxu0 %v8589
        %8691 = vmatpush.bf16.msra.mxu0 %v8588
        %8692 = vmatpush.bf16.msra.mxu0 %v8587
        %8693 = vmatpush.bf16.msra.mxu0 %v8586
        %8694 = vmatmul.bf16.gmra.mxu0 %v8391
        %v8695 = vpop.f32.mrf.mxu0
        %v8696 = vadd.f32 %v8683, %v8695
        %v8697 = vpop.f32.mrf.mxu0
        %8698 = vdwg.mxu0
        %8699 = vmatpush.bf16.msra.mxu0 %v8601
        %8700 = vmatpush.bf16.msra.mxu0 %v8600
        %8701 = vmatpush.bf16.msra.mxu0 %v8599
        %8702 = vmatpush.bf16.msra.mxu0 %v8598
        %8703 = vmatpush.bf16.msra.mxu0 %v8597
        %8704 = vmatpush.bf16.msra.mxu0 %v8596
        %8705 = vmatpush.bf16.msra.mxu0 %v8595
        %8706 = vmatpush.bf16.msra.mxu0 %v8594
        %8707 = vmatmul.bf16.gmra.mxu0 %v8392
        %v8708 = vpop.f32.mrf.mxu0
        %v8709 = vadd.f32 %v8696, %v8708
        %v8710 = vpop.f32.mrf.mxu0
        %8711 = vdwg.mxu0
        %8712 = vmatpush.bf16.msra.mxu0 %v8609
        %8713 = vmatpush.bf16.msra.mxu0 %v8608
        %8714 = vmatpush.bf16.msra.mxu0 %v8607
        %8715 = vmatpush.bf16.msra.mxu0 %v8606
        %8716 = vmatpush.bf16.msra.mxu0 %v8605
        %8717 = vmatpush.bf16.msra.mxu0 %v8604
        %8718 = vmatpush.bf16.msra.mxu0 %v8603
        %8719 = vmatpush.bf16.msra.mxu0 %v8602
        %8720 = vmatmul.bf16.gmra.mxu0 %v8393
        %v8721 = vpop.f32.mrf.mxu0
        %v8722 = vadd.f32 %v8709, %v8721
        %v8723 = vpop.f32.mrf.mxu0
        %8724 = vdwg.mxu0
        %8725 = vmatpush.bf16.msra.mxu0 0
        %8726 = vmatpush.bf16.msra.mxu0 0
        %8727 = vmatpush.bf16.msra.mxu0 0
        %8728 = vmatpush.bf16.msra.mxu0 0
        %8729 = vmatpush.bf16.msra.mxu0 0
        %8730 = vmatpush.bf16.msra.mxu0 %v8658
        %8731 = vmatpush.bf16.msra.mxu0 %v8611
        %8732 = vmatpush.bf16.msra.mxu0 %v8610
        %8733 = vmatmul.bf16.gmra.mxu0 %v8655
        %v8734 = vpop.f32.mrf.mxu0
        %v8735 = vadd.f32 %v8722, %v8734
        %v8736 = vpop.f32.mrf.mxu0
        %8737 = vdwg.mxu0
        %8739 = vst [vmem:[#allocation1] ss:$9 sm:$0xff] %v2111
        %v8740 = vld [vmem:[#allocation1] sm:$0xff]
        %v8741 = vld [vmem:[#allocation1 + $0x9] sm:$0xff]
        %v8742 = vld [vmem:[#allocation1 + $0x12] sm:$0xff]
        %v8743 = vld [vmem:[#allocation1 + $0x1b] sm:$0xff]
        %v8744 = vld [vmem:[#allocation1 + $0x24] sm:$0xff]
        %v8745 = vld [vmem:[#allocation1 + $0x2d] sm:$0xff]
        %v8836 = vunpack.c.l.b16 %v3387
        %v8837 = vunpack.c.l.b16 %v3388
        %v8838 = vunpack.c.l.b16 %v3389
        %v8839 = vunpack.c.l.b16 %v3390
        %v8840 = vunpack.c.l.b16 %v3391
        %v8841 = vunpack.c.l.b16 %v3392
        %v8842 = vunpack.c.l.b16 %v3393
        %v8843 = vunpack.c.l.b16 %v3394
        %v8844 = vunpack.c.l.b16 %v3395
        %v8845 = vunpack.c.l.b16 %v3396
        %v8846 = vunpack.c.l.b16 %v3397
        %v8847 = vunpack.c.l.b16 %v3398
        %v8848 = vunpack.c.l.b16 %v3399
        %v8849 = vunpack.c.l.b16 %v3400
        %v8850 = vunpack.c.l.b16 %v3401
        %v8851 = vunpack.c.l.b16 %v3402
        %v8852 = vunpack.c.l.b16 %v3403
        %v8853 = vunpack.c.l.b16 %v3404
        %v8854 = vunpack.c.l.b16 %v3405
        %v8855 = vunpack.c.l.b16 %v3406
        %v8856 = vunpack.c.l.b16 %v3407
        %v8857 = vunpack.c.l.b16 %v3408
        %v8858 = vunpack.c.l.b16 %v3409
        %v8859 = vunpack.c.l.b16 %v3410
        %v8860 = vunpack.c.l.b16 %v3411
        %v8861 = vunpack.c.l.b16 %v3412
        %v8862 = vunpack.c.l.b16 %v3413
        %v8863 = vunpack.c.l.b16 %v3414
        %v8864 = vunpack.c.l.b16 %v3415
        %v8865 = vunpack.c.l.b16 %v3416
        %v8866 = vunpack.c.l.b16 %v3417
        %v8867 = vunpack.c.l.b16 %v3418
        %v8868 = vunpack.c.l.b16 %v3419
        %v8869 = vunpack.c.l.b16 %v3420
        %v8870 = vunpack.c.l.b16 %v3421
        %v8871 = vunpack.c.l.b16 %v3422
        %v8872 = vunpack.c.l.b16 %v3423
        %v8873 = vunpack.c.l.b16 %v3424
        %v8874 = vunpack.c.l.b16 %v3425
        %v8875 = vunpack.c.l.b16 %v3426
        %v8876 = vunpack.c.l.b16 %v3427
        %v8877 = vunpack.c.l.b16 %v3428
        %v8878 = vunpack.c.l.b16 %v3429
        %v8879 = vunpack.c.l.b16 %v3430
        %v8880 = vunpack.c.l.b16 %v3431
        %v8881 = vunpack.c.l.b16 %v3432
        %v8882 = vunpack.c.l.b16 %v3433
        %v8883 = vunpack.c.l.b16 %v3434
        %v8884 = vunpack.c.l.b16 %v3435
        %v8885 = vunpack.c.l.b16 %v3436
        %v8886 = vunpack.c.l.b16 %v3437
        %v8887 = vunpack.c.l.b16 %v3438
        %v8888 = vunpack.c.l.b16 %v3439
        %v8889 = vunpack.c.l.b16 %v3440
        %v8890 = vunpack.c.l.b16 %v3441
        %v8891 = vunpack.c.l.b16 %v3442
        %v8892 = vunpack.c.l.b16 %v3443
        %v8893 = vunpack.c.l.b16 %v3444
        %v8894 = vunpack.c.l.b16 %v3445
        %v8895 = vunpack.c.l.b16 %v3446
        %v8896 = vunpack.c.l.b16 %v3447
        %v8897 = vunpack.c.l.b16 %v3448
        %v8898 = vunpack.c.l.b16 %v3449
        %v8899 = vunpack.c.l.b16 %v3450
        %v8900 = vunpack.c.l.b16 %v3451
        %v8901 = vunpack.c.l.b16 %v3452
        %v8902 = vunpack.c.l.b16 %v3453
        %v8903 = vunpack.c.l.b16 %v3454
        %v8904 = vunpack.c.l.b16 %v3455
        %v8905 = vunpack.c.l.b16 %v3456
        %v8906 = vunpack.c.l.b16 %v3457
        %v8907 = vunpack.c.l.b16 %v3458
        %v8908 = vunpack.c.l.b16 %v3459
        %v8909 = vunpack.c.l.b16 %v3460
        %v8910 = vunpack.c.l.b16 %v3461
        %v8911 = vunpack.c.l.b16 %v3462
        %v8912 = vunpack.c.l.b16 %v3463
        %v8913 = vunpack.c.l.b16 %v3464
        %v8914 = vunpack.c.l.b16 %v3465
        %v8915 = vunpack.c.l.b16 %v3466
        %v8916 = vunpack.c.l.b16 %v3467
        %v8917 = vunpack.c.l.b16 %v3468
        %v8918 = vunpack.c.l.b16 %v3469
        %v8919 = vunpack.c.l.b16 %v3470
        %v8920 = vunpack.c.l.b16 %v3471
        %v8921 = vpack.c.b16 %v8837, %v8836
        %v8922 = vpack.c.b16 %v8839, %v8838
        %v8923 = vpack.c.b16 %v8841, %v8840
        %v8924 = vpack.c.b16 %v8843, %v8842
        %v8925 = vpack.c.b16 %v8845, %v8844
        %v8926 = vpack.c.b16 %v8847, %v8846
        %v8927 = vpack.c.b16 %v8849, %v8848
        %v8928 = vpack.c.b16 %v8851, %v8850
        %v8929 = vpack.c.b16 %v8853, %v8852
        %v8930 = vpack.c.b16 %v8855, %v8854
        %v8931 = vpack.c.b16 %v8857, %v8856
        %v8932 = vpack.c.b16 %v8859, %v8858
        %v8933 = vpack.c.b16 %v8861, %v8860
        %v8934 = vpack.c.b16 %v8863, %v8862
        %v8935 = vpack.c.b16 %v8865, %v8864
        %v8936 = vpack.c.b16 %v8867, %v8866
        %v8937 = vpack.c.b16 %v8869, %v8868
        %v8938 = vpack.c.b16 %v8871, %v8870
        %v8939 = vpack.c.b16 %v8873, %v8872
        %v8940 = vpack.c.b16 %v8875, %v8874
        %v8941 = vpack.c.b16 %v8877, %v8876
        %v8942 = vpack.c.b16 %v8879, %v8878
        %v8943 = vpack.c.b16 %v8881, %v8880
        %v8944 = vpack.c.b16 %v8883, %v8882
        %v8945 = vpack.c.b16 %v8885, %v8884
        %v8946 = vpack.c.b16 %v8887, %v8886
        %v8947 = vpack.c.b16 %v8889, %v8888
        %v8948 = vpack.c.b16 %v8891, %v8890
        %v8949 = vpack.c.b16 %v8893, %v8892
        %v8950 = vpack.c.b16 %v8895, %v8894
        %v8951 = vpack.c.b16 %v8897, %v8896
        %v8952 = vpack.c.b16 %v8899, %v8898
        %v8953 = vpack.c.b16 %v8901, %v8900
        %v8954 = vpack.c.b16 %v8903, %v8902
        %v8955 = vpack.c.b16 %v8905, %v8904
        %v8956 = vpack.c.b16 %v8907, %v8906
        %v8957 = vpack.c.b16 %v8909, %v8908
        %v8958 = vpack.c.b16 %v8911, %v8910
        %v8959 = vpack.c.b16 %v8913, %v8912
        %v8960 = vpack.c.b16 %v8915, %v8914
        %v8961 = vpack.c.b16 %v8917, %v8916
        %v8962 = vpack.c.b16 %v8919, %v8918
        %v8963 = vpack.c.b16 %v8920, %v8920
        %v9006 = vsel %vm3740, %v8745, 0
        %v9009 = vsel %vm423, %v8963, 0
        %9011 = vmatpush.bf16.msra.mxu0 %v8928
        %9012 = vmatpush.bf16.msra.mxu0 %v8927
        %9013 = vmatpush.bf16.msra.mxu0 %v8926
        %9014 = vmatpush.bf16.msra.mxu0 %v8925
        %9015 = vmatpush.bf16.msra.mxu0 %v8924
        %9016 = vmatpush.bf16.msra.mxu0 %v8923
        %9017 = vmatpush.bf16.msra.mxu0 %v8922
        %9018 = vmatpush.bf16.msra.mxu0 %v8921
        %9019 = vmatmul.bf16.gmra.mxu0 %v8740
        %v9020 = vpop.f32.mrf.mxu0
        %v9021 = vadd.f32 0.0, %v9020
        %v9022 = vpop.f32.mrf.mxu0
        %9023 = vdwg.mxu0
        %9024 = vmatpush.bf16.msra.mxu0 %v8936
        %9025 = vmatpush.bf16.msra.mxu0 %v8935
        %9026 = vmatpush.bf16.msra.mxu0 %v8934
        %9027 = vmatpush.bf16.msra.mxu0 %v8933
        %9028 = vmatpush.bf16.msra.mxu0 %v8932
        %9029 = vmatpush.bf16.msra.mxu0 %v8931
        %9030 = vmatpush.bf16.msra.mxu0 %v8930
        %9031 = vmatpush.bf16.msra.mxu0 %v8929
        %9032 = vmatmul.bf16.gmra.mxu0 %v8741
        %v9033 = vpop.f32.mrf.mxu0
        %v9034 = vadd.f32 %v9021, %v9033
        %v9035 = vpop.f32.mrf.mxu0
        %9036 = vdwg.mxu0
        %9037 = vmatpush.bf16.msra.mxu0 %v8944
        %9038 = vmatpush.bf16.msra.mxu0 %v8943
        %9039 = vmatpush.bf16.msra.mxu0 %v8942
        %9040 = vmatpush.bf16.msra.mxu0 %v8941
        %9041 = vmatpush.bf16.msra.mxu0 %v8940
        %9042 = vmatpush.bf16.msra.mxu0 %v8939
        %9043 = vmatpush.bf16.msra.mxu0 %v8938
        %9044 = vmatpush.bf16.msra.mxu0 %v8937
        %9045 = vmatmul.bf16.gmra.mxu0 %v8742
        %v9046 = vpop.f32.mrf.mxu0
        %v9047 = vadd.f32 %v9034, %v9046
        %v9048 = vpop.f32.mrf.mxu0
        %9049 = vdwg.mxu0
        %9050 = vmatpush.bf16.msra.mxu0 %v8952
        %9051 = vmatpush.bf16.msra.mxu0 %v8951
        %9052 = vmatpush.bf16.msra.mxu0 %v8950
        %9053 = vmatpush.bf16.msra.mxu0 %v8949
        %9054 = vmatpush.bf16.msra.mxu0 %v8948
        %9055 = vmatpush.bf16.msra.mxu0 %v8947
        %9056 = vmatpush.bf16.msra.mxu0 %v8946
        %9057 = vmatpush.bf16.msra.mxu0 %v8945
        %9058 = vmatmul.bf16.gmra.mxu0 %v8743
        %v9059 = vpop.f32.mrf.mxu0
        %v9060 = vadd.f32 %v9047, %v9059
        %v9061 = vpop.f32.mrf.mxu0
        %9062 = vdwg.mxu0
        %9063 = vmatpush.bf16.msra.mxu0 %v8960
        %9064 = vmatpush.bf16.msra.mxu0 %v8959
        %9065 = vmatpush.bf16.msra.mxu0 %v8958
        %9066 = vmatpush.bf16.msra.mxu0 %v8957
        %9067 = vmatpush.bf16.msra.mxu0 %v8956
        %9068 = vmatpush.bf16.msra.mxu0 %v8955
        %9069 = vmatpush.bf16.msra.mxu0 %v8954
        %9070 = vmatpush.bf16.msra.mxu0 %v8953
        %9071 = vmatmul.bf16.gmra.mxu0 %v8744
        %v9072 = vpop.f32.mrf.mxu0
        %v9073 = vadd.f32 %v9060, %v9072
        %v9074 = vpop.f32.mrf.mxu0
        %9075 = vdwg.mxu0
        %9076 = vmatpush.bf16.msra.mxu0 0
        %9077 = vmatpush.bf16.msra.mxu0 0
        %9078 = vmatpush.bf16.msra.mxu0 0
        %9079 = vmatpush.bf16.msra.mxu0 0
        %9080 = vmatpush.bf16.msra.mxu0 0
        %9081 = vmatpush.bf16.msra.mxu0 %v9009
        %9082 = vmatpush.bf16.msra.mxu0 %v8962
        %9083 = vmatpush.bf16.msra.mxu0 %v8961
        %9084 = vmatmul.bf16.gmra.mxu0 %v9006
        %v9085 = vpop.f32.mrf.mxu0
        %v9086 = vadd.f32 %v9073, %v9085
        %v9087 = vpop.f32.mrf.mxu0
        %9088 = vdwg.mxu0
        %v9089 = vld [vmem:[#allocation2] sm:$0x3]
        %v9090 = vsel %vm423, %v3821, 0.0
        %v9091 = vsel %vm423, %v4172, 0.0
        %v9092 = vadd.f32 %v9090, %v9091
        %v9093 = vsel %vm423, %v4523, 0.0
        %v9094 = vadd.f32 %v9092, %v9093
        %v9095 = vsel %vm423, %v4874, 0.0
        %v9096 = vadd.f32 %v9094, %v9095
        %v9097 = vsel %vm423, %v5225, 0.0
        %v9098 = vadd.f32 %v9096, %v9097
        %v9099 = vsel %vm423, %v5576, 0.0
        %v9100 = vadd.f32 %v9098, %v9099
        %v9101 = vsel %vm423, %v5927, 0.0
        %v9102 = vadd.f32 %v9100, %v9101
        %v9103 = vsel %vm423, %v6278, 0.0
        %v9104 = vadd.f32 %v9102, %v9103
        %v9105 = vsel %vm423, %v6629, 0.0
        %v9106 = vadd.f32 %v9104, %v9105
        %v9107 = vsel %vm423, %v6980, 0.0
        %v9108 = vadd.f32 %v9106, %v9107
        %v9109 = vsel %vm423, %v7331, 0.0
        %v9110 = vadd.f32 %v9108, %v9109
        %v9111 = vsel %vm423, %v7682, 0.0
        %v9112 = vadd.f32 %v9110, %v9111
        %v9113 = vsel %vm423, %v8033, 0.0
        %v9114 = vadd.f32 %v9112, %v9113
        %v9115 = vsel %vm423, %v8384, 0.0
        %v9116 = vadd.f32 %v9114, %v9115
        %v9117 = vsel %vm423, %v8735, 0.0
        %v9118 = vadd.f32 %v9116, %v9117
        %v9119 = vsel %vm423, %v9086, 0.0
        %v9120 = vadd.f32 %v9118, %v9119
        %v9121 = vadd.f32 %v9089, %v9120
        %9122 = vst [vmem:[#allocation2] sm:$0x3] %v9121
        %p9123 = scmp.eq.s32.totalorder %s21, 1
        // Predicated region
        $region61: #{cnn_forward.1} parent=47 // pred_check
          %p9124 = pneg %p9123
        $region62: #{cnn_forward.1} parent=47 // pred_check_branch
          %9126 = sbr.rel (%p9124) target = $region64
        $region63: #{cnn_forward.1} parent=47 // pred_region
          %v9127 = vld [vmem:[#allocation2] sm:$0x3]
          %v9128 = vld [vmem:[%s4] sm:$0x1]
          %v9130 = vperm.slane %v9128, 0
          %v9132 = vadd.f32 %v9127, %v9130
          %v9133 = vmax.f32 %v9132, 0.0
          %v9134 = vld [vmem:[%s5] sm:$0xff]
          %v9135 = vld [vmem:[%s5 + $0x8] sm:$0xff]
          %v9136 = vld [vmem:[%s5 + $0x10] sm:$0xff]
          %v9137 = vld [vmem:[%s5 + $0x18] sm:$0xff]
          %v9138 = vld [vmem:[%s5 + $0x20] sm:$0xff]
          %v9139 = vld [vmem:[%s5 + $0x28] sm:$0xff]
          %v9140 = vld [vmem:[%s5 + $0x30] sm:$0xff]
          %v9141 = vld [vmem:[%s5 + $0x38] sm:$0xff]
          %v9142 = vld [vmem:[%s5 + $0x40] sm:$0xff]
          %v9143 = vld [vmem:[%s5 + $0x48] sm:$0xff]
          %v9144 = vld [vmem:[%s5 + $0x50] sm:$0xff]
          %v9145 = vld [vmem:[%s5 + $0x58] sm:$0xff]
          %v9146 = vld [vmem:[%s5 + $0x60] sm:$0xff]
          %v9147 = vld [vmem:[%s5 + $0x68] sm:$0xff]
          %v9148 = vld [vmem:[%s5 + $0x70] sm:$0xff]
          %v9149 = vld [vmem:[%s5 + $0x78] sm:$0xff]
          %v9150 = vld [vmem:[%s6] sm:$0x1]
          %v9152 = vperm.slane %v9150, 0
          %9154 = vmatpush.msra.mxu0 %v9149
          %9155 = vmatpush.msra.mxu0 %v9148
          %9156 = vmatpush.msra.mxu0 %v9147
          %9157 = vmatpush.msra.mxu0 %v9146
          %9158 = vmatpush.msra.mxu0 %v9145
          %9159 = vmatpush.msra.mxu0 %v9144
          %9160 = vmatpush.msra.mxu0 %v9143
          %9161 = vmatpush.msra.mxu0 %v9142
          %9162 = vmatpush.msra.mxu0 %v9141
          %9163 = vmatpush.msra.mxu0 %v9140
          %9164 = vmatpush.msra.mxu0 %v9139
          %9165 = vmatpush.msra.mxu0 %v9138
          %9166 = vmatpush.msra.mxu0 %v9137
          %9167 = vmatpush.msra.mxu0 %v9136
          %9168 = vmatpush.msra.mxu0 %v9135
          %9169 = vmatpush.msra.mxu0 %v9134
          %9170 = vmatmul.f32.gmra.mxu0 %v9133
          %v9171 = vpop.f32.mrf.mxu0
          %v9172 = vadd.f32 %v9152, %v9171
          %9173 = vdwg.mxu0
          %vm9174 = vcmask 74752
          %9175 = vst.msk [vmem:[#allocation9] sm:$0x3] %vm9174, %v9172
        $region64: #{cnn_forward.1} parent=47 // pred_fallthru
          _
        // Predicated region
        $region65: #{cnn_forward.1} parent=47 // pred_check
          %p9176 = pneg %p186
        $region66: #{cnn_forward.1} parent=47 // pred_check_branch
          %9178 = sbr.rel (%p9176) target = $region68
        $region67: #{cnn_forward.1} parent=47 // pred_region
          %9180 = vsyncadd [#allocation5], 0
          %s9182 = sshll.u32 [#allocation9], 4
          %s9183 = int_to_ptr.vmem [resolvable:$true] %s9182
          %s9184 = sshll.u32 %s7, 4
          %s9185 = int_to_ptr.hbm [resolvable:$true] %s9184
          %9187 = dma.vmem_to_hbm [thread:$0]  %s9183, 32, %s9185, [#allocation5]
        $region68: #{cnn_forward.1} parent=47 // pred_fallthru
          _
        // Predicated region
        $region69: #{cnn_forward.1} parent=47 // pred_check
          %p9188 = pneg %p186
        $region70: #{cnn_forward.1} parent=47 // pred_check_branch
          %9190 = sbr.rel (%p9188) target = $region72
        $region71: #{cnn_forward.1} parent=47 // pred_region
          %9192 = dma.done [#allocation5], 32
        $region72: #{cnn_forward.1} parent=47 // pred_fallthru
          _
      $region48: #{cnn_forward.1} parent=5 // pred_fallthru
        _
      %p9193 = scmp.le.s32.totalorder 2, %s16
      // Predicated region
      $region73: #{cnn_forward.1} parent=5 // pred_check
        %p9194 = pneg %p9193
      $region74: #{cnn_forward.1} parent=5 // pred_check_branch
        %9196 = sbr.rel (%p9194) target = $region76
      $region75: #{cnn_forward.1} parent=5 // pred_region
        %s9197 = ssub.s32 %s16, 2
      $region76: #{cnn_forward.1} parent=5 // pred_fallthru
        _
    $region6: #{cnn_forward.1} parent=1 // loop_footer
      %s20 = sadd.s32 1, %s16
    $region7: #{cnn_forward.1} parent=1 // loop_footer_branch
      %15 = sbr.rel target = $region3
    $region8: #{cnn_forward.1} parent=1 // loop_exit
      _
    %9198 = vsyncpa [#allocation5], 1
    %s9199 = scalar_lea.sflag [#allocation5], 1
    %9200 = vsyncpa %s9199, 1
    %9201 = vsyncpa [#allocation6], 1
    %s9202 = scalar_lea.sflag [#allocation6], 1
    %9203 = vsyncpa %s9202, 1
    %9204 = vsyncpa [#allocation8], 1

</llo_original>
